<compile_context>
chip_gen: v6e
topology: v6e:2x2x1
jax: 0.10.0
libtpu: 0.0.40
codegen_flags: <defaults>
</compile_context>

<pallas_src>
import jax
import jax.numpy as jnp
from jax.experimental import pallas as pl
from jax.experimental.pallas import tpu as pltpu

_PB = 16  # halo column offset in the bf16 conv scratches (bf16 sublane tile = 16)
_PF = 8   # halo column offset in the f32 pool scratch   (f32  sublane tile = 8)


# ------------------------------- Pallas kernel ------------------------------

def inception_a_kernel(x_ref, wf_ref, bf_ref, b1_ref,
                       w3b_ref, b3b_ref, w4b_ref, b4b_ref, w4c_ref, b4c_ref,
                       o_ref, pool_ref, pad64_ref, pad96_ref):
    _, H, W, Cin = x_ref.shape
    HW = H * W

    # ---- zero ONLY the 1-wide halo cells the convs/pool read (per review) ----
    # Interiors are fully overwritten below; halo cells are never written, so
    # a thin per-step zero is enough and is safe under megacore partitioning.
    def zero_halo(ref, col0):
        c = ref.shape[-1]
        ref[0:1, col0 - 1:col0 + W + 1, :] = jnp.zeros((1, W + 2, c), ref.dtype)
        ref[H + 1:H + 2, col0 - 1:col0 + W + 1, :] = jnp.zeros((1, W + 2, c), ref.dtype)
        ref[1:H + 1, col0 - 1:col0, :] = jnp.zeros((H, 1, c), ref.dtype)
        ref[1:H + 1, col0 + W:col0 + W + 1, :] = jnp.zeros((H, 1, c), ref.dtype)

    zero_halo(pool_ref, _PF)
    zero_halo(pad64_ref, _PB)
    zero_halo(pad96_ref, _PB)

    x2 = x_ref[0].reshape(HW, Cin)                       # (HW, Cin) bf16

    # ---- fused 1x1 convs: [branch2 | branch3a | branch4a | branch1-1x1] -----
    # 512 columns, every segment starting on a 128-aligned lane:
    #   [0:96]=b2, [128:192]=b3a, [256:320]=b4a, [384:480]=b1 (pre-pool).
    yf = jnp.dot(x2, wf_ref[...], preferred_element_type=jnp.float32)  # (HW, 512)
    ya = jnp.maximum(yf[:, 0:384] + bf_ref[...], 0.0)    # bias+ReLU for b2/b3a/b4a
    out2 = ya[:, 0:96]
    t3 = ya[:, 128:192].astype(jnp.bfloat16).reshape(H, W, 64)
    t4 = ya[:, 256:320].astype(jnp.bfloat16).reshape(H, W, 64)
    z1 = yf[:, 384:480]                                  # branch1 1x1, no bias/ReLU yet

    # ---- branch1: 1x1 conv commuted with the separable 3x3 avg pool ---------
    # pool(x) @ W1 == pool(x @ W1); bias/ReLU applied after pooling.
    pool_ref[1:H + 1, _PF:_PF + W, :] = z1.reshape(H, W, 96)
    hs = (pool_ref[:, _PF - 1:_PF - 1 + W, :]
          + pool_ref[:, _PF:_PF + W, :]
          + pool_ref[:, _PF + 1:_PF + 1 + W, :])         # (H+2, W, 96)
    pooled = (hs[0:H] + hs[1:H + 1] + hs[2:H + 2]) * (1.0 / 9.0)
    out1 = jnp.maximum(pooled.reshape(HW, 96) + b1_ref[...], 0.0)

    def conv3x3_relu(pad_ref, w_ref, bias):
        # K-packed 3x3 conv: pack the 3 horizontal taps along channels once,
        # then 3 dots with K = 3*Cin (one per vertical tap) instead of 9.
        c = pad_ref.shape[-1]
        packed = jnp.concatenate(
            [pad_ref[:, _PB - 1:_PB - 1 + W, :],          # dx = 0  -> t[., x-1]
             pad_ref[:, _PB:_PB + W, :],                  # dx = 1  -> t[., x]
             pad_ref[:, _PB + 1:_PB + 1 + W, :]],         # dx = 2  -> t[., x+1]
            axis=-1)                                      # (H+2, W, 3c)
        flat = packed.reshape((H + 2) * W, 3 * c)
        acc = jnp.dot(flat[0:HW], w_ref[0],
                      preferred_element_type=jnp.float32) + bias
        acc = acc + jnp.dot(flat[W:W + HW], w_ref[1],
                            preferred_element_type=jnp.float32)
        acc = acc + jnp.dot(flat[2 * W:2 * W + HW], w_ref[2],
                            preferred_element_type=jnp.float32)
        return jnp.maximum(acc, 0.0)

    # ---- branch3: (fused 1x1) -> 3x3 -----------------------------------------
    pad64_ref[1:H + 1, _PB:_PB + W, :] = t3
    out3 = conv3x3_relu(pad64_ref, w3b_ref, b3b_ref[...])

    # ---- branch4: (fused 1x1) -> 3x3 -> 3x3 ----------------------------------
    pad64_ref[1:H + 1, _PB:_PB + W, :] = t4
    t4b = conv3x3_relu(pad64_ref, w4b_ref, b4b_ref[...])
    pad96_ref[1:H + 1, _PB:_PB + W, :] = t4b.astype(jnp.bfloat16).reshape(H, W, 96)
    out4 = conv3x3_relu(pad96_ref, w4c_ref, b4c_ref[...])

    # ---- lane-dense bf16 output: (HW, 384); order matches torch.cat ---------
    o_ref[0] = jnp.concatenate(
        [out1.astype(jnp.bfloat16), out2.astype(jnp.bfloat16),
         out3.astype(jnp.bfloat16), out4.astype(jnp.bfloat16)], axis=-1)


# ------------------------------ pallas_call wrapper --------------------------

def inception_a_pallas(x_nhwc, wf, bf, b1, w3b, b3b, w4b, b4b, w4c, b4c):
    B, H, W, Cin = x_nhwc.shape
    HW = H * W
    Wpk = W + 2 * _PB
    Wpf = W + 2 * _PF
    return pl.pallas_call(
        inception_a_kernel,
        out_shape=jax.ShapeDtypeStruct((B, HW, 384), jnp.bfloat16),
        grid=(B,),
        in_specs=[
            pl.BlockSpec((1, H, W, Cin), lambda b: (b, 0, 0, 0)),
            pl.BlockSpec((Cin, 512), lambda b: (0, 0)),
            pl.BlockSpec((1, 384), lambda b: (0, 0)),
            pl.BlockSpec((1, 96), lambda b: (0, 0)),
            pl.BlockSpec((3, 192, 96), lambda b: (0, 0, 0)),
            pl.BlockSpec((1, 96), lambda b: (0, 0)),
            pl.BlockSpec((3, 192, 96), lambda b: (0, 0, 0)),
            pl.BlockSpec((1, 96), lambda b: (0, 0)),
            pl.BlockSpec((3, 288, 96), lambda b: (0, 0, 0)),
            pl.BlockSpec((1, 96), lambda b: (0, 0)),
        ],
        out_specs=pl.BlockSpec((1, HW, 384), lambda b: (b, 0, 0)),
        scratch_shapes=[
            pltpu.VMEM((H + 2, Wpf, 96), jnp.float32),    # padded branch1 1x1 map (pool)
            pltpu.VMEM((H + 2, Wpk, 64), jnp.bfloat16),   # padded t3 / t4
            pltpu.VMEM((H + 2, Wpk, 96), jnp.bfloat16),   # padded t4b
        ],
        compiler_params=pltpu.CompilerParams(
            dimension_semantics=("parallel",),
            vmem_limit_bytes=32 * 1024 * 1024),
    )(x_nhwc, wf, bf, b1, w3b, b3b, w4b, b4b, w4c, b4c)


# ------------------------------ parameter init ------------------------------

def init_bconv(key, cin, cout, k):
    kw, kb, kg, kbe, km, kv = jax.random.split(key, 6)
    w = jax.random.normal(kw, (k * k, cin, cout), jnp.float32) * 0.1
    conv_b = jax.random.normal(kb, (cout,), jnp.float32) * 0.1
    gamma = 1.0 + 0.1 * jax.random.normal(kg, (cout,), jnp.float32)
    beta = 0.1 * jax.random.normal(kbe, (cout,), jnp.float32)
    mean = 0.1 * jax.random.normal(km, (cout,), jnp.float32)
    var = jax.random.uniform(kv, (cout,), jnp.float32, 0.5, 1.5)
    scale = gamma / jnp.sqrt(var + 1e-5)
    bias = (conv_b - mean) * scale + beta
    return w, scale.reshape(1, cout), bias.reshape(1, cout)


def init_inception_a(key, in_channels):
    ks = jax.random.split(key, 7)
    return {
        "b1": init_bconv(ks[0], in_channels, 96, 1),
        "b2": init_bconv(ks[1], in_channels, 96, 1),
        "b3": (init_bconv(ks[2], in_channels, 64, 1),
               init_bconv(ks[3], 64, 96, 3)),
        "b4": (init_bconv(ks[4], in_channels, 64, 1),
               init_bconv(ks[5], 64, 96, 3),
               init_bconv(ks[6], 96, 96, 3)),
    }


# ------------------------------ forward (Pallas) ----------------------------

def _fold(w, scale):
    # fold BN scale into the conv weights; bf16 operands for the MXU
    return (w * scale).astype(jnp.bfloat16)


def _pack3x3(w):
    # (9, cin, cout) -> (3, 3*cin, cout): row dy holds [W[dy,0]; W[dy,1]; W[dy,2]]
    k2, cin, cout = w.shape
    return w.reshape(3, 3 * cin, cout)


@jax.jit
def inception_a_forward(x_nchw, params):
    """NCHW input (PyTorch layout) -> NHWC (B, H, W, 384) bf16 output."""
    B, C, H, W = x_nchw.shape
    x = jnp.transpose(x_nchw, (0, 2, 3, 1)).astype(jnp.bfloat16)     # NHWC bf16

    w1, s1, b1 = params["b1"]
    w2, s2, b2 = params["b2"]
    (w3a, s3a, b3a), (w3b, s3b, b3b) = params["b3"]
    (w4a, s4a, b4a), (w4b, s4b, b4b), (w4c, s4c, b4c) = params["b4"]

    # fused 1x1 weight: [b2 | 0 | b3a | 0 | b4a | 0 | b1 | 0] -> 512 cols,
    # every segment start 128-lane aligned (keep the zero columns: cheaper
    # than unaligned lane slices of yf).
    z32w = jnp.zeros((C, 32), jnp.bfloat16)
    z64w = jnp.zeros((C, 64), jnp.bfloat16)
    wf = jnp.concatenate([_fold(w2, s2)[0], z32w,
                          _fold(w3a, s3a)[0], z64w,
                          _fold(w4a, s4a)[0], z64w,
                          _fold(w1, s1)[0], z32w], axis=1)           # (C, 512)
    z32b = jnp.zeros((1, 32), jnp.float32)
    z64b = jnp.zeros((1, 64), jnp.float32)
    bf = jnp.concatenate([b2, z32b, b3a, z64b, b4a, z64b], axis=1)   # (1, 384)

    out = inception_a_pallas(
        x, wf, bf, b1,
        _pack3x3(_fold(w3b, s3b)), b3b,
        _pack3x3(_fold(w4b, s4b)), b4b,
        _pack3x3(_fold(w4c, s4c)), b4c)                              # (B, HW, 384)
    return out.reshape(B, H, W, 384)


@jax.jit
def inception_a_forward_nchw(x_nchw, params):
    # Strict PyTorch-layout output; the transpose is an extra XLA op outside
    # the kernel pipeline -- only use it at a model boundary.
    return jnp.transpose(inception_a_forward(x_nchw, params), (0, 3, 1, 2))


# ------------------------------ pure-JAX reference ---------------------------

def _ref_bconv(x, w, scale, bias, k):
    w4 = w.reshape(k, k, w.shape[1], w.shape[2])
    y = jax.lax.conv_general_dilated(
        x, w4, (1, 1), padding="SAME" if k == 3 else "VALID",
        dimension_numbers=("NHWC", "HWIO", "NHWC"))
    return jnp.maximum(y * scale.reshape(1, 1, 1, -1)
                       + bias.reshape(1, 1, 1, -1), 0.0)


def inception_a_reference(x_nchw, params):
    x = jnp.transpose(x_nchw, (0, 2, 3, 1))
    # nn.AvgPool2d(3, stride=1, padding=1) default: count_include_pad=True -> /9
    pooled = jax.lax.reduce_window(
        x, 0.0, jax.lax.add, (1, 3, 3, 1), (1, 1, 1, 1),
        padding=((0, 0), (1, 1), (1, 1), (0, 0))) / 9.0
    w1, s1, b1 = params["b1"]
    out1 = _ref_bconv(pooled, w1, s1, b1, 1)
    w2, s2, b2 = params["b2"]
    out2 = _ref_bconv(x, w2, s2, b2, 1)
    (w3a, s3a, b3a), (w3b, s3b, b3b) = params["b3"]
    out3 = _ref_bconv(_ref_bconv(x, w3a, s3a, b3a, 1), w3b, s3b, b3b, 3)
    (w4a, s4a, b4a), (w4b, s4b, b4b), (w4c, s4c, b4c) = params["b4"]
    out4 = _ref_bconv(
        _ref_bconv(_ref_bconv(x, w4a, s4a, b4a, 1), w4b, s4b, b4b, 3),
        w4c, s4c, b4c, 3)
    return jnp.concatenate([out1, out2, out3, out4], axis=-1)        # NHWC


# ---------------------------------- main -------------------------------------

if __name__ == "__main__":
    key = jax.random.PRNGKey(0)
    kx, kp = jax.random.split(key)

    B, C, H, W = 2, 4, 16, 16
    x = jax.random.normal(kx, (B, C, H, W), jnp.float32)
    params = init_inception_a(kp, C)

    out = jax.block_until_ready(inception_a_forward(x, params))
    assert out.shape == (B, H, W, 96 * 4), out.shape

    ref = jax.block_until_ready(inception_a_reference(x, params))
    err = float(jnp.max(jnp.abs(out.astype(jnp.float32) - ref)))
    ref_max = float(jnp.max(jnp.abs(ref)))
    # bf16 MXU operands + bf16 output (f32 accumulate) -> small drift vs f32 ref
    assert err <= 3e-2 * (1.0 + ref_max), (
        f"max abs error too large: {err} (ref max {ref_max})")

    # PyTorch-layout compatibility wrapper
    out_nchw = jax.block_until_ready(inception_a_forward_nchw(x, params))
    assert out_nchw.shape == (B, 96 * 4, H, W), out_nchw.shape

    print("KERNEL_OK")
</pallas_src>

<mosaic_0001>
module attributes {stable_mosaic.version = 11 : i64} {
  func.func @inception_a_kernel(%arg0: i32, %arg1: memref<1x16x16x4xbf16, #tpu.memory_space<vmem>>, %arg2: memref<4x512xbf16, #tpu.memory_space<vmem>>, %arg3: memref<1x384xf32, #tpu.memory_space<vmem>>, %arg4: memref<1x96xf32, #tpu.memory_space<vmem>>, %arg5: memref<3x192x96xbf16, #tpu.memory_space<vmem>>, %arg6: memref<1x96xf32, #tpu.memory_space<vmem>>, %arg7: memref<3x192x96xbf16, #tpu.memory_space<vmem>>, %arg8: memref<1x96xf32, #tpu.memory_space<vmem>>, %arg9: memref<3x288x96xbf16, #tpu.memory_space<vmem>>, %arg10: memref<1x96xf32, #tpu.memory_space<vmem>>, %arg11: memref<1x256x384xbf16, #tpu.memory_space<vmem>>, %arg12: memref<18x32x96xf32, #tpu.memory_space<vmem>>, %arg13: memref<18x48x64xbf16, #tpu.memory_space<vmem>>, %arg14: memref<18x48x96xbf16, #tpu.memory_space<vmem>>) attributes {dimension_semantics = [#tpu.dimension_semantics<parallel>], iteration_bounds = array<i64: 2>, scalar_prefetch = 0 : i64, scratch_operands = 3 : i64, tpu.core_type = #tpu.core_type<tc>, window_params = [{transform_indices = @transform_0, window_bounds = array<i64: 1, 16, 16, 4>}, {pipeline_mode = #tpu.pipeline_mode<synchronous>, transform_indices = @transform_1, window_bounds = array<i64: 4, 512>}, {pipeline_mode = #tpu.pipeline_mode<synchronous>, transform_indices = @transform_2, window_bounds = array<i64: 1, 384>}, {pipeline_mode = #tpu.pipeline_mode<synchronous>, transform_indices = @transform_3, window_bounds = array<i64: 1, 96>}, {pipeline_mode = #tpu.pipeline_mode<synchronous>, transform_indices = @transform_4, window_bounds = array<i64: 3, 192, 96>}, {pipeline_mode = #tpu.pipeline_mode<synchronous>, transform_indices = @transform_5, window_bounds = array<i64: 1, 96>}, {pipeline_mode = #tpu.pipeline_mode<synchronous>, transform_indices = @transform_6, window_bounds = array<i64: 3, 192, 96>}, {pipeline_mode = #tpu.pipeline_mode<synchronous>, transform_indices = @transform_7, window_bounds = array<i64: 1, 96>}, {pipeline_mode = #tpu.pipeline_mode<synchronous>, transform_indices = @transform_8, window_bounds = array<i64: 3, 288, 96>}, {pipeline_mode = #tpu.pipeline_mode<synchronous>, transform_indices = @transform_9, window_bounds = array<i64: 1, 96>}, {transform_indices = @transform_10, window_bounds = array<i64: 1, 256, 384>}]} {
    %cst = arith.constant 0.000000e+00 : f32
    %0 = vector.broadcast %cst : f32 to vector<1x18x96xf32>
    %c0 = arith.constant 0 : index
    %c7 = arith.constant 7 : index
    %c0_0 = arith.constant 0 : index
    %1 = vector.load %arg12[%c0, %c7, %c0_0] : memref<18x32x96xf32, #tpu.memory_space<vmem>>, vector<1x18x96xf32>
    tpu.vector_store %arg12[%c0, %c7, %c0_0], %0 {strides = array<i32>} : memref<18x32x96xf32, #tpu.memory_space<vmem>>, vector<1x18x96xf32>,
    %cst_1 = arith.constant 0.000000e+00 : f32
    %2 = vector.broadcast %cst_1 : f32 to vector<1x18x96xf32>
    %c17 = arith.constant 17 : index
    %c7_2 = arith.constant 7 : index
    %c0_3 = arith.constant 0 : index
    %3 = vector.load %arg12[%c17, %c7_2, %c0_3] : memref<18x32x96xf32, #tpu.memory_space<vmem>>, vector<1x18x96xf32>
    tpu.vector_store %arg12[%c17, %c7_2, %c0_3], %2 {strides = array<i32>} : memref<18x32x96xf32, #tpu.memory_space<vmem>>, vector<1x18x96xf32>,
    %cst_4 = arith.constant 0.000000e+00 : f32
    %4 = vector.broadcast %cst_4 : f32 to vector<16x1x96xf32>
    %c1 = arith.constant 1 : index
    %c7_5 = arith.constant 7 : index
    %c0_6 = arith.constant 0 : index
    %5 = vector.load %arg12[%c1, %c7_5, %c0_6] : memref<18x32x96xf32, #tpu.memory_space<vmem>>, vector<16x1x96xf32>
    tpu.vector_store %arg12[%c1, %c7_5, %c0_6], %4 {strides = array<i32>} : memref<18x32x96xf32, #tpu.memory_space<vmem>>, vector<16x1x96xf32>,
    %cst_7 = arith.constant 0.000000e+00 : f32
    %6 = vector.broadcast %cst_7 : f32 to vector<16x1x96xf32>
    %c1_8 = arith.constant 1 : index
    %c24 = arith.constant 24 : index
    %c0_9 = arith.constant 0 : index
    %7 = vector.load %arg12[%c1_8, %c24, %c0_9] : memref<18x32x96xf32, #tpu.memory_space<vmem>>, vector<16x1x96xf32>
    tpu.vector_store %arg12[%c1_8, %c24, %c0_9], %6 {strides = array<i32>} : memref<18x32x96xf32, #tpu.memory_space<vmem>>, vector<16x1x96xf32>,
    %cst_10 = arith.constant 0.000000e+00 : bf16
    %8 = vector.broadcast %cst_10 : bf16 to vector<1x18x64xbf16>
    %c0_11 = arith.constant 0 : index
    %c15 = arith.constant 15 : index
    %c0_12 = arith.constant 0 : index
    %9 = vector.load %arg13[%c0_11, %c15, %c0_12] : memref<18x48x64xbf16, #tpu.memory_space<vmem>>, vector<1x18x64xbf16>
    tpu.vector_store %arg13[%c0_11, %c15, %c0_12], %8 {strides = array<i32>} : memref<18x48x64xbf16, #tpu.memory_space<vmem>>, vector<1x18x64xbf16>,
    %cst_13 = arith.constant 0.000000e+00 : bf16
    %10 = vector.broadcast %cst_13 : bf16 to vector<1x18x64xbf16>
    %c17_14 = arith.constant 17 : index
    %c15_15 = arith.constant 15 : index
    %c0_16 = arith.constant 0 : index
    %11 = vector.load %arg13[%c17_14, %c15_15, %c0_16] : memref<18x48x64xbf16, #tpu.memory_space<vmem>>, vector<1x18x64xbf16>
    tpu.vector_store %arg13[%c17_14, %c15_15, %c0_16], %10 {strides = array<i32>} : memref<18x48x64xbf16, #tpu.memory_space<vmem>>, vector<1x18x64xbf16>,
    %cst_17 = arith.constant 0.000000e+00 : bf16
    %12 = vector.broadcast %cst_17 : bf16 to vector<16x1x64xbf16>
    %c1_18 = arith.constant 1 : index
    %c15_19 = arith.constant 15 : index
    %c0_20 = arith.constant 0 : index
    %13 = vector.load %arg13[%c1_18, %c15_19, %c0_20] : memref<18x48x64xbf16, #tpu.memory_space<vmem>>, vector<16x1x64xbf16>
    tpu.vector_store %arg13[%c1_18, %c15_19, %c0_20], %12 {strides = array<i32>} : memref<18x48x64xbf16, #tpu.memory_space<vmem>>, vector<16x1x64xbf16>,
    %cst_21 = arith.constant 0.000000e+00 : bf16
    %14 = vector.broadcast %cst_21 : bf16 to vector<16x1x64xbf16>
    %c1_22 = arith.constant 1 : index
    %c32 = arith.constant 32 : index
    %c0_23 = arith.constant 0 : index
    %15 = vector.load %arg13[%c1_22, %c32, %c0_23] : memref<18x48x64xbf16, #tpu.memory_space<vmem>>, vector<16x1x64xbf16>
    tpu.vector_store %arg13[%c1_22, %c32, %c0_23], %14 {strides = array<i32>} : memref<18x48x64xbf16, #tpu.memory_space<vmem>>, vector<16x1x64xbf16>,
    %cst_24 = arith.constant 0.000000e+00 : bf16
    %16 = vector.broadcast %cst_24 : bf16 to vector<1x18x96xbf16>
    %c0_25 = arith.constant 0 : index
    %c15_26 = arith.constant 15 : index
    %c0_27 = arith.constant 0 : index
    %17 = vector.load %arg14[%c0_25, %c15_26, %c0_27] : memref<18x48x96xbf16, #tpu.memory_space<vmem>>, vector<1x18x96xbf16>
    tpu.vector_store %arg14[%c0_25, %c15_26, %c0_27], %16 {strides = array<i32>} : memref<18x48x96xbf16, #tpu.memory_space<vmem>>, vector<1x18x96xbf16>,
    %cst_28 = arith.constant 0.000000e+00 : bf16
    %18 = vector.broadcast %cst_28 : bf16 to vector<1x18x96xbf16>
    %c17_29 = arith.constant 17 : index
    %c15_30 = arith.constant 15 : index
    %c0_31 = arith.constant 0 : index
    %19 = vector.load %arg14[%c17_29, %c15_30, %c0_31] : memref<18x48x96xbf16, #tpu.memory_space<vmem>>, vector<1x18x96xbf16>
    tpu.vector_store %arg14[%c17_29, %c15_30, %c0_31], %18 {strides = array<i32>} : memref<18x48x96xbf16, #tpu.memory_space<vmem>>, vector<1x18x96xbf16>,
    %cst_32 = arith.constant 0.000000e+00 : bf16
    %20 = vector.broadcast %cst_32 : bf16 to vector<16x1x96xbf16>
    %c1_33 = arith.constant 1 : index
    %c15_34 = arith.constant 15 : index
    %c0_35 = arith.constant 0 : index
    %21 = vector.load %arg14[%c1_33, %c15_34, %c0_35] : memref<18x48x96xbf16, #tpu.memory_space<vmem>>, vector<16x1x96xbf16>
    tpu.vector_store %arg14[%c1_33, %c15_34, %c0_35], %20 {strides = array<i32>} : memref<18x48x96xbf16, #tpu.memory_space<vmem>>, vector<16x1x96xbf16>,
    %cst_36 = arith.constant 0.000000e+00 : bf16
    %22 = vector.broadcast %cst_36 : bf16 to vector<16x1x96xbf16>
    %c1_37 = arith.constant 1 : index
    %c32_38 = arith.constant 32 : index
    %c0_39 = arith.constant 0 : index
    %23 = vector.load %arg14[%c1_37, %c32_38, %c0_39] : memref<18x48x96xbf16, #tpu.memory_space<vmem>>, vector<16x1x96xbf16>
    tpu.vector_store %arg14[%c1_37, %c32_38, %c0_39], %22 {strides = array<i32>} : memref<18x48x96xbf16, #tpu.memory_space<vmem>>, vector<16x1x96xbf16>,
    %c0_40 = arith.constant 0 : index
    %c0_41 = arith.constant 0 : index
    %c0_42 = arith.constant 0 : index
    %c0_43 = arith.constant 0 : index
    %24 = vector.load %arg1[%c0_40, %c0_41, %c0_42, %c0_43] : memref<1x16x16x4xbf16, #tpu.memory_space<vmem>>, vector<1x16x16x4xbf16>
    %25 = vector.shape_cast %24 : vector<1x16x16x4xbf16> to vector<16x16x4xbf16>
    %26 = vector.shape_cast %25 : vector<16x16x4xbf16> to vector<256x4xbf16>
    %c0_44 = arith.constant 0 : index
    %c0_45 = arith.constant 0 : index
    %27 = vector.load %arg2[%c0_44, %c0_45] : memref<4x512xbf16, #tpu.memory_space<vmem>>, vector<4x512xbf16>
    %cst_46 = arith.constant dense<0.000000e+00> : vector<256x512xf32>
    %28 = tpu.matmul %26, %27, %cst_46 {dimension_numbers = #tpu.dot_dimension_numbers<[1], [0], [0], [1], [0, 0, 1, 1], [], []>} : vector<256x4xbf16>, vector<4x512xbf16>, vector<256x512xf32> -> vector<256x512xf32>
    %29 = vector.extract_strided_slice %28 {offsets = [0, 0], sizes = [256, 384], strides = [1, 1]} : vector<256x512xf32> to vector<256x384xf32>
    %c0_47 = arith.constant 0 : index
    %c0_48 = arith.constant 0 : index
    %30 = vector.load %arg3[%c0_47, %c0_48] : memref<1x384xf32, #tpu.memory_space<vmem>>, vector<1x384xf32>
    %31 = vector.broadcast %30 : vector<1x384xf32> to vector<256x384xf32>
    %32 = arith.addf %29, %31 : vector<256x384xf32>
    %cst_49 = arith.constant 0.000000e+00 : f32
    %33 = vector.broadcast %cst_49 : f32 to vector<256x384xf32>
    %34 = arith.maximumf %32, %33 : vector<256x384xf32>
    %35 = vector.extract_strided_slice %34 {offsets = [0, 0], sizes = [256, 96], strides = [1, 1]} : vector<256x384xf32> to vector<256x96xf32>
    %36 = vector.extract_strided_slice %34 {offsets = [0, 128], sizes = [256, 64], strides = [1, 1]} : vector<256x384xf32> to vector<256x64xf32>
    %37 = arith.truncf %36 : vector<256x64xf32> to vector<256x64xbf16>
    %38 = vector.shape_cast %37 : vector<256x64xbf16> to vector<16x16x64xbf16>
    %39 = vector.extract_strided_slice %34 {offsets = [0, 256], sizes = [256, 64], strides = [1, 1]} : vector<256x384xf32> to vector<256x64xf32>
    %40 = arith.truncf %39 : vector<256x64xf32> to vector<256x64xbf16>
    %41 = vector.shape_cast %40 : vector<256x64xbf16> to vector<16x16x64xbf16>
    %42 = vector.extract_strided_slice %28 {offsets = [0, 384], sizes = [256, 96], strides = [1, 1]} : vector<256x512xf32> to vector<256x96xf32>
    %43 = vector.shape_cast %42 : vector<256x96xf32> to vector<16x16x96xf32>
    %c1_50 = arith.constant 1 : index
    %c8 = arith.constant 8 : index
    %c0_51 = arith.constant 0 : index
    %44 = vector.load %arg12[%c1_50, %c8, %c0_51] : memref<18x32x96xf32, #tpu.memory_space<vmem>>, vector<16x16x96xf32>
    tpu.vector_store %arg12[%c1_50, %c8, %c0_51], %43 {strides = array<i32>} : memref<18x32x96xf32, #tpu.memory_space<vmem>>, vector<16x16x96xf32>,
    %c0_52 = arith.constant 0 : index
    %c7_53 = arith.constant 7 : index
    %c0_54 = arith.constant 0 : index
    %45 = vector.load %arg12[%c0_52, %c7_53, %c0_54] : memref<18x32x96xf32, #tpu.memory_space<vmem>>, vector<18x16x96xf32>
    %c0_55 = arith.constant 0 : index
    %c8_56 = arith.constant 8 : index
    %c0_57 = arith.constant 0 : index
    %46 = vector.load %arg12[%c0_55, %c8_56, %c0_57] : memref<18x32x96xf32, #tpu.memory_space<vmem>>, vector<18x16x96xf32>
    %47 = arith.addf %45, %46 : vector<18x16x96xf32>
    %c0_58 = arith.constant 0 : index
    %c9 = arith.constant 9 : index
    %c0_59 = arith.constant 0 : index
    %48 = vector.load %arg12[%c0_58, %c9, %c0_59] : memref<18x32x96xf32, #tpu.memory_space<vmem>>, vector<18x16x96xf32>
    %49 = arith.addf %47, %48 : vector<18x16x96xf32>
    %50 = vector.extract_strided_slice %49 {offsets = [0, 0, 0], sizes = [16, 16, 96], strides = [1, 1, 1]} : vector<18x16x96xf32> to vector<16x16x96xf32>
    %51 = vector.extract_strided_slice %49 {offsets = [1, 0, 0], sizes = [16, 16, 96], strides = [1, 1, 1]} : vector<18x16x96xf32> to vector<16x16x96xf32>
    %52 = arith.addf %50, %51 : vector<16x16x96xf32>
    %53 = vector.extract_strided_slice %49 {offsets = [2, 0, 0], sizes = [16, 16, 96], strides = [1, 1, 1]} : vector<18x16x96xf32> to vector<16x16x96xf32>
    %54 = arith.addf %52, %53 : vector<16x16x96xf32>
    %cst_60 = arith.constant 0.111111112 : f32
    %55 = vector.broadcast %cst_60 : f32 to vector<16x16x96xf32>
    %56 = arith.mulf %54, %55 : vector<16x16x96xf32>
    %57 = vector.shape_cast %56 : vector<16x16x96xf32> to vector<256x96xf32>
    %c0_61 = arith.constant 0 : index
    %c0_62 = arith.constant 0 : index
    %58 = vector.load %arg4[%c0_61, %c0_62] : memref<1x96xf32, #tpu.memory_space<vmem>>, vector<1x96xf32>
    %59 = vector.broadcast %58 : vector<1x96xf32> to vector<256x96xf32>
    %60 = arith.addf %57, %59 : vector<256x96xf32>
    %cst_63 = arith.constant 0.000000e+00 : f32
    %61 = vector.broadcast %cst_63 : f32 to vector<256x96xf32>
    %62 = arith.maximumf %60, %61 : vector<256x96xf32>
    %c1_64 = arith.constant 1 : index
    %c16 = arith.constant 16 : index
    %c0_65 = arith.constant 0 : index
    %63 = vector.load %arg13[%c1_64, %c16, %c0_65] : memref<18x48x64xbf16, #tpu.memory_space<vmem>>, vector<16x16x64xbf16>
    tpu.vector_store %arg13[%c1_64, %c16, %c0_65], %38 {strides = array<i32>} : memref<18x48x64xbf16, #tpu.memory_space<vmem>>, vector<16x16x64xbf16>,
    %c0_66 = arith.constant 0 : index
    %c0_67 = arith.constant 0 : index
    %64 = vector.load %arg6[%c0_66, %c0_67] : memref<1x96xf32, #tpu.memory_space<vmem>>, vector<1x96xf32>
    %c0_68 = arith.constant 0 : index
    %c15_69 = arith.constant 15 : index
    %c0_70 = arith.constant 0 : index
    %65 = vector.load %arg13[%c0_68, %c15_69, %c0_70] : memref<18x48x64xbf16, #tpu.memory_space<vmem>>, vector<18x16x64xbf16>
    %c0_71 = arith.constant 0 : index
    %c16_72 = arith.constant 16 : index
    %c0_73 = arith.constant 0 : index
    %66 = vector.load %arg13[%c0_71, %c16_72, %c0_73] : memref<18x48x64xbf16, #tpu.memory_space<vmem>>, vector<18x16x64xbf16>
    %c0_74 = arith.constant 0 : index
    %c17_75 = arith.constant 17 : index
    %c0_76 = arith.constant 0 : index
    %67 = vector.load %arg13[%c0_74, %c17_75, %c0_76] : memref<18x48x64xbf16, #tpu.memory_space<vmem>>, vector<18x16x64xbf16>
    %68 = tpu.concatenate %65, %66, %67 in 2 : vector<18x16x64xbf16>, vector<18x16x64xbf16>, vector<18x16x64xbf16> -> vector<18x16x192xbf16>
    %69 = vector.shape_cast %68 : vector<18x16x192xbf16> to vector<288x192xbf16>
    %70 = vector.extract_strided_slice %69 {offsets = [0, 0], sizes = [256, 192], strides = [1, 1]} : vector<288x192xbf16> to vector<256x192xbf16>
    %c0_77 = arith.constant 0 : index
    %c0_78 = arith.constant 0 : index
    %c0_79 = arith.constant 0 : index
    %71 = vector.load %arg5[%c0_77, %c0_78, %c0_79] : memref<3x192x96xbf16, #tpu.memory_space<vmem>>, vector<1x192x96xbf16>
    %72 = vector.shape_cast %71 : vector<1x192x96xbf16> to vector<192x96xbf16>
    %cst_80 = arith.constant dense<0.000000e+00> : vector<256x96xf32>
    %73 = tpu.matmul %70, %72, %cst_80 {dimension_numbers = #tpu.dot_dimension_numbers<[1], [0], [0], [1], [0, 0, 1, 1], [], []>} : vector<256x192xbf16>, vector<192x96xbf16>, vector<256x96xf32> -> vector<256x96xf32>
    %74 = vector.broadcast %64 : vector<1x96xf32> to vector<256x96xf32>
    %75 = arith.addf %73, %74 : vector<256x96xf32>
    %76 = vector.extract_strided_slice %69 {offsets = [16, 0], sizes = [256, 192], strides = [1, 1]} : vector<288x192xbf16> to vector<256x192xbf16>
    %c1_81 = arith.constant 1 : index
    %c0_82 = arith.constant 0 : index
    %c0_83 = arith.constant 0 : index
    %77 = vector.load %arg5[%c1_81, %c0_82, %c0_83] : memref<3x192x96xbf16, #tpu.memory_space<vmem>>, vector<1x192x96xbf16>
    %78 = vector.shape_cast %77 : vector<1x192x96xbf16> to vector<192x96xbf16>
    %cst_84 = arith.constant dense<0.000000e+00> : vector<256x96xf32>
    %79 = tpu.matmul %76, %78, %cst_84 {dimension_numbers = #tpu.dot_dimension_numbers<[1], [0], [0], [1], [0, 0, 1, 1], [], []>} : vector<256x192xbf16>, vector<192x96xbf16>, vector<256x96xf32> -> vector<256x96xf32>
    %80 = arith.addf %75, %79 : vector<256x96xf32>
    %81 = vector.extract_strided_slice %69 {offsets = [32, 0], sizes = [256, 192], strides = [1, 1]} : vector<288x192xbf16> to vector<256x192xbf16>
    %c2 = arith.constant 2 : index
    %c0_85 = arith.constant 0 : index
    %c0_86 = arith.constant 0 : index
    %82 = vector.load %arg5[%c2, %c0_85, %c0_86] : memref<3x192x96xbf16, #tpu.memory_space<vmem>>, vector<1x192x96xbf16>
    %83 = vector.shape_cast %82 : vector<1x192x96xbf16> to vector<192x96xbf16>
    %cst_87 = arith.constant dense<0.000000e+00> : vector<256x96xf32>
    %84 = tpu.matmul %81, %83, %cst_87 {dimension_numbers = #tpu.dot_dimension_numbers<[1], [0], [0], [1], [0, 0, 1, 1], [], []>} : vector<256x192xbf16>, vector<192x96xbf16>, vector<256x96xf32> -> vector<256x96xf32>
    %85 = arith.addf %80, %84 : vector<256x96xf32>
    %cst_88 = arith.constant 0.000000e+00 : f32
    %86 = vector.broadcast %cst_88 : f32 to vector<256x96xf32>
    %87 = arith.maximumf %85, %86 : vector<256x96xf32>
    %c1_89 = arith.constant 1 : index
    %c16_90 = arith.constant 16 : index
    %c0_91 = arith.constant 0 : index
    %88 = vector.load %arg13[%c1_89, %c16_90, %c0_91] : memref<18x48x64xbf16, #tpu.memory_space<vmem>>, vector<16x16x64xbf16>
    tpu.vector_store %arg13[%c1_89, %c16_90, %c0_91], %41 {strides = array<i32>} : memref<18x48x64xbf16, #tpu.memory_space<vmem>>, vector<16x16x64xbf16>,
    %c0_92 = arith.constant 0 : index
    %c0_93 = arith.constant 0 : index
    %89 = vector.load %arg8[%c0_92, %c0_93] : memref<1x96xf32, #tpu.memory_space<vmem>>, vector<1x96xf32>
    %c0_94 = arith.constant 0 : index
    %c15_95 = arith.constant 15 : index
    %c0_96 = arith.constant 0 : index
    %90 = vector.load %arg13[%c0_94, %c15_95, %c0_96] : memref<18x48x64xbf16, #tpu.memory_space<vmem>>, vector<18x16x64xbf16>
    %c0_97 = arith.constant 0 : index
    %c16_98 = arith.constant 16 : index
    %c0_99 = arith.constant 0 : index
    %91 = vector.load %arg13[%c0_97, %c16_98, %c0_99] : memref<18x48x64xbf16, #tpu.memory_space<vmem>>, vector<18x16x64xbf16>
    %c0_100 = arith.constant 0 : index
    %c17_101 = arith.constant 17 : index
    %c0_102 = arith.constant 0 : index
    %92 = vector.load %arg13[%c0_100, %c17_101, %c0_102] : memref<18x48x64xbf16, #tpu.memory_space<vmem>>, vector<18x16x64xbf16>
    %93 = tpu.concatenate %90, %91, %92 in 2 : vector<18x16x64xbf16>, vector<18x16x64xbf16>, vector<18x16x64xbf16> -> vector<18x16x192xbf16>
    %94 = vector.shape_cast %93 : vector<18x16x192xbf16> to vector<288x192xbf16>
    %95 = vector.extract_strided_slice %94 {offsets = [0, 0], sizes = [256, 192], strides = [1, 1]} : vector<288x192xbf16> to vector<256x192xbf16>
    %c0_103 = arith.constant 0 : index
    %c0_104 = arith.constant 0 : index
    %c0_105 = arith.constant 0 : index
    %96 = vector.load %arg7[%c0_103, %c0_104, %c0_105] : memref<3x192x96xbf16, #tpu.memory_space<vmem>>, vector<1x192x96xbf16>
    %97 = vector.shape_cast %96 : vector<1x192x96xbf16> to vector<192x96xbf16>
    %cst_106 = arith.constant dense<0.000000e+00> : vector<256x96xf32>
    %98 = tpu.matmul %95, %97, %cst_106 {dimension_numbers = #tpu.dot_dimension_numbers<[1], [0], [0], [1], [0, 0, 1, 1], [], []>} : vector<256x192xbf16>, vector<192x96xbf16>, vector<256x96xf32> -> vector<256x96xf32>
    %99 = vector.broadcast %89 : vector<1x96xf32> to vector<256x96xf32>
    %100 = arith.addf %98, %99 : vector<256x96xf32>
    %101 = vector.extract_strided_slice %94 {offsets = [16, 0], sizes = [256, 192], strides = [1, 1]} : vector<288x192xbf16> to vector<256x192xbf16>
    %c1_107 = arith.constant 1 : index
    %c0_108 = arith.constant 0 : index
    %c0_109 = arith.constant 0 : index
    %102 = vector.load %arg7[%c1_107, %c0_108, %c0_109] : memref<3x192x96xbf16, #tpu.memory_space<vmem>>, vector<1x192x96xbf16>
    %103 = vector.shape_cast %102 : vector<1x192x96xbf16> to vector<192x96xbf16>
    %cst_110 = arith.constant dense<0.000000e+00> : vector<256x96xf32>
    %104 = tpu.matmul %101, %103, %cst_110 {dimension_numbers = #tpu.dot_dimension_numbers<[1], [0], [0], [1], [0, 0, 1, 1], [], []>} : vector<256x192xbf16>, vector<192x96xbf16>, vector<256x96xf32> -> vector<256x96xf32>
    %105 = arith.addf %100, %104 : vector<256x96xf32>
    %106 = vector.extract_strided_slice %94 {offsets = [32, 0], sizes = [256, 192], strides = [1, 1]} : vector<288x192xbf16> to vector<256x192xbf16>
    %c2_111 = arith.constant 2 : index
    %c0_112 = arith.constant 0 : index
    %c0_113 = arith.constant 0 : index
    %107 = vector.load %arg7[%c2_111, %c0_112, %c0_113] : memref<3x192x96xbf16, #tpu.memory_space<vmem>>, vector<1x192x96xbf16>
    %108 = vector.shape_cast %107 : vector<1x192x96xbf16> to vector<192x96xbf16>
    %cst_114 = arith.constant dense<0.000000e+00> : vector<256x96xf32>
    %109 = tpu.matmul %106, %108, %cst_114 {dimension_numbers = #tpu.dot_dimension_numbers<[1], [0], [0], [1], [0, 0, 1, 1], [], []>} : vector<256x192xbf16>, vector<192x96xbf16>, vector<256x96xf32> -> vector<256x96xf32>
    %110 = arith.addf %105, %109 : vector<256x96xf32>
    %cst_115 = arith.constant 0.000000e+00 : f32
    %111 = vector.broadcast %cst_115 : f32 to vector<256x96xf32>
    %112 = arith.maximumf %110, %111 : vector<256x96xf32>
    %113 = arith.truncf %112 : vector<256x96xf32> to vector<256x96xbf16>
    %114 = vector.shape_cast %113 : vector<256x96xbf16> to vector<16x16x96xbf16>
    %c1_116 = arith.constant 1 : index
    %c16_117 = arith.constant 16 : index
    %c0_118 = arith.constant 0 : index
    %115 = vector.load %arg14[%c1_116, %c16_117, %c0_118] : memref<18x48x96xbf16, #tpu.memory_space<vmem>>, vector<16x16x96xbf16>
    tpu.vector_store %arg14[%c1_116, %c16_117, %c0_118], %114 {strides = array<i32>} : memref<18x48x96xbf16, #tpu.memory_space<vmem>>, vector<16x16x96xbf16>,
    %c0_119 = arith.constant 0 : index
    %c0_120 = arith.constant 0 : index
    %116 = vector.load %arg10[%c0_119, %c0_120] : memref<1x96xf32, #tpu.memory_space<vmem>>, vector<1x96xf32>
    %c0_121 = arith.constant 0 : index
    %c15_122 = arith.constant 15 : index
    %c0_123 = arith.constant 0 : index
    %117 = vector.load %arg14[%c0_121, %c15_122, %c0_123] : memref<18x48x96xbf16, #tpu.memory_space<vmem>>, vector<18x16x96xbf16>
    %c0_124 = arith.constant 0 : index
    %c16_125 = arith.constant 16 : index
    %c0_126 = arith.constant 0 : index
    %118 = vector.load %arg14[%c0_124, %c16_125, %c0_126] : memref<18x48x96xbf16, #tpu.memory_space<vmem>>, vector<18x16x96xbf16>
    %c0_127 = arith.constant 0 : index
    %c17_128 = arith.constant 17 : index
    %c0_129 = arith.constant 0 : index
    %119 = vector.load %arg14[%c0_127, %c17_128, %c0_129] : memref<18x48x96xbf16, #tpu.memory_space<vmem>>, vector<18x16x96xbf16>
    %120 = tpu.concatenate %117, %118, %119 in 2 : vector<18x16x96xbf16>, vector<18x16x96xbf16>, vector<18x16x96xbf16> -> vector<18x16x288xbf16>
    %121 = vector.shape_cast %120 : vector<18x16x288xbf16> to vector<288x288xbf16>
    %122 = vector.extract_strided_slice %121 {offsets = [0, 0], sizes = [256, 288], strides = [1, 1]} : vector<288x288xbf16> to vector<256x288xbf16>
    %c0_130 = arith.constant 0 : index
    %c0_131 = arith.constant 0 : index
    %c0_132 = arith.constant 0 : index
    %123 = vector.load %arg9[%c0_130, %c0_131, %c0_132] : memref<3x288x96xbf16, #tpu.memory_space<vmem>>, vector<1x288x96xbf16>
    %124 = vector.shape_cast %123 : vector<1x288x96xbf16> to vector<288x96xbf16>
    %cst_133 = arith.constant dense<0.000000e+00> : vector<256x96xf32>
    %125 = tpu.matmul %122, %124, %cst_133 {dimension_numbers = #tpu.dot_dimension_numbers<[1], [0], [0], [1], [0, 0, 1, 1], [], []>} : vector<256x288xbf16>, vector<288x96xbf16>, vector<256x96xf32> -> vector<256x96xf32>
    %126 = vector.broadcast %116 : vector<1x96xf32> to vector<256x96xf32>
    %127 = arith.addf %125, %126 : vector<256x96xf32>
    %128 = vector.extract_strided_slice %121 {offsets = [16, 0], sizes = [256, 288], strides = [1, 1]} : vector<288x288xbf16> to vector<256x288xbf16>
    %c1_134 = arith.constant 1 : index
    %c0_135 = arith.constant 0 : index
    %c0_136 = arith.constant 0 : index
    %129 = vector.load %arg9[%c1_134, %c0_135, %c0_136] : memref<3x288x96xbf16, #tpu.memory_space<vmem>>, vector<1x288x96xbf16>
    %130 = vector.shape_cast %129 : vector<1x288x96xbf16> to vector<288x96xbf16>
    %cst_137 = arith.constant dense<0.000000e+00> : vector<256x96xf32>
    %131 = tpu.matmul %128, %130, %cst_137 {dimension_numbers = #tpu.dot_dimension_numbers<[1], [0], [0], [1], [0, 0, 1, 1], [], []>} : vector<256x288xbf16>, vector<288x96xbf16>, vector<256x96xf32> -> vector<256x96xf32>
    %132 = arith.addf %127, %131 : vector<256x96xf32>
    %133 = vector.extract_strided_slice %121 {offsets = [32, 0], sizes = [256, 288], strides = [1, 1]} : vector<288x288xbf16> to vector<256x288xbf16>
    %c2_138 = arith.constant 2 : index
    %c0_139 = arith.constant 0 : index
    %c0_140 = arith.constant 0 : index
    %134 = vector.load %arg9[%c2_138, %c0_139, %c0_140] : memref<3x288x96xbf16, #tpu.memory_space<vmem>>, vector<1x288x96xbf16>
    %135 = vector.shape_cast %134 : vector<1x288x96xbf16> to vector<288x96xbf16>
    %cst_141 = arith.constant dense<0.000000e+00> : vector<256x96xf32>
    %136 = tpu.matmul %133, %135, %cst_141 {dimension_numbers = #tpu.dot_dimension_numbers<[1], [0], [0], [1], [0, 0, 1, 1], [], []>} : vector<256x288xbf16>, vector<288x96xbf16>, vector<256x96xf32> -> vector<256x96xf32>
    %137 = arith.addf %132, %136 : vector<256x96xf32>
    %cst_142 = arith.constant 0.000000e+00 : f32
    %138 = vector.broadcast %cst_142 : f32 to vector<256x96xf32>
    %139 = arith.maximumf %137, %138 : vector<256x96xf32>
    %140 = arith.truncf %62 : vector<256x96xf32> to vector<256x96xbf16>
    %141 = arith.truncf %35 : vector<256x96xf32> to vector<256x96xbf16>
    %142 = arith.truncf %87 : vector<256x96xf32> to vector<256x96xbf16>
    %143 = arith.truncf %139 : vector<256x96xf32> to vector<256x96xbf16>
    %144 = tpu.concatenate %140, %141, %142, %143 in 1 : vector<256x96xbf16>, vector<256x96xbf16>, vector<256x96xbf16>, vector<256x96xbf16> -> vector<256x384xbf16>
    %c0_143 = arith.constant 0 : index
    %c0_144 = arith.constant 0 : index
    %c0_145 = arith.constant 0 : index
    %145 = vector.load %arg11[%c0_143, %c0_144, %c0_145] : memref<1x256x384xbf16, #tpu.memory_space<vmem>>, vector<1x256x384xbf16>
    %146 = vector.shape_cast %145 : vector<1x256x384xbf16> to vector<256x384xbf16>
    %147 = vector.shape_cast %144 : vector<256x384xbf16> to vector<1x256x384xbf16>
    tpu.vector_store %arg11[%c0_143, %c0_144, %c0_145], %147 {strides = array<i32>} : memref<1x256x384xbf16, #tpu.memory_space<vmem>>, vector<1x256x384xbf16>,
    return
  }
  func.func @transform_0(%arg0: i32) -> (i32, i32, i32, i32) {
    %c0_i32 = arith.constant 0 : i32
    %c0_i32_0 = arith.constant 0 : i32
    %c0_i32_1 = arith.constant 0 : i32
    %c0_i32_2 = arith.constant 0 : i32
    return %arg0, %c0_i32, %c0_i32_0, %c0_i32_1 : i32, i32, i32, i32
  }
  func.func @transform_1(%arg0: i32) -> (i32, i32) {
    %c0_i32 = arith.constant 0 : i32
    %c0_i32_0 = arith.constant 0 : i32
    %c0_i32_1 = arith.constant 0 : i32
    return %c0_i32, %c0_i32_0 : i32, i32
  }
  func.func @transform_2(%arg0: i32) -> (i32, i32) {
    %c0_i32 = arith.constant 0 : i32
    %c0_i32_0 = arith.constant 0 : i32
    %c0_i32_1 = arith.constant 0 : i32
    return %c0_i32, %c0_i32_0 : i32, i32
  }
  func.func @transform_3(%arg0: i32) -> (i32, i32) {
    %c0_i32 = arith.constant 0 : i32
    %c0_i32_0 = arith.constant 0 : i32
    %c0_i32_1 = arith.constant 0 : i32
    return %c0_i32, %c0_i32_0 : i32, i32
  }
  func.func @transform_4(%arg0: i32) -> (i32, i32, i32) {
    %c0_i32 = arith.constant 0 : i32
    %c0_i32_0 = arith.constant 0 : i32
    %c0_i32_1 = arith.constant 0 : i32
    %c0_i32_2 = arith.constant 0 : i32
    return %c0_i32, %c0_i32_0, %c0_i32_1 : i32, i32, i32
  }
  func.func @transform_5(%arg0: i32) -> (i32, i32) {
    %c0_i32 = arith.constant 0 : i32
    %c0_i32_0 = arith.constant 0 : i32
    %c0_i32_1 = arith.constant 0 : i32
    return %c0_i32, %c0_i32_0 : i32, i32
  }
  func.func @transform_6(%arg0: i32) -> (i32, i32, i32) {
    %c0_i32 = arith.constant 0 : i32
    %c0_i32_0 = arith.constant 0 : i32
    %c0_i32_1 = arith.constant 0 : i32
    %c0_i32_2 = arith.constant 0 : i32
    return %c0_i32, %c0_i32_0, %c0_i32_1 : i32, i32, i32
  }
  func.func @transform_7(%arg0: i32) -> (i32, i32) {
    %c0_i32 = arith.constant 0 : i32
    %c0_i32_0 = arith.constant 0 : i32
    %c0_i32_1 = arith.constant 0 : i32
    return %c0_i32, %c0_i32_0 : i32, i32
  }
  func.func @transform_8(%arg0: i32) -> (i32, i32, i32) {
    %c0_i32 = arith.constant 0 : i32
    %c0_i32_0 = arith.constant 0 : i32
    %c0_i32_1 = arith.constant 0 : i32
    %c0_i32_2 = arith.constant 0 : i32
    return %c0_i32, %c0_i32_0, %c0_i32_1 : i32, i32, i32
  }
  func.func @transform_9(%arg0: i32) -> (i32, i32) {
    %c0_i32 = arith.constant 0 : i32
    %c0_i32_0 = arith.constant 0 : i32
    %c0_i32_1 = arith.constant 0 : i32
    return %c0_i32, %c0_i32_0 : i32, i32
  }
  func.func @transform_10(%arg0: i32) -> (i32, i32, i32) {
    %c0_i32 = arith.constant 0 : i32
    %c0_i32_0 = arith.constant 0 : i32
    %c0_i32_1 = arith.constant 0 : i32
    return %arg0, %c0_i32, %c0_i32_0 : i32, i32, i32
  }
}

</mosaic_0001>

<llo_original>
// kernel: inception_a_forward.1
$region0: #{inception_a_forward.1}
  #allocation0 [shape = 'u32[]', space=smem, size = 0x4, offset = 0x4, fixed_abs, tag = 'smem constant byte address 0x4 - core index']
  #allocation1 [shape = 'u32[144,128]{1,0:T(1,128)}', space=vmem, size = 0x12000, scoped, tag = 'internal scratch']
  #allocation2 [shape = 'f32[18,32,96]{2,1,0:T(8,128)}', space=vmem, size = 0x48000, scoped, tag = 'scratch operand']
  #allocation3 [shape = 'bf16[18,48,64]{2,1,0:T(8,128)(2,1)}', space=vmem, size = 0x36000, scoped, tag = 'scratch operand']
  #allocation4 [shape = 'bf16[18,48,96]{2,1,0:T(8,128)(2,1)}', space=vmem, size = 0x36000, scoped, tag = 'scratch operand']
  %s0 = inlined_call_operand.vmem [shape: bf16[2,16,16,4], index: 0, kind: input, shape index: {}]
  %s1 = inlined_call_operand.vmem [shape: bf16[4,512], index: 1, kind: input, shape index: {}]
  %s2 = inlined_call_operand.vmem [shape: f32[1,384], index: 2, kind: input, shape index: {}]
  %s3 = inlined_call_operand.vmem [shape: f32[1,96], index: 3, kind: input, shape index: {}]
  %s4 = inlined_call_operand.vmem [shape: bf16[3,192,96], index: 4, kind: input, shape index: {}]
  %s5 = inlined_call_operand.vmem [shape: f32[1,96], index: 5, kind: input, shape index: {}]
  %s6 = inlined_call_operand.vmem [shape: bf16[3,192,96], index: 6, kind: input, shape index: {}]
  %s7 = inlined_call_operand.vmem [shape: f32[1,96], index: 7, kind: input, shape index: {}]
  %s8 = inlined_call_operand.vmem [shape: bf16[3,288,96], index: 8, kind: input, shape index: {}]
  %s9 = inlined_call_operand.vmem [shape: f32[1,96], index: 9, kind: input, shape index: {}]
  %s10 = inlined_call_operand.hbm [shape: bf16[2,256,384], index: 10, kind: output, shape index: {}]
  %s11 = sld [smem:[#allocation0]]
  $region73: #{inception_a_forward.1} parent=0
    _
  %s13 = ssub.s32 1, %s11
  %s14 = scalar_select 0, %s13, %s11
  $region1: #{inception_a_forward.1} parent=0
    #allocation5 [shape = 'u8[393216]{0}', space=vmem, size = 0x60000, scoped, tag = 'output window, operand 0']
    #allocation6 [shape = 's32[2]{0}', space=sflag, size = 0x8, scoped, tag = 'scoped memory for inception_a_forward.1']
    %15 = vsyncpa [#allocation6], 0
    %s16 = scalar_lea.sflag [#allocation6], 1
    %17 = vsyncpa %s16, 0
    loop: start=0, step=1, limit=4
    $region2: #{inception_a_forward.1} parent=1 // loop_pre_header
      _
    $region3: #{inception_a_forward.1} parent=1 // loop_header
      %s19 = sphi 0, %s23
      %p20 = scmp.ge.s32.totalorder %s19, 4
      %s29 = sphi 0, %s31
      %s32 = sphi 0, %s29
      %s33 = sphi 0, %s32
      %s49 = sphi 0, %s33
      %s53 = sphi 0, %s53
      %s55 = sphi 0, %s53
      %s56 = sphi 0, %s55
      %s70 = sphi 0, %s56
      %s74 = sphi 0, %s74
      %s76 = sphi 0, %s74
      %s77 = sphi 0, %s76
      %s91 = sphi 0, %s77
      %s95 = sphi 0, %s95
      %s97 = sphi 0, %s95
      %s98 = sphi 0, %s97
      %s112 = sphi 0, %s98
      %s116 = sphi 0, %s116
      %s118 = sphi 0, %s116
      %s119 = sphi 0, %s118
      %s133 = sphi 0, %s119
      %s137 = sphi 0, %s137
      %s139 = sphi 0, %s137
      %s140 = sphi 0, %s139
      %s154 = sphi 0, %s140
      %s158 = sphi 0, %s158
      %s160 = sphi 0, %s158
      %s161 = sphi 0, %s160
      %s175 = sphi 0, %s161
      %s179 = sphi 0, %s179
      %s181 = sphi 0, %s179
      %s182 = sphi 0, %s181
      %s196 = sphi 0, %s182
      %s200 = sphi 0, %s200
      %s202 = sphi 0, %s200
      %s203 = sphi 0, %s202
      %s217 = sphi 0, %s203
      %s221 = sphi 0, %s221
      %s223 = sphi 0, %s221
      %s224 = sphi 0, %s223
      %s238 = sphi 0, %s224
      %s244 = sphi 0, %s246
      %s247 = sphi 0, %s244
      %s248 = sphi 0, %s247
      %s264 = sphi 0, %s248
    $region4: #{inception_a_forward.1} parent=1 // loop_header_branch
      %22 = sbr.rel (%p20) target = $region8
    $region5: #{inception_a_forward.1} parent=1 // loop_body
      %s24 = ssub.s32 %s19, 1
      %s25 = ssub.s32 %s19, 2
      %s26 = sadd.s32 %s19, 1
      %s27 = ssub.s32 %s19, %s26
      %p28 = scmp.eq.s32.totalorder %s27, 0
      %s30 = sadd.s32 %s29, 1
      %s31 = scalar_select %p28, %s29, %s30
      %p34 = pneg %p28
      %p35 = scmp.eq.s32.totalorder %s19, 1
      %p36 = por %p34, %p35
      %p37 = scmp.ne.s32.totalorder %s29, %s32
      %p38 = scmp.eq.s32.totalorder %s19, 0
      %p39 = por %p37, %p38
      %p40 = scmp.ne.s32.totalorder %s29, %s32
      %p41 = scmp.eq.s32.totalorder %s24, 1
      %p42 = por %p40, %p41
      %p43 = scmp.ne.s32.totalorder %s32, %s33
      %p44 = scmp.eq.s32.totalorder %s24, 0
      %p45 = por %p43, %p44
      %p46 = scmp.ne.s32.totalorder %s32, %s33
      %p47 = scmp.eq.s32.totalorder %s25, 1
      %p48 = por %p46, %p47
      %p50 = scmp.ne.s32.totalorder %s33, %s49
      %p51 = scmp.eq.s32.totalorder %s25, 0
      %p52 = por %p50, %p51
      %s54 = sadd.s32 %s53, 1
      %p57 = scmp.eq.s32.totalorder %s19, 1
      %p58 = scmp.ne.s32.totalorder %s53, %s55
      %p59 = scmp.eq.s32.totalorder %s19, 0
      %p60 = por %p58, %p59
      %p61 = scmp.ne.s32.totalorder %s53, %s55
      %p62 = scmp.eq.s32.totalorder %s24, 1
      %p63 = por %p61, %p62
      %p64 = scmp.ne.s32.totalorder %s55, %s56
      %p65 = scmp.eq.s32.totalorder %s24, 0
      %p66 = por %p64, %p65
      %p67 = scmp.ne.s32.totalorder %s55, %s56
      %p68 = scmp.eq.s32.totalorder %s25, 1
      %p69 = por %p67, %p68
      %p71 = scmp.ne.s32.totalorder %s56, %s70
      %p72 = scmp.eq.s32.totalorder %s25, 0
      %p73 = por %p71, %p72
      %s75 = sadd.s32 %s74, 1
      %p78 = scmp.eq.s32.totalorder %s19, 1
      %p79 = scmp.ne.s32.totalorder %s74, %s76
      %p80 = scmp.eq.s32.totalorder %s19, 0
      %p81 = por %p79, %p80
      %p82 = scmp.ne.s32.totalorder %s74, %s76
      %p83 = scmp.eq.s32.totalorder %s24, 1
      %p84 = por %p82, %p83
      %p85 = scmp.ne.s32.totalorder %s76, %s77
      %p86 = scmp.eq.s32.totalorder %s24, 0
      %p87 = por %p85, %p86
      %p88 = scmp.ne.s32.totalorder %s76, %s77
      %p89 = scmp.eq.s32.totalorder %s25, 1
      %p90 = por %p88, %p89
      %p92 = scmp.ne.s32.totalorder %s77, %s91
      %p93 = scmp.eq.s32.totalorder %s25, 0
      %p94 = por %p92, %p93
      %s96 = sadd.s32 %s95, 1
      %p99 = scmp.eq.s32.totalorder %s19, 1
      %p100 = scmp.ne.s32.totalorder %s95, %s97
      %p101 = scmp.eq.s32.totalorder %s19, 0
      %p102 = por %p100, %p101
      %p103 = scmp.ne.s32.totalorder %s95, %s97
      %p104 = scmp.eq.s32.totalorder %s24, 1
      %p105 = por %p103, %p104
      %p106 = scmp.ne.s32.totalorder %s97, %s98
      %p107 = scmp.eq.s32.totalorder %s24, 0
      %p108 = por %p106, %p107
      %p109 = scmp.ne.s32.totalorder %s97, %s98
      %p110 = scmp.eq.s32.totalorder %s25, 1
      %p111 = por %p109, %p110
      %p113 = scmp.ne.s32.totalorder %s98, %s112
      %p114 = scmp.eq.s32.totalorder %s25, 0
      %p115 = por %p113, %p114
      %s117 = sadd.s32 %s116, 1
      %p120 = scmp.eq.s32.totalorder %s19, 1
      %p121 = scmp.ne.s32.totalorder %s116, %s118
      %p122 = scmp.eq.s32.totalorder %s19, 0
      %p123 = por %p121, %p122
      %p124 = scmp.ne.s32.totalorder %s116, %s118
      %p125 = scmp.eq.s32.totalorder %s24, 1
      %p126 = por %p124, %p125
      %p127 = scmp.ne.s32.totalorder %s118, %s119
      %p128 = scmp.eq.s32.totalorder %s24, 0
      %p129 = por %p127, %p128
      %p130 = scmp.ne.s32.totalorder %s118, %s119
      %p131 = scmp.eq.s32.totalorder %s25, 1
      %p132 = por %p130, %p131
      %p134 = scmp.ne.s32.totalorder %s119, %s133
      %p135 = scmp.eq.s32.totalorder %s25, 0
      %p136 = por %p134, %p135
      %s138 = sadd.s32 %s137, 1
      %p141 = scmp.eq.s32.totalorder %s19, 1
      %p142 = scmp.ne.s32.totalorder %s137, %s139
      %p143 = scmp.eq.s32.totalorder %s19, 0
      %p144 = por %p142, %p143
      %p145 = scmp.ne.s32.totalorder %s137, %s139
      %p146 = scmp.eq.s32.totalorder %s24, 1
      %p147 = por %p145, %p146
      %p148 = scmp.ne.s32.totalorder %s139, %s140
      %p149 = scmp.eq.s32.totalorder %s24, 0
      %p150 = por %p148, %p149
      %p151 = scmp.ne.s32.totalorder %s139, %s140
      %p152 = scmp.eq.s32.totalorder %s25, 1
      %p153 = por %p151, %p152
      %p155 = scmp.ne.s32.totalorder %s140, %s154
      %p156 = scmp.eq.s32.totalorder %s25, 0
      %p157 = por %p155, %p156
      %s159 = sadd.s32 %s158, 1
      %p162 = scmp.eq.s32.totalorder %s19, 1
      %p163 = scmp.ne.s32.totalorder %s158, %s160
      %p164 = scmp.eq.s32.totalorder %s19, 0
      %p165 = por %p163, %p164
      %p166 = scmp.ne.s32.totalorder %s158, %s160
      %p167 = scmp.eq.s32.totalorder %s24, 1
      %p168 = por %p166, %p167
      %p169 = scmp.ne.s32.totalorder %s160, %s161
      %p170 = scmp.eq.s32.totalorder %s24, 0
      %p171 = por %p169, %p170
      %p172 = scmp.ne.s32.totalorder %s160, %s161
      %p173 = scmp.eq.s32.totalorder %s25, 1
      %p174 = por %p172, %p173
      %p176 = scmp.ne.s32.totalorder %s161, %s175
      %p177 = scmp.eq.s32.totalorder %s25, 0
      %p178 = por %p176, %p177
      %s180 = sadd.s32 %s179, 1
      %p183 = scmp.eq.s32.totalorder %s19, 1
      %p184 = scmp.ne.s32.totalorder %s179, %s181
      %p185 = scmp.eq.s32.totalorder %s19, 0
      %p186 = por %p184, %p185
      %p187 = scmp.ne.s32.totalorder %s179, %s181
      %p188 = scmp.eq.s32.totalorder %s24, 1
      %p189 = por %p187, %p188
      %p190 = scmp.ne.s32.totalorder %s181, %s182
      %p191 = scmp.eq.s32.totalorder %s24, 0
      %p192 = por %p190, %p191
      %p193 = scmp.ne.s32.totalorder %s181, %s182
      %p194 = scmp.eq.s32.totalorder %s25, 1
      %p195 = por %p193, %p194
      %p197 = scmp.ne.s32.totalorder %s182, %s196
      %p198 = scmp.eq.s32.totalorder %s25, 0
      %p199 = por %p197, %p198
      %s201 = sadd.s32 %s200, 1
      %p204 = scmp.eq.s32.totalorder %s19, 1
      %p205 = scmp.ne.s32.totalorder %s200, %s202
      %p206 = scmp.eq.s32.totalorder %s19, 0
      %p207 = por %p205, %p206
      %p208 = scmp.ne.s32.totalorder %s200, %s202
      %p209 = scmp.eq.s32.totalorder %s24, 1
      %p210 = por %p208, %p209
      %p211 = scmp.ne.s32.totalorder %s202, %s203
      %p212 = scmp.eq.s32.totalorder %s24, 0
      %p213 = por %p211, %p212
      %p214 = scmp.ne.s32.totalorder %s202, %s203
      %p215 = scmp.eq.s32.totalorder %s25, 1
      %p216 = por %p214, %p215
      %p218 = scmp.ne.s32.totalorder %s203, %s217
      %p219 = scmp.eq.s32.totalorder %s25, 0
      %p220 = por %p218, %p219
      %s222 = sadd.s32 %s221, 1
      %p225 = scmp.eq.s32.totalorder %s19, 1
      %p226 = scmp.ne.s32.totalorder %s221, %s223
      %p227 = scmp.eq.s32.totalorder %s19, 0
      %p228 = por %p226, %p227
      %p229 = scmp.ne.s32.totalorder %s221, %s223
      %p230 = scmp.eq.s32.totalorder %s24, 1
      %p231 = por %p229, %p230
      %p232 = scmp.ne.s32.totalorder %s223, %s224
      %p233 = scmp.eq.s32.totalorder %s24, 0
      %p234 = por %p232, %p233
      %p235 = scmp.ne.s32.totalorder %s223, %s224
      %p236 = scmp.eq.s32.totalorder %s25, 1
      %p237 = por %p235, %p236
      %p239 = scmp.ne.s32.totalorder %s224, %s238
      %p240 = scmp.eq.s32.totalorder %s25, 0
      %p241 = por %p239, %p240
      %s242 = ssub.s32 %s19, %s26
      %p243 = scmp.eq.s32.totalorder %s242, 0
      %s245 = sadd.s32 %s244, 1
      %s246 = scalar_select %p243, %s244, %s245
      %p249 = pneg %p243
      %p250 = scmp.eq.s32.totalorder %s19, 1
      %p251 = por %p249, %p250
      %p252 = scmp.ne.s32.totalorder %s244, %s247
      %p253 = scmp.eq.s32.totalorder %s19, 0
      %p254 = por %p252, %p253
      %p255 = scmp.ne.s32.totalorder %s244, %s247
      %p256 = scmp.eq.s32.totalorder %s24, 1
      %p257 = por %p255, %p256
      %p258 = scmp.ne.s32.totalorder %s247, %s248
      %p259 = scmp.eq.s32.totalorder %s24, 0
      %p260 = por %p258, %p259
      %p261 = scmp.ne.s32.totalorder %s247, %s248
      %p262 = scmp.eq.s32.totalorder %s25, 1
      %p263 = por %p261, %p262
      %p265 = scmp.ne.s32.totalorder %s248, %s264
      %p266 = scmp.eq.s32.totalorder %s25, 0
      %p267 = por %p265, %p266
      %p268 = scmp.le.s32.totalorder 1, %s19
      %p269 = scmp.lt.s32.totalorder %s19, 3
      %p270 = pnand %p268, %p269
      %p271 = pneg %p270
      // Predicated region
      $region9: #{inception_a_forward.1} parent=5 // pred_check
        _
      $region10: #{inception_a_forward.1} parent=5 // pred_check_branch
        %273 = sbr.rel (%p270) target = $region12
      $region11: #{inception_a_forward.1} parent=5 // pred_region
        %s274 = ssub.s32 %s19, 1
        // Predicated region
        $region13: #{inception_a_forward.1} parent=11 // pred_check
          %p275 = pneg %p66
        $region14: #{inception_a_forward.1} parent=11 // pred_check_branch
          %277 = sbr.rel (%p275) target = $region16
        $region15: #{inception_a_forward.1} parent=11 // pred_region
          _
        $region16: #{inception_a_forward.1} parent=11 // pred_fallthru
          _
        // Predicated region
        $region17: #{inception_a_forward.1} parent=11 // pred_check
          %p278 = pneg %p87
        $region18: #{inception_a_forward.1} parent=11 // pred_check_branch
          %280 = sbr.rel (%p278) target = $region20
        $region19: #{inception_a_forward.1} parent=11 // pred_region
          _
        $region20: #{inception_a_forward.1} parent=11 // pred_fallthru
          _
        // Predicated region
        $region21: #{inception_a_forward.1} parent=11 // pred_check
          %p281 = pneg %p108
        $region22: #{inception_a_forward.1} parent=11 // pred_check_branch
          %283 = sbr.rel (%p281) target = $region24
        $region23: #{inception_a_forward.1} parent=11 // pred_region
          _
        $region24: #{inception_a_forward.1} parent=11 // pred_fallthru
          _
        // Predicated region
        $region25: #{inception_a_forward.1} parent=11 // pred_check
          %p284 = pneg %p129
        $region26: #{inception_a_forward.1} parent=11 // pred_check_branch
          %286 = sbr.rel (%p284) target = $region28
        $region27: #{inception_a_forward.1} parent=11 // pred_region
          _
        $region28: #{inception_a_forward.1} parent=11 // pred_fallthru
          _
        // Predicated region
        $region29: #{inception_a_forward.1} parent=11 // pred_check
          %p287 = pneg %p150
        $region30: #{inception_a_forward.1} parent=11 // pred_check_branch
          %289 = sbr.rel (%p287) target = $region32
        $region31: #{inception_a_forward.1} parent=11 // pred_region
          _
        $region32: #{inception_a_forward.1} parent=11 // pred_fallthru
          _
        // Predicated region
        $region33: #{inception_a_forward.1} parent=11 // pred_check
          %p290 = pneg %p171
        $region34: #{inception_a_forward.1} parent=11 // pred_check_branch
          %292 = sbr.rel (%p290) target = $region36
        $region35: #{inception_a_forward.1} parent=11 // pred_region
          _
        $region36: #{inception_a_forward.1} parent=11 // pred_fallthru
          _
        // Predicated region
        $region37: #{inception_a_forward.1} parent=11 // pred_check
          %p293 = pneg %p192
        $region38: #{inception_a_forward.1} parent=11 // pred_check_branch
          %295 = sbr.rel (%p293) target = $region40
        $region39: #{inception_a_forward.1} parent=11 // pred_region
          _
        $region40: #{inception_a_forward.1} parent=11 // pred_fallthru
          _
        // Predicated region
        $region41: #{inception_a_forward.1} parent=11 // pred_check
          %p296 = pneg %p213
        $region42: #{inception_a_forward.1} parent=11 // pred_check_branch
          %298 = sbr.rel (%p296) target = $region44
        $region43: #{inception_a_forward.1} parent=11 // pred_region
          _
        $region44: #{inception_a_forward.1} parent=11 // pred_fallthru
          _
        // Predicated region
        $region45: #{inception_a_forward.1} parent=11 // pred_check
          %p299 = pneg %p234
        $region46: #{inception_a_forward.1} parent=11 // pred_check_branch
          %301 = sbr.rel (%p299) target = $region48
        $region47: #{inception_a_forward.1} parent=11 // pred_region
          _
        $region48: #{inception_a_forward.1} parent=11 // pred_fallthru
          _
      $region12: #{inception_a_forward.1} parent=5 // pred_fallthru
        _
      %p302 = scmp.lt.s32.totalorder %s19, 2
      // Predicated region
      $region49: #{inception_a_forward.1} parent=5 // pred_check
        %p303 = pneg %p302
      $region50: #{inception_a_forward.1} parent=5 // pred_check_branch
        %305 = sbr.rel (%p303) target = $region52
      $region51: #{inception_a_forward.1} parent=5 // pred_region
        // Predicated region
        $region53: #{inception_a_forward.1} parent=51 // pred_check
          %p306 = pneg %p39
        $region54: #{inception_a_forward.1} parent=51 // pred_check_branch
          %308 = sbr.rel (%p306) target = $region56
        $region55: #{inception_a_forward.1} parent=51 // pred_region
          %p309 = scmp.lt.s32.totalorder %s19, 1
          %s310 = scalar_select %p309, %s19, 1
          %s311 = smul.addr %s310, 32
          %s312 = smul.addr %s311, 4
          %s313 = scalar_lea.vmem %s0, %s312
        $region56: #{inception_a_forward.1} parent=51 // pred_fallthru
          _
      $region52: #{inception_a_forward.1} parent=5 // pred_fallthru
        _
      %p314 = scmp.le.s32.totalorder 1, %s19
      %p315 = scmp.lt.s32.totalorder %s19, 3
      %p316 = pnand %p314, %p315
      %p317 = pneg %p316
      // Predicated region
      $region57: #{inception_a_forward.1} parent=5 // pred_check
        _
      $region58: #{inception_a_forward.1} parent=5 // pred_check_branch
        %319 = sbr.rel (%p316) target = $region60
      $region59: #{inception_a_forward.1} parent=5 // pred_region
        %s320 = ssub.s32 %s19, 1
        %p321 = scmp.lt.s32.totalorder %s24, 1
        %s322 = scalar_select %p321, %s24, 1
        %s323 = smul.addr %s322, 32
        %s324 = smul.addr %s323, 4
        %s325 = scalar_lea.vmem %s0, %s324
        %p326 = pneg %p45
        %p327 = pneg %p42
        %p328 = pneg %p66
        %p329 = pneg %p63
        %p330 = pneg %p87
        %p331 = pneg %p84
        %p332 = pneg %p108
        %p333 = pneg %p105
        %p334 = pneg %p129
        %p335 = pneg %p126
        %p336 = pneg %p150
        %p337 = pneg %p147
        %p338 = pneg %p171
        %p339 = pneg %p168
        %p340 = pneg %p192
        %p341 = pneg %p189
        %p342 = pneg %p213
        %p343 = pneg %p210
        %p344 = pneg %p234
        %p345 = pneg %p231
        %p346 = pneg %p260
        %p347 = pneg %p257
        %s348 = sand.u32 %s247, 1
        %s349 = scalar_lea.sflag [#allocation6], %s348
        %s350 = sand.u32 %s247, 1
        %s351 = smul.addr %s350, 384
        %s352 = scalar_lea.vmem [#allocation5], %s351
        %p353 = scmp.lt.s32.totalorder %s24, 1
        %s354 = scalar_select %p353, %s24, 1
        %s355 = smul.addr %s354, 32
        %s356 = smul.addr %s355, 4
        %s357 = scalar_lea.vmem %s0, %s356
        %vm359 = vcmask 785408
        %360 = vst.msk [vmem:[#allocation2 + $0x7] sm:$0xff] %vm359, 0.0
        %361 = vst.msk [vmem:[#allocation2 + $0xf] sm:$0xff] %vm359, 0.0
        %vm362 = vcmask 779264
        %363 = vst.msk [vmem:[#allocation2 + $0x17] sm:$0x3] %vm362, 0.0
        %s364 = scalar_lea.vmem [#allocation2], 544
        %365 = vst.msk [vmem:[%s364 + $0x7] sm:$0xff] %vm359, 0.0
        %366 = vst.msk [vmem:[%s364 + $0xf] sm:$0xff] %vm359, 0.0
        %367 = vst.msk [vmem:[%s364 + $0x17] sm:$0x3] %vm362, 0.0
        %s368 = scalar_lea.vmem [#allocation2], 32
        %vm369 = vcmask 778240
        %370 = vst.msk [vmem:[%s368 + $0x7] sm:$0x1] %vm369, 0.0
        %371 = vst.msk [vmem:[%s368 + $0x27] sm:$0x1] %vm369, 0.0
        %372 = vst.msk [vmem:[%s368 + $0x47] sm:$0x1] %vm369, 0.0
        %373 = vst.msk [vmem:[%s368 + $0x67] sm:$0x1] %vm369, 0.0
        %374 = vst.msk [vmem:[%s368 + $0x87] sm:$0x1] %vm369, 0.0
        %375 = vst.msk [vmem:[%s368 + $0xa7] sm:$0x1] %vm369, 0.0
        %376 = vst.msk [vmem:[%s368 + $0xc7] sm:$0x1] %vm369, 0.0
        %377 = vst.msk [vmem:[%s368 + $0xe7] sm:$0x1] %vm369, 0.0
        %378 = vst.msk [vmem:[%s368 + $0x107] sm:$0x1] %vm369, 0.0
        %379 = vst.msk [vmem:[%s368 + $0x127] sm:$0x1] %vm369, 0.0
        %380 = vst.msk [vmem:[%s368 + $0x147] sm:$0x1] %vm369, 0.0
        %381 = vst.msk [vmem:[%s368 + $0x167] sm:$0x1] %vm369, 0.0
        %382 = vst.msk [vmem:[%s368 + $0x187] sm:$0x1] %vm369, 0.0
        %383 = vst.msk [vmem:[%s368 + $0x1a7] sm:$0x1] %vm369, 0.0
        %384 = vst.msk [vmem:[%s368 + $0x1c7] sm:$0x1] %vm369, 0.0
        %385 = vst.msk [vmem:[%s368 + $0x1e7] sm:$0x1] %vm369, 0.0
        %386 = vst.msk [vmem:[%s368 + $0x18] sm:$0x1] %vm369, 0.0
        %387 = vst.msk [vmem:[%s368 + $0x38] sm:$0x1] %vm369, 0.0
        %388 = vst.msk [vmem:[%s368 + $0x58] sm:$0x1] %vm369, 0.0
        %389 = vst.msk [vmem:[%s368 + $0x78] sm:$0x1] %vm369, 0.0
        %390 = vst.msk [vmem:[%s368 + $0x98] sm:$0x1] %vm369, 0.0
        %391 = vst.msk [vmem:[%s368 + $0xb8] sm:$0x1] %vm369, 0.0
        %392 = vst.msk [vmem:[%s368 + $0xd8] sm:$0x1] %vm369, 0.0
        %393 = vst.msk [vmem:[%s368 + $0xf8] sm:$0x1] %vm369, 0.0
        %394 = vst.msk [vmem:[%s368 + $0x118] sm:$0x1] %vm369, 0.0
        %395 = vst.msk [vmem:[%s368 + $0x138] sm:$0x1] %vm369, 0.0
        %396 = vst.msk [vmem:[%s368 + $0x158] sm:$0x1] %vm369, 0.0
        %397 = vst.msk [vmem:[%s368 + $0x178] sm:$0x1] %vm369, 0.0
        %398 = vst.msk [vmem:[%s368 + $0x198] sm:$0x1] %vm369, 0.0
        %399 = vst.msk [vmem:[%s368 + $0x1b8] sm:$0x1] %vm369, 0.0
        %400 = vst.msk [vmem:[%s368 + $0x1d8] sm:$0x1] %vm369, 0.0
        %401 = vst.msk [vmem:[%s368 + $0x1f8] sm:$0x1] %vm369, 0.0
        %vm402 = vcmask 519171
        %vm403 = vsmask.f32 7950
        %vm404 = vmand %vm402, %vm403
        %v405 = vld [vmem:[#allocation3 + $0x4] sm:$0x8]
        %v406 = vsel %vm404, 0, %v405
        %407 = vst [vmem:[#allocation3 + $0x4] sm:$0x8] %v406
        %vm408 = vcmask 519168
        %409 = vst.msk [vmem:[#allocation3 + $0x8] sm:$0xf] %vm408, 0
        %410 = vst.msk [vmem:[#allocation3 + $0xc] sm:$0xf] %vm408, 0
        %vm411 = vcmask 516096
        %vm412 = vsmask.f32 256
        %vm413 = vmand %vm411, %vm412
        %v414 = vld [vmem:[#allocation3 + $0x10] sm:$0x1]
        %v415 = vsel %vm413, 0, %v414
        %416 = vst [vmem:[#allocation3 + $0x10] sm:$0x1] %v415
        %s417 = scalar_lea.vmem [#allocation3], 408
        %v418 = vld [vmem:[%s417 + $0x4] sm:$0x8]
        %v419 = vsel %vm404, 0, %v418
        %420 = vst [vmem:[%s417 + $0x4] sm:$0x8] %v419
        %421 = vst.msk [vmem:[%s417 + $0x8] sm:$0xf] %vm408, 0
        %422 = vst.msk [vmem:[%s417 + $0xc] sm:$0xf] %vm408, 0
        %v423 = vld [vmem:[%s417 + $0x10] sm:$0x1]
        %v424 = vsel %vm413, 0, %v423
        %425 = vst [vmem:[%s417 + $0x10] sm:$0x1] %v424
        %s426 = scalar_lea.vmem [#allocation3], 24
        %v427 = vld [vmem:[%s426 + $0x4] sm:$0x8]
        %v428 = vsel %vm404, 0, %v427
        %429 = vst [vmem:[%s426 + $0x4] sm:$0x8] %v428
        %v430 = vld [vmem:[%s426 + $0x1c] sm:$0x8]
        %v431 = vsel %vm404, 0, %v430
        %432 = vst [vmem:[%s426 + $0x1c] sm:$0x8] %v431
        %v433 = vld [vmem:[%s426 + $0x34] sm:$0x8]
        %v434 = vsel %vm404, 0, %v433
        %435 = vst [vmem:[%s426 + $0x34] sm:$0x8] %v434
        %v436 = vld [vmem:[%s426 + $0x4c] sm:$0x8]
        %v437 = vsel %vm404, 0, %v436
        %438 = vst [vmem:[%s426 + $0x4c] sm:$0x8] %v437
        %v439 = vld [vmem:[%s426 + $0x64] sm:$0x8]
        %v440 = vsel %vm404, 0, %v439
        %441 = vst [vmem:[%s426 + $0x64] sm:$0x8] %v440
        %v442 = vld [vmem:[%s426 + $0x7c] sm:$0x8]
        %v443 = vsel %vm404, 0, %v442
        %444 = vst [vmem:[%s426 + $0x7c] sm:$0x8] %v443
        %v445 = vld [vmem:[%s426 + $0x94] sm:$0x8]
        %v446 = vsel %vm404, 0, %v445
        %447 = vst [vmem:[%s426 + $0x94] sm:$0x8] %v446
        %v448 = vld [vmem:[%s426 + $0xac] sm:$0x8]
        %v449 = vsel %vm404, 0, %v448
        %450 = vst [vmem:[%s426 + $0xac] sm:$0x8] %v449
        %v451 = vld [vmem:[%s426 + $0xc4] sm:$0x8]
        %v452 = vsel %vm404, 0, %v451
        %453 = vst [vmem:[%s426 + $0xc4] sm:$0x8] %v452
        %v454 = vld [vmem:[%s426 + $0xdc] sm:$0x8]
        %v455 = vsel %vm404, 0, %v454
        %456 = vst [vmem:[%s426 + $0xdc] sm:$0x8] %v455
        %v457 = vld [vmem:[%s426 + $0xf4] sm:$0x8]
        %v458 = vsel %vm404, 0, %v457
        %459 = vst [vmem:[%s426 + $0xf4] sm:$0x8] %v458
        %v460 = vld [vmem:[%s426 + $0x10c] sm:$0x8]
        %v461 = vsel %vm404, 0, %v460
        %462 = vst [vmem:[%s426 + $0x10c] sm:$0x8] %v461
        %v463 = vld [vmem:[%s426 + $0x124] sm:$0x8]
        %v464 = vsel %vm404, 0, %v463
        %465 = vst [vmem:[%s426 + $0x124] sm:$0x8] %v464
        %v466 = vld [vmem:[%s426 + $0x13c] sm:$0x8]
        %v467 = vsel %vm404, 0, %v466
        %468 = vst [vmem:[%s426 + $0x13c] sm:$0x8] %v467
        %v469 = vld [vmem:[%s426 + $0x154] sm:$0x8]
        %v470 = vsel %vm404, 0, %v469
        %471 = vst [vmem:[%s426 + $0x154] sm:$0x8] %v470
        %v472 = vld [vmem:[%s426 + $0x16c] sm:$0x8]
        %v473 = vsel %vm404, 0, %v472
        %474 = vst [vmem:[%s426 + $0x16c] sm:$0x8] %v473
        %v475 = vld [vmem:[%s426 + $0x10] sm:$0x1]
        %v476 = vsel %vm413, 0, %v475
        %477 = vst [vmem:[%s426 + $0x10] sm:$0x1] %v476
        %v478 = vld [vmem:[%s426 + $0x28] sm:$0x1]
        %v479 = vsel %vm413, 0, %v478
        %480 = vst [vmem:[%s426 + $0x28] sm:$0x1] %v479
        %v481 = vld [vmem:[%s426 + $0x40] sm:$0x1]
        %v482 = vsel %vm413, 0, %v481
        %483 = vst [vmem:[%s426 + $0x40] sm:$0x1] %v482
        %v484 = vld [vmem:[%s426 + $0x58] sm:$0x1]
        %v485 = vsel %vm413, 0, %v484
        %486 = vst [vmem:[%s426 + $0x58] sm:$0x1] %v485
        %v487 = vld [vmem:[%s426 + $0x70] sm:$0x1]
        %v488 = vsel %vm413, 0, %v487
        %489 = vst [vmem:[%s426 + $0x70] sm:$0x1] %v488
        %v490 = vld [vmem:[%s426 + $0x88] sm:$0x1]
        %v491 = vsel %vm413, 0, %v490
        %492 = vst [vmem:[%s426 + $0x88] sm:$0x1] %v491
        %v493 = vld [vmem:[%s426 + $0xa0] sm:$0x1]
        %v494 = vsel %vm413, 0, %v493
        %495 = vst [vmem:[%s426 + $0xa0] sm:$0x1] %v494
        %v496 = vld [vmem:[%s426 + $0xb8] sm:$0x1]
        %v497 = vsel %vm413, 0, %v496
        %498 = vst [vmem:[%s426 + $0xb8] sm:$0x1] %v497
        %v499 = vld [vmem:[%s426 + $0xd0] sm:$0x1]
        %v500 = vsel %vm413, 0, %v499
        %501 = vst [vmem:[%s426 + $0xd0] sm:$0x1] %v500
        %v502 = vld [vmem:[%s426 + $0xe8] sm:$0x1]
        %v503 = vsel %vm413, 0, %v502
        %504 = vst [vmem:[%s426 + $0xe8] sm:$0x1] %v503
        %v505 = vld [vmem:[%s426 + $0x100] sm:$0x1]
        %v506 = vsel %vm413, 0, %v505
        %507 = vst [vmem:[%s426 + $0x100] sm:$0x1] %v506
        %v508 = vld [vmem:[%s426 + $0x118] sm:$0x1]
        %v509 = vsel %vm413, 0, %v508
        %510 = vst [vmem:[%s426 + $0x118] sm:$0x1] %v509
        %v511 = vld [vmem:[%s426 + $0x130] sm:$0x1]
        %v512 = vsel %vm413, 0, %v511
        %513 = vst [vmem:[%s426 + $0x130] sm:$0x1] %v512
        %v514 = vld [vmem:[%s426 + $0x148] sm:$0x1]
        %v515 = vsel %vm413, 0, %v514
        %516 = vst [vmem:[%s426 + $0x148] sm:$0x1] %v515
        %v517 = vld [vmem:[%s426 + $0x160] sm:$0x1]
        %v518 = vsel %vm413, 0, %v517
        %519 = vst [vmem:[%s426 + $0x160] sm:$0x1] %v518
        %v520 = vld [vmem:[%s426 + $0x178] sm:$0x1]
        %v521 = vsel %vm413, 0, %v520
        %522 = vst [vmem:[%s426 + $0x178] sm:$0x1] %v521
        %vm523 = vcmask 781315
        %vm524 = vmand %vm523, %vm403
        %v525 = vld [vmem:[#allocation4 + $0x4] sm:$0x8]
        %v526 = vsel %vm524, 0, %v525
        %527 = vst [vmem:[#allocation4 + $0x4] sm:$0x8] %v526
        %vm528 = vcmask 781312
        %529 = vst.msk [vmem:[#allocation4 + $0x8] sm:$0xf] %vm528, 0
        %530 = vst.msk [vmem:[#allocation4 + $0xc] sm:$0xf] %vm528, 0
        %vm531 = vcmask 778240
        %vm532 = vmand %vm531, %vm412
        %v533 = vld [vmem:[#allocation4 + $0x10] sm:$0x1]
        %v534 = vsel %vm532, 0, %v533
        %535 = vst [vmem:[#allocation4 + $0x10] sm:$0x1] %v534
        %s536 = scalar_lea.vmem [#allocation4], 408
        %v537 = vld [vmem:[%s536 + $0x4] sm:$0x8]
        %v538 = vsel %vm524, 0, %v537
        %539 = vst [vmem:[%s536 + $0x4] sm:$0x8] %v538
        %540 = vst.msk [vmem:[%s536 + $0x8] sm:$0xf] %vm528, 0
        %541 = vst.msk [vmem:[%s536 + $0xc] sm:$0xf] %vm528, 0
        %v542 = vld [vmem:[%s536 + $0x10] sm:$0x1]
        %v543 = vsel %vm532, 0, %v542
        %544 = vst [vmem:[%s536 + $0x10] sm:$0x1] %v543
        %s545 = scalar_lea.vmem [#allocation4], 24
        %v546 = vld [vmem:[%s545 + $0x4] sm:$0x8]
        %v547 = vsel %vm524, 0, %v546
        %548 = vst [vmem:[%s545 + $0x4] sm:$0x8] %v547
        %v549 = vld [vmem:[%s545 + $0x1c] sm:$0x8]
        %v550 = vsel %vm524, 0, %v549
        %551 = vst [vmem:[%s545 + $0x1c] sm:$0x8] %v550
        %v552 = vld [vmem:[%s545 + $0x34] sm:$0x8]
        %v553 = vsel %vm524, 0, %v552
        %554 = vst [vmem:[%s545 + $0x34] sm:$0x8] %v553
        %v555 = vld [vmem:[%s545 + $0x4c] sm:$0x8]
        %v556 = vsel %vm524, 0, %v555
        %557 = vst [vmem:[%s545 + $0x4c] sm:$0x8] %v556
        %v558 = vld [vmem:[%s545 + $0x64] sm:$0x8]
        %v559 = vsel %vm524, 0, %v558
        %560 = vst [vmem:[%s545 + $0x64] sm:$0x8] %v559
        %v561 = vld [vmem:[%s545 + $0x7c] sm:$0x8]
        %v562 = vsel %vm524, 0, %v561
        %563 = vst [vmem:[%s545 + $0x7c] sm:$0x8] %v562
        %v564 = vld [vmem:[%s545 + $0x94] sm:$0x8]
        %v565 = vsel %vm524, 0, %v564
        %566 = vst [vmem:[%s545 + $0x94] sm:$0x8] %v565
        %v567 = vld [vmem:[%s545 + $0xac] sm:$0x8]
        %v568 = vsel %vm524, 0, %v567
        %569 = vst [vmem:[%s545 + $0xac] sm:$0x8] %v568
        %v570 = vld [vmem:[%s545 + $0xc4] sm:$0x8]
        %v571 = vsel %vm524, 0, %v570
        %572 = vst [vmem:[%s545 + $0xc4] sm:$0x8] %v571
        %v573 = vld [vmem:[%s545 + $0xdc] sm:$0x8]
        %v574 = vsel %vm524, 0, %v573
        %575 = vst [vmem:[%s545 + $0xdc] sm:$0x8] %v574
        %v576 = vld [vmem:[%s545 + $0xf4] sm:$0x8]
        %v577 = vsel %vm524, 0, %v576
        %578 = vst [vmem:[%s545 + $0xf4] sm:$0x8] %v577
        %v579 = vld [vmem:[%s545 + $0x10c] sm:$0x8]
        %v580 = vsel %vm524, 0, %v579
        %581 = vst [vmem:[%s545 + $0x10c] sm:$0x8] %v580
        %v582 = vld [vmem:[%s545 + $0x124] sm:$0x8]
        %v583 = vsel %vm524, 0, %v582
        %584 = vst [vmem:[%s545 + $0x124] sm:$0x8] %v583
        %v585 = vld [vmem:[%s545 + $0x13c] sm:$0x8]
        %v586 = vsel %vm524, 0, %v585
        %587 = vst [vmem:[%s545 + $0x13c] sm:$0x8] %v586
        %v588 = vld [vmem:[%s545 + $0x154] sm:$0x8]
        %v589 = vsel %vm524, 0, %v588
        %590 = vst [vmem:[%s545 + $0x154] sm:$0x8] %v589
        %v591 = vld [vmem:[%s545 + $0x16c] sm:$0x8]
        %v592 = vsel %vm524, 0, %v591
        %593 = vst [vmem:[%s545 + $0x16c] sm:$0x8] %v592
        %v594 = vld [vmem:[%s545 + $0x10] sm:$0x1]
        %v595 = vsel %vm532, 0, %v594
        %596 = vst [vmem:[%s545 + $0x10] sm:$0x1] %v595
        %v597 = vld [vmem:[%s545 + $0x28] sm:$0x1]
        %v598 = vsel %vm532, 0, %v597
        %599 = vst [vmem:[%s545 + $0x28] sm:$0x1] %v598
        %v600 = vld [vmem:[%s545 + $0x40] sm:$0x1]
        %v601 = vsel %vm532, 0, %v600
        %602 = vst [vmem:[%s545 + $0x40] sm:$0x1] %v601
        %v603 = vld [vmem:[%s545 + $0x58] sm:$0x1]
        %v604 = vsel %vm532, 0, %v603
        %605 = vst [vmem:[%s545 + $0x58] sm:$0x1] %v604
        %v606 = vld [vmem:[%s545 + $0x70] sm:$0x1]
        %v607 = vsel %vm532, 0, %v606
        %608 = vst [vmem:[%s545 + $0x70] sm:$0x1] %v607
        %v609 = vld [vmem:[%s545 + $0x88] sm:$0x1]
        %v610 = vsel %vm532, 0, %v609
        %611 = vst [vmem:[%s545 + $0x88] sm:$0x1] %v610
        %v612 = vld [vmem:[%s545 + $0xa0] sm:$0x1]
        %v613 = vsel %vm532, 0, %v612
        %614 = vst [vmem:[%s545 + $0xa0] sm:$0x1] %v613
        %v615 = vld [vmem:[%s545 + $0xb8] sm:$0x1]
        %v616 = vsel %vm532, 0, %v615
        %617 = vst [vmem:[%s545 + $0xb8] sm:$0x1] %v616
        %v618 = vld [vmem:[%s545 + $0xd0] sm:$0x1]
        %v619 = vsel %vm532, 0, %v618
        %620 = vst [vmem:[%s545 + $0xd0] sm:$0x1] %v619
        %v621 = vld [vmem:[%s545 + $0xe8] sm:$0x1]
        %v622 = vsel %vm532, 0, %v621
        %623 = vst [vmem:[%s545 + $0xe8] sm:$0x1] %v622
        %v624 = vld [vmem:[%s545 + $0x100] sm:$0x1]
        %v625 = vsel %vm532, 0, %v624
        %626 = vst [vmem:[%s545 + $0x100] sm:$0x1] %v625
        %v627 = vld [vmem:[%s545 + $0x118] sm:$0x1]
        %v628 = vsel %vm532, 0, %v627
        %629 = vst [vmem:[%s545 + $0x118] sm:$0x1] %v628
        %v630 = vld [vmem:[%s545 + $0x130] sm:$0x1]
        %v631 = vsel %vm532, 0, %v630
        %632 = vst [vmem:[%s545 + $0x130] sm:$0x1] %v631
        %v633 = vld [vmem:[%s545 + $0x148] sm:$0x1]
        %v634 = vsel %vm532, 0, %v633
        %635 = vst [vmem:[%s545 + $0x148] sm:$0x1] %v634
        %v636 = vld [vmem:[%s545 + $0x160] sm:$0x1]
        %v637 = vsel %vm532, 0, %v636
        %638 = vst [vmem:[%s545 + $0x160] sm:$0x1] %v637
        %v639 = vld [vmem:[%s545 + $0x178] sm:$0x1]
        %v640 = vsel %vm532, 0, %v639
        %641 = vst [vmem:[%s545 + $0x178] sm:$0x1] %v640
        %v642 = vld [vmem:[%s357] sm:$0xf]
        %v643 = vld [vmem:[%s357 + $0x4] sm:$0xf]
        %v644 = vld [vmem:[%s357 + $0x8] sm:$0xf]
        %v645 = vld [vmem:[%s357 + $0xc] sm:$0xf]
        %v646 = vld [vmem:[%s357 + $0x10] sm:$0xf]
        %v647 = vld [vmem:[%s357 + $0x14] sm:$0xf]
        %v648 = vld [vmem:[%s357 + $0x18] sm:$0xf]
        %v649 = vld [vmem:[%s357 + $0x1c] sm:$0xf]
        %v650 = vld [vmem:[%s357 + $0x20] sm:$0xf]
        %v651 = vld [vmem:[%s357 + $0x24] sm:$0xf]
        %v652 = vld [vmem:[%s357 + $0x28] sm:$0xf]
        %v653 = vld [vmem:[%s357 + $0x2c] sm:$0xf]
        %v654 = vld [vmem:[%s357 + $0x30] sm:$0xf]
        %v655 = vld [vmem:[%s357 + $0x34] sm:$0xf]
        %v656 = vld [vmem:[%s357 + $0x38] sm:$0xf]
        %v657 = vld [vmem:[%s357 + $0x3c] sm:$0xf]
        %v658 = vld [vmem:[%s357 + $0x40] sm:$0xf]
        %v659 = vld [vmem:[%s357 + $0x44] sm:$0xf]
        %v660 = vld [vmem:[%s357 + $0x48] sm:$0xf]
        %v661 = vld [vmem:[%s357 + $0x4c] sm:$0xf]
        %v662 = vld [vmem:[%s357 + $0x50] sm:$0xf]
        %v663 = vld [vmem:[%s357 + $0x54] sm:$0xf]
        %v664 = vld [vmem:[%s357 + $0x58] sm:$0xf]
        %v665 = vld [vmem:[%s357 + $0x5c] sm:$0xf]
        %v666 = vld [vmem:[%s357 + $0x60] sm:$0xf]
        %v667 = vld [vmem:[%s357 + $0x64] sm:$0xf]
        %v668 = vld [vmem:[%s357 + $0x68] sm:$0xf]
        %v669 = vld [vmem:[%s357 + $0x6c] sm:$0xf]
        %v670 = vld [vmem:[%s357 + $0x70] sm:$0xf]
        %v671 = vld [vmem:[%s357 + $0x74] sm:$0xf]
        %v672 = vld [vmem:[%s357 + $0x78] sm:$0xf]
        %v673 = vld [vmem:[%s357 + $0x7c] sm:$0xf]
        %v674 = vld [vmem:[%s1] sm:$0xff]
        %v707 = vunpack.c.l.b16 %v642
        %v708 = vunpack.c.l.b16 %v643
        %v709 = vunpack.c.l.b16 %v644
        %v710 = vunpack.c.l.b16 %v645
        %v711 = vunpack.c.l.b16 %v646
        %v712 = vunpack.c.l.b16 %v647
        %v713 = vunpack.c.l.b16 %v648
        %v714 = vunpack.c.l.b16 %v649
        %v715 = vunpack.c.l.b16 %v650
        %v716 = vunpack.c.l.b16 %v651
        %v717 = vunpack.c.l.b16 %v652
        %v718 = vunpack.c.l.b16 %v653
        %v719 = vunpack.c.l.b16 %v654
        %v720 = vunpack.c.l.b16 %v655
        %v721 = vunpack.c.l.b16 %v656
        %v722 = vunpack.c.l.b16 %v657
        %v723 = vunpack.c.l.b16 %v658
        %v724 = vunpack.c.l.b16 %v659
        %v725 = vunpack.c.l.b16 %v660
        %v726 = vunpack.c.l.b16 %v661
        %v727 = vunpack.c.l.b16 %v662
        %v728 = vunpack.c.l.b16 %v663
        %v729 = vunpack.c.l.b16 %v664
        %v730 = vunpack.c.l.b16 %v665
        %v731 = vunpack.c.l.b16 %v666
        %v732 = vunpack.c.l.b16 %v667
        %v733 = vunpack.c.l.b16 %v668
        %v734 = vunpack.c.l.b16 %v669
        %v735 = vunpack.c.l.b16 %v670
        %v736 = vunpack.c.l.b16 %v671
        %v737 = vunpack.c.l.b16 %v672
        %v738 = vunpack.c.l.b16 %v673
        %v739 = vpack.c.b16 %v708, %v707
        %v740 = vpack.c.b16 %v710, %v709
        %v741 = vpack.c.b16 %v712, %v711
        %v742 = vpack.c.b16 %v714, %v713
        %v743 = vpack.c.b16 %v716, %v715
        %v744 = vpack.c.b16 %v718, %v717
        %v745 = vpack.c.b16 %v720, %v719
        %v746 = vpack.c.b16 %v722, %v721
        %v747 = vpack.c.b16 %v724, %v723
        %v748 = vpack.c.b16 %v726, %v725
        %v749 = vpack.c.b16 %v728, %v727
        %v750 = vpack.c.b16 %v730, %v729
        %v751 = vpack.c.b16 %v732, %v731
        %v752 = vpack.c.b16 %v734, %v733
        %v753 = vpack.c.b16 %v736, %v735
        %v754 = vpack.c.b16 %v738, %v737
        %v756 = vcombine.high %v674, %v674
        %v758 = vunpack.c.l.s4 1983009808
        %v759 = vunpack.c.0.s8 %v758
        %v760 = vlaneseq
        %v761 = vshrl.u32 %v760, 7
        %v762 = vsub.s32 %v759, %v761
        %v763 = vrot.slane %v674, %v762
        %v765 = vunpack.c.l.s4 1983009808
        %v766 = vunpack.c.0.s8 %v765
        %v767 = vlaneseq
        %v768 = vshrl.u32 %v767, 7
        %v769 = vsub.s32 %v766, %v768
        %v770 = vrot.slane %v756, %v769
        %v771 = vcombine.high %v763, %v763
        %v772 = vcombine.high %v770, %v770
        %vm773 = vcmask 31744
        %v775 = vsel %vm773, %v739, 0
        %v778 = vsel %vm773, %v740, 0
        %v781 = vsel %vm773, %v741, 0
        %v784 = vsel %vm773, %v742, 0
        %v787 = vsel %vm773, %v743, 0
        %v790 = vsel %vm773, %v744, 0
        %v793 = vsel %vm773, %v745, 0
        %v796 = vsel %vm773, %v746, 0
        %v799 = vsel %vm773, %v747, 0
        %v802 = vsel %vm773, %v748, 0
        %v805 = vsel %vm773, %v749, 0
        %v808 = vsel %vm773, %v750, 0
        %v811 = vsel %vm773, %v751, 0
        %v814 = vsel %vm773, %v752, 0
        %v817 = vsel %vm773, %v753, 0
        %v820 = vsel %vm773, %v754, 0
        %vm822 = vcmask 1041408
        %v824 = vsel %vm822, %v763, 0
        %v827 = vsel %vm822, %v771, 0
        %v830 = vsel %vm822, %v770, 0
        %v833 = vsel %vm822, %v772, 0
        %835 = vmatprep.subr.bf16.mxu0 0
        %836 = vmatpush1.bf16.msra.mxu0 0
        %837 = vmatprep.subr.bf16.mxu0 0
        %838 = vmatpush1.bf16.msra.mxu0 0
        %839 = vmatprep.subr.bf16.mxu0 0
        %840 = vmatpush1.bf16.msra.mxu0 0
        %841 = vmatprep.subr.bf16.mxu0 0
        %842 = vmatpush1.bf16.msra.mxu0 0
        %843 = vmatprep.subr.bf16.mxu0 0
        %844 = vmatpush1.bf16.msra.mxu0 0
        %845 = vmatprep.subr.bf16.mxu0 0
        %846 = vmatpush1.bf16.msra.mxu0 0
        %847 = vmatprep.subr.bf16.mxu0 0
        %848 = vmatpush1.bf16.msra.mxu0 0
        %849 = vmatprep.subr.bf16.mxu0 %v827
        %850 = vmatpush1.bf16.msra.mxu0 %v824
        %851 = vmatprep.subr.bf16.mxu0 0
        %852 = vmatpush2.bf16.msra.mxu0 0
        %853 = vmatprep.subr.bf16.mxu0 0
        %854 = vmatpush2.bf16.msra.mxu0 0
        %855 = vmatprep.subr.bf16.mxu0 0
        %856 = vmatpush2.bf16.msra.mxu0 0
        %857 = vmatprep.subr.bf16.mxu0 0
        %858 = vmatpush2.bf16.msra.mxu0 0
        %859 = vmatprep.subr.bf16.mxu0 0
        %860 = vmatpush2.bf16.msra.mxu0 0
        %861 = vmatprep.subr.bf16.mxu0 0
        %862 = vmatpush2.bf16.msra.mxu0 0
        %863 = vmatprep.subr.bf16.mxu0 0
        %864 = vmatpush2.bf16.msra.mxu0 0
        %865 = vmatprep.subr.bf16.mxu0 0
        %866 = vmatpush2.bf16.msra.mxu0 0
        %867 = vmatprep.mubr.bf16.mxu0 0
        %868 = vmatmul.mubr.bf16.gmra.mxu0 %v775
        %v869 = vpop.f32.mrf.mxu0
        %v870 = vadd.f32 0.0, %v869
        %v871 = vpop.f32.mrf.mxu0
        %v872 = vadd.f32 0.0, %v871
        %v873 = vpop.f32.mrf.mxu0
        %v874 = vadd.f32 0.0, %v873
        %v875 = vpop.f32.mrf.mxu0
        %v876 = vadd.f32 0.0, %v875
        %877 = vmatprep.mubr.bf16.mxu0 0
        %878 = vmatmul.mubr.bf16.gmra.mxu0 %v778
        %v879 = vpop.f32.mrf.mxu0
        %v880 = vadd.f32 0.0, %v879
        %v881 = vpop.f32.mrf.mxu0
        %v882 = vadd.f32 0.0, %v881
        %v883 = vpop.f32.mrf.mxu0
        %v884 = vadd.f32 0.0, %v883
        %v885 = vpop.f32.mrf.mxu0
        %v886 = vadd.f32 0.0, %v885
        %887 = vmatprep.mubr.bf16.mxu0 0
        %888 = vmatmul.mubr.bf16.gmra.mxu0 %v781
        %v889 = vpop.f32.mrf.mxu0
        %v890 = vadd.f32 0.0, %v889
        %v891 = vpop.f32.mrf.mxu0
        %v892 = vadd.f32 0.0, %v891
        %v893 = vpop.f32.mrf.mxu0
        %v894 = vadd.f32 0.0, %v893
        %v895 = vpop.f32.mrf.mxu0
        %v896 = vadd.f32 0.0, %v895
        %897 = vmatprep.mubr.bf16.mxu0 0
        %898 = vmatmul.mubr.bf16.gmra.mxu0 %v784
        %v899 = vpop.f32.mrf.mxu0
        %v900 = vadd.f32 0.0, %v899
        %v901 = vpop.f32.mrf.mxu0
        %v902 = vadd.f32 0.0, %v901
        %v903 = vpop.f32.mrf.mxu0
        %v904 = vadd.f32 0.0, %v903
        %v905 = vpop.f32.mrf.mxu0
        %v906 = vadd.f32 0.0, %v905
        %907 = vmatprep.mubr.bf16.mxu0 0
        %908 = vmatmul.mubr.bf16.gmra.mxu0 %v787
        %v909 = vpop.f32.mrf.mxu0
        %v910 = vadd.f32 0.0, %v909
        %v911 = vpop.f32.mrf.mxu0
        %v912 = vadd.f32 0.0, %v911
        %v913 = vpop.f32.mrf.mxu0
        %v914 = vadd.f32 0.0, %v913
        %v915 = vpop.f32.mrf.mxu0
        %v916 = vadd.f32 0.0, %v915
        %917 = vmatprep.mubr.bf16.mxu0 0
        %918 = vmatmul.mubr.bf16.gmra.mxu0 %v790
        %v919 = vpop.f32.mrf.mxu0
        %v920 = vadd.f32 0.0, %v919
        %v921 = vpop.f32.mrf.mxu0
        %v922 = vadd.f32 0.0, %v921
        %v923 = vpop.f32.mrf.mxu0
        %v924 = vadd.f32 0.0, %v923
        %v925 = vpop.f32.mrf.mxu0
        %v926 = vadd.f32 0.0, %v925
        %927 = vmatprep.mubr.bf16.mxu0 0
        %928 = vmatmul.mubr.bf16.gmra.mxu0 %v793
        %v929 = vpop.f32.mrf.mxu0
        %v930 = vadd.f32 0.0, %v929
        %v931 = vpop.f32.mrf.mxu0
        %v932 = vadd.f32 0.0, %v931
        %v933 = vpop.f32.mrf.mxu0
        %v934 = vadd.f32 0.0, %v933
        %v935 = vpop.f32.mrf.mxu0
        %v936 = vadd.f32 0.0, %v935
        %937 = vmatprep.mubr.bf16.mxu0 0
        %938 = vmatmul.mubr.bf16.gmra.mxu0 %v796
        %v939 = vpop.f32.mrf.mxu0
        %v940 = vadd.f32 0.0, %v939
        %v941 = vpop.f32.mrf.mxu0
        %v942 = vadd.f32 0.0, %v941
        %v943 = vpop.f32.mrf.mxu0
        %v944 = vadd.f32 0.0, %v943
        %v945 = vpop.f32.mrf.mxu0
        %v946 = vadd.f32 0.0, %v945
        %947 = vmatprep.mubr.bf16.mxu0 0
        %948 = vmatmul.mubr.bf16.gmra.mxu0 %v799
        %v949 = vpop.f32.mrf.mxu0
        %v950 = vadd.f32 0.0, %v949
        %v951 = vpop.f32.mrf.mxu0
        %v952 = vadd.f32 0.0, %v951
        %v953 = vpop.f32.mrf.mxu0
        %v954 = vadd.f32 0.0, %v953
        %v955 = vpop.f32.mrf.mxu0
        %v956 = vadd.f32 0.0, %v955
        %957 = vmatprep.mubr.bf16.mxu0 0
        %958 = vmatmul.mubr.bf16.gmra.mxu0 %v802
        %v959 = vpop.f32.mrf.mxu0
        %v960 = vadd.f32 0.0, %v959
        %v961 = vpop.f32.mrf.mxu0
        %v962 = vadd.f32 0.0, %v961
        %v963 = vpop.f32.mrf.mxu0
        %v964 = vadd.f32 0.0, %v963
        %v965 = vpop.f32.mrf.mxu0
        %v966 = vadd.f32 0.0, %v965
        %967 = vmatprep.mubr.bf16.mxu0 0
        %968 = vmatmul.mubr.bf16.gmra.mxu0 %v805
        %v969 = vpop.f32.mrf.mxu0
        %v970 = vadd.f32 0.0, %v969
        %v971 = vpop.f32.mrf.mxu0
        %v972 = vadd.f32 0.0, %v971
        %v973 = vpop.f32.mrf.mxu0
        %v974 = vadd.f32 0.0, %v973
        %v975 = vpop.f32.mrf.mxu0
        %v976 = vadd.f32 0.0, %v975
        %977 = vmatprep.mubr.bf16.mxu0 0
        %978 = vmatmul.mubr.bf16.gmra.mxu0 %v808
        %v979 = vpop.f32.mrf.mxu0
        %v980 = vadd.f32 0.0, %v979
        %v981 = vpop.f32.mrf.mxu0
        %v982 = vadd.f32 0.0, %v981
        %v983 = vpop.f32.mrf.mxu0
        %v984 = vadd.f32 0.0, %v983
        %v985 = vpop.f32.mrf.mxu0
        %v986 = vadd.f32 0.0, %v985
        %987 = vmatprep.mubr.bf16.mxu0 0
        %988 = vmatmul.mubr.bf16.gmra.mxu0 %v811
        %v989 = vpop.f32.mrf.mxu0
        %v990 = vadd.f32 0.0, %v989
        %v991 = vpop.f32.mrf.mxu0
        %v992 = vadd.f32 0.0, %v991
        %v993 = vpop.f32.mrf.mxu0
        %v994 = vadd.f32 0.0, %v993
        %v995 = vpop.f32.mrf.mxu0
        %v996 = vadd.f32 0.0, %v995
        %997 = vmatprep.mubr.bf16.mxu0 0
        %998 = vmatmul.mubr.bf16.gmra.mxu0 %v814
        %v999 = vpop.f32.mrf.mxu0
        %v1000 = vadd.f32 0.0, %v999
        %v1001 = vpop.f32.mrf.mxu0
        %v1002 = vadd.f32 0.0, %v1001
        %v1003 = vpop.f32.mrf.mxu0
        %v1004 = vadd.f32 0.0, %v1003
        %v1005 = vpop.f32.mrf.mxu0
        %v1006 = vadd.f32 0.0, %v1005
        %1007 = vmatprep.mubr.bf16.mxu0 0
        %1008 = vmatmul.mubr.bf16.gmra.mxu0 %v817
        %v1009 = vpop.f32.mrf.mxu0
        %v1010 = vadd.f32 0.0, %v1009
        %v1011 = vpop.f32.mrf.mxu0
        %v1012 = vadd.f32 0.0, %v1011
        %v1013 = vpop.f32.mrf.mxu0
        %v1014 = vadd.f32 0.0, %v1013
        %v1015 = vpop.f32.mrf.mxu0
        %v1016 = vadd.f32 0.0, %v1015
        %1017 = vmatprep.mubr.bf16.mxu0 0
        %1018 = vmatmul.mubr.bf16.gmra.mxu0 %v820
        %v1019 = vpop.f32.mrf.mxu0
        %v1020 = vadd.f32 0.0, %v1019
        %v1021 = vpop.f32.mrf.mxu0
        %v1022 = vadd.f32 0.0, %v1021
        %v1023 = vpop.f32.mrf.mxu0
        %v1024 = vadd.f32 0.0, %v1023
        %v1025 = vpop.f32.mrf.mxu0
        %v1026 = vadd.f32 0.0, %v1025
        %1027 = vdwg.mxu0
        %1028 = vmatprep.subr.bf16.mxu0 0
        %1029 = vmatpush1.bf16.msra.mxu0 0
        %1030 = vmatprep.subr.bf16.mxu0 0
        %1031 = vmatpush1.bf16.msra.mxu0 0
        %1032 = vmatprep.subr.bf16.mxu0 0
        %1033 = vmatpush1.bf16.msra.mxu0 0
        %1034 = vmatprep.subr.bf16.mxu0 0
        %1035 = vmatpush1.bf16.msra.mxu0 0
        %1036 = vmatprep.subr.bf16.mxu0 0
        %1037 = vmatpush1.bf16.msra.mxu0 0
        %1038 = vmatprep.subr.bf16.mxu0 0
        %1039 = vmatpush1.bf16.msra.mxu0 0
        %1040 = vmatprep.subr.bf16.mxu0 0
        %1041 = vmatpush1.bf16.msra.mxu0 0
        %1042 = vmatprep.subr.bf16.mxu0 %v833
        %1043 = vmatpush1.bf16.msra.mxu0 %v830
        %1044 = vmatprep.subr.bf16.mxu0 0
        %1045 = vmatpush2.bf16.msra.mxu0 0
        %1046 = vmatprep.subr.bf16.mxu0 0
        %1047 = vmatpush2.bf16.msra.mxu0 0
        %1048 = vmatprep.subr.bf16.mxu0 0
        %1049 = vmatpush2.bf16.msra.mxu0 0
        %1050 = vmatprep.subr.bf16.mxu0 0
        %1051 = vmatpush2.bf16.msra.mxu0 0
        %1052 = vmatprep.subr.bf16.mxu0 0
        %1053 = vmatpush2.bf16.msra.mxu0 0
        %1054 = vmatprep.subr.bf16.mxu0 0
        %1055 = vmatpush2.bf16.msra.mxu0 0
        %1056 = vmatprep.subr.bf16.mxu0 0
        %1057 = vmatpush2.bf16.msra.mxu0 0
        %1058 = vmatprep.subr.bf16.mxu0 0
        %1059 = vmatpush2.bf16.msra.mxu0 0
        %1060 = vmatprep.mubr.bf16.mxu0 0
        %1061 = vmatmul.mubr.bf16.gmra.mxu0 %v775
        %v1062 = vpop.f32.mrf.mxu0
        %v1063 = vadd.f32 0.0, %v1062
        %v1064 = vpop.f32.mrf.mxu0
        %v1065 = vadd.f32 0.0, %v1064
        %v1066 = vpop.f32.mrf.mxu0
        %v1067 = vadd.f32 0.0, %v1066
        %v1068 = vpop.f32.mrf.mxu0
        %v1069 = vadd.f32 0.0, %v1068
        %1070 = vmatprep.mubr.bf16.mxu0 0
        %1071 = vmatmul.mubr.bf16.gmra.mxu0 %v778
        %v1072 = vpop.f32.mrf.mxu0
        %v1073 = vadd.f32 0.0, %v1072
        %v1074 = vpop.f32.mrf.mxu0
        %v1075 = vadd.f32 0.0, %v1074
        %v1076 = vpop.f32.mrf.mxu0
        %v1077 = vadd.f32 0.0, %v1076
        %v1078 = vpop.f32.mrf.mxu0
        %v1079 = vadd.f32 0.0, %v1078
        %1080 = vmatprep.mubr.bf16.mxu0 0
        %1081 = vmatmul.mubr.bf16.gmra.mxu0 %v781
        %v1082 = vpop.f32.mrf.mxu0
        %v1083 = vadd.f32 0.0, %v1082
        %v1084 = vpop.f32.mrf.mxu0
        %v1085 = vadd.f32 0.0, %v1084
        %v1086 = vpop.f32.mrf.mxu0
        %v1087 = vadd.f32 0.0, %v1086
        %v1088 = vpop.f32.mrf.mxu0
        %v1089 = vadd.f32 0.0, %v1088
        %1090 = vmatprep.mubr.bf16.mxu0 0
        %1091 = vmatmul.mubr.bf16.gmra.mxu0 %v784
        %v1092 = vpop.f32.mrf.mxu0
        %v1093 = vadd.f32 0.0, %v1092
        %v1094 = vpop.f32.mrf.mxu0
        %v1095 = vadd.f32 0.0, %v1094
        %v1096 = vpop.f32.mrf.mxu0
        %v1097 = vadd.f32 0.0, %v1096
        %v1098 = vpop.f32.mrf.mxu0
        %v1099 = vadd.f32 0.0, %v1098
        %1100 = vmatprep.mubr.bf16.mxu0 0
        %1101 = vmatmul.mubr.bf16.gmra.mxu0 %v787
        %v1102 = vpop.f32.mrf.mxu0
        %v1103 = vadd.f32 0.0, %v1102
        %v1104 = vpop.f32.mrf.mxu0
        %v1105 = vadd.f32 0.0, %v1104
        %v1106 = vpop.f32.mrf.mxu0
        %v1107 = vadd.f32 0.0, %v1106
        %v1108 = vpop.f32.mrf.mxu0
        %v1109 = vadd.f32 0.0, %v1108
        %1110 = vmatprep.mubr.bf16.mxu0 0
        %1111 = vmatmul.mubr.bf16.gmra.mxu0 %v790
        %v1112 = vpop.f32.mrf.mxu0
        %v1113 = vadd.f32 0.0, %v1112
        %v1114 = vpop.f32.mrf.mxu0
        %v1115 = vadd.f32 0.0, %v1114
        %v1116 = vpop.f32.mrf.mxu0
        %v1117 = vadd.f32 0.0, %v1116
        %v1118 = vpop.f32.mrf.mxu0
        %v1119 = vadd.f32 0.0, %v1118
        %1120 = vmatprep.mubr.bf16.mxu0 0
        %1121 = vmatmul.mubr.bf16.gmra.mxu0 %v793
        %v1122 = vpop.f32.mrf.mxu0
        %v1123 = vadd.f32 0.0, %v1122
        %v1124 = vpop.f32.mrf.mxu0
        %v1125 = vadd.f32 0.0, %v1124
        %v1126 = vpop.f32.mrf.mxu0
        %v1127 = vadd.f32 0.0, %v1126
        %v1128 = vpop.f32.mrf.mxu0
        %v1129 = vadd.f32 0.0, %v1128
        %1130 = vmatprep.mubr.bf16.mxu0 0
        %1131 = vmatmul.mubr.bf16.gmra.mxu0 %v796
        %v1132 = vpop.f32.mrf.mxu0
        %v1133 = vadd.f32 0.0, %v1132
        %v1134 = vpop.f32.mrf.mxu0
        %v1135 = vadd.f32 0.0, %v1134
        %v1136 = vpop.f32.mrf.mxu0
        %v1137 = vadd.f32 0.0, %v1136
        %v1138 = vpop.f32.mrf.mxu0
        %v1139 = vadd.f32 0.0, %v1138
        %1140 = vmatprep.mubr.bf16.mxu0 0
        %1141 = vmatmul.mubr.bf16.gmra.mxu0 %v799
        %v1142 = vpop.f32.mrf.mxu0
        %v1143 = vadd.f32 0.0, %v1142
        %v1144 = vpop.f32.mrf.mxu0
        %v1145 = vadd.f32 0.0, %v1144
        %v1146 = vpop.f32.mrf.mxu0
        %v1147 = vadd.f32 0.0, %v1146
        %v1148 = vpop.f32.mrf.mxu0
        %v1149 = vadd.f32 0.0, %v1148
        %1150 = vmatprep.mubr.bf16.mxu0 0
        %1151 = vmatmul.mubr.bf16.gmra.mxu0 %v802
        %v1152 = vpop.f32.mrf.mxu0
        %v1153 = vadd.f32 0.0, %v1152
        %v1154 = vpop.f32.mrf.mxu0
        %v1155 = vadd.f32 0.0, %v1154
        %v1156 = vpop.f32.mrf.mxu0
        %v1157 = vadd.f32 0.0, %v1156
        %v1158 = vpop.f32.mrf.mxu0
        %v1159 = vadd.f32 0.0, %v1158
        %1160 = vmatprep.mubr.bf16.mxu0 0
        %1161 = vmatmul.mubr.bf16.gmra.mxu0 %v805
        %v1162 = vpop.f32.mrf.mxu0
        %v1163 = vadd.f32 0.0, %v1162
        %v1164 = vpop.f32.mrf.mxu0
        %v1165 = vadd.f32 0.0, %v1164
        %v1166 = vpop.f32.mrf.mxu0
        %v1167 = vadd.f32 0.0, %v1166
        %v1168 = vpop.f32.mrf.mxu0
        %v1169 = vadd.f32 0.0, %v1168
        %1170 = vmatprep.mubr.bf16.mxu0 0
        %1171 = vmatmul.mubr.bf16.gmra.mxu0 %v808
        %v1172 = vpop.f32.mrf.mxu0
        %v1173 = vadd.f32 0.0, %v1172
        %v1174 = vpop.f32.mrf.mxu0
        %v1175 = vadd.f32 0.0, %v1174
        %v1176 = vpop.f32.mrf.mxu0
        %v1177 = vadd.f32 0.0, %v1176
        %v1178 = vpop.f32.mrf.mxu0
        %v1179 = vadd.f32 0.0, %v1178
        %1180 = vmatprep.mubr.bf16.mxu0 0
        %1181 = vmatmul.mubr.bf16.gmra.mxu0 %v811
        %v1182 = vpop.f32.mrf.mxu0
        %v1183 = vadd.f32 0.0, %v1182
        %v1184 = vpop.f32.mrf.mxu0
        %v1185 = vadd.f32 0.0, %v1184
        %v1186 = vpop.f32.mrf.mxu0
        %v1187 = vadd.f32 0.0, %v1186
        %v1188 = vpop.f32.mrf.mxu0
        %v1189 = vadd.f32 0.0, %v1188
        %1190 = vmatprep.mubr.bf16.mxu0 0
        %1191 = vmatmul.mubr.bf16.gmra.mxu0 %v814
        %v1192 = vpop.f32.mrf.mxu0
        %v1193 = vadd.f32 0.0, %v1192
        %v1194 = vpop.f32.mrf.mxu0
        %v1195 = vadd.f32 0.0, %v1194
        %v1196 = vpop.f32.mrf.mxu0
        %v1197 = vadd.f32 0.0, %v1196
        %v1198 = vpop.f32.mrf.mxu0
        %v1199 = vadd.f32 0.0, %v1198
        %1200 = vmatprep.mubr.bf16.mxu0 0
        %1201 = vmatmul.mubr.bf16.gmra.mxu0 %v817
        %v1202 = vpop.f32.mrf.mxu0
        %v1203 = vadd.f32 0.0, %v1202
        %v1204 = vpop.f32.mrf.mxu0
        %v1205 = vadd.f32 0.0, %v1204
        %v1206 = vpop.f32.mrf.mxu0
        %v1207 = vadd.f32 0.0, %v1206
        %v1208 = vpop.f32.mrf.mxu0
        %v1209 = vadd.f32 0.0, %v1208
        %1210 = vmatprep.mubr.bf16.mxu0 0
        %1211 = vmatmul.mubr.bf16.gmra.mxu0 %v820
        %v1212 = vpop.f32.mrf.mxu0
        %v1213 = vadd.f32 0.0, %v1212
        %v1214 = vpop.f32.mrf.mxu0
        %v1215 = vadd.f32 0.0, %v1214
        %v1216 = vpop.f32.mrf.mxu0
        %v1217 = vadd.f32 0.0, %v1216
        %v1218 = vpop.f32.mrf.mxu0
        %v1219 = vadd.f32 0.0, %v1218
        %1220 = vdwg.mxu0
        %v1221 = vld [vmem:[%s2] sm:$0x7]
        %v1223 = vlaneseq
        %v1224 = vshrl.u32 %v1223, 7
        %v1225 = vsub.s32 0, %v1224
        %v1226 = vrot.slane %v1221, %v1225
        %v1227 = vlaneseq
        %v1228 = vshrl.u32 %v1227, 7
        %v1229 = vsub.s32 1, %v1228
        %v1230 = vrot.slane %v1221, %v1229
        %v1231 = vlaneseq
        %v1232 = vshrl.u32 %v1231, 7
        %v1233 = vsub.s32 2, %v1232
        %v1234 = vrot.slane %v1221, %v1233
        %v1238 = vadd.f32 %v870, %v1226
        %v1239 = vadd.f32 %v872, %v1230
        %v1240 = vadd.f32 %v1063, %v1234
        %v1241 = vadd.f32 %v874, %v1226
        %v1242 = vadd.f32 %v876, %v1230
        %v1243 = vadd.f32 %v1067, %v1234
        %v1244 = vadd.f32 %v880, %v1226
        %v1245 = vadd.f32 %v882, %v1230
        %v1246 = vadd.f32 %v1073, %v1234
        %v1247 = vadd.f32 %v884, %v1226
        %v1248 = vadd.f32 %v886, %v1230
        %v1249 = vadd.f32 %v1077, %v1234
        %v1250 = vadd.f32 %v890, %v1226
        %v1251 = vadd.f32 %v892, %v1230
        %v1252 = vadd.f32 %v1083, %v1234
        %v1253 = vadd.f32 %v894, %v1226
        %v1254 = vadd.f32 %v896, %v1230
        %v1255 = vadd.f32 %v1087, %v1234
        %v1256 = vadd.f32 %v900, %v1226
        %v1257 = vadd.f32 %v902, %v1230
        %v1258 = vadd.f32 %v1093, %v1234
        %v1259 = vadd.f32 %v904, %v1226
        %v1260 = vadd.f32 %v906, %v1230
        %v1261 = vadd.f32 %v1097, %v1234
        %v1262 = vadd.f32 %v910, %v1226
        %v1263 = vadd.f32 %v912, %v1230
        %v1264 = vadd.f32 %v1103, %v1234
        %v1265 = vadd.f32 %v914, %v1226
        %v1266 = vadd.f32 %v916, %v1230
        %v1267 = vadd.f32 %v1107, %v1234
        %v1268 = vadd.f32 %v920, %v1226
        %v1269 = vadd.f32 %v922, %v1230
        %v1270 = vadd.f32 %v1113, %v1234
        %v1271 = vadd.f32 %v924, %v1226
        %v1272 = vadd.f32 %v926, %v1230
        %v1273 = vadd.f32 %v1117, %v1234
        %v1274 = vadd.f32 %v930, %v1226
        %v1275 = vadd.f32 %v932, %v1230
        %v1276 = vadd.f32 %v1123, %v1234
        %v1277 = vadd.f32 %v934, %v1226
        %v1278 = vadd.f32 %v936, %v1230
        %v1279 = vadd.f32 %v1127, %v1234
        %v1280 = vadd.f32 %v940, %v1226
        %v1281 = vadd.f32 %v942, %v1230
        %v1282 = vadd.f32 %v1133, %v1234
        %v1283 = vadd.f32 %v944, %v1226
        %v1284 = vadd.f32 %v946, %v1230
        %v1285 = vadd.f32 %v1137, %v1234
        %v1286 = vadd.f32 %v950, %v1226
        %v1287 = vadd.f32 %v952, %v1230
        %v1288 = vadd.f32 %v1143, %v1234
        %v1289 = vadd.f32 %v954, %v1226
        %v1290 = vadd.f32 %v956, %v1230
        %v1291 = vadd.f32 %v1147, %v1234
        %v1292 = vadd.f32 %v960, %v1226
        %v1293 = vadd.f32 %v962, %v1230
        %v1294 = vadd.f32 %v1153, %v1234
        %v1295 = vadd.f32 %v964, %v1226
        %v1296 = vadd.f32 %v966, %v1230
        %v1297 = vadd.f32 %v1157, %v1234
        %v1298 = vadd.f32 %v970, %v1226
        %v1299 = vadd.f32 %v972, %v1230
        %v1300 = vadd.f32 %v1163, %v1234
        %v1301 = vadd.f32 %v974, %v1226
        %v1302 = vadd.f32 %v976, %v1230
        %v1303 = vadd.f32 %v1167, %v1234
        %v1304 = vadd.f32 %v980, %v1226
        %v1305 = vadd.f32 %v982, %v1230
        %v1306 = vadd.f32 %v1173, %v1234
        %v1307 = vadd.f32 %v984, %v1226
        %v1308 = vadd.f32 %v986, %v1230
        %v1309 = vadd.f32 %v1177, %v1234
        %v1310 = vadd.f32 %v990, %v1226
        %v1311 = vadd.f32 %v992, %v1230
        %v1312 = vadd.f32 %v1183, %v1234
        %v1313 = vadd.f32 %v994, %v1226
        %v1314 = vadd.f32 %v996, %v1230
        %v1315 = vadd.f32 %v1187, %v1234
        %v1316 = vadd.f32 %v1000, %v1226
        %v1317 = vadd.f32 %v1002, %v1230
        %v1318 = vadd.f32 %v1193, %v1234
        %v1319 = vadd.f32 %v1004, %v1226
        %v1320 = vadd.f32 %v1006, %v1230
        %v1321 = vadd.f32 %v1197, %v1234
        %v1322 = vadd.f32 %v1010, %v1226
        %v1323 = vadd.f32 %v1012, %v1230
        %v1324 = vadd.f32 %v1203, %v1234
        %v1325 = vadd.f32 %v1014, %v1226
        %v1326 = vadd.f32 %v1016, %v1230
        %v1327 = vadd.f32 %v1207, %v1234
        %v1328 = vadd.f32 %v1020, %v1226
        %v1329 = vadd.f32 %v1022, %v1230
        %v1330 = vadd.f32 %v1213, %v1234
        %v1331 = vadd.f32 %v1024, %v1226
        %v1332 = vadd.f32 %v1026, %v1230
        %v1333 = vadd.f32 %v1217, %v1234
        %v1334 = vmax.f32 %v1238, 0.0
        %v1335 = vmax.f32 %v1239, 0.0
        %v1336 = vmax.f32 %v1240, 0.0
        %v1337 = vmax.f32 %v1241, 0.0
        %v1338 = vmax.f32 %v1242, 0.0
        %v1339 = vmax.f32 %v1243, 0.0
        %v1340 = vmax.f32 %v1244, 0.0
        %v1341 = vmax.f32 %v1245, 0.0
        %v1342 = vmax.f32 %v1246, 0.0
        %v1343 = vmax.f32 %v1247, 0.0
        %v1344 = vmax.f32 %v1248, 0.0
        %v1345 = vmax.f32 %v1249, 0.0
        %v1346 = vmax.f32 %v1250, 0.0
        %v1347 = vmax.f32 %v1251, 0.0
        %v1348 = vmax.f32 %v1252, 0.0
        %v1349 = vmax.f32 %v1253, 0.0
        %v1350 = vmax.f32 %v1254, 0.0
        %v1351 = vmax.f32 %v1255, 0.0
        %v1352 = vmax.f32 %v1256, 0.0
        %v1353 = vmax.f32 %v1257, 0.0
        %v1354 = vmax.f32 %v1258, 0.0
        %v1355 = vmax.f32 %v1259, 0.0
        %v1356 = vmax.f32 %v1260, 0.0
        %v1357 = vmax.f32 %v1261, 0.0
        %v1358 = vmax.f32 %v1262, 0.0
        %v1359 = vmax.f32 %v1263, 0.0
        %v1360 = vmax.f32 %v1264, 0.0
        %v1361 = vmax.f32 %v1265, 0.0
        %v1362 = vmax.f32 %v1266, 0.0
        %v1363 = vmax.f32 %v1267, 0.0
        %v1364 = vmax.f32 %v1268, 0.0
        %v1365 = vmax.f32 %v1269, 0.0
        %v1366 = vmax.f32 %v1270, 0.0
        %v1367 = vmax.f32 %v1271, 0.0
        %v1368 = vmax.f32 %v1272, 0.0
        %v1369 = vmax.f32 %v1273, 0.0
        %v1370 = vmax.f32 %v1274, 0.0
        %v1371 = vmax.f32 %v1275, 0.0
        %v1372 = vmax.f32 %v1276, 0.0
        %v1373 = vmax.f32 %v1277, 0.0
        %v1374 = vmax.f32 %v1278, 0.0
        %v1375 = vmax.f32 %v1279, 0.0
        %v1376 = vmax.f32 %v1280, 0.0
        %v1377 = vmax.f32 %v1281, 0.0
        %v1378 = vmax.f32 %v1282, 0.0
        %v1379 = vmax.f32 %v1283, 0.0
        %v1380 = vmax.f32 %v1284, 0.0
        %v1381 = vmax.f32 %v1285, 0.0
        %v1382 = vmax.f32 %v1286, 0.0
        %v1383 = vmax.f32 %v1287, 0.0
        %v1384 = vmax.f32 %v1288, 0.0
        %v1385 = vmax.f32 %v1289, 0.0
        %v1386 = vmax.f32 %v1290, 0.0
        %v1387 = vmax.f32 %v1291, 0.0
        %v1388 = vmax.f32 %v1292, 0.0
        %v1389 = vmax.f32 %v1293, 0.0
        %v1390 = vmax.f32 %v1294, 0.0
        %v1391 = vmax.f32 %v1295, 0.0
        %v1392 = vmax.f32 %v1296, 0.0
        %v1393 = vmax.f32 %v1297, 0.0
        %v1394 = vmax.f32 %v1298, 0.0
        %v1395 = vmax.f32 %v1299, 0.0
        %v1396 = vmax.f32 %v1300, 0.0
        %v1397 = vmax.f32 %v1301, 0.0
        %v1398 = vmax.f32 %v1302, 0.0
        %v1399 = vmax.f32 %v1303, 0.0
        %v1400 = vmax.f32 %v1304, 0.0
        %v1401 = vmax.f32 %v1305, 0.0
        %v1402 = vmax.f32 %v1306, 0.0
        %v1403 = vmax.f32 %v1307, 0.0
        %v1404 = vmax.f32 %v1308, 0.0
        %v1405 = vmax.f32 %v1309, 0.0
        %v1406 = vmax.f32 %v1310, 0.0
        %v1407 = vmax.f32 %v1311, 0.0
        %v1408 = vmax.f32 %v1312, 0.0
        %v1409 = vmax.f32 %v1313, 0.0
        %v1410 = vmax.f32 %v1314, 0.0
        %v1411 = vmax.f32 %v1315, 0.0
        %v1412 = vmax.f32 %v1316, 0.0
        %v1413 = vmax.f32 %v1317, 0.0
        %v1414 = vmax.f32 %v1318, 0.0
        %v1415 = vmax.f32 %v1319, 0.0
        %v1416 = vmax.f32 %v1320, 0.0
        %v1417 = vmax.f32 %v1321, 0.0
        %v1418 = vmax.f32 %v1322, 0.0
        %v1419 = vmax.f32 %v1323, 0.0
        %v1420 = vmax.f32 %v1324, 0.0
        %v1421 = vmax.f32 %v1325, 0.0
        %v1422 = vmax.f32 %v1326, 0.0
        %v1423 = vmax.f32 %v1327, 0.0
        %v1424 = vmax.f32 %v1328, 0.0
        %v1425 = vmax.f32 %v1329, 0.0
        %v1426 = vmax.f32 %v1330, 0.0
        %v1427 = vmax.f32 %v1331, 0.0
        %v1428 = vmax.f32 %v1332, 0.0
        %v1429 = vmax.f32 %v1333, 0.0
        %v1430 = vpack.c.bf16 %v1338, %v1335
        %v1431 = vpack.c.bf16 %v1344, %v1341
        %v1432 = vpack.c.bf16 %v1350, %v1347
        %v1433 = vpack.c.bf16 %v1356, %v1353
        %v1434 = vpack.c.bf16 %v1362, %v1359
        %v1435 = vpack.c.bf16 %v1368, %v1365
        %v1436 = vpack.c.bf16 %v1374, %v1371
        %v1437 = vpack.c.bf16 %v1380, %v1377
        %v1438 = vpack.c.bf16 %v1386, %v1383
        %v1439 = vpack.c.bf16 %v1392, %v1389
        %v1440 = vpack.c.bf16 %v1398, %v1395
        %v1441 = vpack.c.bf16 %v1404, %v1401
        %v1442 = vpack.c.bf16 %v1410, %v1407
        %v1443 = vpack.c.bf16 %v1416, %v1413
        %v1444 = vpack.c.bf16 %v1422, %v1419
        %v1445 = vpack.c.bf16 %v1428, %v1425
        %v1446 = vpack.c.bf16 %v1339, %v1336
        %v1447 = vpack.c.bf16 %v1345, %v1342
        %v1448 = vpack.c.bf16 %v1351, %v1348
        %v1449 = vpack.c.bf16 %v1357, %v1354
        %v1450 = vpack.c.bf16 %v1363, %v1360
        %v1451 = vpack.c.bf16 %v1369, %v1366
        %v1452 = vpack.c.bf16 %v1375, %v1372
        %v1453 = vpack.c.bf16 %v1381, %v1378
        %v1454 = vpack.c.bf16 %v1387, %v1384
        %v1455 = vpack.c.bf16 %v1393, %v1390
        %v1456 = vpack.c.bf16 %v1399, %v1396
        %v1457 = vpack.c.bf16 %v1405, %v1402
        %v1458 = vpack.c.bf16 %v1411, %v1408
        %v1459 = vpack.c.bf16 %v1417, %v1414
        %v1460 = vpack.c.bf16 %v1423, %v1420
        %v1461 = vpack.c.bf16 %v1429, %v1426
        %1462 = vst.msk [vmem:[%s368 + $0x8] sm:$0xff] %vm359, %v1065
        %1463 = vst.msk [vmem:[%s368 + $0x10] sm:$0xff] %vm359, %v1069
        %1464 = vst.msk [vmem:[%s368 + $0x28] sm:$0xff] %vm359, %v1075
        %1465 = vst.msk [vmem:[%s368 + $0x30] sm:$0xff] %vm359, %v1079
        %1466 = vst.msk [vmem:[%s368 + $0x48] sm:$0xff] %vm359, %v1085
        %1467 = vst.msk [vmem:[%s368 + $0x50] sm:$0xff] %vm359, %v1089
        %1468 = vst.msk [vmem:[%s368 + $0x68] sm:$0xff] %vm359, %v1095
        %1469 = vst.msk [vmem:[%s368 + $0x70] sm:$0xff] %vm359, %v1099
        %1470 = vst.msk [vmem:[%s368 + $0x88] sm:$0xff] %vm359, %v1105
        %1471 = vst.msk [vmem:[%s368 + $0x90] sm:$0xff] %vm359, %v1109
        %1472 = vst.msk [vmem:[%s368 + $0xa8] sm:$0xff] %vm359, %v1115
        %1473 = vst.msk [vmem:[%s368 + $0xb0] sm:$0xff] %vm359, %v1119
        %1474 = vst.msk [vmem:[%s368 + $0xc8] sm:$0xff] %vm359, %v1125
        %1475 = vst.msk [vmem:[%s368 + $0xd0] sm:$0xff] %vm359, %v1129
        %1476 = vst.msk [vmem:[%s368 + $0xe8] sm:$0xff] %vm359, %v1135
        %1477 = vst.msk [vmem:[%s368 + $0xf0] sm:$0xff] %vm359, %v1139
        %1478 = vst.msk [vmem:[%s368 + $0x108] sm:$0xff] %vm359, %v1145
        %1479 = vst.msk [vmem:[%s368 + $0x110] sm:$0xff] %vm359, %v1149
        %1480 = vst.msk [vmem:[%s368 + $0x128] sm:$0xff] %vm359, %v1155
        %1481 = vst.msk [vmem:[%s368 + $0x130] sm:$0xff] %vm359, %v1159
        %1482 = vst.msk [vmem:[%s368 + $0x148] sm:$0xff] %vm359, %v1165
        %1483 = vst.msk [vmem:[%s368 + $0x150] sm:$0xff] %vm359, %v1169
        %1484 = vst.msk [vmem:[%s368 + $0x168] sm:$0xff] %vm359, %v1175
        %1485 = vst.msk [vmem:[%s368 + $0x170] sm:$0xff] %vm359, %v1179
        %1486 = vst.msk [vmem:[%s368 + $0x188] sm:$0xff] %vm359, %v1185
        %1487 = vst.msk [vmem:[%s368 + $0x190] sm:$0xff] %vm359, %v1189
        %1488 = vst.msk [vmem:[%s368 + $0x1a8] sm:$0xff] %vm359, %v1195
        %1489 = vst.msk [vmem:[%s368 + $0x1b0] sm:$0xff] %vm359, %v1199
        %1490 = vst.msk [vmem:[%s368 + $0x1c8] sm:$0xff] %vm359, %v1205
        %1491 = vst.msk [vmem:[%s368 + $0x1d0] sm:$0xff] %vm359, %v1209
        %1492 = vst.msk [vmem:[%s368 + $0x1e8] sm:$0xff] %vm359, %v1215
        %1493 = vst.msk [vmem:[%s368 + $0x1f0] sm:$0xff] %vm359, %v1219
        %v1494 = vld [vmem:[#allocation2 + $0x7] sm:$0xff]
        %v1495 = vld [vmem:[#allocation2 + $0xf] sm:$0xff]
        %v1496 = vld [vmem:[#allocation2 + $0x27] sm:$0xff]
        %v1497 = vld [vmem:[#allocation2 + $0x2f] sm:$0xff]
        %v1498 = vld [vmem:[#allocation2 + $0x47] sm:$0xff]
        %v1499 = vld [vmem:[#allocation2 + $0x4f] sm:$0xff]
        %v1500 = vld [vmem:[#allocation2 + $0x67] sm:$0xff]
        %v1501 = vld [vmem:[#allocation2 + $0x6f] sm:$0xff]
        %v1502 = vld [vmem:[#allocation2 + $0x87] sm:$0xff]
        %v1503 = vld [vmem:[#allocation2 + $0x8f] sm:$0xff]
        %v1504 = vld [vmem:[#allocation2 + $0xa7] sm:$0xff]
        %v1505 = vld [vmem:[#allocation2 + $0xaf] sm:$0xff]
        %v1506 = vld [vmem:[#allocation2 + $0xc7] sm:$0xff]
        %v1507 = vld [vmem:[#allocation2 + $0xcf] sm:$0xff]
        %v1508 = vld [vmem:[#allocation2 + $0xe7] sm:$0xff]
        %v1509 = vld [vmem:[#allocation2 + $0xef] sm:$0xff]
        %v1510 = vld [vmem:[#allocation2 + $0x107] sm:$0xff]
        %v1511 = vld [vmem:[#allocation2 + $0x10f] sm:$0xff]
        %v1512 = vld [vmem:[#allocation2 + $0x127] sm:$0xff]
        %v1513 = vld [vmem:[#allocation2 + $0x12f] sm:$0xff]
        %v1514 = vld [vmem:[#allocation2 + $0x147] sm:$0xff]
        %v1515 = vld [vmem:[#allocation2 + $0x14f] sm:$0xff]
        %v1516 = vld [vmem:[#allocation2 + $0x167] sm:$0xff]
        %v1517 = vld [vmem:[#allocation2 + $0x16f] sm:$0xff]
        %v1518 = vld [vmem:[#allocation2 + $0x187] sm:$0xff]
        %v1519 = vld [vmem:[#allocation2 + $0x18f] sm:$0xff]
        %v1520 = vld [vmem:[#allocation2 + $0x1a7] sm:$0xff]
        %v1521 = vld [vmem:[#allocation2 + $0x1af] sm:$0xff]
        %v1522 = vld [vmem:[#allocation2 + $0x1c7] sm:$0xff]
        %v1523 = vld [vmem:[#allocation2 + $0x1cf] sm:$0xff]
        %v1524 = vld [vmem:[#allocation2 + $0x1e7] sm:$0xff]
        %v1525 = vld [vmem:[#allocation2 + $0x1ef] sm:$0xff]
        %v1526 = vld [vmem:[#allocation2 + $0x207] sm:$0xff]
        %v1527 = vld [vmem:[#allocation2 + $0x20f] sm:$0xff]
        %v1528 = vld [vmem:[#allocation2 + $0x227] sm:$0xff]
        %v1529 = vld [vmem:[#allocation2 + $0x22f] sm:$0xff]
        %v1530 = vld [vmem:[#allocation2 + $0x8] sm:$0xff]
        %v1531 = vld [vmem:[#allocation2 + $0x10] sm:$0xff]
        %v1532 = vld [vmem:[#allocation2 + $0x28] sm:$0xff]
        %v1533 = vld [vmem:[#allocation2 + $0x30] sm:$0xff]
        %v1534 = vld [vmem:[#allocation2 + $0x48] sm:$0xff]
        %v1535 = vld [vmem:[#allocation2 + $0x50] sm:$0xff]
        %v1536 = vld [vmem:[#allocation2 + $0x68] sm:$0xff]
        %v1537 = vld [vmem:[#allocation2 + $0x70] sm:$0xff]
        %v1538 = vld [vmem:[#allocation2 + $0x88] sm:$0xff]
        %v1539 = vld [vmem:[#allocation2 + $0x90] sm:$0xff]
        %v1540 = vld [vmem:[#allocation2 + $0xa8] sm:$0xff]
        %v1541 = vld [vmem:[#allocation2 + $0xb0] sm:$0xff]
        %v1542 = vld [vmem:[#allocation2 + $0xc8] sm:$0xff]
        %v1543 = vld [vmem:[#allocation2 + $0xd0] sm:$0xff]
        %v1544 = vld [vmem:[#allocation2 + $0xe8] sm:$0xff]
        %v1545 = vld [vmem:[#allocation2 + $0xf0] sm:$0xff]
        %v1546 = vld [vmem:[#allocation2 + $0x108] sm:$0xff]
        %v1547 = vld [vmem:[#allocation2 + $0x110] sm:$0xff]
        %v1548 = vld [vmem:[#allocation2 + $0x128] sm:$0xff]
        %v1549 = vld [vmem:[#allocation2 + $0x130] sm:$0xff]
        %v1550 = vld [vmem:[#allocation2 + $0x148] sm:$0xff]
        %v1551 = vld [vmem:[#allocation2 + $0x150] sm:$0xff]
        %v1552 = vld [vmem:[#allocation2 + $0x168] sm:$0xff]
        %v1553 = vld [vmem:[#allocation2 + $0x170] sm:$0xff]
        %v1554 = vld [vmem:[#allocation2 + $0x188] sm:$0xff]
        %v1555 = vld [vmem:[#allocation2 + $0x190] sm:$0xff]
        %v1556 = vld [vmem:[#allocation2 + $0x1a8] sm:$0xff]
        %v1557 = vld [vmem:[#allocation2 + $0x1b0] sm:$0xff]
        %v1558 = vld [vmem:[#allocation2 + $0x1c8] sm:$0xff]
        %v1559 = vld [vmem:[#allocation2 + $0x1d0] sm:$0xff]
        %v1560 = vld [vmem:[#allocation2 + $0x1e8] sm:$0xff]
        %v1561 = vld [vmem:[#allocation2 + $0x1f0] sm:$0xff]
        %v1562 = vld [vmem:[#allocation2 + $0x208] sm:$0xff]
        %v1563 = vld [vmem:[#allocation2 + $0x210] sm:$0xff]
        %v1564 = vld [vmem:[#allocation2 + $0x228] sm:$0xff]
        %v1565 = vld [vmem:[#allocation2 + $0x230] sm:$0xff]
        %v1566 = vadd.f32 %v1494, %v1530
        %v1567 = vadd.f32 %v1495, %v1531
        %v1568 = vadd.f32 %v1496, %v1532
        %v1569 = vadd.f32 %v1497, %v1533
        %v1570 = vadd.f32 %v1498, %v1534
        %v1571 = vadd.f32 %v1499, %v1535
        %v1572 = vadd.f32 %v1500, %v1536
        %v1573 = vadd.f32 %v1501, %v1537
        %v1574 = vadd.f32 %v1502, %v1538
        %v1575 = vadd.f32 %v1503, %v1539
        %v1576 = vadd.f32 %v1504, %v1540
        %v1577 = vadd.f32 %v1505, %v1541
        %v1578 = vadd.f32 %v1506, %v1542
        %v1579 = vadd.f32 %v1507, %v1543
        %v1580 = vadd.f32 %v1508, %v1544
        %v1581 = vadd.f32 %v1509, %v1545
        %v1582 = vadd.f32 %v1510, %v1546
        %v1583 = vadd.f32 %v1511, %v1547
        %v1584 = vadd.f32 %v1512, %v1548
        %v1585 = vadd.f32 %v1513, %v1549
        %v1586 = vadd.f32 %v1514, %v1550
        %v1587 = vadd.f32 %v1515, %v1551
        %v1588 = vadd.f32 %v1516, %v1552
        %v1589 = vadd.f32 %v1517, %v1553
        %v1590 = vadd.f32 %v1518, %v1554
        %v1591 = vadd.f32 %v1519, %v1555
        %v1592 = vadd.f32 %v1520, %v1556
        %v1593 = vadd.f32 %v1521, %v1557
        %v1594 = vadd.f32 %v1522, %v1558
        %v1595 = vadd.f32 %v1523, %v1559
        %v1596 = vadd.f32 %v1524, %v1560
        %v1597 = vadd.f32 %v1525, %v1561
        %v1598 = vadd.f32 %v1526, %v1562
        %v1599 = vadd.f32 %v1527, %v1563
        %v1600 = vadd.f32 %v1528, %v1564
        %v1601 = vadd.f32 %v1529, %v1565
        %v1602 = vld [vmem:[#allocation2 + $0x9] sm:$0xff]
        %v1603 = vld [vmem:[#allocation2 + $0x11] sm:$0xff]
        %v1604 = vld [vmem:[#allocation2 + $0x29] sm:$0xff]
        %v1605 = vld [vmem:[#allocation2 + $0x31] sm:$0xff]
        %v1606 = vld [vmem:[#allocation2 + $0x49] sm:$0xff]
        %v1607 = vld [vmem:[#allocation2 + $0x51] sm:$0xff]
        %v1608 = vld [vmem:[#allocation2 + $0x69] sm:$0xff]
        %v1609 = vld [vmem:[#allocation2 + $0x71] sm:$0xff]
        %v1610 = vld [vmem:[#allocation2 + $0x89] sm:$0xff]
        %v1611 = vld [vmem:[#allocation2 + $0x91] sm:$0xff]
        %v1612 = vld [vmem:[#allocation2 + $0xa9] sm:$0xff]
        %v1613 = vld [vmem:[#allocation2 + $0xb1] sm:$0xff]
        %v1614 = vld [vmem:[#allocation2 + $0xc9] sm:$0xff]
        %v1615 = vld [vmem:[#allocation2 + $0xd1] sm:$0xff]
        %v1616 = vld [vmem:[#allocation2 + $0xe9] sm:$0xff]
        %v1617 = vld [vmem:[#allocation2 + $0xf1] sm:$0xff]
        %v1618 = vld [vmem:[#allocation2 + $0x109] sm:$0xff]
        %v1619 = vld [vmem:[#allocation2 + $0x111] sm:$0xff]
        %v1620 = vld [vmem:[#allocation2 + $0x129] sm:$0xff]
        %v1621 = vld [vmem:[#allocation2 + $0x131] sm:$0xff]
        %v1622 = vld [vmem:[#allocation2 + $0x149] sm:$0xff]
        %v1623 = vld [vmem:[#allocation2 + $0x151] sm:$0xff]
        %v1624 = vld [vmem:[#allocation2 + $0x169] sm:$0xff]
        %v1625 = vld [vmem:[#allocation2 + $0x171] sm:$0xff]
        %v1626 = vld [vmem:[#allocation2 + $0x189] sm:$0xff]
        %v1627 = vld [vmem:[#allocation2 + $0x191] sm:$0xff]
        %v1628 = vld [vmem:[#allocation2 + $0x1a9] sm:$0xff]
        %v1629 = vld [vmem:[#allocation2 + $0x1b1] sm:$0xff]
        %v1630 = vld [vmem:[#allocation2 + $0x1c9] sm:$0xff]
        %v1631 = vld [vmem:[#allocation2 + $0x1d1] sm:$0xff]
        %v1632 = vld [vmem:[#allocation2 + $0x1e9] sm:$0xff]
        %v1633 = vld [vmem:[#allocation2 + $0x1f1] sm:$0xff]
        %v1634 = vld [vmem:[#allocation2 + $0x209] sm:$0xff]
        %v1635 = vld [vmem:[#allocation2 + $0x211] sm:$0xff]
        %v1636 = vld [vmem:[#allocation2 + $0x229] sm:$0xff]
        %v1637 = vld [vmem:[#allocation2 + $0x231] sm:$0xff]
        %v1638 = vadd.f32 %v1566, %v1602
        %v1639 = vadd.f32 %v1567, %v1603
        %v1640 = vadd.f32 %v1568, %v1604
        %v1641 = vadd.f32 %v1569, %v1605
        %v1642 = vadd.f32 %v1570, %v1606
        %v1643 = vadd.f32 %v1571, %v1607
        %v1644 = vadd.f32 %v1572, %v1608
        %v1645 = vadd.f32 %v1573, %v1609
        %v1646 = vadd.f32 %v1574, %v1610
        %v1647 = vadd.f32 %v1575, %v1611
        %v1648 = vadd.f32 %v1576, %v1612
        %v1649 = vadd.f32 %v1577, %v1613
        %v1650 = vadd.f32 %v1578, %v1614
        %v1651 = vadd.f32 %v1579, %v1615
        %v1652 = vadd.f32 %v1580, %v1616
        %v1653 = vadd.f32 %v1581, %v1617
        %v1654 = vadd.f32 %v1582, %v1618
        %v1655 = vadd.f32 %v1583, %v1619
        %v1656 = vadd.f32 %v1584, %v1620
        %v1657 = vadd.f32 %v1585, %v1621
        %v1658 = vadd.f32 %v1586, %v1622
        %v1659 = vadd.f32 %v1587, %v1623
        %v1660 = vadd.f32 %v1588, %v1624
        %v1661 = vadd.f32 %v1589, %v1625
        %v1662 = vadd.f32 %v1590, %v1626
        %v1663 = vadd.f32 %v1591, %v1627
        %v1664 = vadd.f32 %v1592, %v1628
        %v1665 = vadd.f32 %v1593, %v1629
        %v1666 = vadd.f32 %v1594, %v1630
        %v1667 = vadd.f32 %v1595, %v1631
        %v1668 = vadd.f32 %v1596, %v1632
        %v1669 = vadd.f32 %v1597, %v1633
        %v1670 = vadd.f32 %v1598, %v1634
        %v1671 = vadd.f32 %v1599, %v1635
        %v1672 = vadd.f32 %v1600, %v1636
        %v1673 = vadd.f32 %v1601, %v1637
        %v1674 = vadd.f32 %v1638, %v1640
        %v1675 = vadd.f32 %v1639, %v1641
        %v1676 = vadd.f32 %v1640, %v1642
        %v1677 = vadd.f32 %v1641, %v1643
        %v1678 = vadd.f32 %v1642, %v1644
        %v1679 = vadd.f32 %v1643, %v1645
        %v1680 = vadd.f32 %v1644, %v1646
        %v1681 = vadd.f32 %v1645, %v1647
        %v1682 = vadd.f32 %v1646, %v1648
        %v1683 = vadd.f32 %v1647, %v1649
        %v1684 = vadd.f32 %v1648, %v1650
        %v1685 = vadd.f32 %v1649, %v1651
        %v1686 = vadd.f32 %v1650, %v1652
        %v1687 = vadd.f32 %v1651, %v1653
        %v1688 = vadd.f32 %v1652, %v1654
        %v1689 = vadd.f32 %v1653, %v1655
        %v1690 = vadd.f32 %v1654, %v1656
        %v1691 = vadd.f32 %v1655, %v1657
        %v1692 = vadd.f32 %v1656, %v1658
        %v1693 = vadd.f32 %v1657, %v1659
        %v1694 = vadd.f32 %v1658, %v1660
        %v1695 = vadd.f32 %v1659, %v1661
        %v1696 = vadd.f32 %v1660, %v1662
        %v1697 = vadd.f32 %v1661, %v1663
        %v1698 = vadd.f32 %v1662, %v1664
        %v1699 = vadd.f32 %v1663, %v1665
        %v1700 = vadd.f32 %v1664, %v1666
        %v1701 = vadd.f32 %v1665, %v1667
        %v1702 = vadd.f32 %v1666, %v1668
        %v1703 = vadd.f32 %v1667, %v1669
        %v1704 = vadd.f32 %v1668, %v1670
        %v1705 = vadd.f32 %v1669, %v1671
        %v1706 = vadd.f32 %v1674, %v1642
        %v1707 = vadd.f32 %v1675, %v1643
        %v1708 = vadd.f32 %v1676, %v1644
        %v1709 = vadd.f32 %v1677, %v1645
        %v1710 = vadd.f32 %v1678, %v1646
        %v1711 = vadd.f32 %v1679, %v1647
        %v1712 = vadd.f32 %v1680, %v1648
        %v1713 = vadd.f32 %v1681, %v1649
        %v1714 = vadd.f32 %v1682, %v1650
        %v1715 = vadd.f32 %v1683, %v1651
        %v1716 = vadd.f32 %v1684, %v1652
        %v1717 = vadd.f32 %v1685, %v1653
        %v1718 = vadd.f32 %v1686, %v1654
        %v1719 = vadd.f32 %v1687, %v1655
        %v1720 = vadd.f32 %v1688, %v1656
        %v1721 = vadd.f32 %v1689, %v1657
        %v1722 = vadd.f32 %v1690, %v1658
        %v1723 = vadd.f32 %v1691, %v1659
        %v1724 = vadd.f32 %v1692, %v1660
        %v1725 = vadd.f32 %v1693, %v1661
        %v1726 = vadd.f32 %v1694, %v1662
        %v1727 = vadd.f32 %v1695, %v1663
        %v1728 = vadd.f32 %v1696, %v1664
        %v1729 = vadd.f32 %v1697, %v1665
        %v1730 = vadd.f32 %v1698, %v1666
        %v1731 = vadd.f32 %v1699, %v1667
        %v1732 = vadd.f32 %v1700, %v1668
        %v1733 = vadd.f32 %v1701, %v1669
        %v1734 = vadd.f32 %v1702, %v1670
        %v1735 = vadd.f32 %v1703, %v1671
        %v1736 = vadd.f32 %v1704, %v1672
        %v1737 = vadd.f32 %v1705, %v1673
        %v1738 = vmul.f32 %v1706, 0.11111111
        %v1739 = vmul.f32 %v1707, 0.11111111
        %v1740 = vmul.f32 %v1708, 0.11111111
        %v1741 = vmul.f32 %v1709, 0.11111111
        %v1742 = vmul.f32 %v1710, 0.11111111
        %v1743 = vmul.f32 %v1711, 0.11111111
        %v1744 = vmul.f32 %v1712, 0.11111111
        %v1745 = vmul.f32 %v1713, 0.11111111
        %v1746 = vmul.f32 %v1714, 0.11111111
        %v1747 = vmul.f32 %v1715, 0.11111111
        %v1748 = vmul.f32 %v1716, 0.11111111
        %v1749 = vmul.f32 %v1717, 0.11111111
        %v1750 = vmul.f32 %v1718, 0.11111111
        %v1751 = vmul.f32 %v1719, 0.11111111
        %v1752 = vmul.f32 %v1720, 0.11111111
        %v1753 = vmul.f32 %v1721, 0.11111111
        %v1754 = vmul.f32 %v1722, 0.11111111
        %v1755 = vmul.f32 %v1723, 0.11111111
        %v1756 = vmul.f32 %v1724, 0.11111111
        %v1757 = vmul.f32 %v1725, 0.11111111
        %v1758 = vmul.f32 %v1726, 0.11111111
        %v1759 = vmul.f32 %v1727, 0.11111111
        %v1760 = vmul.f32 %v1728, 0.11111111
        %v1761 = vmul.f32 %v1729, 0.11111111
        %v1762 = vmul.f32 %v1730, 0.11111111
        %v1763 = vmul.f32 %v1731, 0.11111111
        %v1764 = vmul.f32 %v1732, 0.11111111
        %v1765 = vmul.f32 %v1733, 0.11111111
        %v1766 = vmul.f32 %v1734, 0.11111111
        %v1767 = vmul.f32 %v1735, 0.11111111
        %v1768 = vmul.f32 %v1736, 0.11111111
        %v1769 = vmul.f32 %v1737, 0.11111111
        %v1770 = vld [vmem:[%s3] sm:$0x1]
        %v1772 = vlaneseq
        %v1773 = vshrl.u32 %v1772, 7
        %v1774 = vsub.s32 0, %v1773
        %v1775 = vrot.slane %v1770, %v1774
        %v1777 = vadd.f32 %v1738, %v1775
        %v1778 = vadd.f32 %v1739, %v1775
        %v1779 = vadd.f32 %v1740, %v1775
        %v1780 = vadd.f32 %v1741, %v1775
        %v1781 = vadd.f32 %v1742, %v1775
        %v1782 = vadd.f32 %v1743, %v1775
        %v1783 = vadd.f32 %v1744, %v1775
        %v1784 = vadd.f32 %v1745, %v1775
        %v1785 = vadd.f32 %v1746, %v1775
        %v1786 = vadd.f32 %v1747, %v1775
        %v1787 = vadd.f32 %v1748, %v1775
        %v1788 = vadd.f32 %v1749, %v1775
        %v1789 = vadd.f32 %v1750, %v1775
        %v1790 = vadd.f32 %v1751, %v1775
        %v1791 = vadd.f32 %v1752, %v1775
        %v1792 = vadd.f32 %v1753, %v1775
        %v1793 = vadd.f32 %v1754, %v1775
        %v1794 = vadd.f32 %v1755, %v1775
        %v1795 = vadd.f32 %v1756, %v1775
        %v1796 = vadd.f32 %v1757, %v1775
        %v1797 = vadd.f32 %v1758, %v1775
        %v1798 = vadd.f32 %v1759, %v1775
        %v1799 = vadd.f32 %v1760, %v1775
        %v1800 = vadd.f32 %v1761, %v1775
        %v1801 = vadd.f32 %v1762, %v1775
        %v1802 = vadd.f32 %v1763, %v1775
        %v1803 = vadd.f32 %v1764, %v1775
        %v1804 = vadd.f32 %v1765, %v1775
        %v1805 = vadd.f32 %v1766, %v1775
        %v1806 = vadd.f32 %v1767, %v1775
        %v1807 = vadd.f32 %v1768, %v1775
        %v1808 = vadd.f32 %v1769, %v1775
        %v1809 = vmax.f32 %v1777, 0.0
        %v1810 = vmax.f32 %v1778, 0.0
        %v1811 = vmax.f32 %v1779, 0.0
        %v1812 = vmax.f32 %v1780, 0.0
        %v1813 = vmax.f32 %v1781, 0.0
        %v1814 = vmax.f32 %v1782, 0.0
        %v1815 = vmax.f32 %v1783, 0.0
        %v1816 = vmax.f32 %v1784, 0.0
        %v1817 = vmax.f32 %v1785, 0.0
        %v1818 = vmax.f32 %v1786, 0.0
        %v1819 = vmax.f32 %v1787, 0.0
        %v1820 = vmax.f32 %v1788, 0.0
        %v1821 = vmax.f32 %v1789, 0.0
        %v1822 = vmax.f32 %v1790, 0.0
        %v1823 = vmax.f32 %v1791, 0.0
        %v1824 = vmax.f32 %v1792, 0.0
        %v1825 = vmax.f32 %v1793, 0.0
        %v1826 = vmax.f32 %v1794, 0.0
        %v1827 = vmax.f32 %v1795, 0.0
        %v1828 = vmax.f32 %v1796, 0.0
        %v1829 = vmax.f32 %v1797, 0.0
        %v1830 = vmax.f32 %v1798, 0.0
        %v1831 = vmax.f32 %v1799, 0.0
        %v1832 = vmax.f32 %v1800, 0.0
        %v1833 = vmax.f32 %v1801, 0.0
        %v1834 = vmax.f32 %v1802, 0.0
        %v1835 = vmax.f32 %v1803, 0.0
        %v1836 = vmax.f32 %v1804, 0.0
        %v1837 = vmax.f32 %v1805, 0.0
        %v1838 = vmax.f32 %v1806, 0.0
        %v1839 = vmax.f32 %v1807, 0.0
        %v1840 = vmax.f32 %v1808, 0.0
        %v1857 = vunpack.c.l.b16 %v1430
        %v1858 = vunpack.c.h.b16 %v1430
        %v1859 = vunpack.c.l.b16 %v1431
        %v1860 = vunpack.c.h.b16 %v1431
        %v1861 = vunpack.c.l.b16 %v1432
        %v1862 = vunpack.c.h.b16 %v1432
        %v1863 = vunpack.c.l.b16 %v1433
        %v1864 = vunpack.c.h.b16 %v1433
        %v1865 = vunpack.c.l.b16 %v1434
        %v1866 = vunpack.c.h.b16 %v1434
        %v1867 = vunpack.c.l.b16 %v1435
        %v1868 = vunpack.c.h.b16 %v1435
        %v1869 = vunpack.c.l.b16 %v1436
        %v1870 = vunpack.c.h.b16 %v1436
        %v1871 = vunpack.c.l.b16 %v1437
        %v1872 = vunpack.c.h.b16 %v1437
        %v1873 = vunpack.c.l.b16 %v1438
        %v1874 = vunpack.c.h.b16 %v1438
        %v1875 = vunpack.c.l.b16 %v1439
        %v1876 = vunpack.c.h.b16 %v1439
        %v1877 = vunpack.c.l.b16 %v1440
        %v1878 = vunpack.c.h.b16 %v1440
        %v1879 = vunpack.c.l.b16 %v1441
        %v1880 = vunpack.c.h.b16 %v1441
        %v1881 = vunpack.c.l.b16 %v1442
        %v1882 = vunpack.c.h.b16 %v1442
        %v1883 = vunpack.c.l.b16 %v1443
        %v1884 = vunpack.c.h.b16 %v1443
        %v1885 = vunpack.c.l.b16 %v1444
        %v1886 = vunpack.c.h.b16 %v1444
        %v1887 = vunpack.c.l.b16 %v1445
        %v1888 = vunpack.c.h.b16 %v1445
        %v1889 = vpack.c.b16 %v1857, %v1857
        %v1890 = vpack.c.b16 %v1858, %v1858
        %v1891 = vpack.c.b16 %v1859, %v1859
        %v1892 = vpack.c.b16 %v1860, %v1860
        %v1893 = vpack.c.b16 %v1861, %v1861
        %v1894 = vpack.c.b16 %v1862, %v1862
        %v1895 = vpack.c.b16 %v1863, %v1863
        %v1896 = vpack.c.b16 %v1864, %v1864
        %v1897 = vpack.c.b16 %v1865, %v1865
        %v1898 = vpack.c.b16 %v1866, %v1866
        %v1899 = vpack.c.b16 %v1867, %v1867
        %v1900 = vpack.c.b16 %v1868, %v1868
        %v1901 = vpack.c.b16 %v1869, %v1869
        %v1902 = vpack.c.b16 %v1870, %v1870
        %v1903 = vpack.c.b16 %v1871, %v1871
        %v1904 = vpack.c.b16 %v1872, %v1872
        %v1905 = vpack.c.b16 %v1873, %v1873
        %v1906 = vpack.c.b16 %v1874, %v1874
        %v1907 = vpack.c.b16 %v1875, %v1875
        %v1908 = vpack.c.b16 %v1876, %v1876
        %v1909 = vpack.c.b16 %v1877, %v1877
        %v1910 = vpack.c.b16 %v1878, %v1878
        %v1911 = vpack.c.b16 %v1879, %v1879
        %v1912 = vpack.c.b16 %v1880, %v1880
        %v1913 = vpack.c.b16 %v1881, %v1881
        %v1914 = vpack.c.b16 %v1882, %v1882
        %v1915 = vpack.c.b16 %v1883, %v1883
        %v1916 = vpack.c.b16 %v1884, %v1884
        %v1917 = vpack.c.b16 %v1885, %v1885
        %v1918 = vpack.c.b16 %v1886, %v1886
        %v1919 = vpack.c.b16 %v1887, %v1887
        %v1920 = vpack.c.b16 %v1888, %v1888
        %1953 = vst.msk [vmem:[%s426 + $0x8] sm:$0xf] %vm408, %v1889
        %1954 = vst.msk [vmem:[%s426 + $0xc] sm:$0xf] %vm408, %v1890
        %1955 = vst.msk [vmem:[%s426 + $0x20] sm:$0xf] %vm408, %v1891
        %1956 = vst.msk [vmem:[%s426 + $0x24] sm:$0xf] %vm408, %v1892
        %1957 = vst.msk [vmem:[%s426 + $0x38] sm:$0xf] %vm408, %v1893
        %1958 = vst.msk [vmem:[%s426 + $0x3c] sm:$0xf] %vm408, %v1894
        %1959 = vst.msk [vmem:[%s426 + $0x50] sm:$0xf] %vm408, %v1895
        %1960 = vst.msk [vmem:[%s426 + $0x54] sm:$0xf] %vm408, %v1896
        %1961 = vst.msk [vmem:[%s426 + $0x68] sm:$0xf] %vm408, %v1897
        %1962 = vst.msk [vmem:[%s426 + $0x6c] sm:$0xf] %vm408, %v1898
        %1963 = vst.msk [vmem:[%s426 + $0x80] sm:$0xf] %vm408, %v1899
        %1964 = vst.msk [vmem:[%s426 + $0x84] sm:$0xf] %vm408, %v1900
        %1965 = vst.msk [vmem:[%s426 + $0x98] sm:$0xf] %vm408, %v1901
        %1966 = vst.msk [vmem:[%s426 + $0x9c] sm:$0xf] %vm408, %v1902
        %1967 = vst.msk [vmem:[%s426 + $0xb0] sm:$0xf] %vm408, %v1903
        %1968 = vst.msk [vmem:[%s426 + $0xb4] sm:$0xf] %vm408, %v1904
        %1969 = vst.msk [vmem:[%s426 + $0xc8] sm:$0xf] %vm408, %v1905
        %1970 = vst.msk [vmem:[%s426 + $0xcc] sm:$0xf] %vm408, %v1906
        %1971 = vst.msk [vmem:[%s426 + $0xe0] sm:$0xf] %vm408, %v1907
        %1972 = vst.msk [vmem:[%s426 + $0xe4] sm:$0xf] %vm408, %v1908
        %1973 = vst.msk [vmem:[%s426 + $0xf8] sm:$0xf] %vm408, %v1909
        %1974 = vst.msk [vmem:[%s426 + $0xfc] sm:$0xf] %vm408, %v1910
        %1975 = vst.msk [vmem:[%s426 + $0x110] sm:$0xf] %vm408, %v1911
        %1976 = vst.msk [vmem:[%s426 + $0x114] sm:$0xf] %vm408, %v1912
        %1977 = vst.msk [vmem:[%s426 + $0x128] sm:$0xf] %vm408, %v1913
        %1978 = vst.msk [vmem:[%s426 + $0x12c] sm:$0xf] %vm408, %v1914
        %1979 = vst.msk [vmem:[%s426 + $0x140] sm:$0xf] %vm408, %v1915
        %1980 = vst.msk [vmem:[%s426 + $0x144] sm:$0xf] %vm408, %v1916
        %1981 = vst.msk [vmem:[%s426 + $0x158] sm:$0xf] %vm408, %v1917
        %1982 = vst.msk [vmem:[%s426 + $0x15c] sm:$0xf] %vm408, %v1918
        %1983 = vst.msk [vmem:[%s426 + $0x170] sm:$0xf] %vm408, %v1919
        %1984 = vst.msk [vmem:[%s426 + $0x174] sm:$0xf] %vm408, %v1920
        %v1985 = vld [vmem:[%s5] sm:$0x1]
        %v1986 = vld [vmem:[#allocation3 + $0x4] sm:$0x8]
        %v1987 = vld [vmem:[#allocation3 + $0x8] sm:$0xf]
        %v1988 = vld [vmem:[#allocation3 + $0xc] sm:$0xf]
        %v1989 = vld [vmem:[#allocation3 + $0x1c] sm:$0x8]
        %v1990 = vld [vmem:[#allocation3 + $0x20] sm:$0xf]
        %v1991 = vld [vmem:[#allocation3 + $0x24] sm:$0xf]
        %v1992 = vld [vmem:[#allocation3 + $0x34] sm:$0x8]
        %v1993 = vld [vmem:[#allocation3 + $0x38] sm:$0xf]
        %v1994 = vld [vmem:[#allocation3 + $0x3c] sm:$0xf]
        %v1995 = vld [vmem:[#allocation3 + $0x4c] sm:$0x8]
        %v1996 = vld [vmem:[#allocation3 + $0x50] sm:$0xf]
        %v1997 = vld [vmem:[#allocation3 + $0x54] sm:$0xf]
        %v1998 = vld [vmem:[#allocation3 + $0x64] sm:$0x8]
        %v1999 = vld [vmem:[#allocation3 + $0x68] sm:$0xf]
        %v2000 = vld [vmem:[#allocation3 + $0x6c] sm:$0xf]
        %v2001 = vld [vmem:[#allocation3 + $0x7c] sm:$0x8]
        %v2002 = vld [vmem:[#allocation3 + $0x80] sm:$0xf]
        %v2003 = vld [vmem:[#allocation3 + $0x84] sm:$0xf]
        %v2004 = vld [vmem:[#allocation3 + $0x94] sm:$0x8]
        %v2005 = vld [vmem:[#allocation3 + $0x98] sm:$0xf]
        %v2006 = vld [vmem:[#allocation3 + $0x9c] sm:$0xf]
        %v2007 = vld [vmem:[#allocation3 + $0xac] sm:$0x8]
        %v2008 = vld [vmem:[#allocation3 + $0xb0] sm:$0xf]
        %v2009 = vld [vmem:[#allocation3 + $0xb4] sm:$0xf]
        %v2010 = vld [vmem:[#allocation3 + $0xc4] sm:$0x8]
        %v2011 = vld [vmem:[#allocation3 + $0xc8] sm:$0xf]
        %v2012 = vld [vmem:[#allocation3 + $0xcc] sm:$0xf]
        %v2013 = vld [vmem:[#allocation3 + $0xdc] sm:$0x8]
        %v2014 = vld [vmem:[#allocation3 + $0xe0] sm:$0xf]
        %v2015 = vld [vmem:[#allocation3 + $0xe4] sm:$0xf]
        %v2016 = vld [vmem:[#allocation3 + $0xf4] sm:$0x8]
        %v2017 = vld [vmem:[#allocation3 + $0xf8] sm:$0xf]
        %v2018 = vld [vmem:[#allocation3 + $0xfc] sm:$0xf]
        %v2019 = vld [vmem:[#allocation3 + $0x10c] sm:$0x8]
        %v2020 = vld [vmem:[#allocation3 + $0x110] sm:$0xf]
        %v2021 = vld [vmem:[#allocation3 + $0x114] sm:$0xf]
        %v2022 = vld [vmem:[#allocation3 + $0x124] sm:$0x8]
        %v2023 = vld [vmem:[#allocation3 + $0x128] sm:$0xf]
        %v2024 = vld [vmem:[#allocation3 + $0x12c] sm:$0xf]
        %v2025 = vld [vmem:[#allocation3 + $0x13c] sm:$0x8]
        %v2026 = vld [vmem:[#allocation3 + $0x140] sm:$0xf]
        %v2027 = vld [vmem:[#allocation3 + $0x144] sm:$0xf]
        %v2028 = vld [vmem:[#allocation3 + $0x154] sm:$0x8]
        %v2029 = vld [vmem:[#allocation3 + $0x158] sm:$0xf]
        %v2030 = vld [vmem:[#allocation3 + $0x15c] sm:$0xf]
        %v2031 = vld [vmem:[#allocation3 + $0x16c] sm:$0x8]
        %v2032 = vld [vmem:[#allocation3 + $0x170] sm:$0xf]
        %v2033 = vld [vmem:[#allocation3 + $0x174] sm:$0xf]
        %v2034 = vld [vmem:[#allocation3 + $0x184] sm:$0x8]
        %v2035 = vld [vmem:[#allocation3 + $0x188] sm:$0xf]
        %v2036 = vld [vmem:[#allocation3 + $0x18c] sm:$0xf]
        %v2037 = vld [vmem:[#allocation3 + $0x19c] sm:$0x8]
        %v2038 = vld [vmem:[#allocation3 + $0x1a0] sm:$0xf]
        %v2039 = vld [vmem:[#allocation3 + $0x1a4] sm:$0xf]
        %v2040 = vld [vmem:[#allocation3 + $0x10] sm:$0x1]
        %v2041 = vld [vmem:[#allocation3 + $0x28] sm:$0x1]
        %v2042 = vld [vmem:[#allocation3 + $0x40] sm:$0x1]
        %v2043 = vld [vmem:[#allocation3 + $0x58] sm:$0x1]
        %v2044 = vld [vmem:[#allocation3 + $0x70] sm:$0x1]
        %v2045 = vld [vmem:[#allocation3 + $0x88] sm:$0x1]
        %v2046 = vld [vmem:[#allocation3 + $0xa0] sm:$0x1]
        %v2047 = vld [vmem:[#allocation3 + $0xb8] sm:$0x1]
        %v2048 = vld [vmem:[#allocation3 + $0xd0] sm:$0x1]
        %v2049 = vld [vmem:[#allocation3 + $0xe8] sm:$0x1]
        %v2050 = vld [vmem:[#allocation3 + $0x100] sm:$0x1]
        %v2051 = vld [vmem:[#allocation3 + $0x118] sm:$0x1]
        %v2052 = vld [vmem:[#allocation3 + $0x130] sm:$0x1]
        %v2053 = vld [vmem:[#allocation3 + $0x148] sm:$0x1]
        %v2054 = vld [vmem:[#allocation3 + $0x160] sm:$0x1]
        %v2055 = vld [vmem:[#allocation3 + $0x178] sm:$0x1]
        %v2056 = vld [vmem:[#allocation3 + $0x190] sm:$0x1]
        %v2057 = vld [vmem:[#allocation3 + $0x1a8] sm:$0x1]
        %v2112 = vunpack.c.l.b16 %v1986
        %v2113 = vunpack.c.l.b16 %v1987
        %v2114 = vunpack.c.l.b16 %v1988
        %v2115 = vunpack.c.l.b16 %v1989
        %v2116 = vunpack.c.l.b16 %v1990
        %v2117 = vunpack.c.l.b16 %v1991
        %v2118 = vunpack.c.l.b16 %v1992
        %v2119 = vunpack.c.l.b16 %v1993
        %v2120 = vunpack.c.l.b16 %v1994
        %v2121 = vunpack.c.l.b16 %v1995
        %v2122 = vunpack.c.l.b16 %v1996
        %v2123 = vunpack.c.l.b16 %v1997
        %v2124 = vunpack.c.l.b16 %v1998
        %v2125 = vunpack.c.l.b16 %v1999
        %v2126 = vunpack.c.l.b16 %v2000
        %v2127 = vunpack.c.l.b16 %v2001
        %v2128 = vunpack.c.l.b16 %v2002
        %v2129 = vunpack.c.l.b16 %v2003
        %v2130 = vunpack.c.l.b16 %v2004
        %v2131 = vunpack.c.l.b16 %v2005
        %v2132 = vunpack.c.l.b16 %v2006
        %v2133 = vunpack.c.l.b16 %v2007
        %v2134 = vunpack.c.l.b16 %v2008
        %v2135 = vunpack.c.l.b16 %v2009
        %v2136 = vunpack.c.l.b16 %v2010
        %v2137 = vunpack.c.l.b16 %v2011
        %v2138 = vunpack.c.l.b16 %v2012
        %v2139 = vunpack.c.l.b16 %v2013
        %v2140 = vunpack.c.l.b16 %v2014
        %v2141 = vunpack.c.l.b16 %v2015
        %v2142 = vunpack.c.l.b16 %v2016
        %v2143 = vunpack.c.l.b16 %v2017
        %v2144 = vunpack.c.l.b16 %v2018
        %v2145 = vunpack.c.l.b16 %v2019
        %v2146 = vunpack.c.l.b16 %v2020
        %v2147 = vunpack.c.l.b16 %v2021
        %v2148 = vunpack.c.l.b16 %v2022
        %v2149 = vunpack.c.l.b16 %v2023
        %v2150 = vunpack.c.l.b16 %v2024
        %v2151 = vunpack.c.l.b16 %v2025
        %v2152 = vunpack.c.l.b16 %v2026
        %v2153 = vunpack.c.l.b16 %v2027
        %v2154 = vunpack.c.l.b16 %v2028
        %v2155 = vunpack.c.l.b16 %v2029
        %v2156 = vunpack.c.l.b16 %v2030
        %v2157 = vunpack.c.l.b16 %v2031
        %v2158 = vunpack.c.l.b16 %v2032
        %v2159 = vunpack.c.l.b16 %v2033
        %v2160 = vunpack.c.l.b16 %v2034
        %v2161 = vunpack.c.l.b16 %v2035
        %v2162 = vunpack.c.l.b16 %v2036
        %v2163 = vunpack.c.l.b16 %v2037
        %v2164 = vunpack.c.l.b16 %v2038
        %v2165 = vunpack.c.l.b16 %v2039
        %v2166 = vpack.c.b16 %v2113, %v2112
        %v2167 = vpack.c.b16 %v2114, %v2114
        %v2168 = vpack.c.b16 %v2116, %v2115
        %v2169 = vpack.c.b16 %v2117, %v2117
        %v2170 = vpack.c.b16 %v2119, %v2118
        %v2171 = vpack.c.b16 %v2120, %v2120
        %v2172 = vpack.c.b16 %v2122, %v2121
        %v2173 = vpack.c.b16 %v2123, %v2123
        %v2174 = vpack.c.b16 %v2125, %v2124
        %v2175 = vpack.c.b16 %v2126, %v2126
        %v2176 = vpack.c.b16 %v2128, %v2127
        %v2177 = vpack.c.b16 %v2129, %v2129
        %v2178 = vpack.c.b16 %v2131, %v2130
        %v2179 = vpack.c.b16 %v2132, %v2132
        %v2180 = vpack.c.b16 %v2134, %v2133
        %v2181 = vpack.c.b16 %v2135, %v2135
        %v2182 = vpack.c.b16 %v2137, %v2136
        %v2183 = vpack.c.b16 %v2138, %v2138
        %v2184 = vpack.c.b16 %v2140, %v2139
        %v2185 = vpack.c.b16 %v2141, %v2141
        %v2186 = vpack.c.b16 %v2143, %v2142
        %v2187 = vpack.c.b16 %v2144, %v2144
        %v2188 = vpack.c.b16 %v2146, %v2145
        %v2189 = vpack.c.b16 %v2147, %v2147
        %v2190 = vpack.c.b16 %v2149, %v2148
        %v2191 = vpack.c.b16 %v2150, %v2150
        %v2192 = vpack.c.b16 %v2152, %v2151
        %v2193 = vpack.c.b16 %v2153, %v2153
        %v2194 = vpack.c.b16 %v2155, %v2154
        %v2195 = vpack.c.b16 %v2156, %v2156
        %v2196 = vpack.c.b16 %v2158, %v2157
        %v2197 = vpack.c.b16 %v2159, %v2159
        %v2198 = vpack.c.b16 %v2161, %v2160
        %v2199 = vpack.c.b16 %v2162, %v2162
        %v2200 = vpack.c.b16 %v2164, %v2163
        %v2201 = vpack.c.b16 %v2165, %v2165
        %v2202 = vpack.c.b16 %v2114, %v2113
        %v2203 = vpack.c.b16 %v2117, %v2116
        %v2204 = vpack.c.b16 %v2120, %v2119
        %v2205 = vpack.c.b16 %v2123, %v2122
        %v2206 = vpack.c.b16 %v2126, %v2125
        %v2207 = vpack.c.b16 %v2129, %v2128
        %v2208 = vpack.c.b16 %v2132, %v2131
        %v2209 = vpack.c.b16 %v2135, %v2134
        %v2210 = vpack.c.b16 %v2138, %v2137
        %v2211 = vpack.c.b16 %v2141, %v2140
        %v2212 = vpack.c.b16 %v2144, %v2143
        %v2213 = vpack.c.b16 %v2147, %v2146
        %v2214 = vpack.c.b16 %v2150, %v2149
        %v2215 = vpack.c.b16 %v2153, %v2152
        %v2216 = vpack.c.b16 %v2156, %v2155
        %v2217 = vpack.c.b16 %v2159, %v2158
        %v2218 = vpack.c.b16 %v2162, %v2161
        %v2219 = vpack.c.b16 %v2165, %v2164
        %v2221 = vshrl.u32 %v2202, 16
        %v2223 = vrot.slane %v2221, 4
        %v2224 = vshll.u32 %v2202, 16
        %v2226 = vrot.slane %v2224, 5
        %v2227 = vor.u32 %v2223, %v2226
        %v2229 = vshrl.u32 %v2203, 16
        %v2231 = vrot.slane %v2229, 4
        %v2232 = vshll.u32 %v2203, 16
        %v2234 = vrot.slane %v2232, 5
        %v2235 = vor.u32 %v2231, %v2234
        %v2237 = vshrl.u32 %v2204, 16
        %v2239 = vrot.slane %v2237, 4
        %v2240 = vshll.u32 %v2204, 16
        %v2242 = vrot.slane %v2240, 5
        %v2243 = vor.u32 %v2239, %v2242
        %v2245 = vshrl.u32 %v2205, 16
        %v2247 = vrot.slane %v2245, 4
        %v2248 = vshll.u32 %v2205, 16
        %v2250 = vrot.slane %v2248, 5
        %v2251 = vor.u32 %v2247, %v2250
        %v2253 = vshrl.u32 %v2206, 16
        %v2255 = vrot.slane %v2253, 4
        %v2256 = vshll.u32 %v2206, 16
        %v2258 = vrot.slane %v2256, 5
        %v2259 = vor.u32 %v2255, %v2258
        %v2261 = vshrl.u32 %v2207, 16
        %v2263 = vrot.slane %v2261, 4
        %v2264 = vshll.u32 %v2207, 16
        %v2266 = vrot.slane %v2264, 5
        %v2267 = vor.u32 %v2263, %v2266
        %v2269 = vshrl.u32 %v2208, 16
        %v2271 = vrot.slane %v2269, 4
        %v2272 = vshll.u32 %v2208, 16
        %v2274 = vrot.slane %v2272, 5
        %v2275 = vor.u32 %v2271, %v2274
        %v2277 = vshrl.u32 %v2209, 16
        %v2279 = vrot.slane %v2277, 4
        %v2280 = vshll.u32 %v2209, 16
        %v2282 = vrot.slane %v2280, 5
        %v2283 = vor.u32 %v2279, %v2282
        %v2285 = vshrl.u32 %v2210, 16
        %v2287 = vrot.slane %v2285, 4
        %v2288 = vshll.u32 %v2210, 16
        %v2290 = vrot.slane %v2288, 5
        %v2291 = vor.u32 %v2287, %v2290
        %v2293 = vshrl.u32 %v2211, 16
        %v2295 = vrot.slane %v2293, 4
        %v2296 = vshll.u32 %v2211, 16
        %v2298 = vrot.slane %v2296, 5
        %v2299 = vor.u32 %v2295, %v2298
        %v2301 = vshrl.u32 %v2212, 16
        %v2303 = vrot.slane %v2301, 4
        %v2304 = vshll.u32 %v2212, 16
        %v2306 = vrot.slane %v2304, 5
        %v2307 = vor.u32 %v2303, %v2306
        %v2309 = vshrl.u32 %v2213, 16
        %v2311 = vrot.slane %v2309, 4
        %v2312 = vshll.u32 %v2213, 16
        %v2314 = vrot.slane %v2312, 5
        %v2315 = vor.u32 %v2311, %v2314
        %v2317 = vshrl.u32 %v2214, 16
        %v2319 = vrot.slane %v2317, 4
        %v2320 = vshll.u32 %v2214, 16
        %v2322 = vrot.slane %v2320, 5
        %v2323 = vor.u32 %v2319, %v2322
        %v2325 = vshrl.u32 %v2215, 16
        %v2327 = vrot.slane %v2325, 4
        %v2328 = vshll.u32 %v2215, 16
        %v2330 = vrot.slane %v2328, 5
        %v2331 = vor.u32 %v2327, %v2330
        %v2333 = vshrl.u32 %v2216, 16
        %v2335 = vrot.slane %v2333, 4
        %v2336 = vshll.u32 %v2216, 16
        %v2338 = vrot.slane %v2336, 5
        %v2339 = vor.u32 %v2335, %v2338
        %v2341 = vshrl.u32 %v2217, 16
        %v2343 = vrot.slane %v2341, 4
        %v2344 = vshll.u32 %v2217, 16
        %v2346 = vrot.slane %v2344, 5
        %v2347 = vor.u32 %v2343, %v2346
        %v2349 = vshrl.u32 %v2218, 16
        %v2351 = vrot.slane %v2349, 4
        %v2352 = vshll.u32 %v2218, 16
        %v2354 = vrot.slane %v2352, 5
        %v2355 = vor.u32 %v2351, %v2354
        %v2357 = vshrl.u32 %v2219, 16
        %v2359 = vrot.slane %v2357, 4
        %v2360 = vshll.u32 %v2219, 16
        %v2362 = vrot.slane %v2360, 5
        %v2363 = vor.u32 %v2359, %v2362
        %2364 = vrot.lane.b32.xlu0 %v2227, 64
        %v2365 = vpop.permute.xlu0 %2364
        %2366 = vrot.lane.b32.xlu0 %v2235, 64
        %v2367 = vpop.permute.xlu0 %2366
        %2368 = vrot.lane.b32.xlu0 %v2243, 64
        %v2369 = vpop.permute.xlu0 %2368
        %2370 = vrot.lane.b32.xlu0 %v2251, 64
        %v2371 = vpop.permute.xlu0 %2370
        %2372 = vrot.lane.b32.xlu0 %v2259, 64
        %v2373 = vpop.permute.xlu0 %2372
        %2374 = vrot.lane.b32.xlu0 %v2267, 64
        %v2375 = vpop.permute.xlu0 %2374
        %2376 = vrot.lane.b32.xlu0 %v2275, 64
        %v2377 = vpop.permute.xlu0 %2376
        %2378 = vrot.lane.b32.xlu0 %v2283, 64
        %v2379 = vpop.permute.xlu0 %2378
        %2380 = vrot.lane.b32.xlu0 %v2291, 64
        %v2381 = vpop.permute.xlu0 %2380
        %2382 = vrot.lane.b32.xlu0 %v2299, 64
        %v2383 = vpop.permute.xlu0 %2382
        %2384 = vrot.lane.b32.xlu0 %v2307, 64
        %v2385 = vpop.permute.xlu0 %2384
        %2386 = vrot.lane.b32.xlu0 %v2315, 64
        %v2387 = vpop.permute.xlu0 %2386
        %2388 = vrot.lane.b32.xlu0 %v2323, 64
        %v2389 = vpop.permute.xlu0 %2388
        %2390 = vrot.lane.b32.xlu0 %v2331, 64
        %v2391 = vpop.permute.xlu0 %2390
        %2392 = vrot.lane.b32.xlu0 %v2339, 64
        %v2393 = vpop.permute.xlu0 %2392
        %2394 = vrot.lane.b32.xlu0 %v2347, 64
        %v2395 = vpop.permute.xlu0 %2394
        %2396 = vrot.lane.b32.xlu0 %v2355, 64
        %v2397 = vpop.permute.xlu0 %2396
        %2398 = vrot.lane.b32.xlu0 %v2363, 64
        %v2399 = vpop.permute.xlu0 %2398
        %v2418 = vunpack.c.l.b16 %v2040
        %v2419 = vunpack.c.l.b16 %v2041
        %v2420 = vunpack.c.l.b16 %v2042
        %v2421 = vunpack.c.l.b16 %v2043
        %v2422 = vunpack.c.l.b16 %v2044
        %v2423 = vunpack.c.l.b16 %v2045
        %v2424 = vunpack.c.l.b16 %v2046
        %v2425 = vunpack.c.l.b16 %v2047
        %v2426 = vunpack.c.l.b16 %v2048
        %v2427 = vunpack.c.l.b16 %v2049
        %v2428 = vunpack.c.l.b16 %v2050
        %v2429 = vunpack.c.l.b16 %v2051
        %v2430 = vunpack.c.l.b16 %v2052
        %v2431 = vunpack.c.l.b16 %v2053
        %v2432 = vunpack.c.l.b16 %v2054
        %v2433 = vunpack.c.l.b16 %v2055
        %v2434 = vunpack.c.l.b16 %v2056
        %v2435 = vunpack.c.l.b16 %v2057
        %v2436 = vpack.c.b16 %v2418, %v2418
        %v2437 = vpack.c.b16 %v2419, %v2419
        %v2438 = vpack.c.b16 %v2420, %v2420
        %v2439 = vpack.c.b16 %v2421, %v2421
        %v2440 = vpack.c.b16 %v2422, %v2422
        %v2441 = vpack.c.b16 %v2423, %v2423
        %v2442 = vpack.c.b16 %v2424, %v2424
        %v2443 = vpack.c.b16 %v2425, %v2425
        %v2444 = vpack.c.b16 %v2426, %v2426
        %v2445 = vpack.c.b16 %v2427, %v2427
        %v2446 = vpack.c.b16 %v2428, %v2428
        %v2447 = vpack.c.b16 %v2429, %v2429
        %v2448 = vpack.c.b16 %v2430, %v2430
        %v2449 = vpack.c.b16 %v2431, %v2431
        %v2450 = vpack.c.b16 %v2432, %v2432
        %v2451 = vpack.c.b16 %v2433, %v2433
        %v2452 = vpack.c.b16 %v2434, %v2434
        %v2453 = vpack.c.b16 %v2435, %v2435
        %vm2454 = vcmask 1042432
        %v2455 = vrot.slane %v2202, 5
        %v2456 = vrot.slane %v2436, 5
        %v2457 = vsel %vm2454, %v2455, %v2456
        %v2458 = vrot.slane %v2203, 5
        %v2459 = vrot.slane %v2437, 5
        %v2460 = vsel %vm2454, %v2458, %v2459
        %v2461 = vrot.slane %v2204, 5
        %v2462 = vrot.slane %v2438, 5
        %v2463 = vsel %vm2454, %v2461, %v2462
        %v2464 = vrot.slane %v2205, 5
        %v2465 = vrot.slane %v2439, 5
        %v2466 = vsel %vm2454, %v2464, %v2465
        %v2467 = vrot.slane %v2206, 5
        %v2468 = vrot.slane %v2440, 5
        %v2469 = vsel %vm2454, %v2467, %v2468
        %v2470 = vrot.slane %v2207, 5
        %v2471 = vrot.slane %v2441, 5
        %v2472 = vsel %vm2454, %v2470, %v2471
        %v2473 = vrot.slane %v2208, 5
        %v2474 = vrot.slane %v2442, 5
        %v2475 = vsel %vm2454, %v2473, %v2474
        %v2476 = vrot.slane %v2209, 5
        %v2477 = vrot.slane %v2443, 5
        %v2478 = vsel %vm2454, %v2476, %v2477
        %v2479 = vrot.slane %v2210, 5
        %v2480 = vrot.slane %v2444, 5
        %v2481 = vsel %vm2454, %v2479, %v2480
        %v2482 = vrot.slane %v2211, 5
        %v2483 = vrot.slane %v2445, 5
        %v2484 = vsel %vm2454, %v2482, %v2483
        %v2485 = vrot.slane %v2212, 5
        %v2486 = vrot.slane %v2446, 5
        %v2487 = vsel %vm2454, %v2485, %v2486
        %v2488 = vrot.slane %v2213, 5
        %v2489 = vrot.slane %v2447, 5
        %v2490 = vsel %vm2454, %v2488, %v2489
        %v2491 = vrot.slane %v2214, 5
        %v2492 = vrot.slane %v2448, 5
        %v2493 = vsel %vm2454, %v2491, %v2492
        %v2494 = vrot.slane %v2215, 5
        %v2495 = vrot.slane %v2449, 5
        %v2496 = vsel %vm2454, %v2494, %v2495
        %v2497 = vrot.slane %v2216, 5
        %v2498 = vrot.slane %v2450, 5
        %v2499 = vsel %vm2454, %v2497, %v2498
        %v2500 = vrot.slane %v2217, 5
        %v2501 = vrot.slane %v2451, 5
        %v2502 = vsel %vm2454, %v2500, %v2501
        %v2503 = vrot.slane %v2218, 5
        %v2504 = vrot.slane %v2452, 5
        %v2505 = vsel %vm2454, %v2503, %v2504
        %v2506 = vrot.slane %v2219, 5
        %v2507 = vrot.slane %v2453, 5
        %v2508 = vsel %vm2454, %v2506, %v2507
        %vm2509 = vcmask 523264
        %v2512 = vsel %vm2509, %v2166, %v2365
        %v2514 = vsel %vm2509, %v2167, %v2365
        %v2517 = vsel %vm2509, %v2168, %v2367
        %v2519 = vsel %vm2509, %v2169, %v2367
        %v2522 = vsel %vm2509, %v2170, %v2369
        %v2524 = vsel %vm2509, %v2171, %v2369
        %v2527 = vsel %vm2509, %v2172, %v2371
        %v2529 = vsel %vm2509, %v2173, %v2371
        %v2532 = vsel %vm2509, %v2174, %v2373
        %v2534 = vsel %vm2509, %v2175, %v2373
        %v2537 = vsel %vm2509, %v2176, %v2375
        %v2539 = vsel %vm2509, %v2177, %v2375
        %v2542 = vsel %vm2509, %v2178, %v2377
        %v2544 = vsel %vm2509, %v2179, %v2377
        %v2547 = vsel %vm2509, %v2180, %v2379
        %v2549 = vsel %vm2509, %v2181, %v2379
        %v2552 = vsel %vm2509, %v2182, %v2381
        %v2554 = vsel %vm2509, %v2183, %v2381
        %v2557 = vsel %vm2509, %v2184, %v2383
        %v2559 = vsel %vm2509, %v2185, %v2383
        %v2562 = vsel %vm2509, %v2186, %v2385
        %v2564 = vsel %vm2509, %v2187, %v2385
        %v2567 = vsel %vm2509, %v2188, %v2387
        %v2569 = vsel %vm2509, %v2189, %v2387
        %v2572 = vsel %vm2509, %v2190, %v2389
        %v2574 = vsel %vm2509, %v2191, %v2389
        %v2577 = vsel %vm2509, %v2192, %v2391
        %v2579 = vsel %vm2509, %v2193, %v2391
        %v2582 = vsel %vm2509, %v2194, %v2393
        %v2584 = vsel %vm2509, %v2195, %v2393
        %v2587 = vsel %vm2509, %v2196, %v2395
        %v2589 = vsel %vm2509, %v2197, %v2395
        %v2592 = vsel %vm2509, %v2198, %v2397
        %v2594 = vsel %vm2509, %v2199, %v2397
        %v2597 = vsel %vm2509, %v2200, %v2399
        %v2599 = vsel %vm2509, %v2201, %v2399
        %vm2600 = vsmask.f32 4352
        %v2601 = vshrl.u32 %v2512, 16
        %v2603 = vrot.slane %v2601, 3
        %v2604 = vshll.u32 %v2512, 16
        %v2606 = vrot.slane %v2604, 4
        %v2607 = vor.u32 %v2603, %v2606
        %v2608 = vshrl.u32 %v2514, 16
        %v2610 = vrot.slane %v2608, 3
        %v2611 = vshll.u32 %v2514, 16
        %v2613 = vrot.slane %v2611, 4
        %v2614 = vor.u32 %v2610, %v2613
        %v2615 = vsel %vm2600, %v2607, %v2614
        %v2617 = vshrl.u32 %v2455, 16
        %v2619 = vrot.slane %v2617, 3
        %v2620 = vshll.u32 %v2455, 16
        %v2622 = vrot.slane %v2620, 4
        %v2623 = vor.u32 %v2619, %v2622
        %v2625 = vshrl.u32 %v2457, 16
        %v2627 = vrot.slane %v2625, 3
        %v2628 = vshll.u32 %v2457, 16
        %v2630 = vrot.slane %v2628, 4
        %v2631 = vor.u32 %v2627, %v2630
        %v2632 = vsel %vm2600, %v2623, %v2631
        %v2633 = vshrl.u32 %v2517, 16
        %v2635 = vrot.slane %v2633, 3
        %v2636 = vshll.u32 %v2517, 16
        %v2638 = vrot.slane %v2636, 4
        %v2639 = vor.u32 %v2635, %v2638
        %v2640 = vshrl.u32 %v2519, 16
        %v2642 = vrot.slane %v2640, 3
        %v2643 = vshll.u32 %v2519, 16
        %v2645 = vrot.slane %v2643, 4
        %v2646 = vor.u32 %v2642, %v2645
        %v2647 = vsel %vm2600, %v2639, %v2646
        %v2649 = vshrl.u32 %v2458, 16
        %v2651 = vrot.slane %v2649, 3
        %v2652 = vshll.u32 %v2458, 16
        %v2654 = vrot.slane %v2652, 4
        %v2655 = vor.u32 %v2651, %v2654
        %v2657 = vshrl.u32 %v2460, 16
        %v2659 = vrot.slane %v2657, 3
        %v2660 = vshll.u32 %v2460, 16
        %v2662 = vrot.slane %v2660, 4
        %v2663 = vor.u32 %v2659, %v2662
        %v2664 = vsel %vm2600, %v2655, %v2663
        %v2665 = vshrl.u32 %v2522, 16
        %v2667 = vrot.slane %v2665, 3
        %v2668 = vshll.u32 %v2522, 16
        %v2670 = vrot.slane %v2668, 4
        %v2671 = vor.u32 %v2667, %v2670
        %v2672 = vshrl.u32 %v2524, 16
        %v2674 = vrot.slane %v2672, 3
        %v2675 = vshll.u32 %v2524, 16
        %v2677 = vrot.slane %v2675, 4
        %v2678 = vor.u32 %v2674, %v2677
        %v2679 = vsel %vm2600, %v2671, %v2678
        %v2681 = vshrl.u32 %v2461, 16
        %v2683 = vrot.slane %v2681, 3
        %v2684 = vshll.u32 %v2461, 16
        %v2686 = vrot.slane %v2684, 4
        %v2687 = vor.u32 %v2683, %v2686
        %v2689 = vshrl.u32 %v2463, 16
        %v2691 = vrot.slane %v2689, 3
        %v2692 = vshll.u32 %v2463, 16
        %v2694 = vrot.slane %v2692, 4
        %v2695 = vor.u32 %v2691, %v2694
        %v2696 = vsel %vm2600, %v2687, %v2695
        %v2697 = vshrl.u32 %v2527, 16
        %v2699 = vrot.slane %v2697, 3
        %v2700 = vshll.u32 %v2527, 16
        %v2702 = vrot.slane %v2700, 4
        %v2703 = vor.u32 %v2699, %v2702
        %v2704 = vshrl.u32 %v2529, 16
        %v2706 = vrot.slane %v2704, 3
        %v2707 = vshll.u32 %v2529, 16
        %v2709 = vrot.slane %v2707, 4
        %v2710 = vor.u32 %v2706, %v2709
        %v2711 = vsel %vm2600, %v2703, %v2710
        %v2713 = vshrl.u32 %v2464, 16
        %v2715 = vrot.slane %v2713, 3
        %v2716 = vshll.u32 %v2464, 16
        %v2718 = vrot.slane %v2716, 4
        %v2719 = vor.u32 %v2715, %v2718
        %v2721 = vshrl.u32 %v2466, 16
        %v2723 = vrot.slane %v2721, 3
        %v2724 = vshll.u32 %v2466, 16
        %v2726 = vrot.slane %v2724, 4
        %v2727 = vor.u32 %v2723, %v2726
        %v2728 = vsel %vm2600, %v2719, %v2727
        %v2729 = vshrl.u32 %v2532, 16
        %v2731 = vrot.slane %v2729, 3
        %v2732 = vshll.u32 %v2532, 16
        %v2734 = vrot.slane %v2732, 4
        %v2735 = vor.u32 %v2731, %v2734
        %v2736 = vshrl.u32 %v2534, 16
        %v2738 = vrot.slane %v2736, 3
        %v2739 = vshll.u32 %v2534, 16
        %v2741 = vrot.slane %v2739, 4
        %v2742 = vor.u32 %v2738, %v2741
        %v2743 = vsel %vm2600, %v2735, %v2742
        %v2745 = vshrl.u32 %v2467, 16
        %v2747 = vrot.slane %v2745, 3
        %v2748 = vshll.u32 %v2467, 16
        %v2750 = vrot.slane %v2748, 4
        %v2751 = vor.u32 %v2747, %v2750
        %v2753 = vshrl.u32 %v2469, 16
        %v2755 = vrot.slane %v2753, 3
        %v2756 = vshll.u32 %v2469, 16
        %v2758 = vrot.slane %v2756, 4
        %v2759 = vor.u32 %v2755, %v2758
        %v2760 = vsel %vm2600, %v2751, %v2759
        %v2761 = vshrl.u32 %v2537, 16
        %v2763 = vrot.slane %v2761, 3
        %v2764 = vshll.u32 %v2537, 16
        %v2766 = vrot.slane %v2764, 4
        %v2767 = vor.u32 %v2763, %v2766
        %v2768 = vshrl.u32 %v2539, 16
        %v2770 = vrot.slane %v2768, 3
        %v2771 = vshll.u32 %v2539, 16
        %v2773 = vrot.slane %v2771, 4
        %v2774 = vor.u32 %v2770, %v2773
        %v2775 = vsel %vm2600, %v2767, %v2774
        %v2777 = vshrl.u32 %v2470, 16
        %v2779 = vrot.slane %v2777, 3
        %v2780 = vshll.u32 %v2470, 16
        %v2782 = vrot.slane %v2780, 4
        %v2783 = vor.u32 %v2779, %v2782
        %v2785 = vshrl.u32 %v2472, 16
        %v2787 = vrot.slane %v2785, 3
        %v2788 = vshll.u32 %v2472, 16
        %v2790 = vrot.slane %v2788, 4
        %v2791 = vor.u32 %v2787, %v2790
        %v2792 = vsel %vm2600, %v2783, %v2791
        %v2793 = vshrl.u32 %v2542, 16
        %v2795 = vrot.slane %v2793, 3
        %v2796 = vshll.u32 %v2542, 16
        %v2798 = vrot.slane %v2796, 4
        %v2799 = vor.u32 %v2795, %v2798
        %v2800 = vshrl.u32 %v2544, 16
        %v2802 = vrot.slane %v2800, 3
        %v2803 = vshll.u32 %v2544, 16
        %v2805 = vrot.slane %v2803, 4
        %v2806 = vor.u32 %v2802, %v2805
        %v2807 = vsel %vm2600, %v2799, %v2806
        %v2809 = vshrl.u32 %v2473, 16
        %v2811 = vrot.slane %v2809, 3
        %v2812 = vshll.u32 %v2473, 16
        %v2814 = vrot.slane %v2812, 4
        %v2815 = vor.u32 %v2811, %v2814
        %v2817 = vshrl.u32 %v2475, 16
        %v2819 = vrot.slane %v2817, 3
        %v2820 = vshll.u32 %v2475, 16
        %v2822 = vrot.slane %v2820, 4
        %v2823 = vor.u32 %v2819, %v2822
        %v2824 = vsel %vm2600, %v2815, %v2823
        %v2825 = vshrl.u32 %v2547, 16
        %v2827 = vrot.slane %v2825, 3
        %v2828 = vshll.u32 %v2547, 16
        %v2830 = vrot.slane %v2828, 4
        %v2831 = vor.u32 %v2827, %v2830
        %v2832 = vshrl.u32 %v2549, 16
        %v2834 = vrot.slane %v2832, 3
        %v2835 = vshll.u32 %v2549, 16
        %v2837 = vrot.slane %v2835, 4
        %v2838 = vor.u32 %v2834, %v2837
        %v2839 = vsel %vm2600, %v2831, %v2838
        %v2841 = vshrl.u32 %v2476, 16
        %v2843 = vrot.slane %v2841, 3
        %v2844 = vshll.u32 %v2476, 16
        %v2846 = vrot.slane %v2844, 4
        %v2847 = vor.u32 %v2843, %v2846
        %v2849 = vshrl.u32 %v2478, 16
        %v2851 = vrot.slane %v2849, 3
        %v2852 = vshll.u32 %v2478, 16
        %v2854 = vrot.slane %v2852, 4
        %v2855 = vor.u32 %v2851, %v2854
        %v2856 = vsel %vm2600, %v2847, %v2855
        %v2857 = vshrl.u32 %v2552, 16
        %v2859 = vrot.slane %v2857, 3
        %v2860 = vshll.u32 %v2552, 16
        %v2862 = vrot.slane %v2860, 4
        %v2863 = vor.u32 %v2859, %v2862
        %v2864 = vshrl.u32 %v2554, 16
        %v2866 = vrot.slane %v2864, 3
        %v2867 = vshll.u32 %v2554, 16
        %v2869 = vrot.slane %v2867, 4
        %v2870 = vor.u32 %v2866, %v2869
        %v2871 = vsel %vm2600, %v2863, %v2870
        %v2873 = vshrl.u32 %v2479, 16
        %v2875 = vrot.slane %v2873, 3
        %v2876 = vshll.u32 %v2479, 16
        %v2878 = vrot.slane %v2876, 4
        %v2879 = vor.u32 %v2875, %v2878
        %v2881 = vshrl.u32 %v2481, 16
        %v2883 = vrot.slane %v2881, 3
        %v2884 = vshll.u32 %v2481, 16
        %v2886 = vrot.slane %v2884, 4
        %v2887 = vor.u32 %v2883, %v2886
        %v2888 = vsel %vm2600, %v2879, %v2887
        %v2889 = vshrl.u32 %v2557, 16
        %v2891 = vrot.slane %v2889, 3
        %v2892 = vshll.u32 %v2557, 16
        %v2894 = vrot.slane %v2892, 4
        %v2895 = vor.u32 %v2891, %v2894
        %v2896 = vshrl.u32 %v2559, 16
        %v2898 = vrot.slane %v2896, 3
        %v2899 = vshll.u32 %v2559, 16
        %v2901 = vrot.slane %v2899, 4
        %v2902 = vor.u32 %v2898, %v2901
        %v2903 = vsel %vm2600, %v2895, %v2902
        %v2905 = vshrl.u32 %v2482, 16
        %v2907 = vrot.slane %v2905, 3
        %v2908 = vshll.u32 %v2482, 16
        %v2910 = vrot.slane %v2908, 4
        %v2911 = vor.u32 %v2907, %v2910
        %v2913 = vshrl.u32 %v2484, 16
        %v2915 = vrot.slane %v2913, 3
        %v2916 = vshll.u32 %v2484, 16
        %v2918 = vrot.slane %v2916, 4
        %v2919 = vor.u32 %v2915, %v2918
        %v2920 = vsel %vm2600, %v2911, %v2919
        %v2921 = vshrl.u32 %v2562, 16
        %v2923 = vrot.slane %v2921, 3
        %v2924 = vshll.u32 %v2562, 16
        %v2926 = vrot.slane %v2924, 4
        %v2927 = vor.u32 %v2923, %v2926
        %v2928 = vshrl.u32 %v2564, 16
        %v2930 = vrot.slane %v2928, 3
        %v2931 = vshll.u32 %v2564, 16
        %v2933 = vrot.slane %v2931, 4
        %v2934 = vor.u32 %v2930, %v2933
        %v2935 = vsel %vm2600, %v2927, %v2934
        %v2937 = vshrl.u32 %v2485, 16
        %v2939 = vrot.slane %v2937, 3
        %v2940 = vshll.u32 %v2485, 16
        %v2942 = vrot.slane %v2940, 4
        %v2943 = vor.u32 %v2939, %v2942
        %v2945 = vshrl.u32 %v2487, 16
        %v2947 = vrot.slane %v2945, 3
        %v2948 = vshll.u32 %v2487, 16
        %v2950 = vrot.slane %v2948, 4
        %v2951 = vor.u32 %v2947, %v2950
        %v2952 = vsel %vm2600, %v2943, %v2951
        %v2953 = vshrl.u32 %v2567, 16
        %v2955 = vrot.slane %v2953, 3
        %v2956 = vshll.u32 %v2567, 16
        %v2958 = vrot.slane %v2956, 4
        %v2959 = vor.u32 %v2955, %v2958
        %v2960 = vshrl.u32 %v2569, 16
        %v2962 = vrot.slane %v2960, 3
        %v2963 = vshll.u32 %v2569, 16
        %v2965 = vrot.slane %v2963, 4
        %v2966 = vor.u32 %v2962, %v2965
        %v2967 = vsel %vm2600, %v2959, %v2966
        %v2969 = vshrl.u32 %v2488, 16
        %v2971 = vrot.slane %v2969, 3
        %v2972 = vshll.u32 %v2488, 16
        %v2974 = vrot.slane %v2972, 4
        %v2975 = vor.u32 %v2971, %v2974
        %v2977 = vshrl.u32 %v2490, 16
        %v2979 = vrot.slane %v2977, 3
        %v2980 = vshll.u32 %v2490, 16
        %v2982 = vrot.slane %v2980, 4
        %v2983 = vor.u32 %v2979, %v2982
        %v2984 = vsel %vm2600, %v2975, %v2983
        %v2985 = vshrl.u32 %v2572, 16
        %v2987 = vrot.slane %v2985, 3
        %v2988 = vshll.u32 %v2572, 16
        %v2990 = vrot.slane %v2988, 4
        %v2991 = vor.u32 %v2987, %v2990
        %v2992 = vshrl.u32 %v2574, 16
        %v2994 = vrot.slane %v2992, 3
        %v2995 = vshll.u32 %v2574, 16
        %v2997 = vrot.slane %v2995, 4
        %v2998 = vor.u32 %v2994, %v2997
        %v2999 = vsel %vm2600, %v2991, %v2998
        %v3001 = vshrl.u32 %v2491, 16
        %v3003 = vrot.slane %v3001, 3
        %v3004 = vshll.u32 %v2491, 16
        %v3006 = vrot.slane %v3004, 4
        %v3007 = vor.u32 %v3003, %v3006
        %v3009 = vshrl.u32 %v2493, 16
        %v3011 = vrot.slane %v3009, 3
        %v3012 = vshll.u32 %v2493, 16
        %v3014 = vrot.slane %v3012, 4
        %v3015 = vor.u32 %v3011, %v3014
        %v3016 = vsel %vm2600, %v3007, %v3015
        %v3017 = vshrl.u32 %v2577, 16
        %v3019 = vrot.slane %v3017, 3
        %v3020 = vshll.u32 %v2577, 16
        %v3022 = vrot.slane %v3020, 4
        %v3023 = vor.u32 %v3019, %v3022
        %v3024 = vshrl.u32 %v2579, 16
        %v3026 = vrot.slane %v3024, 3
        %v3027 = vshll.u32 %v2579, 16
        %v3029 = vrot.slane %v3027, 4
        %v3030 = vor.u32 %v3026, %v3029
        %v3031 = vsel %vm2600, %v3023, %v3030
        %v3033 = vshrl.u32 %v2494, 16
        %v3035 = vrot.slane %v3033, 3
        %v3036 = vshll.u32 %v2494, 16
        %v3038 = vrot.slane %v3036, 4
        %v3039 = vor.u32 %v3035, %v3038
        %v3041 = vshrl.u32 %v2496, 16
        %v3043 = vrot.slane %v3041, 3
        %v3044 = vshll.u32 %v2496, 16
        %v3046 = vrot.slane %v3044, 4
        %v3047 = vor.u32 %v3043, %v3046
        %v3048 = vsel %vm2600, %v3039, %v3047
        %v3049 = vshrl.u32 %v2582, 16
        %v3051 = vrot.slane %v3049, 3
        %v3052 = vshll.u32 %v2582, 16
        %v3054 = vrot.slane %v3052, 4
        %v3055 = vor.u32 %v3051, %v3054
        %v3056 = vshrl.u32 %v2584, 16
        %v3058 = vrot.slane %v3056, 3
        %v3059 = vshll.u32 %v2584, 16
        %v3061 = vrot.slane %v3059, 4
        %v3062 = vor.u32 %v3058, %v3061
        %v3063 = vsel %vm2600, %v3055, %v3062
        %v3065 = vshrl.u32 %v2497, 16
        %v3067 = vrot.slane %v3065, 3
        %v3068 = vshll.u32 %v2497, 16
        %v3070 = vrot.slane %v3068, 4
        %v3071 = vor.u32 %v3067, %v3070
        %v3073 = vshrl.u32 %v2499, 16
        %v3075 = vrot.slane %v3073, 3
        %v3076 = vshll.u32 %v2499, 16
        %v3078 = vrot.slane %v3076, 4
        %v3079 = vor.u32 %v3075, %v3078
        %v3080 = vsel %vm2600, %v3071, %v3079
        %v3081 = vshrl.u32 %v2587, 16
        %v3083 = vrot.slane %v3081, 3
        %v3084 = vshll.u32 %v2587, 16
        %v3086 = vrot.slane %v3084, 4
        %v3087 = vor.u32 %v3083, %v3086
        %v3088 = vshrl.u32 %v2589, 16
        %v3090 = vrot.slane %v3088, 3
        %v3091 = vshll.u32 %v2589, 16
        %v3093 = vrot.slane %v3091, 4
        %v3094 = vor.u32 %v3090, %v3093
        %v3095 = vsel %vm2600, %v3087, %v3094
        %v3097 = vshrl.u32 %v2500, 16
        %v3099 = vrot.slane %v3097, 3
        %v3100 = vshll.u32 %v2500, 16
        %v3102 = vrot.slane %v3100, 4
        %v3103 = vor.u32 %v3099, %v3102
        %v3105 = vshrl.u32 %v2502, 16
        %v3107 = vrot.slane %v3105, 3
        %v3108 = vshll.u32 %v2502, 16
        %v3110 = vrot.slane %v3108, 4
        %v3111 = vor.u32 %v3107, %v3110
        %v3112 = vsel %vm2600, %v3103, %v3111
        %v3113 = vshrl.u32 %v2592, 16
        %v3115 = vrot.slane %v3113, 3
        %v3116 = vshll.u32 %v2592, 16
        %v3118 = vrot.slane %v3116, 4
        %v3119 = vor.u32 %v3115, %v3118
        %v3120 = vshrl.u32 %v2594, 16
        %v3122 = vrot.slane %v3120, 3
        %v3123 = vshll.u32 %v2594, 16
        %v3125 = vrot.slane %v3123, 4
        %v3126 = vor.u32 %v3122, %v3125
        %v3127 = vsel %vm2600, %v3119, %v3126
        %v3129 = vshrl.u32 %v2503, 16
        %v3131 = vrot.slane %v3129, 3
        %v3132 = vshll.u32 %v2503, 16
        %v3134 = vrot.slane %v3132, 4
        %v3135 = vor.u32 %v3131, %v3134
        %v3137 = vshrl.u32 %v2505, 16
        %v3139 = vrot.slane %v3137, 3
        %v3140 = vshll.u32 %v2505, 16
        %v3142 = vrot.slane %v3140, 4
        %v3143 = vor.u32 %v3139, %v3142
        %v3144 = vsel %vm2600, %v3135, %v3143
        %v3145 = vshrl.u32 %v2597, 16
        %v3147 = vrot.slane %v3145, 3
        %v3148 = vshll.u32 %v2597, 16
        %v3150 = vrot.slane %v3148, 4
        %v3151 = vor.u32 %v3147, %v3150
        %v3152 = vshrl.u32 %v2599, 16
        %v3154 = vrot.slane %v3152, 3
        %v3155 = vshll.u32 %v2599, 16
        %v3157 = vrot.slane %v3155, 4
        %v3158 = vor.u32 %v3154, %v3157
        %v3159 = vsel %vm2600, %v3151, %v3158
        %v3161 = vshrl.u32 %v2506, 16
        %v3163 = vrot.slane %v3161, 3
        %v3164 = vshll.u32 %v2506, 16
        %v3166 = vrot.slane %v3164, 4
        %v3167 = vor.u32 %v3163, %v3166
        %v3169 = vshrl.u32 %v2508, 16
        %v3171 = vrot.slane %v3169, 3
        %v3172 = vshll.u32 %v2508, 16
        %v3174 = vrot.slane %v3172, 4
        %v3175 = vor.u32 %v3171, %v3174
        %v3176 = vsel %vm2600, %v3167, %v3175
        %v3195 = vld [vmem:[%s4] sm:$0xf]
        %v3196 = vld [vmem:[%s4 + $0x4] sm:$0xf]
        %v3197 = vld [vmem:[%s4 + $0x8] sm:$0xf]
        %v3198 = vld [vmem:[%s4 + $0xc] sm:$0xf]
        %v3199 = vld [vmem:[%s4 + $0x10] sm:$0xf]
        %v3200 = vld [vmem:[%s4 + $0x14] sm:$0xf]
        %v3201 = vld [vmem:[%s4 + $0x18] sm:$0xf]
        %v3202 = vld [vmem:[%s4 + $0x1c] sm:$0xf]
        %v3203 = vld [vmem:[%s4 + $0x20] sm:$0xf]
        %v3204 = vld [vmem:[%s4 + $0x24] sm:$0xf]
        %v3205 = vld [vmem:[%s4 + $0x28] sm:$0xf]
        %v3206 = vld [vmem:[%s4 + $0x2c] sm:$0xf]
        %v3207 = vld [vmem:[%s4 + $0x30] sm:$0xf]
        %v3208 = vld [vmem:[%s4 + $0x34] sm:$0xf]
        %v3209 = vld [vmem:[%s4 + $0x38] sm:$0xf]
        %v3210 = vld [vmem:[%s4 + $0x3c] sm:$0xf]
        %v3211 = vld [vmem:[%s4 + $0x40] sm:$0xf]
        %v3212 = vld [vmem:[%s4 + $0x44] sm:$0xf]
        %v3213 = vld [vmem:[%s4 + $0x48] sm:$0xf]
        %v3214 = vld [vmem:[%s4 + $0x4c] sm:$0xf]
        %v3215 = vld [vmem:[%s4 + $0x50] sm:$0xf]
        %v3216 = vld [vmem:[%s4 + $0x54] sm:$0xf]
        %v3217 = vld [vmem:[%s4 + $0x58] sm:$0xf]
        %v3218 = vld [vmem:[%s4 + $0x5c] sm:$0xf]
        %v3220 = vlaneseq
        %v3221 = vshrl.u32 %v3220, 7
        %v3222 = vsub.s32 0, %v3221
        %v3223 = vrot.slane %v1985, %v3222
        %v3249 = vunpack.c.l.b16 %v3195
        %v3250 = vunpack.c.l.b16 %v3196
        %v3251 = vunpack.c.l.b16 %v3197
        %v3252 = vunpack.c.l.b16 %v3198
        %v3253 = vunpack.c.l.b16 %v3199
        %v3254 = vunpack.c.l.b16 %v3200
        %v3255 = vunpack.c.l.b16 %v3201
        %v3256 = vunpack.c.l.b16 %v3202
        %v3257 = vunpack.c.l.b16 %v3203
        %v3258 = vunpack.c.l.b16 %v3204
        %v3259 = vunpack.c.l.b16 %v3205
        %v3260 = vunpack.c.l.b16 %v3206
        %v3261 = vunpack.c.l.b16 %v3207
        %v3262 = vunpack.c.l.b16 %v3208
        %v3263 = vunpack.c.l.b16 %v3209
        %v3264 = vunpack.c.l.b16 %v3210
        %v3265 = vunpack.c.l.b16 %v3211
        %v3266 = vunpack.c.l.b16 %v3212
        %v3267 = vunpack.c.l.b16 %v3213
        %v3268 = vunpack.c.l.b16 %v3214
        %v3269 = vunpack.c.l.b16 %v3215
        %v3270 = vunpack.c.l.b16 %v3216
        %v3271 = vunpack.c.l.b16 %v3217
        %v3272 = vunpack.c.l.b16 %v3218
        %v3273 = vpack.c.b16 %v3250, %v3249
        %v3274 = vpack.c.b16 %v3252, %v3251
        %v3275 = vpack.c.b16 %v3254, %v3253
        %v3276 = vpack.c.b16 %v3256, %v3255
        %v3277 = vpack.c.b16 %v3258, %v3257
        %v3278 = vpack.c.b16 %v3260, %v3259
        %v3279 = vpack.c.b16 %v3262, %v3261
        %v3280 = vpack.c.b16 %v3264, %v3263
        %v3281 = vpack.c.b16 %v3266, %v3265
        %v3282 = vpack.c.b16 %v3268, %v3267
        %v3283 = vpack.c.b16 %v3270, %v3269
        %v3284 = vpack.c.b16 %v3272, %v3271
        %v3298 = vsel %vm2509, %v2632, 0
        %v3301 = vsel %vm2509, %v2664, 0
        %v3304 = vsel %vm2509, %v2696, 0
        %v3307 = vsel %vm2509, %v2728, 0
        %v3310 = vsel %vm2509, %v2760, 0
        %v3313 = vsel %vm2509, %v2792, 0
        %v3316 = vsel %vm2509, %v2824, 0
        %v3319 = vsel %vm2509, %v2856, 0
        %v3322 = vsel %vm2509, %v2888, 0
        %v3325 = vsel %vm2509, %v2920, 0
        %v3328 = vsel %vm2509, %v2952, 0
        %v3331 = vsel %vm2509, %v2984, 0
        %v3334 = vsel %vm2509, %v3016, 0
        %v3337 = vsel %vm2509, %v3048, 0
        %v3340 = vsel %vm2509, %v3080, 0
        %v3343 = vsel %vm2509, %v3112, 0
        %3345 = vmatprep.subr.bf16.mxu0 0
        %3346 = vmatpush1.bf16.msra.mxu0 %v3280
        %3347 = vmatprep.subr.bf16.mxu0 0
        %3348 = vmatpush1.bf16.msra.mxu0 %v3279
        %3349 = vmatprep.subr.bf16.mxu0 0
        %3350 = vmatpush1.bf16.msra.mxu0 %v3278
        %3351 = vmatprep.subr.bf16.mxu0 0
        %3352 = vmatpush1.bf16.msra.mxu0 %v3277
        %3353 = vmatprep.subr.bf16.mxu0 0
        %3354 = vmatpush1.bf16.msra.mxu0 %v3276
        %3355 = vmatprep.subr.bf16.mxu0 0
        %3356 = vmatpush1.bf16.msra.mxu0 %v3275
        %3357 = vmatprep.subr.bf16.mxu0 0
        %3358 = vmatpush1.bf16.msra.mxu0 %v3274
        %3359 = vmatprep.subr.bf16.mxu0 0
        %3360 = vmatpush1.bf16.msra.mxu0 %v3273
        %3361 = vmatprep.subr.bf16.mxu0 0
        %3362 = vmatpush2.bf16.msra.mxu0 0
        %3363 = vmatprep.subr.bf16.mxu0 0
        %3364 = vmatpush2.bf16.msra.mxu0 0
        %3365 = vmatprep.subr.bf16.mxu0 0
        %3366 = vmatpush2.bf16.msra.mxu0 0
        %3367 = vmatprep.subr.bf16.mxu0 0
        %3368 = vmatpush2.bf16.msra.mxu0 0
        %3369 = vmatprep.subr.bf16.mxu0 0
        %3370 = vmatpush2.bf16.msra.mxu0 %v3284
        %3371 = vmatprep.subr.bf16.mxu0 0
        %3372 = vmatpush2.bf16.msra.mxu0 %v3283
        %3373 = vmatprep.subr.bf16.mxu0 0
        %3374 = vmatpush2.bf16.msra.mxu0 %v3282
        %3375 = vmatprep.subr.bf16.mxu0 0
        %3376 = vmatpush2.bf16.msra.mxu0 %v3281
        %3377 = vmatprep.mubr.bf16.mxu0 %v3298
        %3378 = vmatmul.mubr.bf16.gmra.mxu0 %v2615
        %v3379 = vpop.f32.mrf.mxu0
        %v3380 = vadd.f32 %v3223, %v3379
        %v3381 = vpop.f32.mrf.mxu0
        %v3382 = vpop.f32.mrf.mxu0
        %v3383 = vadd.f32 %v3223, %v3382
        %v3384 = vpop.f32.mrf.mxu0
        %3385 = vmatprep.mubr.bf16.mxu0 %v3301
        %3386 = vmatmul.mubr.bf16.gmra.mxu0 %v2647
        %v3387 = vpop.f32.mrf.mxu0
        %v3388 = vadd.f32 %v3223, %v3387
        %v3389 = vpop.f32.mrf.mxu0
        %v3390 = vpop.f32.mrf.mxu0
        %v3391 = vadd.f32 %v3223, %v3390
        %v3392 = vpop.f32.mrf.mxu0
        %3393 = vmatprep.mubr.bf16.mxu0 %v3304
        %3394 = vmatmul.mubr.bf16.gmra.mxu0 %v2679
        %v3395 = vpop.f32.mrf.mxu0
        %v3396 = vadd.f32 %v3223, %v3395
        %v3397 = vpop.f32.mrf.mxu0
        %v3398 = vpop.f32.mrf.mxu0
        %v3399 = vadd.f32 %v3223, %v3398
        %v3400 = vpop.f32.mrf.mxu0
        %3401 = vmatprep.mubr.bf16.mxu0 %v3307
        %3402 = vmatmul.mubr.bf16.gmra.mxu0 %v2711
        %v3403 = vpop.f32.mrf.mxu0
        %v3404 = vadd.f32 %v3223, %v3403
        %v3405 = vpop.f32.mrf.mxu0
        %v3406 = vpop.f32.mrf.mxu0
        %v3407 = vadd.f32 %v3223, %v3406
        %v3408 = vpop.f32.mrf.mxu0
        %3409 = vmatprep.mubr.bf16.mxu0 %v3310
        %3410 = vmatmul.mubr.bf16.gmra.mxu0 %v2743
        %v3411 = vpop.f32.mrf.mxu0
        %v3412 = vadd.f32 %v3223, %v3411
        %v3413 = vpop.f32.mrf.mxu0
        %v3414 = vpop.f32.mrf.mxu0
        %v3415 = vadd.f32 %v3223, %v3414
        %v3416 = vpop.f32.mrf.mxu0
        %3417 = vmatprep.mubr.bf16.mxu0 %v3313
        %3418 = vmatmul.mubr.bf16.gmra.mxu0 %v2775
        %v3419 = vpop.f32.mrf.mxu0
        %v3420 = vadd.f32 %v3223, %v3419
        %v3421 = vpop.f32.mrf.mxu0
        %v3422 = vpop.f32.mrf.mxu0
        %v3423 = vadd.f32 %v3223, %v3422
        %v3424 = vpop.f32.mrf.mxu0
        %3425 = vmatprep.mubr.bf16.mxu0 %v3316
        %3426 = vmatmul.mubr.bf16.gmra.mxu0 %v2807
        %v3427 = vpop.f32.mrf.mxu0
        %v3428 = vadd.f32 %v3223, %v3427
        %v3429 = vpop.f32.mrf.mxu0
        %v3430 = vpop.f32.mrf.mxu0
        %v3431 = vadd.f32 %v3223, %v3430
        %v3432 = vpop.f32.mrf.mxu0
        %3433 = vmatprep.mubr.bf16.mxu0 %v3319
        %3434 = vmatmul.mubr.bf16.gmra.mxu0 %v2839
        %v3435 = vpop.f32.mrf.mxu0
        %v3436 = vadd.f32 %v3223, %v3435
        %v3437 = vpop.f32.mrf.mxu0
        %v3438 = vpop.f32.mrf.mxu0
        %v3439 = vadd.f32 %v3223, %v3438
        %v3440 = vpop.f32.mrf.mxu0
        %3441 = vmatprep.mubr.bf16.mxu0 %v3322
        %3442 = vmatmul.mubr.bf16.gmra.mxu0 %v2871
        %v3443 = vpop.f32.mrf.mxu0
        %v3444 = vadd.f32 %v3223, %v3443
        %v3445 = vpop.f32.mrf.mxu0
        %v3446 = vpop.f32.mrf.mxu0
        %v3447 = vadd.f32 %v3223, %v3446
        %v3448 = vpop.f32.mrf.mxu0
        %3449 = vmatprep.mubr.bf16.mxu0 %v3325
        %3450 = vmatmul.mubr.bf16.gmra.mxu0 %v2903
        %v3451 = vpop.f32.mrf.mxu0
        %v3452 = vadd.f32 %v3223, %v3451
        %v3453 = vpop.f32.mrf.mxu0
        %v3454 = vpop.f32.mrf.mxu0
        %v3455 = vadd.f32 %v3223, %v3454
        %v3456 = vpop.f32.mrf.mxu0
        %3457 = vmatprep.mubr.bf16.mxu0 %v3328
        %3458 = vmatmul.mubr.bf16.gmra.mxu0 %v2935
        %v3459 = vpop.f32.mrf.mxu0
        %v3460 = vadd.f32 %v3223, %v3459
        %v3461 = vpop.f32.mrf.mxu0
        %v3462 = vpop.f32.mrf.mxu0
        %v3463 = vadd.f32 %v3223, %v3462
        %v3464 = vpop.f32.mrf.mxu0
        %3465 = vmatprep.mubr.bf16.mxu0 %v3331
        %3466 = vmatmul.mubr.bf16.gmra.mxu0 %v2967
        %v3467 = vpop.f32.mrf.mxu0
        %v3468 = vadd.f32 %v3223, %v3467
        %v3469 = vpop.f32.mrf.mxu0
        %v3470 = vpop.f32.mrf.mxu0
        %v3471 = vadd.f32 %v3223, %v3470
        %v3472 = vpop.f32.mrf.mxu0
        %3473 = vmatprep.mubr.bf16.mxu0 %v3334
        %3474 = vmatmul.mubr.bf16.gmra.mxu0 %v2999
        %v3475 = vpop.f32.mrf.mxu0
        %v3476 = vadd.f32 %v3223, %v3475
        %v3477 = vpop.f32.mrf.mxu0
        %v3478 = vpop.f32.mrf.mxu0
        %v3479 = vadd.f32 %v3223, %v3478
        %v3480 = vpop.f32.mrf.mxu0
        %3481 = vmatprep.mubr.bf16.mxu0 %v3337
        %3482 = vmatmul.mubr.bf16.gmra.mxu0 %v3031
        %v3483 = vpop.f32.mrf.mxu0
        %v3484 = vadd.f32 %v3223, %v3483
        %v3485 = vpop.f32.mrf.mxu0
        %v3486 = vpop.f32.mrf.mxu0
        %v3487 = vadd.f32 %v3223, %v3486
        %v3488 = vpop.f32.mrf.mxu0
        %3489 = vmatprep.mubr.bf16.mxu0 %v3340
        %3490 = vmatmul.mubr.bf16.gmra.mxu0 %v3063
        %v3491 = vpop.f32.mrf.mxu0
        %v3492 = vadd.f32 %v3223, %v3491
        %v3493 = vpop.f32.mrf.mxu0
        %v3494 = vpop.f32.mrf.mxu0
        %v3495 = vadd.f32 %v3223, %v3494
        %v3496 = vpop.f32.mrf.mxu0
        %3497 = vmatprep.mubr.bf16.mxu0 %v3343
        %3498 = vmatmul.mubr.bf16.gmra.mxu0 %v3095
        %v3499 = vpop.f32.mrf.mxu0
        %v3500 = vadd.f32 %v3223, %v3499
        %v3501 = vpop.f32.mrf.mxu0
        %v3502 = vpop.f32.mrf.mxu0
        %v3503 = vadd.f32 %v3223, %v3502
        %v3504 = vpop.f32.mrf.mxu0
        %3505 = vdwg.mxu0
        %s3506 = scalar_lea.vmem %s4, 96
        %v3507 = vld [vmem:[%s3506] sm:$0xf]
        %v3508 = vld [vmem:[%s3506 + $0x4] sm:$0xf]
        %v3509 = vld [vmem:[%s3506 + $0x8] sm:$0xf]
        %v3510 = vld [vmem:[%s3506 + $0xc] sm:$0xf]
        %v3511 = vld [vmem:[%s3506 + $0x10] sm:$0xf]
        %v3512 = vld [vmem:[%s3506 + $0x14] sm:$0xf]
        %v3513 = vld [vmem:[%s3506 + $0x18] sm:$0xf]
        %v3514 = vld [vmem:[%s3506 + $0x1c] sm:$0xf]
        %v3515 = vld [vmem:[%s3506 + $0x20] sm:$0xf]
        %v3516 = vld [vmem:[%s3506 + $0x24] sm:$0xf]
        %v3517 = vld [vmem:[%s3506 + $0x28] sm:$0xf]
        %v3518 = vld [vmem:[%s3506 + $0x2c] sm:$0xf]
        %v3519 = vld [vmem:[%s3506 + $0x30] sm:$0xf]
        %v3520 = vld [vmem:[%s3506 + $0x34] sm:$0xf]
        %v3521 = vld [vmem:[%s3506 + $0x38] sm:$0xf]
        %v3522 = vld [vmem:[%s3506 + $0x3c] sm:$0xf]
        %v3523 = vld [vmem:[%s3506 + $0x40] sm:$0xf]
        %v3524 = vld [vmem:[%s3506 + $0x44] sm:$0xf]
        %v3525 = vld [vmem:[%s3506 + $0x48] sm:$0xf]
        %v3526 = vld [vmem:[%s3506 + $0x4c] sm:$0xf]
        %v3527 = vld [vmem:[%s3506 + $0x50] sm:$0xf]
        %v3528 = vld [vmem:[%s3506 + $0x54] sm:$0xf]
        %v3529 = vld [vmem:[%s3506 + $0x58] sm:$0xf]
        %v3530 = vld [vmem:[%s3506 + $0x5c] sm:$0xf]
        %v3555 = vunpack.c.l.b16 %v3507
        %v3556 = vunpack.c.l.b16 %v3508
        %v3557 = vunpack.c.l.b16 %v3509
        %v3558 = vunpack.c.l.b16 %v3510
        %v3559 = vunpack.c.l.b16 %v3511
        %v3560 = vunpack.c.l.b16 %v3512
        %v3561 = vunpack.c.l.b16 %v3513
        %v3562 = vunpack.c.l.b16 %v3514
        %v3563 = vunpack.c.l.b16 %v3515
        %v3564 = vunpack.c.l.b16 %v3516
        %v3565 = vunpack.c.l.b16 %v3517
        %v3566 = vunpack.c.l.b16 %v3518
        %v3567 = vunpack.c.l.b16 %v3519
        %v3568 = vunpack.c.l.b16 %v3520
        %v3569 = vunpack.c.l.b16 %v3521
        %v3570 = vunpack.c.l.b16 %v3522
        %v3571 = vunpack.c.l.b16 %v3523
        %v3572 = vunpack.c.l.b16 %v3524
        %v3573 = vunpack.c.l.b16 %v3525
        %v3574 = vunpack.c.l.b16 %v3526
        %v3575 = vunpack.c.l.b16 %v3527
        %v3576 = vunpack.c.l.b16 %v3528
        %v3577 = vunpack.c.l.b16 %v3529
        %v3578 = vunpack.c.l.b16 %v3530
        %v3579 = vpack.c.b16 %v3556, %v3555
        %v3580 = vpack.c.b16 %v3558, %v3557
        %v3581 = vpack.c.b16 %v3560, %v3559
        %v3582 = vpack.c.b16 %v3562, %v3561
        %v3583 = vpack.c.b16 %v3564, %v3563
        %v3584 = vpack.c.b16 %v3566, %v3565
        %v3585 = vpack.c.b16 %v3568, %v3567
        %v3586 = vpack.c.b16 %v3570, %v3569
        %v3587 = vpack.c.b16 %v3572, %v3571
        %v3588 = vpack.c.b16 %v3574, %v3573
        %v3589 = vpack.c.b16 %v3576, %v3575
        %v3590 = vpack.c.b16 %v3578, %v3577
        %v3604 = vsel %vm2509, %v3144, 0
        %3606 = vmatprep.subr.bf16.mxu0 0
        %3607 = vmatpush1.bf16.msra.mxu0 %v3586
        %3608 = vmatprep.subr.bf16.mxu0 0
        %3609 = vmatpush1.bf16.msra.mxu0 %v3585
        %3610 = vmatprep.subr.bf16.mxu0 0
        %3611 = vmatpush1.bf16.msra.mxu0 %v3584
        %3612 = vmatprep.subr.bf16.mxu0 0
        %3613 = vmatpush1.bf16.msra.mxu0 %v3583
        %3614 = vmatprep.subr.bf16.mxu0 0
        %3615 = vmatpush1.bf16.msra.mxu0 %v3582
        %3616 = vmatprep.subr.bf16.mxu0 0
        %3617 = vmatpush1.bf16.msra.mxu0 %v3581
        %3618 = vmatprep.subr.bf16.mxu0 0
        %3619 = vmatpush1.bf16.msra.mxu0 %v3580
        %3620 = vmatprep.subr.bf16.mxu0 0
        %3621 = vmatpush1.bf16.msra.mxu0 %v3579
        %3622 = vmatprep.subr.bf16.mxu0 0
        %3623 = vmatpush2.bf16.msra.mxu0 0
        %3624 = vmatprep.subr.bf16.mxu0 0
        %3625 = vmatpush2.bf16.msra.mxu0 0
        %3626 = vmatprep.subr.bf16.mxu0 0
        %3627 = vmatpush2.bf16.msra.mxu0 0
        %3628 = vmatprep.subr.bf16.mxu0 0
        %3629 = vmatpush2.bf16.msra.mxu0 0
        %3630 = vmatprep.subr.bf16.mxu0 0
        %3631 = vmatpush2.bf16.msra.mxu0 %v3590
        %3632 = vmatprep.subr.bf16.mxu0 0
        %3633 = vmatpush2.bf16.msra.mxu0 %v3589
        %3634 = vmatprep.subr.bf16.mxu0 0
        %3635 = vmatpush2.bf16.msra.mxu0 %v3588
        %3636 = vmatprep.subr.bf16.mxu0 0
        %3637 = vmatpush2.bf16.msra.mxu0 %v3587
        %3638 = vmatprep.mubr.bf16.mxu0 %v3301
        %3639 = vmatmul.mubr.bf16.gmra.mxu0 %v2647
        %v3640 = vpop.f32.mrf.mxu0
        %v3641 = vadd.f32 0.0, %v3640
        %v3642 = vpop.f32.mrf.mxu0
        %v3643 = vpop.f32.mrf.mxu0
        %v3644 = vadd.f32 0.0, %v3643
        %v3645 = vpop.f32.mrf.mxu0
        %3646 = vmatprep.mubr.bf16.mxu0 %v3304
        %3647 = vmatmul.mubr.bf16.gmra.mxu0 %v2679
        %v3648 = vpop.f32.mrf.mxu0
        %v3649 = vadd.f32 0.0, %v3648
        %v3650 = vpop.f32.mrf.mxu0
        %v3651 = vpop.f32.mrf.mxu0
        %v3652 = vadd.f32 0.0, %v3651
        %v3653 = vpop.f32.mrf.mxu0
        %3654 = vmatprep.mubr.bf16.mxu0 %v3307
        %3655 = vmatmul.mubr.bf16.gmra.mxu0 %v2711
        %v3656 = vpop.f32.mrf.mxu0
        %v3657 = vadd.f32 0.0, %v3656
        %v3658 = vpop.f32.mrf.mxu0
        %v3659 = vpop.f32.mrf.mxu0
        %v3660 = vadd.f32 0.0, %v3659
        %v3661 = vpop.f32.mrf.mxu0
        %3662 = vmatprep.mubr.bf16.mxu0 %v3310
        %3663 = vmatmul.mubr.bf16.gmra.mxu0 %v2743
        %v3664 = vpop.f32.mrf.mxu0
        %v3665 = vadd.f32 0.0, %v3664
        %v3666 = vpop.f32.mrf.mxu0
        %v3667 = vpop.f32.mrf.mxu0
        %v3668 = vadd.f32 0.0, %v3667
        %v3669 = vpop.f32.mrf.mxu0
        %3670 = vmatprep.mubr.bf16.mxu0 %v3313
        %3671 = vmatmul.mubr.bf16.gmra.mxu0 %v2775
        %v3672 = vpop.f32.mrf.mxu0
        %v3673 = vadd.f32 0.0, %v3672
        %v3674 = vpop.f32.mrf.mxu0
        %v3675 = vpop.f32.mrf.mxu0
        %v3676 = vadd.f32 0.0, %v3675
        %v3677 = vpop.f32.mrf.mxu0
        %3678 = vmatprep.mubr.bf16.mxu0 %v3316
        %3679 = vmatmul.mubr.bf16.gmra.mxu0 %v2807
        %v3680 = vpop.f32.mrf.mxu0
        %v3681 = vadd.f32 0.0, %v3680
        %v3682 = vpop.f32.mrf.mxu0
        %v3683 = vpop.f32.mrf.mxu0
        %v3684 = vadd.f32 0.0, %v3683
        %v3685 = vpop.f32.mrf.mxu0
        %3686 = vmatprep.mubr.bf16.mxu0 %v3319
        %3687 = vmatmul.mubr.bf16.gmra.mxu0 %v2839
        %v3688 = vpop.f32.mrf.mxu0
        %v3689 = vadd.f32 0.0, %v3688
        %v3690 = vpop.f32.mrf.mxu0
        %v3691 = vpop.f32.mrf.mxu0
        %v3692 = vadd.f32 0.0, %v3691
        %v3693 = vpop.f32.mrf.mxu0
        %3694 = vmatprep.mubr.bf16.mxu0 %v3322
        %3695 = vmatmul.mubr.bf16.gmra.mxu0 %v2871
        %v3696 = vpop.f32.mrf.mxu0
        %v3697 = vadd.f32 0.0, %v3696
        %v3698 = vpop.f32.mrf.mxu0
        %v3699 = vpop.f32.mrf.mxu0
        %v3700 = vadd.f32 0.0, %v3699
        %v3701 = vpop.f32.mrf.mxu0
        %3702 = vmatprep.mubr.bf16.mxu0 %v3325
        %3703 = vmatmul.mubr.bf16.gmra.mxu0 %v2903
        %v3704 = vpop.f32.mrf.mxu0
        %v3705 = vadd.f32 0.0, %v3704
        %v3706 = vpop.f32.mrf.mxu0
        %v3707 = vpop.f32.mrf.mxu0
        %v3708 = vadd.f32 0.0, %v3707
        %v3709 = vpop.f32.mrf.mxu0
        %3710 = vmatprep.mubr.bf16.mxu0 %v3328
        %3711 = vmatmul.mubr.bf16.gmra.mxu0 %v2935
        %v3712 = vpop.f32.mrf.mxu0
        %v3713 = vadd.f32 0.0, %v3712
        %v3714 = vpop.f32.mrf.mxu0
        %v3715 = vpop.f32.mrf.mxu0
        %v3716 = vadd.f32 0.0, %v3715
        %v3717 = vpop.f32.mrf.mxu0
        %3718 = vmatprep.mubr.bf16.mxu0 %v3331
        %3719 = vmatmul.mubr.bf16.gmra.mxu0 %v2967
        %v3720 = vpop.f32.mrf.mxu0
        %v3721 = vadd.f32 0.0, %v3720
        %v3722 = vpop.f32.mrf.mxu0
        %v3723 = vpop.f32.mrf.mxu0
        %v3724 = vadd.f32 0.0, %v3723
        %v3725 = vpop.f32.mrf.mxu0
        %3726 = vmatprep.mubr.bf16.mxu0 %v3334
        %3727 = vmatmul.mubr.bf16.gmra.mxu0 %v2999
        %v3728 = vpop.f32.mrf.mxu0
        %v3729 = vadd.f32 0.0, %v3728
        %v3730 = vpop.f32.mrf.mxu0
        %v3731 = vpop.f32.mrf.mxu0
        %v3732 = vadd.f32 0.0, %v3731
        %v3733 = vpop.f32.mrf.mxu0
        %3734 = vmatprep.mubr.bf16.mxu0 %v3337
        %3735 = vmatmul.mubr.bf16.gmra.mxu0 %v3031
        %v3736 = vpop.f32.mrf.mxu0
        %v3737 = vadd.f32 0.0, %v3736
        %v3738 = vpop.f32.mrf.mxu0
        %v3739 = vpop.f32.mrf.mxu0
        %v3740 = vadd.f32 0.0, %v3739
        %v3741 = vpop.f32.mrf.mxu0
        %3742 = vmatprep.mubr.bf16.mxu0 %v3340
        %3743 = vmatmul.mubr.bf16.gmra.mxu0 %v3063
        %v3744 = vpop.f32.mrf.mxu0
        %v3745 = vadd.f32 0.0, %v3744
        %v3746 = vpop.f32.mrf.mxu0
        %v3747 = vpop.f32.mrf.mxu0
        %v3748 = vadd.f32 0.0, %v3747
        %v3749 = vpop.f32.mrf.mxu0
        %3750 = vmatprep.mubr.bf16.mxu0 %v3343
        %3751 = vmatmul.mubr.bf16.gmra.mxu0 %v3095
        %v3752 = vpop.f32.mrf.mxu0
        %v3753 = vadd.f32 0.0, %v3752
        %v3754 = vpop.f32.mrf.mxu0
        %v3755 = vpop.f32.mrf.mxu0
        %v3756 = vadd.f32 0.0, %v3755
        %v3757 = vpop.f32.mrf.mxu0
        %3758 = vmatprep.mubr.bf16.mxu0 %v3604
        %3759 = vmatmul.mubr.bf16.gmra.mxu0 %v3127
        %v3760 = vpop.f32.mrf.mxu0
        %v3761 = vadd.f32 0.0, %v3760
        %v3762 = vpop.f32.mrf.mxu0
        %v3763 = vpop.f32.mrf.mxu0
        %v3764 = vadd.f32 0.0, %v3763
        %v3765 = vpop.f32.mrf.mxu0
        %3766 = vdwg.mxu0
        %v3767 = vadd.f32 %v3380, %v3641
        %v3768 = vadd.f32 %v3383, %v3644
        %v3769 = vadd.f32 %v3388, %v3649
        %v3770 = vadd.f32 %v3391, %v3652
        %v3771 = vadd.f32 %v3396, %v3657
        %v3772 = vadd.f32 %v3399, %v3660
        %v3773 = vadd.f32 %v3404, %v3665
        %v3774 = vadd.f32 %v3407, %v3668
        %v3775 = vadd.f32 %v3412, %v3673
        %v3776 = vadd.f32 %v3415, %v3676
        %v3777 = vadd.f32 %v3420, %v3681
        %v3778 = vadd.f32 %v3423, %v3684
        %v3779 = vadd.f32 %v3428, %v3689
        %v3780 = vadd.f32 %v3431, %v3692
        %v3781 = vadd.f32 %v3436, %v3697
        %v3782 = vadd.f32 %v3439, %v3700
        %v3783 = vadd.f32 %v3444, %v3705
        %v3784 = vadd.f32 %v3447, %v3708
        %v3785 = vadd.f32 %v3452, %v3713
        %v3786 = vadd.f32 %v3455, %v3716
        %v3787 = vadd.f32 %v3460, %v3721
        %v3788 = vadd.f32 %v3463, %v3724
        %v3789 = vadd.f32 %v3468, %v3729
        %v3790 = vadd.f32 %v3471, %v3732
        %v3791 = vadd.f32 %v3476, %v3737
        %v3792 = vadd.f32 %v3479, %v3740
        %v3793 = vadd.f32 %v3484, %v3745
        %v3794 = vadd.f32 %v3487, %v3748
        %v3795 = vadd.f32 %v3492, %v3753
        %v3796 = vadd.f32 %v3495, %v3756
        %v3797 = vadd.f32 %v3500, %v3761
        %v3798 = vadd.f32 %v3503, %v3764
        %s3799 = scalar_lea.vmem %s4, 192
        %v3800 = vld [vmem:[%s3799] sm:$0xf]
        %v3801 = vld [vmem:[%s3799 + $0x4] sm:$0xf]
        %v3802 = vld [vmem:[%s3799 + $0x8] sm:$0xf]
        %v3803 = vld [vmem:[%s3799 + $0xc] sm:$0xf]
        %v3804 = vld [vmem:[%s3799 + $0x10] sm:$0xf]
        %v3805 = vld [vmem:[%s3799 + $0x14] sm:$0xf]
        %v3806 = vld [vmem:[%s3799 + $0x18] sm:$0xf]
        %v3807 = vld [vmem:[%s3799 + $0x1c] sm:$0xf]
        %v3808 = vld [vmem:[%s3799 + $0x20] sm:$0xf]
        %v3809 = vld [vmem:[%s3799 + $0x24] sm:$0xf]
        %v3810 = vld [vmem:[%s3799 + $0x28] sm:$0xf]
        %v3811 = vld [vmem:[%s3799 + $0x2c] sm:$0xf]
        %v3812 = vld [vmem:[%s3799 + $0x30] sm:$0xf]
        %v3813 = vld [vmem:[%s3799 + $0x34] sm:$0xf]
        %v3814 = vld [vmem:[%s3799 + $0x38] sm:$0xf]
        %v3815 = vld [vmem:[%s3799 + $0x3c] sm:$0xf]
        %v3816 = vld [vmem:[%s3799 + $0x40] sm:$0xf]
        %v3817 = vld [vmem:[%s3799 + $0x44] sm:$0xf]
        %v3818 = vld [vmem:[%s3799 + $0x48] sm:$0xf]
        %v3819 = vld [vmem:[%s3799 + $0x4c] sm:$0xf]
        %v3820 = vld [vmem:[%s3799 + $0x50] sm:$0xf]
        %v3821 = vld [vmem:[%s3799 + $0x54] sm:$0xf]
        %v3822 = vld [vmem:[%s3799 + $0x58] sm:$0xf]
        %v3823 = vld [vmem:[%s3799 + $0x5c] sm:$0xf]
        %v3848 = vunpack.c.l.b16 %v3800
        %v3849 = vunpack.c.l.b16 %v3801
        %v3850 = vunpack.c.l.b16 %v3802
        %v3851 = vunpack.c.l.b16 %v3803
        %v3852 = vunpack.c.l.b16 %v3804
        %v3853 = vunpack.c.l.b16 %v3805
        %v3854 = vunpack.c.l.b16 %v3806
        %v3855 = vunpack.c.l.b16 %v3807
        %v3856 = vunpack.c.l.b16 %v3808
        %v3857 = vunpack.c.l.b16 %v3809
        %v3858 = vunpack.c.l.b16 %v3810
        %v3859 = vunpack.c.l.b16 %v3811
        %v3860 = vunpack.c.l.b16 %v3812
        %v3861 = vunpack.c.l.b16 %v3813
        %v3862 = vunpack.c.l.b16 %v3814
        %v3863 = vunpack.c.l.b16 %v3815
        %v3864 = vunpack.c.l.b16 %v3816
        %v3865 = vunpack.c.l.b16 %v3817
        %v3866 = vunpack.c.l.b16 %v3818
        %v3867 = vunpack.c.l.b16 %v3819
        %v3868 = vunpack.c.l.b16 %v3820
        %v3869 = vunpack.c.l.b16 %v3821
        %v3870 = vunpack.c.l.b16 %v3822
        %v3871 = vunpack.c.l.b16 %v3823
        %v3872 = vpack.c.b16 %v3849, %v3848
        %v3873 = vpack.c.b16 %v3851, %v3850
        %v3874 = vpack.c.b16 %v3853, %v3852
        %v3875 = vpack.c.b16 %v3855, %v3854
        %v3876 = vpack.c.b16 %v3857, %v3856
        %v3877 = vpack.c.b16 %v3859, %v3858
        %v3878 = vpack.c.b16 %v3861, %v3860
        %v3879 = vpack.c.b16 %v3863, %v3862
        %v3880 = vpack.c.b16 %v3865, %v3864
        %v3881 = vpack.c.b16 %v3867, %v3866
        %v3882 = vpack.c.b16 %v3869, %v3868
        %v3883 = vpack.c.b16 %v3871, %v3870
        %v3897 = vsel %vm2509, %v3176, 0
        %3899 = vmatprep.subr.bf16.mxu0 0
        %3900 = vmatpush1.bf16.msra.mxu0 %v3879
        %3901 = vmatprep.subr.bf16.mxu0 0
        %3902 = vmatpush1.bf16.msra.mxu0 %v3878
        %3903 = vmatprep.subr.bf16.mxu0 0
        %3904 = vmatpush1.bf16.msra.mxu0 %v3877
        %3905 = vmatprep.subr.bf16.mxu0 0
        %3906 = vmatpush1.bf16.msra.mxu0 %v3876
        %3907 = vmatprep.subr.bf16.mxu0 0
        %3908 = vmatpush1.bf16.msra.mxu0 %v3875
        %3909 = vmatprep.subr.bf16.mxu0 0
        %3910 = vmatpush1.bf16.msra.mxu0 %v3874
        %3911 = vmatprep.subr.bf16.mxu0 0
        %3912 = vmatpush1.bf16.msra.mxu0 %v3873
        %3913 = vmatprep.subr.bf16.mxu0 0
        %3914 = vmatpush1.bf16.msra.mxu0 %v3872
        %3915 = vmatprep.subr.bf16.mxu0 0
        %3916 = vmatpush2.bf16.msra.mxu0 0
        %3917 = vmatprep.subr.bf16.mxu0 0
        %3918 = vmatpush2.bf16.msra.mxu0 0
        %3919 = vmatprep.subr.bf16.mxu0 0
        %3920 = vmatpush2.bf16.msra.mxu0 0
        %3921 = vmatprep.subr.bf16.mxu0 0
        %3922 = vmatpush2.bf16.msra.mxu0 0
        %3923 = vmatprep.subr.bf16.mxu0 0
        %3924 = vmatpush2.bf16.msra.mxu0 %v3883
        %3925 = vmatprep.subr.bf16.mxu0 0
        %3926 = vmatpush2.bf16.msra.mxu0 %v3882
        %3927 = vmatprep.subr.bf16.mxu0 0
        %3928 = vmatpush2.bf16.msra.mxu0 %v3881
        %3929 = vmatprep.subr.bf16.mxu0 0
        %3930 = vmatpush2.bf16.msra.mxu0 %v3880
        %3931 = vmatprep.mubr.bf16.mxu0 %v3304
        %3932 = vmatmul.mubr.bf16.gmra.mxu0 %v2679
        %v3933 = vpop.f32.mrf.mxu0
        %v3934 = vadd.f32 0.0, %v3933
        %v3935 = vpop.f32.mrf.mxu0
        %v3936 = vpop.f32.mrf.mxu0
        %v3937 = vadd.f32 0.0, %v3936
        %v3938 = vpop.f32.mrf.mxu0
        %3939 = vmatprep.mubr.bf16.mxu0 %v3307
        %3940 = vmatmul.mubr.bf16.gmra.mxu0 %v2711
        %v3941 = vpop.f32.mrf.mxu0
        %v3942 = vadd.f32 0.0, %v3941
        %v3943 = vpop.f32.mrf.mxu0
        %v3944 = vpop.f32.mrf.mxu0
        %v3945 = vadd.f32 0.0, %v3944
        %v3946 = vpop.f32.mrf.mxu0
        %3947 = vmatprep.mubr.bf16.mxu0 %v3310
        %3948 = vmatmul.mubr.bf16.gmra.mxu0 %v2743
        %v3949 = vpop.f32.mrf.mxu0
        %v3950 = vadd.f32 0.0, %v3949
        %v3951 = vpop.f32.mrf.mxu0
        %v3952 = vpop.f32.mrf.mxu0
        %v3953 = vadd.f32 0.0, %v3952
        %v3954 = vpop.f32.mrf.mxu0
        %3955 = vmatprep.mubr.bf16.mxu0 %v3313
        %3956 = vmatmul.mubr.bf16.gmra.mxu0 %v2775
        %v3957 = vpop.f32.mrf.mxu0
        %v3958 = vadd.f32 0.0, %v3957
        %v3959 = vpop.f32.mrf.mxu0
        %v3960 = vpop.f32.mrf.mxu0
        %v3961 = vadd.f32 0.0, %v3960
        %v3962 = vpop.f32.mrf.mxu0
        %3963 = vmatprep.mubr.bf16.mxu0 %v3316
        %3964 = vmatmul.mubr.bf16.gmra.mxu0 %v2807
        %v3965 = vpop.f32.mrf.mxu0
        %v3966 = vadd.f32 0.0, %v3965
        %v3967 = vpop.f32.mrf.mxu0
        %v3968 = vpop.f32.mrf.mxu0
        %v3969 = vadd.f32 0.0, %v3968
        %v3970 = vpop.f32.mrf.mxu0
        %3971 = vmatprep.mubr.bf16.mxu0 %v3319
        %3972 = vmatmul.mubr.bf16.gmra.mxu0 %v2839
        %v3973 = vpop.f32.mrf.mxu0
        %v3974 = vadd.f32 0.0, %v3973
        %v3975 = vpop.f32.mrf.mxu0
        %v3976 = vpop.f32.mrf.mxu0
        %v3977 = vadd.f32 0.0, %v3976
        %v3978 = vpop.f32.mrf.mxu0
        %3979 = vmatprep.mubr.bf16.mxu0 %v3322
        %3980 = vmatmul.mubr.bf16.gmra.mxu0 %v2871
        %v3981 = vpop.f32.mrf.mxu0
        %v3982 = vadd.f32 0.0, %v3981
        %v3983 = vpop.f32.mrf.mxu0
        %v3984 = vpop.f32.mrf.mxu0
        %v3985 = vadd.f32 0.0, %v3984
        %v3986 = vpop.f32.mrf.mxu0
        %3987 = vmatprep.mubr.bf16.mxu0 %v3325
        %3988 = vmatmul.mubr.bf16.gmra.mxu0 %v2903
        %v3989 = vpop.f32.mrf.mxu0
        %v3990 = vadd.f32 0.0, %v3989
        %v3991 = vpop.f32.mrf.mxu0
        %v3992 = vpop.f32.mrf.mxu0
        %v3993 = vadd.f32 0.0, %v3992
        %v3994 = vpop.f32.mrf.mxu0
        %3995 = vmatprep.mubr.bf16.mxu0 %v3328
        %3996 = vmatmul.mubr.bf16.gmra.mxu0 %v2935
        %v3997 = vpop.f32.mrf.mxu0
        %v3998 = vadd.f32 0.0, %v3997
        %v3999 = vpop.f32.mrf.mxu0
        %v4000 = vpop.f32.mrf.mxu0
        %v4001 = vadd.f32 0.0, %v4000
        %v4002 = vpop.f32.mrf.mxu0
        %4003 = vmatprep.mubr.bf16.mxu0 %v3331
        %4004 = vmatmul.mubr.bf16.gmra.mxu0 %v2967
        %v4005 = vpop.f32.mrf.mxu0
        %v4006 = vadd.f32 0.0, %v4005
        %v4007 = vpop.f32.mrf.mxu0
        %v4008 = vpop.f32.mrf.mxu0
        %v4009 = vadd.f32 0.0, %v4008
        %v4010 = vpop.f32.mrf.mxu0
        %4011 = vmatprep.mubr.bf16.mxu0 %v3334
        %4012 = vmatmul.mubr.bf16.gmra.mxu0 %v2999
        %v4013 = vpop.f32.mrf.mxu0
        %v4014 = vadd.f32 0.0, %v4013
        %v4015 = vpop.f32.mrf.mxu0
        %v4016 = vpop.f32.mrf.mxu0
        %v4017 = vadd.f32 0.0, %v4016
        %v4018 = vpop.f32.mrf.mxu0
        %4019 = vmatprep.mubr.bf16.mxu0 %v3337
        %4020 = vmatmul.mubr.bf16.gmra.mxu0 %v3031
        %v4021 = vpop.f32.mrf.mxu0
        %v4022 = vadd.f32 0.0, %v4021
        %v4023 = vpop.f32.mrf.mxu0
        %v4024 = vpop.f32.mrf.mxu0
        %v4025 = vadd.f32 0.0, %v4024
        %v4026 = vpop.f32.mrf.mxu0
        %4027 = vmatprep.mubr.bf16.mxu0 %v3340
        %4028 = vmatmul.mubr.bf16.gmra.mxu0 %v3063
        %v4029 = vpop.f32.mrf.mxu0
        %v4030 = vadd.f32 0.0, %v4029
        %v4031 = vpop.f32.mrf.mxu0
        %v4032 = vpop.f32.mrf.mxu0
        %v4033 = vadd.f32 0.0, %v4032
        %v4034 = vpop.f32.mrf.mxu0
        %4035 = vmatprep.mubr.bf16.mxu0 %v3343
        %4036 = vmatmul.mubr.bf16.gmra.mxu0 %v3095
        %v4037 = vpop.f32.mrf.mxu0
        %v4038 = vadd.f32 0.0, %v4037
        %v4039 = vpop.f32.mrf.mxu0
        %v4040 = vpop.f32.mrf.mxu0
        %v4041 = vadd.f32 0.0, %v4040
        %v4042 = vpop.f32.mrf.mxu0
        %4043 = vmatprep.mubr.bf16.mxu0 %v3604
        %4044 = vmatmul.mubr.bf16.gmra.mxu0 %v3127
        %v4045 = vpop.f32.mrf.mxu0
        %v4046 = vadd.f32 0.0, %v4045
        %v4047 = vpop.f32.mrf.mxu0
        %v4048 = vpop.f32.mrf.mxu0
        %v4049 = vadd.f32 0.0, %v4048
        %v4050 = vpop.f32.mrf.mxu0
        %4051 = vmatprep.mubr.bf16.mxu0 %v3897
        %4052 = vmatmul.mubr.bf16.gmra.mxu0 %v3159
        %v4053 = vpop.f32.mrf.mxu0
        %v4054 = vadd.f32 0.0, %v4053
        %v4055 = vpop.f32.mrf.mxu0
        %v4056 = vpop.f32.mrf.mxu0
        %v4057 = vadd.f32 0.0, %v4056
        %v4058 = vpop.f32.mrf.mxu0
        %4059 = vdwg.mxu0
        %v4060 = vadd.f32 %v3767, %v3934
        %v4061 = vadd.f32 %v3768, %v3937
        %v4062 = vadd.f32 %v3769, %v3942
        %v4063 = vadd.f32 %v3770, %v3945
        %v4064 = vadd.f32 %v3771, %v3950
        %v4065 = vadd.f32 %v3772, %v3953
        %v4066 = vadd.f32 %v3773, %v3958
        %v4067 = vadd.f32 %v3774, %v3961
        %v4068 = vadd.f32 %v3775, %v3966
        %v4069 = vadd.f32 %v3776, %v3969
        %v4070 = vadd.f32 %v3777, %v3974
        %v4071 = vadd.f32 %v3778, %v3977
        %v4072 = vadd.f32 %v3779, %v3982
        %v4073 = vadd.f32 %v3780, %v3985
        %v4074 = vadd.f32 %v3781, %v3990
        %v4075 = vadd.f32 %v3782, %v3993
        %v4076 = vadd.f32 %v3783, %v3998
        %v4077 = vadd.f32 %v3784, %v4001
        %v4078 = vadd.f32 %v3785, %v4006
        %v4079 = vadd.f32 %v3786, %v4009
        %v4080 = vadd.f32 %v3787, %v4014
        %v4081 = vadd.f32 %v3788, %v4017
        %v4082 = vadd.f32 %v3789, %v4022
        %v4083 = vadd.f32 %v3790, %v4025
        %v4084 = vadd.f32 %v3791, %v4030
        %v4085 = vadd.f32 %v3792, %v4033
        %v4086 = vadd.f32 %v3793, %v4038
        %v4087 = vadd.f32 %v3794, %v4041
        %v4088 = vadd.f32 %v3795, %v4046
        %v4089 = vadd.f32 %v3796, %v4049
        %v4090 = vadd.f32 %v3797, %v4054
        %v4091 = vadd.f32 %v3798, %v4057
        %v4092 = vmax.f32 %v4060, 0.0
        %v4093 = vmax.f32 %v4061, 0.0
        %v4094 = vmax.f32 %v4062, 0.0
        %v4095 = vmax.f32 %v4063, 0.0
        %v4096 = vmax.f32 %v4064, 0.0
        %v4097 = vmax.f32 %v4065, 0.0
        %v4098 = vmax.f32 %v4066, 0.0
        %v4099 = vmax.f32 %v4067, 0.0
        %v4100 = vmax.f32 %v4068, 0.0
        %v4101 = vmax.f32 %v4069, 0.0
        %v4102 = vmax.f32 %v4070, 0.0
        %v4103 = vmax.f32 %v4071, 0.0
        %v4104 = vmax.f32 %v4072, 0.0
        %v4105 = vmax.f32 %v4073, 0.0
        %v4106 = vmax.f32 %v4074, 0.0
        %v4107 = vmax.f32 %v4075, 0.0
        %v4108 = vmax.f32 %v4076, 0.0
        %v4109 = vmax.f32 %v4077, 0.0
        %v4110 = vmax.f32 %v4078, 0.0
        %v4111 = vmax.f32 %v4079, 0.0
        %v4112 = vmax.f32 %v4080, 0.0
        %v4113 = vmax.f32 %v4081, 0.0
        %v4114 = vmax.f32 %v4082, 0.0
        %v4115 = vmax.f32 %v4083, 0.0
        %v4116 = vmax.f32 %v4084, 0.0
        %v4117 = vmax.f32 %v4085, 0.0
        %v4118 = vmax.f32 %v4086, 0.0
        %v4119 = vmax.f32 %v4087, 0.0
        %v4120 = vmax.f32 %v4088, 0.0
        %v4121 = vmax.f32 %v4089, 0.0
        %v4122 = vmax.f32 %v4090, 0.0
        %v4123 = vmax.f32 %v4091, 0.0
        %v4140 = vunpack.c.l.b16 %v1446
        %v4141 = vunpack.c.h.b16 %v1446
        %v4142 = vunpack.c.l.b16 %v1447
        %v4143 = vunpack.c.h.b16 %v1447
        %v4144 = vunpack.c.l.b16 %v1448
        %v4145 = vunpack.c.h.b16 %v1448
        %v4146 = vunpack.c.l.b16 %v1449
        %v4147 = vunpack.c.h.b16 %v1449
        %v4148 = vunpack.c.l.b16 %v1450
        %v4149 = vunpack.c.h.b16 %v1450
        %v4150 = vunpack.c.l.b16 %v1451
        %v4151 = vunpack.c.h.b16 %v1451
        %v4152 = vunpack.c.l.b16 %v1452
        %v4153 = vunpack.c.h.b16 %v1452
        %v4154 = vunpack.c.l.b16 %v1453
        %v4155 = vunpack.c.h.b16 %v1453
        %v4156 = vunpack.c.l.b16 %v1454
        %v4157 = vunpack.c.h.b16 %v1454
        %v4158 = vunpack.c.l.b16 %v1455
        %v4159 = vunpack.c.h.b16 %v1455
        %v4160 = vunpack.c.l.b16 %v1456
        %v4161 = vunpack.c.h.b16 %v1456
        %v4162 = vunpack.c.l.b16 %v1457
        %v4163 = vunpack.c.h.b16 %v1457
        %v4164 = vunpack.c.l.b16 %v1458
        %v4165 = vunpack.c.h.b16 %v1458
        %v4166 = vunpack.c.l.b16 %v1459
        %v4167 = vunpack.c.h.b16 %v1459
        %v4168 = vunpack.c.l.b16 %v1460
        %v4169 = vunpack.c.h.b16 %v1460
        %v4170 = vunpack.c.l.b16 %v1461
        %v4171 = vunpack.c.h.b16 %v1461
        %v4172 = vpack.c.b16 %v4140, %v4140
        %v4173 = vpack.c.b16 %v4141, %v4141
        %v4174 = vpack.c.b16 %v4142, %v4142
        %v4175 = vpack.c.b16 %v4143, %v4143
        %v4176 = vpack.c.b16 %v4144, %v4144
        %v4177 = vpack.c.b16 %v4145, %v4145
        %v4178 = vpack.c.b16 %v4146, %v4146
        %v4179 = vpack.c.b16 %v4147, %v4147
        %v4180 = vpack.c.b16 %v4148, %v4148
        %v4181 = vpack.c.b16 %v4149, %v4149
        %v4182 = vpack.c.b16 %v4150, %v4150
        %v4183 = vpack.c.b16 %v4151, %v4151
        %v4184 = vpack.c.b16 %v4152, %v4152
        %v4185 = vpack.c.b16 %v4153, %v4153
        %v4186 = vpack.c.b16 %v4154, %v4154
        %v4187 = vpack.c.b16 %v4155, %v4155
        %v4188 = vpack.c.b16 %v4156, %v4156
        %v4189 = vpack.c.b16 %v4157, %v4157
        %v4190 = vpack.c.b16 %v4158, %v4158
        %v4191 = vpack.c.b16 %v4159, %v4159
        %v4192 = vpack.c.b16 %v4160, %v4160
        %v4193 = vpack.c.b16 %v4161, %v4161
        %v4194 = vpack.c.b16 %v4162, %v4162
        %v4195 = vpack.c.b16 %v4163, %v4163
        %v4196 = vpack.c.b16 %v4164, %v4164
        %v4197 = vpack.c.b16 %v4165, %v4165
        %v4198 = vpack.c.b16 %v4166, %v4166
        %v4199 = vpack.c.b16 %v4167, %v4167
        %v4200 = vpack.c.b16 %v4168, %v4168
        %v4201 = vpack.c.b16 %v4169, %v4169
        %v4202 = vpack.c.b16 %v4170, %v4170
        %v4203 = vpack.c.b16 %v4171, %v4171
        %4236 = vst.msk [vmem:[%s426 + $0x8] sm:$0xf] %vm408, %v4172
        %4237 = vst.msk [vmem:[%s426 + $0xc] sm:$0xf] %vm408, %v4173
        %4238 = vst.msk [vmem:[%s426 + $0x20] sm:$0xf] %vm408, %v4174
        %4239 = vst.msk [vmem:[%s426 + $0x24] sm:$0xf] %vm408, %v4175
        %4240 = vst.msk [vmem:[%s426 + $0x38] sm:$0xf] %vm408, %v4176
        %4241 = vst.msk [vmem:[%s426 + $0x3c] sm:$0xf] %vm408, %v4177
        %4242 = vst.msk [vmem:[%s426 + $0x50] sm:$0xf] %vm408, %v4178
        %4243 = vst.msk [vmem:[%s426 + $0x54] sm:$0xf] %vm408, %v4179
        %4244 = vst.msk [vmem:[%s426 + $0x68] sm:$0xf] %vm408, %v4180
        %4245 = vst.msk [vmem:[%s426 + $0x6c] sm:$0xf] %vm408, %v4181
        %4246 = vst.msk [vmem:[%s426 + $0x80] sm:$0xf] %vm408, %v4182
        %4247 = vst.msk [vmem:[%s426 + $0x84] sm:$0xf] %vm408, %v4183
        %4248 = vst.msk [vmem:[%s426 + $0x98] sm:$0xf] %vm408, %v4184
        %4249 = vst.msk [vmem:[%s426 + $0x9c] sm:$0xf] %vm408, %v4185
        %4250 = vst.msk [vmem:[%s426 + $0xb0] sm:$0xf] %vm408, %v4186
        %4251 = vst.msk [vmem:[%s426 + $0xb4] sm:$0xf] %vm408, %v4187
        %4252 = vst.msk [vmem:[%s426 + $0xc8] sm:$0xf] %vm408, %v4188
        %4253 = vst.msk [vmem:[%s426 + $0xcc] sm:$0xf] %vm408, %v4189
        %4254 = vst.msk [vmem:[%s426 + $0xe0] sm:$0xf] %vm408, %v4190
        %4255 = vst.msk [vmem:[%s426 + $0xe4] sm:$0xf] %vm408, %v4191
        %4256 = vst.msk [vmem:[%s426 + $0xf8] sm:$0xf] %vm408, %v4192
        %4257 = vst.msk [vmem:[%s426 + $0xfc] sm:$0xf] %vm408, %v4193
        %4258 = vst.msk [vmem:[%s426 + $0x110] sm:$0xf] %vm408, %v4194
        %4259 = vst.msk [vmem:[%s426 + $0x114] sm:$0xf] %vm408, %v4195
        %4260 = vst.msk [vmem:[%s426 + $0x128] sm:$0xf] %vm408, %v4196
        %4261 = vst.msk [vmem:[%s426 + $0x12c] sm:$0xf] %vm408, %v4197
        %4262 = vst.msk [vmem:[%s426 + $0x140] sm:$0xf] %vm408, %v4198
        %4263 = vst.msk [vmem:[%s426 + $0x144] sm:$0xf] %vm408, %v4199
        %4264 = vst.msk [vmem:[%s426 + $0x158] sm:$0xf] %vm408, %v4200
        %4265 = vst.msk [vmem:[%s426 + $0x15c] sm:$0xf] %vm408, %v4201
        %4266 = vst.msk [vmem:[%s426 + $0x170] sm:$0xf] %vm408, %v4202
        %4267 = vst.msk [vmem:[%s426 + $0x174] sm:$0xf] %vm408, %v4203
        %v4268 = vld [vmem:[%s7] sm:$0x1]
        %v4269 = vld [vmem:[#allocation3 + $0x4] sm:$0x8]
        %v4270 = vld [vmem:[#allocation3 + $0x8] sm:$0xf]
        %v4271 = vld [vmem:[#allocation3 + $0xc] sm:$0xf]
        %v4272 = vld [vmem:[#allocation3 + $0x1c] sm:$0x8]
        %v4273 = vld [vmem:[#allocation3 + $0x20] sm:$0xf]
        %v4274 = vld [vmem:[#allocation3 + $0x24] sm:$0xf]
        %v4275 = vld [vmem:[#allocation3 + $0x34] sm:$0x8]
        %v4276 = vld [vmem:[#allocation3 + $0x38] sm:$0xf]
        %v4277 = vld [vmem:[#allocation3 + $0x3c] sm:$0xf]
        %v4278 = vld [vmem:[#allocation3 + $0x4c] sm:$0x8]
        %v4279 = vld [vmem:[#allocation3 + $0x50] sm:$0xf]
        %v4280 = vld [vmem:[#allocation3 + $0x54] sm:$0xf]
        %v4281 = vld [vmem:[#allocation3 + $0x64] sm:$0x8]
        %v4282 = vld [vmem:[#allocation3 + $0x68] sm:$0xf]
        %v4283 = vld [vmem:[#allocation3 + $0x6c] sm:$0xf]
        %v4284 = vld [vmem:[#allocation3 + $0x7c] sm:$0x8]
        %v4285 = vld [vmem:[#allocation3 + $0x80] sm:$0xf]
        %v4286 = vld [vmem:[#allocation3 + $0x84] sm:$0xf]
        %v4287 = vld [vmem:[#allocation3 + $0x94] sm:$0x8]
        %v4288 = vld [vmem:[#allocation3 + $0x98] sm:$0xf]
        %v4289 = vld [vmem:[#allocation3 + $0x9c] sm:$0xf]
        %v4290 = vld [vmem:[#allocation3 + $0xac] sm:$0x8]
        %v4291 = vld [vmem:[#allocation3 + $0xb0] sm:$0xf]
        %v4292 = vld [vmem:[#allocation3 + $0xb4] sm:$0xf]
        %v4293 = vld [vmem:[#allocation3 + $0xc4] sm:$0x8]
        %v4294 = vld [vmem:[#allocation3 + $0xc8] sm:$0xf]
        %v4295 = vld [vmem:[#allocation3 + $0xcc] sm:$0xf]
        %v4296 = vld [vmem:[#allocation3 + $0xdc] sm:$0x8]
        %v4297 = vld [vmem:[#allocation3 + $0xe0] sm:$0xf]
        %v4298 = vld [vmem:[#allocation3 + $0xe4] sm:$0xf]
        %v4299 = vld [vmem:[#allocation3 + $0xf4] sm:$0x8]
        %v4300 = vld [vmem:[#allocation3 + $0xf8] sm:$0xf]
        %v4301 = vld [vmem:[#allocation3 + $0xfc] sm:$0xf]
        %v4302 = vld [vmem:[#allocation3 + $0x10c] sm:$0x8]
        %v4303 = vld [vmem:[#allocation3 + $0x110] sm:$0xf]
        %v4304 = vld [vmem:[#allocation3 + $0x114] sm:$0xf]
        %v4305 = vld [vmem:[#allocation3 + $0x124] sm:$0x8]
        %v4306 = vld [vmem:[#allocation3 + $0x128] sm:$0xf]
        %v4307 = vld [vmem:[#allocation3 + $0x12c] sm:$0xf]
        %v4308 = vld [vmem:[#allocation3 + $0x13c] sm:$0x8]
        %v4309 = vld [vmem:[#allocation3 + $0x140] sm:$0xf]
        %v4310 = vld [vmem:[#allocation3 + $0x144] sm:$0xf]
        %v4311 = vld [vmem:[#allocation3 + $0x154] sm:$0x8]
        %v4312 = vld [vmem:[#allocation3 + $0x158] sm:$0xf]
        %v4313 = vld [vmem:[#allocation3 + $0x15c] sm:$0xf]
        %v4314 = vld [vmem:[#allocation3 + $0x16c] sm:$0x8]
        %v4315 = vld [vmem:[#allocation3 + $0x170] sm:$0xf]
        %v4316 = vld [vmem:[#allocation3 + $0x174] sm:$0xf]
        %v4317 = vld [vmem:[#allocation3 + $0x184] sm:$0x8]
        %v4318 = vld [vmem:[#allocation3 + $0x188] sm:$0xf]
        %v4319 = vld [vmem:[#allocation3 + $0x18c] sm:$0xf]
        %v4320 = vld [vmem:[#allocation3 + $0x19c] sm:$0x8]
        %v4321 = vld [vmem:[#allocation3 + $0x1a0] sm:$0xf]
        %v4322 = vld [vmem:[#allocation3 + $0x1a4] sm:$0xf]
        %v4323 = vld [vmem:[#allocation3 + $0x10] sm:$0x1]
        %v4324 = vld [vmem:[#allocation3 + $0x28] sm:$0x1]
        %v4325 = vld [vmem:[#allocation3 + $0x40] sm:$0x1]
        %v4326 = vld [vmem:[#allocation3 + $0x58] sm:$0x1]
        %v4327 = vld [vmem:[#allocation3 + $0x70] sm:$0x1]
        %v4328 = vld [vmem:[#allocation3 + $0x88] sm:$0x1]
        %v4329 = vld [vmem:[#allocation3 + $0xa0] sm:$0x1]
        %v4330 = vld [vmem:[#allocation3 + $0xb8] sm:$0x1]
        %v4331 = vld [vmem:[#allocation3 + $0xd0] sm:$0x1]
        %v4332 = vld [vmem:[#allocation3 + $0xe8] sm:$0x1]
        %v4333 = vld [vmem:[#allocation3 + $0x100] sm:$0x1]
        %v4334 = vld [vmem:[#allocation3 + $0x118] sm:$0x1]
        %v4335 = vld [vmem:[#allocation3 + $0x130] sm:$0x1]
        %v4336 = vld [vmem:[#allocation3 + $0x148] sm:$0x1]
        %v4337 = vld [vmem:[#allocation3 + $0x160] sm:$0x1]
        %v4338 = vld [vmem:[#allocation3 + $0x178] sm:$0x1]
        %v4339 = vld [vmem:[#allocation3 + $0x190] sm:$0x1]
        %v4340 = vld [vmem:[#allocation3 + $0x1a8] sm:$0x1]
        %v4395 = vunpack.c.l.b16 %v4269
        %v4396 = vunpack.c.l.b16 %v4270
        %v4397 = vunpack.c.l.b16 %v4271
        %v4398 = vunpack.c.l.b16 %v4272
        %v4399 = vunpack.c.l.b16 %v4273
        %v4400 = vunpack.c.l.b16 %v4274
        %v4401 = vunpack.c.l.b16 %v4275
        %v4402 = vunpack.c.l.b16 %v4276
        %v4403 = vunpack.c.l.b16 %v4277
        %v4404 = vunpack.c.l.b16 %v4278
        %v4405 = vunpack.c.l.b16 %v4279
        %v4406 = vunpack.c.l.b16 %v4280
        %v4407 = vunpack.c.l.b16 %v4281
        %v4408 = vunpack.c.l.b16 %v4282
        %v4409 = vunpack.c.l.b16 %v4283
        %v4410 = vunpack.c.l.b16 %v4284
        %v4411 = vunpack.c.l.b16 %v4285
        %v4412 = vunpack.c.l.b16 %v4286
        %v4413 = vunpack.c.l.b16 %v4287
        %v4414 = vunpack.c.l.b16 %v4288
        %v4415 = vunpack.c.l.b16 %v4289
        %v4416 = vunpack.c.l.b16 %v4290
        %v4417 = vunpack.c.l.b16 %v4291
        %v4418 = vunpack.c.l.b16 %v4292
        %v4419 = vunpack.c.l.b16 %v4293
        %v4420 = vunpack.c.l.b16 %v4294
        %v4421 = vunpack.c.l.b16 %v4295
        %v4422 = vunpack.c.l.b16 %v4296
        %v4423 = vunpack.c.l.b16 %v4297
        %v4424 = vunpack.c.l.b16 %v4298
        %v4425 = vunpack.c.l.b16 %v4299
        %v4426 = vunpack.c.l.b16 %v4300
        %v4427 = vunpack.c.l.b16 %v4301
        %v4428 = vunpack.c.l.b16 %v4302
        %v4429 = vunpack.c.l.b16 %v4303
        %v4430 = vunpack.c.l.b16 %v4304
        %v4431 = vunpack.c.l.b16 %v4305
        %v4432 = vunpack.c.l.b16 %v4306
        %v4433 = vunpack.c.l.b16 %v4307
        %v4434 = vunpack.c.l.b16 %v4308
        %v4435 = vunpack.c.l.b16 %v4309
        %v4436 = vunpack.c.l.b16 %v4310
        %v4437 = vunpack.c.l.b16 %v4311
        %v4438 = vunpack.c.l.b16 %v4312
        %v4439 = vunpack.c.l.b16 %v4313
        %v4440 = vunpack.c.l.b16 %v4314
        %v4441 = vunpack.c.l.b16 %v4315
        %v4442 = vunpack.c.l.b16 %v4316
        %v4443 = vunpack.c.l.b16 %v4317
        %v4444 = vunpack.c.l.b16 %v4318
        %v4445 = vunpack.c.l.b16 %v4319
        %v4446 = vunpack.c.l.b16 %v4320
        %v4447 = vunpack.c.l.b16 %v4321
        %v4448 = vunpack.c.l.b16 %v4322
        %v4449 = vpack.c.b16 %v4396, %v4395
        %v4450 = vpack.c.b16 %v4397, %v4397
        %v4451 = vpack.c.b16 %v4399, %v4398
        %v4452 = vpack.c.b16 %v4400, %v4400
        %v4453 = vpack.c.b16 %v4402, %v4401
        %v4454 = vpack.c.b16 %v4403, %v4403
        %v4455 = vpack.c.b16 %v4405, %v4404
        %v4456 = vpack.c.b16 %v4406, %v4406
        %v4457 = vpack.c.b16 %v4408, %v4407
        %v4458 = vpack.c.b16 %v4409, %v4409
        %v4459 = vpack.c.b16 %v4411, %v4410
        %v4460 = vpack.c.b16 %v4412, %v4412
        %v4461 = vpack.c.b16 %v4414, %v4413
        %v4462 = vpack.c.b16 %v4415, %v4415
        %v4463 = vpack.c.b16 %v4417, %v4416
        %v4464 = vpack.c.b16 %v4418, %v4418
        %v4465 = vpack.c.b16 %v4420, %v4419
        %v4466 = vpack.c.b16 %v4421, %v4421
        %v4467 = vpack.c.b16 %v4423, %v4422
        %v4468 = vpack.c.b16 %v4424, %v4424
        %v4469 = vpack.c.b16 %v4426, %v4425
        %v4470 = vpack.c.b16 %v4427, %v4427
        %v4471 = vpack.c.b16 %v4429, %v4428
        %v4472 = vpack.c.b16 %v4430, %v4430
        %v4473 = vpack.c.b16 %v4432, %v4431
        %v4474 = vpack.c.b16 %v4433, %v4433
        %v4475 = vpack.c.b16 %v4435, %v4434
        %v4476 = vpack.c.b16 %v4436, %v4436
        %v4477 = vpack.c.b16 %v4438, %v4437
        %v4478 = vpack.c.b16 %v4439, %v4439
        %v4479 = vpack.c.b16 %v4441, %v4440
        %v4480 = vpack.c.b16 %v4442, %v4442
        %v4481 = vpack.c.b16 %v4444, %v4443
        %v4482 = vpack.c.b16 %v4445, %v4445
        %v4483 = vpack.c.b16 %v4447, %v4446
        %v4484 = vpack.c.b16 %v4448, %v4448
        %v4485 = vpack.c.b16 %v4397, %v4396
        %v4486 = vpack.c.b16 %v4400, %v4399
        %v4487 = vpack.c.b16 %v4403, %v4402
        %v4488 = vpack.c.b16 %v4406, %v4405
        %v4489 = vpack.c.b16 %v4409, %v4408
        %v4490 = vpack.c.b16 %v4412, %v4411
        %v4491 = vpack.c.b16 %v4415, %v4414
        %v4492 = vpack.c.b16 %v4418, %v4417
        %v4493 = vpack.c.b16 %v4421, %v4420
        %v4494 = vpack.c.b16 %v4424, %v4423
        %v4495 = vpack.c.b16 %v4427, %v4426
        %v4496 = vpack.c.b16 %v4430, %v4429
        %v4497 = vpack.c.b16 %v4433, %v4432
        %v4498 = vpack.c.b16 %v4436, %v4435
        %v4499 = vpack.c.b16 %v4439, %v4438
        %v4500 = vpack.c.b16 %v4442, %v4441
        %v4501 = vpack.c.b16 %v4445, %v4444
        %v4502 = vpack.c.b16 %v4448, %v4447
        %v4504 = vshrl.u32 %v4485, 16
        %v4506 = vrot.slane %v4504, 4
        %v4507 = vshll.u32 %v4485, 16
        %v4509 = vrot.slane %v4507, 5
        %v4510 = vor.u32 %v4506, %v4509
        %v4512 = vshrl.u32 %v4486, 16
        %v4514 = vrot.slane %v4512, 4
        %v4515 = vshll.u32 %v4486, 16
        %v4517 = vrot.slane %v4515, 5
        %v4518 = vor.u32 %v4514, %v4517
        %v4520 = vshrl.u32 %v4487, 16
        %v4522 = vrot.slane %v4520, 4
        %v4523 = vshll.u32 %v4487, 16
        %v4525 = vrot.slane %v4523, 5
        %v4526 = vor.u32 %v4522, %v4525
        %v4528 = vshrl.u32 %v4488, 16
        %v4530 = vrot.slane %v4528, 4
        %v4531 = vshll.u32 %v4488, 16
        %v4533 = vrot.slane %v4531, 5
        %v4534 = vor.u32 %v4530, %v4533
        %v4536 = vshrl.u32 %v4489, 16
        %v4538 = vrot.slane %v4536, 4
        %v4539 = vshll.u32 %v4489, 16
        %v4541 = vrot.slane %v4539, 5
        %v4542 = vor.u32 %v4538, %v4541
        %v4544 = vshrl.u32 %v4490, 16
        %v4546 = vrot.slane %v4544, 4
        %v4547 = vshll.u32 %v4490, 16
        %v4549 = vrot.slane %v4547, 5
        %v4550 = vor.u32 %v4546, %v4549
        %v4552 = vshrl.u32 %v4491, 16
        %v4554 = vrot.slane %v4552, 4
        %v4555 = vshll.u32 %v4491, 16
        %v4557 = vrot.slane %v4555, 5
        %v4558 = vor.u32 %v4554, %v4557
        %v4560 = vshrl.u32 %v4492, 16
        %v4562 = vrot.slane %v4560, 4
        %v4563 = vshll.u32 %v4492, 16
        %v4565 = vrot.slane %v4563, 5
        %v4566 = vor.u32 %v4562, %v4565
        %v4568 = vshrl.u32 %v4493, 16
        %v4570 = vrot.slane %v4568, 4
        %v4571 = vshll.u32 %v4493, 16
        %v4573 = vrot.slane %v4571, 5
        %v4574 = vor.u32 %v4570, %v4573
        %v4576 = vshrl.u32 %v4494, 16
        %v4578 = vrot.slane %v4576, 4
        %v4579 = vshll.u32 %v4494, 16
        %v4581 = vrot.slane %v4579, 5
        %v4582 = vor.u32 %v4578, %v4581
        %v4584 = vshrl.u32 %v4495, 16
        %v4586 = vrot.slane %v4584, 4
        %v4587 = vshll.u32 %v4495, 16
        %v4589 = vrot.slane %v4587, 5
        %v4590 = vor.u32 %v4586, %v4589
        %v4592 = vshrl.u32 %v4496, 16
        %v4594 = vrot.slane %v4592, 4
        %v4595 = vshll.u32 %v4496, 16
        %v4597 = vrot.slane %v4595, 5
        %v4598 = vor.u32 %v4594, %v4597
        %v4600 = vshrl.u32 %v4497, 16
        %v4602 = vrot.slane %v4600, 4
        %v4603 = vshll.u32 %v4497, 16
        %v4605 = vrot.slane %v4603, 5
        %v4606 = vor.u32 %v4602, %v4605
        %v4608 = vshrl.u32 %v4498, 16
        %v4610 = vrot.slane %v4608, 4
        %v4611 = vshll.u32 %v4498, 16
        %v4613 = vrot.slane %v4611, 5
        %v4614 = vor.u32 %v4610, %v4613
        %v4616 = vshrl.u32 %v4499, 16
        %v4618 = vrot.slane %v4616, 4
        %v4619 = vshll.u32 %v4499, 16
        %v4621 = vrot.slane %v4619, 5
        %v4622 = vor.u32 %v4618, %v4621
        %v4624 = vshrl.u32 %v4500, 16
        %v4626 = vrot.slane %v4624, 4
        %v4627 = vshll.u32 %v4500, 16
        %v4629 = vrot.slane %v4627, 5
        %v4630 = vor.u32 %v4626, %v4629
        %v4632 = vshrl.u32 %v4501, 16
        %v4634 = vrot.slane %v4632, 4
        %v4635 = vshll.u32 %v4501, 16
        %v4637 = vrot.slane %v4635, 5
        %v4638 = vor.u32 %v4634, %v4637
        %v4640 = vshrl.u32 %v4502, 16
        %v4642 = vrot.slane %v4640, 4
        %v4643 = vshll.u32 %v4502, 16
        %v4645 = vrot.slane %v4643, 5
        %v4646 = vor.u32 %v4642, %v4645
        %4647 = vrot.lane.b32.xlu0 %v4510, 64
        %v4648 = vpop.permute.xlu0 %4647
        %4649 = vrot.lane.b32.xlu0 %v4518, 64
        %v4650 = vpop.permute.xlu0 %4649
        %4651 = vrot.lane.b32.xlu0 %v4526, 64
        %v4652 = vpop.permute.xlu0 %4651
        %4653 = vrot.lane.b32.xlu0 %v4534, 64
        %v4654 = vpop.permute.xlu0 %4653
        %4655 = vrot.lane.b32.xlu0 %v4542, 64
        %v4656 = vpop.permute.xlu0 %4655
        %4657 = vrot.lane.b32.xlu0 %v4550, 64
        %v4658 = vpop.permute.xlu0 %4657
        %4659 = vrot.lane.b32.xlu0 %v4558, 64
        %v4660 = vpop.permute.xlu0 %4659
        %4661 = vrot.lane.b32.xlu0 %v4566, 64
        %v4662 = vpop.permute.xlu0 %4661
        %4663 = vrot.lane.b32.xlu0 %v4574, 64
        %v4664 = vpop.permute.xlu0 %4663
        %4665 = vrot.lane.b32.xlu0 %v4582, 64
        %v4666 = vpop.permute.xlu0 %4665
        %4667 = vrot.lane.b32.xlu0 %v4590, 64
        %v4668 = vpop.permute.xlu0 %4667
        %4669 = vrot.lane.b32.xlu0 %v4598, 64
        %v4670 = vpop.permute.xlu0 %4669
        %4671 = vrot.lane.b32.xlu0 %v4606, 64
        %v4672 = vpop.permute.xlu0 %4671
        %4673 = vrot.lane.b32.xlu0 %v4614, 64
        %v4674 = vpop.permute.xlu0 %4673
        %4675 = vrot.lane.b32.xlu0 %v4622, 64
        %v4676 = vpop.permute.xlu0 %4675
        %4677 = vrot.lane.b32.xlu0 %v4630, 64
        %v4678 = vpop.permute.xlu0 %4677
        %4679 = vrot.lane.b32.xlu0 %v4638, 64
        %v4680 = vpop.permute.xlu0 %4679
        %4681 = vrot.lane.b32.xlu0 %v4646, 64
        %v4682 = vpop.permute.xlu0 %4681
        %v4701 = vunpack.c.l.b16 %v4323
        %v4702 = vunpack.c.l.b16 %v4324
        %v4703 = vunpack.c.l.b16 %v4325
        %v4704 = vunpack.c.l.b16 %v4326
        %v4705 = vunpack.c.l.b16 %v4327
        %v4706 = vunpack.c.l.b16 %v4328
        %v4707 = vunpack.c.l.b16 %v4329
        %v4708 = vunpack.c.l.b16 %v4330
        %v4709 = vunpack.c.l.b16 %v4331
        %v4710 = vunpack.c.l.b16 %v4332
        %v4711 = vunpack.c.l.b16 %v4333
        %v4712 = vunpack.c.l.b16 %v4334
        %v4713 = vunpack.c.l.b16 %v4335
        %v4714 = vunpack.c.l.b16 %v4336
        %v4715 = vunpack.c.l.b16 %v4337
        %v4716 = vunpack.c.l.b16 %v4338
        %v4717 = vunpack.c.l.b16 %v4339
        %v4718 = vunpack.c.l.b16 %v4340
        %v4719 = vpack.c.b16 %v4701, %v4701
        %v4720 = vpack.c.b16 %v4702, %v4702
        %v4721 = vpack.c.b16 %v4703, %v4703
        %v4722 = vpack.c.b16 %v4704, %v4704
        %v4723 = vpack.c.b16 %v4705, %v4705
        %v4724 = vpack.c.b16 %v4706, %v4706
        %v4725 = vpack.c.b16 %v4707, %v4707
        %v4726 = vpack.c.b16 %v4708, %v4708
        %v4727 = vpack.c.b16 %v4709, %v4709
        %v4728 = vpack.c.b16 %v4710, %v4710
        %v4729 = vpack.c.b16 %v4711, %v4711
        %v4730 = vpack.c.b16 %v4712, %v4712
        %v4731 = vpack.c.b16 %v4713, %v4713
        %v4732 = vpack.c.b16 %v4714, %v4714
        %v4733 = vpack.c.b16 %v4715, %v4715
        %v4734 = vpack.c.b16 %v4716, %v4716
        %v4735 = vpack.c.b16 %v4717, %v4717
        %v4736 = vpack.c.b16 %v4718, %v4718
        %v4737 = vrot.slane %v4485, 5
        %v4738 = vrot.slane %v4719, 5
        %v4739 = vsel %vm2454, %v4737, %v4738
        %v4740 = vrot.slane %v4486, 5
        %v4741 = vrot.slane %v4720, 5
        %v4742 = vsel %vm2454, %v4740, %v4741
        %v4743 = vrot.slane %v4487, 5
        %v4744 = vrot.slane %v4721, 5
        %v4745 = vsel %vm2454, %v4743, %v4744
        %v4746 = vrot.slane %v4488, 5
        %v4747 = vrot.slane %v4722, 5
        %v4748 = vsel %vm2454, %v4746, %v4747
        %v4749 = vrot.slane %v4489, 5
        %v4750 = vrot.slane %v4723, 5
        %v4751 = vsel %vm2454, %v4749, %v4750
        %v4752 = vrot.slane %v4490, 5
        %v4753 = vrot.slane %v4724, 5
        %v4754 = vsel %vm2454, %v4752, %v4753
        %v4755 = vrot.slane %v4491, 5
        %v4756 = vrot.slane %v4725, 5
        %v4757 = vsel %vm2454, %v4755, %v4756
        %v4758 = vrot.slane %v4492, 5
        %v4759 = vrot.slane %v4726, 5
        %v4760 = vsel %vm2454, %v4758, %v4759
        %v4761 = vrot.slane %v4493, 5
        %v4762 = vrot.slane %v4727, 5
        %v4763 = vsel %vm2454, %v4761, %v4762
        %v4764 = vrot.slane %v4494, 5
        %v4765 = vrot.slane %v4728, 5
        %v4766 = vsel %vm2454, %v4764, %v4765
        %v4767 = vrot.slane %v4495, 5
        %v4768 = vrot.slane %v4729, 5
        %v4769 = vsel %vm2454, %v4767, %v4768
        %v4770 = vrot.slane %v4496, 5
        %v4771 = vrot.slane %v4730, 5
        %v4772 = vsel %vm2454, %v4770, %v4771
        %v4773 = vrot.slane %v4497, 5
        %v4774 = vrot.slane %v4731, 5
        %v4775 = vsel %vm2454, %v4773, %v4774
        %v4776 = vrot.slane %v4498, 5
        %v4777 = vrot.slane %v4732, 5
        %v4778 = vsel %vm2454, %v4776, %v4777
        %v4779 = vrot.slane %v4499, 5
        %v4780 = vrot.slane %v4733, 5
        %v4781 = vsel %vm2454, %v4779, %v4780
        %v4782 = vrot.slane %v4500, 5
        %v4783 = vrot.slane %v4734, 5
        %v4784 = vsel %vm2454, %v4782, %v4783
        %v4785 = vrot.slane %v4501, 5
        %v4786 = vrot.slane %v4735, 5
        %v4787 = vsel %vm2454, %v4785, %v4786
        %v4788 = vrot.slane %v4502, 5
        %v4789 = vrot.slane %v4736, 5
        %v4790 = vsel %vm2454, %v4788, %v4789
        %v4793 = vsel %vm2509, %v4449, %v4648
        %v4795 = vsel %vm2509, %v4450, %v4648
        %v4798 = vsel %vm2509, %v4451, %v4650
        %v4800 = vsel %vm2509, %v4452, %v4650
        %v4803 = vsel %vm2509, %v4453, %v4652
        %v4805 = vsel %vm2509, %v4454, %v4652
        %v4808 = vsel %vm2509, %v4455, %v4654
        %v4810 = vsel %vm2509, %v4456, %v4654
        %v4813 = vsel %vm2509, %v4457, %v4656
        %v4815 = vsel %vm2509, %v4458, %v4656
        %v4818 = vsel %vm2509, %v4459, %v4658
        %v4820 = vsel %vm2509, %v4460, %v4658
        %v4823 = vsel %vm2509, %v4461, %v4660
        %v4825 = vsel %vm2509, %v4462, %v4660
        %v4828 = vsel %vm2509, %v4463, %v4662
        %v4830 = vsel %vm2509, %v4464, %v4662
        %v4833 = vsel %vm2509, %v4465, %v4664
        %v4835 = vsel %vm2509, %v4466, %v4664
        %v4838 = vsel %vm2509, %v4467, %v4666
        %v4840 = vsel %vm2509, %v4468, %v4666
        %v4843 = vsel %vm2509, %v4469, %v4668
        %v4845 = vsel %vm2509, %v4470, %v4668
        %v4848 = vsel %vm2509, %v4471, %v4670
        %v4850 = vsel %vm2509, %v4472, %v4670
        %v4853 = vsel %vm2509, %v4473, %v4672
        %v4855 = vsel %vm2509, %v4474, %v4672
        %v4858 = vsel %vm2509, %v4475, %v4674
        %v4860 = vsel %vm2509, %v4476, %v4674
        %v4863 = vsel %vm2509, %v4477, %v4676
        %v4865 = vsel %vm2509, %v4478, %v4676
        %v4868 = vsel %vm2509, %v4479, %v4678
        %v4870 = vsel %vm2509, %v4480, %v4678
        %v4873 = vsel %vm2509, %v4481, %v4680
        %v4875 = vsel %vm2509, %v4482, %v4680
        %v4878 = vsel %vm2509, %v4483, %v4682
        %v4880 = vsel %vm2509, %v4484, %v4682
        %v4881 = vshrl.u32 %v4793, 16
        %v4883 = vrot.slane %v4881, 3
        %v4884 = vshll.u32 %v4793, 16
        %v4886 = vrot.slane %v4884, 4
        %v4887 = vor.u32 %v4883, %v4886
        %v4888 = vshrl.u32 %v4795, 16
        %v4890 = vrot.slane %v4888, 3
        %v4891 = vshll.u32 %v4795, 16
        %v4893 = vrot.slane %v4891, 4
        %v4894 = vor.u32 %v4890, %v4893
        %v4895 = vsel %vm2600, %v4887, %v4894
        %v4897 = vshrl.u32 %v4737, 16
        %v4899 = vrot.slane %v4897, 3
        %v4900 = vshll.u32 %v4737, 16
        %v4902 = vrot.slane %v4900, 4
        %v4903 = vor.u32 %v4899, %v4902
        %v4905 = vshrl.u32 %v4739, 16
        %v4907 = vrot.slane %v4905, 3
        %v4908 = vshll.u32 %v4739, 16
        %v4910 = vrot.slane %v4908, 4
        %v4911 = vor.u32 %v4907, %v4910
        %v4912 = vsel %vm2600, %v4903, %v4911
        %v4913 = vshrl.u32 %v4798, 16
        %v4915 = vrot.slane %v4913, 3
        %v4916 = vshll.u32 %v4798, 16
        %v4918 = vrot.slane %v4916, 4
        %v4919 = vor.u32 %v4915, %v4918
        %v4920 = vshrl.u32 %v4800, 16
        %v4922 = vrot.slane %v4920, 3
        %v4923 = vshll.u32 %v4800, 16
        %v4925 = vrot.slane %v4923, 4
        %v4926 = vor.u32 %v4922, %v4925
        %v4927 = vsel %vm2600, %v4919, %v4926
        %v4929 = vshrl.u32 %v4740, 16
        %v4931 = vrot.slane %v4929, 3
        %v4932 = vshll.u32 %v4740, 16
        %v4934 = vrot.slane %v4932, 4
        %v4935 = vor.u32 %v4931, %v4934
        %v4937 = vshrl.u32 %v4742, 16
        %v4939 = vrot.slane %v4937, 3
        %v4940 = vshll.u32 %v4742, 16
        %v4942 = vrot.slane %v4940, 4
        %v4943 = vor.u32 %v4939, %v4942
        %v4944 = vsel %vm2600, %v4935, %v4943
        %v4945 = vshrl.u32 %v4803, 16
        %v4947 = vrot.slane %v4945, 3
        %v4948 = vshll.u32 %v4803, 16
        %v4950 = vrot.slane %v4948, 4
        %v4951 = vor.u32 %v4947, %v4950
        %v4952 = vshrl.u32 %v4805, 16
        %v4954 = vrot.slane %v4952, 3
        %v4955 = vshll.u32 %v4805, 16
        %v4957 = vrot.slane %v4955, 4
        %v4958 = vor.u32 %v4954, %v4957
        %v4959 = vsel %vm2600, %v4951, %v4958
        %v4961 = vshrl.u32 %v4743, 16
        %v4963 = vrot.slane %v4961, 3
        %v4964 = vshll.u32 %v4743, 16
        %v4966 = vrot.slane %v4964, 4
        %v4967 = vor.u32 %v4963, %v4966
        %v4969 = vshrl.u32 %v4745, 16
        %v4971 = vrot.slane %v4969, 3
        %v4972 = vshll.u32 %v4745, 16
        %v4974 = vrot.slane %v4972, 4
        %v4975 = vor.u32 %v4971, %v4974
        %v4976 = vsel %vm2600, %v4967, %v4975
        %v4977 = vshrl.u32 %v4808, 16
        %v4979 = vrot.slane %v4977, 3
        %v4980 = vshll.u32 %v4808, 16
        %v4982 = vrot.slane %v4980, 4
        %v4983 = vor.u32 %v4979, %v4982
        %v4984 = vshrl.u32 %v4810, 16
        %v4986 = vrot.slane %v4984, 3
        %v4987 = vshll.u32 %v4810, 16
        %v4989 = vrot.slane %v4987, 4
        %v4990 = vor.u32 %v4986, %v4989
        %v4991 = vsel %vm2600, %v4983, %v4990
        %v4993 = vshrl.u32 %v4746, 16
        %v4995 = vrot.slane %v4993, 3
        %v4996 = vshll.u32 %v4746, 16
        %v4998 = vrot.slane %v4996, 4
        %v4999 = vor.u32 %v4995, %v4998
        %v5001 = vshrl.u32 %v4748, 16
        %v5003 = vrot.slane %v5001, 3
        %v5004 = vshll.u32 %v4748, 16
        %v5006 = vrot.slane %v5004, 4
        %v5007 = vor.u32 %v5003, %v5006
        %v5008 = vsel %vm2600, %v4999, %v5007
        %v5009 = vshrl.u32 %v4813, 16
        %v5011 = vrot.slane %v5009, 3
        %v5012 = vshll.u32 %v4813, 16
        %v5014 = vrot.slane %v5012, 4
        %v5015 = vor.u32 %v5011, %v5014
        %v5016 = vshrl.u32 %v4815, 16
        %v5018 = vrot.slane %v5016, 3
        %v5019 = vshll.u32 %v4815, 16
        %v5021 = vrot.slane %v5019, 4
        %v5022 = vor.u32 %v5018, %v5021
        %v5023 = vsel %vm2600, %v5015, %v5022
        %v5025 = vshrl.u32 %v4749, 16
        %v5027 = vrot.slane %v5025, 3
        %v5028 = vshll.u32 %v4749, 16
        %v5030 = vrot.slane %v5028, 4
        %v5031 = vor.u32 %v5027, %v5030
        %v5033 = vshrl.u32 %v4751, 16
        %v5035 = vrot.slane %v5033, 3
        %v5036 = vshll.u32 %v4751, 16
        %v5038 = vrot.slane %v5036, 4
        %v5039 = vor.u32 %v5035, %v5038
        %v5040 = vsel %vm2600, %v5031, %v5039
        %v5041 = vshrl.u32 %v4818, 16
        %v5043 = vrot.slane %v5041, 3
        %v5044 = vshll.u32 %v4818, 16
        %v5046 = vrot.slane %v5044, 4
        %v5047 = vor.u32 %v5043, %v5046
        %v5048 = vshrl.u32 %v4820, 16
        %v5050 = vrot.slane %v5048, 3
        %v5051 = vshll.u32 %v4820, 16
        %v5053 = vrot.slane %v5051, 4
        %v5054 = vor.u32 %v5050, %v5053
        %v5055 = vsel %vm2600, %v5047, %v5054
        %v5057 = vshrl.u32 %v4752, 16
        %v5059 = vrot.slane %v5057, 3
        %v5060 = vshll.u32 %v4752, 16
        %v5062 = vrot.slane %v5060, 4
        %v5063 = vor.u32 %v5059, %v5062
        %v5065 = vshrl.u32 %v4754, 16
        %v5067 = vrot.slane %v5065, 3
        %v5068 = vshll.u32 %v4754, 16
        %v5070 = vrot.slane %v5068, 4
        %v5071 = vor.u32 %v5067, %v5070
        %v5072 = vsel %vm2600, %v5063, %v5071
        %v5073 = vshrl.u32 %v4823, 16
        %v5075 = vrot.slane %v5073, 3
        %v5076 = vshll.u32 %v4823, 16
        %v5078 = vrot.slane %v5076, 4
        %v5079 = vor.u32 %v5075, %v5078
        %v5080 = vshrl.u32 %v4825, 16
        %v5082 = vrot.slane %v5080, 3
        %v5083 = vshll.u32 %v4825, 16
        %v5085 = vrot.slane %v5083, 4
        %v5086 = vor.u32 %v5082, %v5085
        %v5087 = vsel %vm2600, %v5079, %v5086
        %v5089 = vshrl.u32 %v4755, 16
        %v5091 = vrot.slane %v5089, 3
        %v5092 = vshll.u32 %v4755, 16
        %v5094 = vrot.slane %v5092, 4
        %v5095 = vor.u32 %v5091, %v5094
        %v5097 = vshrl.u32 %v4757, 16
        %v5099 = vrot.slane %v5097, 3
        %v5100 = vshll.u32 %v4757, 16
        %v5102 = vrot.slane %v5100, 4
        %v5103 = vor.u32 %v5099, %v5102
        %v5104 = vsel %vm2600, %v5095, %v5103
        %v5105 = vshrl.u32 %v4828, 16
        %v5107 = vrot.slane %v5105, 3
        %v5108 = vshll.u32 %v4828, 16
        %v5110 = vrot.slane %v5108, 4
        %v5111 = vor.u32 %v5107, %v5110
        %v5112 = vshrl.u32 %v4830, 16
        %v5114 = vrot.slane %v5112, 3
        %v5115 = vshll.u32 %v4830, 16
        %v5117 = vrot.slane %v5115, 4
        %v5118 = vor.u32 %v5114, %v5117
        %v5119 = vsel %vm2600, %v5111, %v5118
        %v5121 = vshrl.u32 %v4758, 16
        %v5123 = vrot.slane %v5121, 3
        %v5124 = vshll.u32 %v4758, 16
        %v5126 = vrot.slane %v5124, 4
        %v5127 = vor.u32 %v5123, %v5126
        %v5129 = vshrl.u32 %v4760, 16
        %v5131 = vrot.slane %v5129, 3
        %v5132 = vshll.u32 %v4760, 16
        %v5134 = vrot.slane %v5132, 4
        %v5135 = vor.u32 %v5131, %v5134
        %v5136 = vsel %vm2600, %v5127, %v5135
        %v5137 = vshrl.u32 %v4833, 16
        %v5139 = vrot.slane %v5137, 3
        %v5140 = vshll.u32 %v4833, 16
        %v5142 = vrot.slane %v5140, 4
        %v5143 = vor.u32 %v5139, %v5142
        %v5144 = vshrl.u32 %v4835, 16
        %v5146 = vrot.slane %v5144, 3
        %v5147 = vshll.u32 %v4835, 16
        %v5149 = vrot.slane %v5147, 4
        %v5150 = vor.u32 %v5146, %v5149
        %v5151 = vsel %vm2600, %v5143, %v5150
        %v5153 = vshrl.u32 %v4761, 16
        %v5155 = vrot.slane %v5153, 3
        %v5156 = vshll.u32 %v4761, 16
        %v5158 = vrot.slane %v5156, 4
        %v5159 = vor.u32 %v5155, %v5158
        %v5161 = vshrl.u32 %v4763, 16
        %v5163 = vrot.slane %v5161, 3
        %v5164 = vshll.u32 %v4763, 16
        %v5166 = vrot.slane %v5164, 4
        %v5167 = vor.u32 %v5163, %v5166
        %v5168 = vsel %vm2600, %v5159, %v5167
        %v5169 = vshrl.u32 %v4838, 16
        %v5171 = vrot.slane %v5169, 3
        %v5172 = vshll.u32 %v4838, 16
        %v5174 = vrot.slane %v5172, 4
        %v5175 = vor.u32 %v5171, %v5174
        %v5176 = vshrl.u32 %v4840, 16
        %v5178 = vrot.slane %v5176, 3
        %v5179 = vshll.u32 %v4840, 16
        %v5181 = vrot.slane %v5179, 4
        %v5182 = vor.u32 %v5178, %v5181
        %v5183 = vsel %vm2600, %v5175, %v5182
        %v5185 = vshrl.u32 %v4764, 16
        %v5187 = vrot.slane %v5185, 3
        %v5188 = vshll.u32 %v4764, 16
        %v5190 = vrot.slane %v5188, 4
        %v5191 = vor.u32 %v5187, %v5190
        %v5193 = vshrl.u32 %v4766, 16
        %v5195 = vrot.slane %v5193, 3
        %v5196 = vshll.u32 %v4766, 16
        %v5198 = vrot.slane %v5196, 4
        %v5199 = vor.u32 %v5195, %v5198
        %v5200 = vsel %vm2600, %v5191, %v5199
        %v5201 = vshrl.u32 %v4843, 16
        %v5203 = vrot.slane %v5201, 3
        %v5204 = vshll.u32 %v4843, 16
        %v5206 = vrot.slane %v5204, 4
        %v5207 = vor.u32 %v5203, %v5206
        %v5208 = vshrl.u32 %v4845, 16
        %v5210 = vrot.slane %v5208, 3
        %v5211 = vshll.u32 %v4845, 16
        %v5213 = vrot.slane %v5211, 4
        %v5214 = vor.u32 %v5210, %v5213
        %v5215 = vsel %vm2600, %v5207, %v5214
        %v5217 = vshrl.u32 %v4767, 16
        %v5219 = vrot.slane %v5217, 3
        %v5220 = vshll.u32 %v4767, 16
        %v5222 = vrot.slane %v5220, 4
        %v5223 = vor.u32 %v5219, %v5222
        %v5225 = vshrl.u32 %v4769, 16
        %v5227 = vrot.slane %v5225, 3
        %v5228 = vshll.u32 %v4769, 16
        %v5230 = vrot.slane %v5228, 4
        %v5231 = vor.u32 %v5227, %v5230
        %v5232 = vsel %vm2600, %v5223, %v5231
        %v5233 = vshrl.u32 %v4848, 16
        %v5235 = vrot.slane %v5233, 3
        %v5236 = vshll.u32 %v4848, 16
        %v5238 = vrot.slane %v5236, 4
        %v5239 = vor.u32 %v5235, %v5238
        %v5240 = vshrl.u32 %v4850, 16
        %v5242 = vrot.slane %v5240, 3
        %v5243 = vshll.u32 %v4850, 16
        %v5245 = vrot.slane %v5243, 4
        %v5246 = vor.u32 %v5242, %v5245
        %v5247 = vsel %vm2600, %v5239, %v5246
        %v5249 = vshrl.u32 %v4770, 16
        %v5251 = vrot.slane %v5249, 3
        %v5252 = vshll.u32 %v4770, 16
        %v5254 = vrot.slane %v5252, 4
        %v5255 = vor.u32 %v5251, %v5254
        %v5257 = vshrl.u32 %v4772, 16
        %v5259 = vrot.slane %v5257, 3
        %v5260 = vshll.u32 %v4772, 16
        %v5262 = vrot.slane %v5260, 4
        %v5263 = vor.u32 %v5259, %v5262
        %v5264 = vsel %vm2600, %v5255, %v5263
        %v5265 = vshrl.u32 %v4853, 16
        %v5267 = vrot.slane %v5265, 3
        %v5268 = vshll.u32 %v4853, 16
        %v5270 = vrot.slane %v5268, 4
        %v5271 = vor.u32 %v5267, %v5270
        %v5272 = vshrl.u32 %v4855, 16
        %v5274 = vrot.slane %v5272, 3
        %v5275 = vshll.u32 %v4855, 16
        %v5277 = vrot.slane %v5275, 4
        %v5278 = vor.u32 %v5274, %v5277
        %v5279 = vsel %vm2600, %v5271, %v5278
        %v5281 = vshrl.u32 %v4773, 16
        %v5283 = vrot.slane %v5281, 3
        %v5284 = vshll.u32 %v4773, 16
        %v5286 = vrot.slane %v5284, 4
        %v5287 = vor.u32 %v5283, %v5286
        %v5289 = vshrl.u32 %v4775, 16
        %v5291 = vrot.slane %v5289, 3
        %v5292 = vshll.u32 %v4775, 16
        %v5294 = vrot.slane %v5292, 4
        %v5295 = vor.u32 %v5291, %v5294
        %v5296 = vsel %vm2600, %v5287, %v5295
        %v5297 = vshrl.u32 %v4858, 16
        %v5299 = vrot.slane %v5297, 3
        %v5300 = vshll.u32 %v4858, 16
        %v5302 = vrot.slane %v5300, 4
        %v5303 = vor.u32 %v5299, %v5302
        %v5304 = vshrl.u32 %v4860, 16
        %v5306 = vrot.slane %v5304, 3
        %v5307 = vshll.u32 %v4860, 16
        %v5309 = vrot.slane %v5307, 4
        %v5310 = vor.u32 %v5306, %v5309
        %v5311 = vsel %vm2600, %v5303, %v5310
        %v5313 = vshrl.u32 %v4776, 16
        %v5315 = vrot.slane %v5313, 3
        %v5316 = vshll.u32 %v4776, 16
        %v5318 = vrot.slane %v5316, 4
        %v5319 = vor.u32 %v5315, %v5318
        %v5321 = vshrl.u32 %v4778, 16
        %v5323 = vrot.slane %v5321, 3
        %v5324 = vshll.u32 %v4778, 16
        %v5326 = vrot.slane %v5324, 4
        %v5327 = vor.u32 %v5323, %v5326
        %v5328 = vsel %vm2600, %v5319, %v5327
        %v5329 = vshrl.u32 %v4863, 16
        %v5331 = vrot.slane %v5329, 3
        %v5332 = vshll.u32 %v4863, 16
        %v5334 = vrot.slane %v5332, 4
        %v5335 = vor.u32 %v5331, %v5334
        %v5336 = vshrl.u32 %v4865, 16
        %v5338 = vrot.slane %v5336, 3
        %v5339 = vshll.u32 %v4865, 16
        %v5341 = vrot.slane %v5339, 4
        %v5342 = vor.u32 %v5338, %v5341
        %v5343 = vsel %vm2600, %v5335, %v5342
        %v5345 = vshrl.u32 %v4779, 16
        %v5347 = vrot.slane %v5345, 3
        %v5348 = vshll.u32 %v4779, 16
        %v5350 = vrot.slane %v5348, 4
        %v5351 = vor.u32 %v5347, %v5350
        %v5353 = vshrl.u32 %v4781, 16
        %v5355 = vrot.slane %v5353, 3
        %v5356 = vshll.u32 %v4781, 16
        %v5358 = vrot.slane %v5356, 4
        %v5359 = vor.u32 %v5355, %v5358
        %v5360 = vsel %vm2600, %v5351, %v5359
        %v5361 = vshrl.u32 %v4868, 16
        %v5363 = vrot.slane %v5361, 3
        %v5364 = vshll.u32 %v4868, 16
        %v5366 = vrot.slane %v5364, 4
        %v5367 = vor.u32 %v5363, %v5366
        %v5368 = vshrl.u32 %v4870, 16
        %v5370 = vrot.slane %v5368, 3
        %v5371 = vshll.u32 %v4870, 16
        %v5373 = vrot.slane %v5371, 4
        %v5374 = vor.u32 %v5370, %v5373
        %v5375 = vsel %vm2600, %v5367, %v5374
        %v5377 = vshrl.u32 %v4782, 16
        %v5379 = vrot.slane %v5377, 3
        %v5380 = vshll.u32 %v4782, 16
        %v5382 = vrot.slane %v5380, 4
        %v5383 = vor.u32 %v5379, %v5382
        %v5385 = vshrl.u32 %v4784, 16
        %v5387 = vrot.slane %v5385, 3
        %v5388 = vshll.u32 %v4784, 16
        %v5390 = vrot.slane %v5388, 4
        %v5391 = vor.u32 %v5387, %v5390
        %v5392 = vsel %vm2600, %v5383, %v5391
        %v5393 = vshrl.u32 %v4873, 16
        %v5395 = vrot.slane %v5393, 3
        %v5396 = vshll.u32 %v4873, 16
        %v5398 = vrot.slane %v5396, 4
        %v5399 = vor.u32 %v5395, %v5398
        %v5400 = vshrl.u32 %v4875, 16
        %v5402 = vrot.slane %v5400, 3
        %v5403 = vshll.u32 %v4875, 16
        %v5405 = vrot.slane %v5403, 4
        %v5406 = vor.u32 %v5402, %v5405
        %v5407 = vsel %vm2600, %v5399, %v5406
        %v5409 = vshrl.u32 %v4785, 16
        %v5411 = vrot.slane %v5409, 3
        %v5412 = vshll.u32 %v4785, 16
        %v5414 = vrot.slane %v5412, 4
        %v5415 = vor.u32 %v5411, %v5414
        %v5417 = vshrl.u32 %v4787, 16
        %v5419 = vrot.slane %v5417, 3
        %v5420 = vshll.u32 %v4787, 16
        %v5422 = vrot.slane %v5420, 4
        %v5423 = vor.u32 %v5419, %v5422
        %v5424 = vsel %vm2600, %v5415, %v5423
        %v5425 = vshrl.u32 %v4878, 16
        %v5427 = vrot.slane %v5425, 3
        %v5428 = vshll.u32 %v4878, 16
        %v5430 = vrot.slane %v5428, 4
        %v5431 = vor.u32 %v5427, %v5430
        %v5432 = vshrl.u32 %v4880, 16
        %v5434 = vrot.slane %v5432, 3
        %v5435 = vshll.u32 %v4880, 16
        %v5437 = vrot.slane %v5435, 4
        %v5438 = vor.u32 %v5434, %v5437
        %v5439 = vsel %vm2600, %v5431, %v5438
        %v5441 = vshrl.u32 %v4788, 16
        %v5443 = vrot.slane %v5441, 3
        %v5444 = vshll.u32 %v4788, 16
        %v5446 = vrot.slane %v5444, 4
        %v5447 = vor.u32 %v5443, %v5446
        %v5449 = vshrl.u32 %v4790, 16
        %v5451 = vrot.slane %v5449, 3
        %v5452 = vshll.u32 %v4790, 16
        %v5454 = vrot.slane %v5452, 4
        %v5455 = vor.u32 %v5451, %v5454
        %v5456 = vsel %vm2600, %v5447, %v5455
        %v5475 = vld [vmem:[%s6] sm:$0xf]
        %v5476 = vld [vmem:[%s6 + $0x4] sm:$0xf]
        %v5477 = vld [vmem:[%s6 + $0x8] sm:$0xf]
        %v5478 = vld [vmem:[%s6 + $0xc] sm:$0xf]
        %v5479 = vld [vmem:[%s6 + $0x10] sm:$0xf]
        %v5480 = vld [vmem:[%s6 + $0x14] sm:$0xf]
        %v5481 = vld [vmem:[%s6 + $0x18] sm:$0xf]
        %v5482 = vld [vmem:[%s6 + $0x1c] sm:$0xf]
        %v5483 = vld [vmem:[%s6 + $0x20] sm:$0xf]
        %v5484 = vld [vmem:[%s6 + $0x24] sm:$0xf]
        %v5485 = vld [vmem:[%s6 + $0x28] sm:$0xf]
        %v5486 = vld [vmem:[%s6 + $0x2c] sm:$0xf]
        %v5487 = vld [vmem:[%s6 + $0x30] sm:$0xf]
        %v5488 = vld [vmem:[%s6 + $0x34] sm:$0xf]
        %v5489 = vld [vmem:[%s6 + $0x38] sm:$0xf]
        %v5490 = vld [vmem:[%s6 + $0x3c] sm:$0xf]
        %v5491 = vld [vmem:[%s6 + $0x40] sm:$0xf]
        %v5492 = vld [vmem:[%s6 + $0x44] sm:$0xf]
        %v5493 = vld [vmem:[%s6 + $0x48] sm:$0xf]
        %v5494 = vld [vmem:[%s6 + $0x4c] sm:$0xf]
        %v5495 = vld [vmem:[%s6 + $0x50] sm:$0xf]
        %v5496 = vld [vmem:[%s6 + $0x54] sm:$0xf]
        %v5497 = vld [vmem:[%s6 + $0x58] sm:$0xf]
        %v5498 = vld [vmem:[%s6 + $0x5c] sm:$0xf]
        %v5500 = vlaneseq
        %v5501 = vshrl.u32 %v5500, 7
        %v5502 = vsub.s32 0, %v5501
        %v5503 = vrot.slane %v4268, %v5502
        %v5529 = vunpack.c.l.b16 %v5475
        %v5530 = vunpack.c.l.b16 %v5476
        %v5531 = vunpack.c.l.b16 %v5477
        %v5532 = vunpack.c.l.b16 %v5478
        %v5533 = vunpack.c.l.b16 %v5479
        %v5534 = vunpack.c.l.b16 %v5480
        %v5535 = vunpack.c.l.b16 %v5481
        %v5536 = vunpack.c.l.b16 %v5482
        %v5537 = vunpack.c.l.b16 %v5483
        %v5538 = vunpack.c.l.b16 %v5484
        %v5539 = vunpack.c.l.b16 %v5485
        %v5540 = vunpack.c.l.b16 %v5486
        %v5541 = vunpack.c.l.b16 %v5487
        %v5542 = vunpack.c.l.b16 %v5488
        %v5543 = vunpack.c.l.b16 %v5489
        %v5544 = vunpack.c.l.b16 %v5490
        %v5545 = vunpack.c.l.b16 %v5491
        %v5546 = vunpack.c.l.b16 %v5492
        %v5547 = vunpack.c.l.b16 %v5493
        %v5548 = vunpack.c.l.b16 %v5494
        %v5549 = vunpack.c.l.b16 %v5495
        %v5550 = vunpack.c.l.b16 %v5496
        %v5551 = vunpack.c.l.b16 %v5497
        %v5552 = vunpack.c.l.b16 %v5498
        %v5553 = vpack.c.b16 %v5530, %v5529
        %v5554 = vpack.c.b16 %v5532, %v5531
        %v5555 = vpack.c.b16 %v5534, %v5533
        %v5556 = vpack.c.b16 %v5536, %v5535
        %v5557 = vpack.c.b16 %v5538, %v5537
        %v5558 = vpack.c.b16 %v5540, %v5539
        %v5559 = vpack.c.b16 %v5542, %v5541
        %v5560 = vpack.c.b16 %v5544, %v5543
        %v5561 = vpack.c.b16 %v5546, %v5545
        %v5562 = vpack.c.b16 %v5548, %v5547
        %v5563 = vpack.c.b16 %v5550, %v5549
        %v5564 = vpack.c.b16 %v5552, %v5551
        %v5578 = vsel %vm2509, %v4912, 0
        %v5581 = vsel %vm2509, %v4944, 0
        %v5584 = vsel %vm2509, %v4976, 0
        %v5587 = vsel %vm2509, %v5008, 0
        %v5590 = vsel %vm2509, %v5040, 0
        %v5593 = vsel %vm2509, %v5072, 0
        %v5596 = vsel %vm2509, %v5104, 0
        %v5599 = vsel %vm2509, %v5136, 0
        %v5602 = vsel %vm2509, %v5168, 0
        %v5605 = vsel %vm2509, %v5200, 0
        %v5608 = vsel %vm2509, %v5232, 0
        %v5611 = vsel %vm2509, %v5264, 0
        %v5614 = vsel %vm2509, %v5296, 0
        %v5617 = vsel %vm2509, %v5328, 0
        %v5620 = vsel %vm2509, %v5360, 0
        %v5623 = vsel %vm2509, %v5392, 0
        %5625 = vmatprep.subr.bf16.mxu0 0
        %5626 = vmatpush1.bf16.msra.mxu0 %v5560
        %5627 = vmatprep.subr.bf16.mxu0 0
        %5628 = vmatpush1.bf16.msra.mxu0 %v5559
        %5629 = vmatprep.subr.bf16.mxu0 0
        %5630 = vmatpush1.bf16.msra.mxu0 %v5558
        %5631 = vmatprep.subr.bf16.mxu0 0
        %5632 = vmatpush1.bf16.msra.mxu0 %v5557
        %5633 = vmatprep.subr.bf16.mxu0 0
        %5634 = vmatpush1.bf16.msra.mxu0 %v5556
        %5635 = vmatprep.subr.bf16.mxu0 0
        %5636 = vmatpush1.bf16.msra.mxu0 %v5555
        %5637 = vmatprep.subr.bf16.mxu0 0
        %5638 = vmatpush1.bf16.msra.mxu0 %v5554
        %5639 = vmatprep.subr.bf16.mxu0 0
        %5640 = vmatpush1.bf16.msra.mxu0 %v5553
        %5641 = vmatprep.subr.bf16.mxu0 0
        %5642 = vmatpush2.bf16.msra.mxu0 0
        %5643 = vmatprep.subr.bf16.mxu0 0
        %5644 = vmatpush2.bf16.msra.mxu0 0
        %5645 = vmatprep.subr.bf16.mxu0 0
        %5646 = vmatpush2.bf16.msra.mxu0 0
        %5647 = vmatprep.subr.bf16.mxu0 0
        %5648 = vmatpush2.bf16.msra.mxu0 0
        %5649 = vmatprep.subr.bf16.mxu0 0
        %5650 = vmatpush2.bf16.msra.mxu0 %v5564
        %5651 = vmatprep.subr.bf16.mxu0 0
        %5652 = vmatpush2.bf16.msra.mxu0 %v5563
        %5653 = vmatprep.subr.bf16.mxu0 0
        %5654 = vmatpush2.bf16.msra.mxu0 %v5562
        %5655 = vmatprep.subr.bf16.mxu0 0
        %5656 = vmatpush2.bf16.msra.mxu0 %v5561
        %5657 = vmatprep.mubr.bf16.mxu0 %v5578
        %5658 = vmatmul.mubr.bf16.gmra.mxu0 %v4895
        %v5659 = vpop.f32.mrf.mxu0
        %v5660 = vadd.f32 %v5503, %v5659
        %v5661 = vpop.f32.mrf.mxu0
        %v5662 = vpop.f32.mrf.mxu0
        %v5663 = vadd.f32 %v5503, %v5662
        %v5664 = vpop.f32.mrf.mxu0
        %5665 = vmatprep.mubr.bf16.mxu0 %v5581
        %5666 = vmatmul.mubr.bf16.gmra.mxu0 %v4927
        %v5667 = vpop.f32.mrf.mxu0
        %v5668 = vadd.f32 %v5503, %v5667
        %v5669 = vpop.f32.mrf.mxu0
        %v5670 = vpop.f32.mrf.mxu0
        %v5671 = vadd.f32 %v5503, %v5670
        %v5672 = vpop.f32.mrf.mxu0
        %5673 = vmatprep.mubr.bf16.mxu0 %v5584
        %5674 = vmatmul.mubr.bf16.gmra.mxu0 %v4959
        %v5675 = vpop.f32.mrf.mxu0
        %v5676 = vadd.f32 %v5503, %v5675
        %v5677 = vpop.f32.mrf.mxu0
        %v5678 = vpop.f32.mrf.mxu0
        %v5679 = vadd.f32 %v5503, %v5678
        %v5680 = vpop.f32.mrf.mxu0
        %5681 = vmatprep.mubr.bf16.mxu0 %v5587
        %5682 = vmatmul.mubr.bf16.gmra.mxu0 %v4991
        %v5683 = vpop.f32.mrf.mxu0
        %v5684 = vadd.f32 %v5503, %v5683
        %v5685 = vpop.f32.mrf.mxu0
        %v5686 = vpop.f32.mrf.mxu0
        %v5687 = vadd.f32 %v5503, %v5686
        %v5688 = vpop.f32.mrf.mxu0
        %5689 = vmatprep.mubr.bf16.mxu0 %v5590
        %5690 = vmatmul.mubr.bf16.gmra.mxu0 %v5023
        %v5691 = vpop.f32.mrf.mxu0
        %v5692 = vadd.f32 %v5503, %v5691
        %v5693 = vpop.f32.mrf.mxu0
        %v5694 = vpop.f32.mrf.mxu0
        %v5695 = vadd.f32 %v5503, %v5694
        %v5696 = vpop.f32.mrf.mxu0
        %5697 = vmatprep.mubr.bf16.mxu0 %v5593
        %5698 = vmatmul.mubr.bf16.gmra.mxu0 %v5055
        %v5699 = vpop.f32.mrf.mxu0
        %v5700 = vadd.f32 %v5503, %v5699
        %v5701 = vpop.f32.mrf.mxu0
        %v5702 = vpop.f32.mrf.mxu0
        %v5703 = vadd.f32 %v5503, %v5702
        %v5704 = vpop.f32.mrf.mxu0
        %5705 = vmatprep.mubr.bf16.mxu0 %v5596
        %5706 = vmatmul.mubr.bf16.gmra.mxu0 %v5087
        %v5707 = vpop.f32.mrf.mxu0
        %v5708 = vadd.f32 %v5503, %v5707
        %v5709 = vpop.f32.mrf.mxu0
        %v5710 = vpop.f32.mrf.mxu0
        %v5711 = vadd.f32 %v5503, %v5710
        %v5712 = vpop.f32.mrf.mxu0
        %5713 = vmatprep.mubr.bf16.mxu0 %v5599
        %5714 = vmatmul.mubr.bf16.gmra.mxu0 %v5119
        %v5715 = vpop.f32.mrf.mxu0
        %v5716 = vadd.f32 %v5503, %v5715
        %v5717 = vpop.f32.mrf.mxu0
        %v5718 = vpop.f32.mrf.mxu0
        %v5719 = vadd.f32 %v5503, %v5718
        %v5720 = vpop.f32.mrf.mxu0
        %5721 = vmatprep.mubr.bf16.mxu0 %v5602
        %5722 = vmatmul.mubr.bf16.gmra.mxu0 %v5151
        %v5723 = vpop.f32.mrf.mxu0
        %v5724 = vadd.f32 %v5503, %v5723
        %v5725 = vpop.f32.mrf.mxu0
        %v5726 = vpop.f32.mrf.mxu0
        %v5727 = vadd.f32 %v5503, %v5726
        %v5728 = vpop.f32.mrf.mxu0
        %5729 = vmatprep.mubr.bf16.mxu0 %v5605
        %5730 = vmatmul.mubr.bf16.gmra.mxu0 %v5183
        %v5731 = vpop.f32.mrf.mxu0
        %v5732 = vadd.f32 %v5503, %v5731
        %v5733 = vpop.f32.mrf.mxu0
        %v5734 = vpop.f32.mrf.mxu0
        %v5735 = vadd.f32 %v5503, %v5734
        %v5736 = vpop.f32.mrf.mxu0
        %5737 = vmatprep.mubr.bf16.mxu0 %v5608
        %5738 = vmatmul.mubr.bf16.gmra.mxu0 %v5215
        %v5739 = vpop.f32.mrf.mxu0
        %v5740 = vadd.f32 %v5503, %v5739
        %v5741 = vpop.f32.mrf.mxu0
        %v5742 = vpop.f32.mrf.mxu0
        %v5743 = vadd.f32 %v5503, %v5742
        %v5744 = vpop.f32.mrf.mxu0
        %5745 = vmatprep.mubr.bf16.mxu0 %v5611
        %5746 = vmatmul.mubr.bf16.gmra.mxu0 %v5247
        %v5747 = vpop.f32.mrf.mxu0
        %v5748 = vadd.f32 %v5503, %v5747
        %v5749 = vpop.f32.mrf.mxu0
        %v5750 = vpop.f32.mrf.mxu0
        %v5751 = vadd.f32 %v5503, %v5750
        %v5752 = vpop.f32.mrf.mxu0
        %5753 = vmatprep.mubr.bf16.mxu0 %v5614
        %5754 = vmatmul.mubr.bf16.gmra.mxu0 %v5279
        %v5755 = vpop.f32.mrf.mxu0
        %v5756 = vadd.f32 %v5503, %v5755
        %v5757 = vpop.f32.mrf.mxu0
        %v5758 = vpop.f32.mrf.mxu0
        %v5759 = vadd.f32 %v5503, %v5758
        %v5760 = vpop.f32.mrf.mxu0
        %5761 = vmatprep.mubr.bf16.mxu0 %v5617
        %5762 = vmatmul.mubr.bf16.gmra.mxu0 %v5311
        %v5763 = vpop.f32.mrf.mxu0
        %v5764 = vadd.f32 %v5503, %v5763
        %v5765 = vpop.f32.mrf.mxu0
        %v5766 = vpop.f32.mrf.mxu0
        %v5767 = vadd.f32 %v5503, %v5766
        %v5768 = vpop.f32.mrf.mxu0
        %5769 = vmatprep.mubr.bf16.mxu0 %v5620
        %5770 = vmatmul.mubr.bf16.gmra.mxu0 %v5343
        %v5771 = vpop.f32.mrf.mxu0
        %v5772 = vadd.f32 %v5503, %v5771
        %v5773 = vpop.f32.mrf.mxu0
        %v5774 = vpop.f32.mrf.mxu0
        %v5775 = vadd.f32 %v5503, %v5774
        %v5776 = vpop.f32.mrf.mxu0
        %5777 = vmatprep.mubr.bf16.mxu0 %v5623
        %5778 = vmatmul.mubr.bf16.gmra.mxu0 %v5375
        %v5779 = vpop.f32.mrf.mxu0
        %v5780 = vadd.f32 %v5503, %v5779
        %v5781 = vpop.f32.mrf.mxu0
        %v5782 = vpop.f32.mrf.mxu0
        %v5783 = vadd.f32 %v5503, %v5782
        %v5784 = vpop.f32.mrf.mxu0
        %5785 = vdwg.mxu0
        %s5786 = scalar_lea.vmem %s6, 96
        %v5787 = vld [vmem:[%s5786] sm:$0xf]
        %v5788 = vld [vmem:[%s5786 + $0x4] sm:$0xf]
        %v5789 = vld [vmem:[%s5786 + $0x8] sm:$0xf]
        %v5790 = vld [vmem:[%s5786 + $0xc] sm:$0xf]
        %v5791 = vld [vmem:[%s5786 + $0x10] sm:$0xf]
        %v5792 = vld [vmem:[%s5786 + $0x14] sm:$0xf]
        %v5793 = vld [vmem:[%s5786 + $0x18] sm:$0xf]
        %v5794 = vld [vmem:[%s5786 + $0x1c] sm:$0xf]
        %v5795 = vld [vmem:[%s5786 + $0x20] sm:$0xf]
        %v5796 = vld [vmem:[%s5786 + $0x24] sm:$0xf]
        %v5797 = vld [vmem:[%s5786 + $0x28] sm:$0xf]
        %v5798 = vld [vmem:[%s5786 + $0x2c] sm:$0xf]
        %v5799 = vld [vmem:[%s5786 + $0x30] sm:$0xf]
        %v5800 = vld [vmem:[%s5786 + $0x34] sm:$0xf]
        %v5801 = vld [vmem:[%s5786 + $0x38] sm:$0xf]
        %v5802 = vld [vmem:[%s5786 + $0x3c] sm:$0xf]
        %v5803 = vld [vmem:[%s5786 + $0x40] sm:$0xf]
        %v5804 = vld [vmem:[%s5786 + $0x44] sm:$0xf]
        %v5805 = vld [vmem:[%s5786 + $0x48] sm:$0xf]
        %v5806 = vld [vmem:[%s5786 + $0x4c] sm:$0xf]
        %v5807 = vld [vmem:[%s5786 + $0x50] sm:$0xf]
        %v5808 = vld [vmem:[%s5786 + $0x54] sm:$0xf]
        %v5809 = vld [vmem:[%s5786 + $0x58] sm:$0xf]
        %v5810 = vld [vmem:[%s5786 + $0x5c] sm:$0xf]
        %v5835 = vunpack.c.l.b16 %v5787
        %v5836 = vunpack.c.l.b16 %v5788
        %v5837 = vunpack.c.l.b16 %v5789
        %v5838 = vunpack.c.l.b16 %v5790
        %v5839 = vunpack.c.l.b16 %v5791
        %v5840 = vunpack.c.l.b16 %v5792
        %v5841 = vunpack.c.l.b16 %v5793
        %v5842 = vunpack.c.l.b16 %v5794
        %v5843 = vunpack.c.l.b16 %v5795
        %v5844 = vunpack.c.l.b16 %v5796
        %v5845 = vunpack.c.l.b16 %v5797
        %v5846 = vunpack.c.l.b16 %v5798
        %v5847 = vunpack.c.l.b16 %v5799
        %v5848 = vunpack.c.l.b16 %v5800
        %v5849 = vunpack.c.l.b16 %v5801
        %v5850 = vunpack.c.l.b16 %v5802
        %v5851 = vunpack.c.l.b16 %v5803
        %v5852 = vunpack.c.l.b16 %v5804
        %v5853 = vunpack.c.l.b16 %v5805
        %v5854 = vunpack.c.l.b16 %v5806
        %v5855 = vunpack.c.l.b16 %v5807
        %v5856 = vunpack.c.l.b16 %v5808
        %v5857 = vunpack.c.l.b16 %v5809
        %v5858 = vunpack.c.l.b16 %v5810
        %v5859 = vpack.c.b16 %v5836, %v5835
        %v5860 = vpack.c.b16 %v5838, %v5837
        %v5861 = vpack.c.b16 %v5840, %v5839
        %v5862 = vpack.c.b16 %v5842, %v5841
        %v5863 = vpack.c.b16 %v5844, %v5843
        %v5864 = vpack.c.b16 %v5846, %v5845
        %v5865 = vpack.c.b16 %v5848, %v5847
        %v5866 = vpack.c.b16 %v5850, %v5849
        %v5867 = vpack.c.b16 %v5852, %v5851
        %v5868 = vpack.c.b16 %v5854, %v5853
        %v5869 = vpack.c.b16 %v5856, %v5855
        %v5870 = vpack.c.b16 %v5858, %v5857
        %v5884 = vsel %vm2509, %v5424, 0
        %5886 = vmatprep.subr.bf16.mxu0 0
        %5887 = vmatpush1.bf16.msra.mxu0 %v5866
        %5888 = vmatprep.subr.bf16.mxu0 0
        %5889 = vmatpush1.bf16.msra.mxu0 %v5865
        %5890 = vmatprep.subr.bf16.mxu0 0
        %5891 = vmatpush1.bf16.msra.mxu0 %v5864
        %5892 = vmatprep.subr.bf16.mxu0 0
        %5893 = vmatpush1.bf16.msra.mxu0 %v5863
        %5894 = vmatprep.subr.bf16.mxu0 0
        %5895 = vmatpush1.bf16.msra.mxu0 %v5862
        %5896 = vmatprep.subr.bf16.mxu0 0
        %5897 = vmatpush1.bf16.msra.mxu0 %v5861
        %5898 = vmatprep.subr.bf16.mxu0 0
        %5899 = vmatpush1.bf16.msra.mxu0 %v5860
        %5900 = vmatprep.subr.bf16.mxu0 0
        %5901 = vmatpush1.bf16.msra.mxu0 %v5859
        %5902 = vmatprep.subr.bf16.mxu0 0
        %5903 = vmatpush2.bf16.msra.mxu0 0
        %5904 = vmatprep.subr.bf16.mxu0 0
        %5905 = vmatpush2.bf16.msra.mxu0 0
        %5906 = vmatprep.subr.bf16.mxu0 0
        %5907 = vmatpush2.bf16.msra.mxu0 0
        %5908 = vmatprep.subr.bf16.mxu0 0
        %5909 = vmatpush2.bf16.msra.mxu0 0
        %5910 = vmatprep.subr.bf16.mxu0 0
        %5911 = vmatpush2.bf16.msra.mxu0 %v5870
        %5912 = vmatprep.subr.bf16.mxu0 0
        %5913 = vmatpush2.bf16.msra.mxu0 %v5869
        %5914 = vmatprep.subr.bf16.mxu0 0
        %5915 = vmatpush2.bf16.msra.mxu0 %v5868
        %5916 = vmatprep.subr.bf16.mxu0 0
        %5917 = vmatpush2.bf16.msra.mxu0 %v5867
        %5918 = vmatprep.mubr.bf16.mxu0 %v5581
        %5919 = vmatmul.mubr.bf16.gmra.mxu0 %v4927
        %v5920 = vpop.f32.mrf.mxu0
        %v5921 = vadd.f32 0.0, %v5920
        %v5922 = vpop.f32.mrf.mxu0
        %v5923 = vpop.f32.mrf.mxu0
        %v5924 = vadd.f32 0.0, %v5923
        %v5925 = vpop.f32.mrf.mxu0
        %5926 = vmatprep.mubr.bf16.mxu0 %v5584
        %5927 = vmatmul.mubr.bf16.gmra.mxu0 %v4959
        %v5928 = vpop.f32.mrf.mxu0
        %v5929 = vadd.f32 0.0, %v5928
        %v5930 = vpop.f32.mrf.mxu0
        %v5931 = vpop.f32.mrf.mxu0
        %v5932 = vadd.f32 0.0, %v5931
        %v5933 = vpop.f32.mrf.mxu0
        %5934 = vmatprep.mubr.bf16.mxu0 %v5587
        %5935 = vmatmul.mubr.bf16.gmra.mxu0 %v4991
        %v5936 = vpop.f32.mrf.mxu0
        %v5937 = vadd.f32 0.0, %v5936
        %v5938 = vpop.f32.mrf.mxu0
        %v5939 = vpop.f32.mrf.mxu0
        %v5940 = vadd.f32 0.0, %v5939
        %v5941 = vpop.f32.mrf.mxu0
        %5942 = vmatprep.mubr.bf16.mxu0 %v5590
        %5943 = vmatmul.mubr.bf16.gmra.mxu0 %v5023
        %v5944 = vpop.f32.mrf.mxu0
        %v5945 = vadd.f32 0.0, %v5944
        %v5946 = vpop.f32.mrf.mxu0
        %v5947 = vpop.f32.mrf.mxu0
        %v5948 = vadd.f32 0.0, %v5947
        %v5949 = vpop.f32.mrf.mxu0
        %5950 = vmatprep.mubr.bf16.mxu0 %v5593
        %5951 = vmatmul.mubr.bf16.gmra.mxu0 %v5055
        %v5952 = vpop.f32.mrf.mxu0
        %v5953 = vadd.f32 0.0, %v5952
        %v5954 = vpop.f32.mrf.mxu0
        %v5955 = vpop.f32.mrf.mxu0
        %v5956 = vadd.f32 0.0, %v5955
        %v5957 = vpop.f32.mrf.mxu0
        %5958 = vmatprep.mubr.bf16.mxu0 %v5596
        %5959 = vmatmul.mubr.bf16.gmra.mxu0 %v5087
        %v5960 = vpop.f32.mrf.mxu0
        %v5961 = vadd.f32 0.0, %v5960
        %v5962 = vpop.f32.mrf.mxu0
        %v5963 = vpop.f32.mrf.mxu0
        %v5964 = vadd.f32 0.0, %v5963
        %v5965 = vpop.f32.mrf.mxu0
        %5966 = vmatprep.mubr.bf16.mxu0 %v5599
        %5967 = vmatmul.mubr.bf16.gmra.mxu0 %v5119
        %v5968 = vpop.f32.mrf.mxu0
        %v5969 = vadd.f32 0.0, %v5968
        %v5970 = vpop.f32.mrf.mxu0
        %v5971 = vpop.f32.mrf.mxu0
        %v5972 = vadd.f32 0.0, %v5971
        %v5973 = vpop.f32.mrf.mxu0
        %5974 = vmatprep.mubr.bf16.mxu0 %v5602
        %5975 = vmatmul.mubr.bf16.gmra.mxu0 %v5151
        %v5976 = vpop.f32.mrf.mxu0
        %v5977 = vadd.f32 0.0, %v5976
        %v5978 = vpop.f32.mrf.mxu0
        %v5979 = vpop.f32.mrf.mxu0
        %v5980 = vadd.f32 0.0, %v5979
        %v5981 = vpop.f32.mrf.mxu0
        %5982 = vmatprep.mubr.bf16.mxu0 %v5605
        %5983 = vmatmul.mubr.bf16.gmra.mxu0 %v5183
        %v5984 = vpop.f32.mrf.mxu0
        %v5985 = vadd.f32 0.0, %v5984
        %v5986 = vpop.f32.mrf.mxu0
        %v5987 = vpop.f32.mrf.mxu0
        %v5988 = vadd.f32 0.0, %v5987
        %v5989 = vpop.f32.mrf.mxu0
        %5990 = vmatprep.mubr.bf16.mxu0 %v5608
        %5991 = vmatmul.mubr.bf16.gmra.mxu0 %v5215
        %v5992 = vpop.f32.mrf.mxu0
        %v5993 = vadd.f32 0.0, %v5992
        %v5994 = vpop.f32.mrf.mxu0
        %v5995 = vpop.f32.mrf.mxu0
        %v5996 = vadd.f32 0.0, %v5995
        %v5997 = vpop.f32.mrf.mxu0
        %5998 = vmatprep.mubr.bf16.mxu0 %v5611
        %5999 = vmatmul.mubr.bf16.gmra.mxu0 %v5247
        %v6000 = vpop.f32.mrf.mxu0
        %v6001 = vadd.f32 0.0, %v6000
        %v6002 = vpop.f32.mrf.mxu0
        %v6003 = vpop.f32.mrf.mxu0
        %v6004 = vadd.f32 0.0, %v6003
        %v6005 = vpop.f32.mrf.mxu0
        %6006 = vmatprep.mubr.bf16.mxu0 %v5614
        %6007 = vmatmul.mubr.bf16.gmra.mxu0 %v5279
        %v6008 = vpop.f32.mrf.mxu0
        %v6009 = vadd.f32 0.0, %v6008
        %v6010 = vpop.f32.mrf.mxu0
        %v6011 = vpop.f32.mrf.mxu0
        %v6012 = vadd.f32 0.0, %v6011
        %v6013 = vpop.f32.mrf.mxu0
        %6014 = vmatprep.mubr.bf16.mxu0 %v5617
        %6015 = vmatmul.mubr.bf16.gmra.mxu0 %v5311
        %v6016 = vpop.f32.mrf.mxu0
        %v6017 = vadd.f32 0.0, %v6016
        %v6018 = vpop.f32.mrf.mxu0
        %v6019 = vpop.f32.mrf.mxu0
        %v6020 = vadd.f32 0.0, %v6019
        %v6021 = vpop.f32.mrf.mxu0
        %6022 = vmatprep.mubr.bf16.mxu0 %v5620
        %6023 = vmatmul.mubr.bf16.gmra.mxu0 %v5343
        %v6024 = vpop.f32.mrf.mxu0
        %v6025 = vadd.f32 0.0, %v6024
        %v6026 = vpop.f32.mrf.mxu0
        %v6027 = vpop.f32.mrf.mxu0
        %v6028 = vadd.f32 0.0, %v6027
        %v6029 = vpop.f32.mrf.mxu0
        %6030 = vmatprep.mubr.bf16.mxu0 %v5623
        %6031 = vmatmul.mubr.bf16.gmra.mxu0 %v5375
        %v6032 = vpop.f32.mrf.mxu0
        %v6033 = vadd.f32 0.0, %v6032
        %v6034 = vpop.f32.mrf.mxu0
        %v6035 = vpop.f32.mrf.mxu0
        %v6036 = vadd.f32 0.0, %v6035
        %v6037 = vpop.f32.mrf.mxu0
        %6038 = vmatprep.mubr.bf16.mxu0 %v5884
        %6039 = vmatmul.mubr.bf16.gmra.mxu0 %v5407
        %v6040 = vpop.f32.mrf.mxu0
        %v6041 = vadd.f32 0.0, %v6040
        %v6042 = vpop.f32.mrf.mxu0
        %v6043 = vpop.f32.mrf.mxu0
        %v6044 = vadd.f32 0.0, %v6043
        %v6045 = vpop.f32.mrf.mxu0
        %6046 = vdwg.mxu0
        %v6047 = vadd.f32 %v5660, %v5921
        %v6048 = vadd.f32 %v5663, %v5924
        %v6049 = vadd.f32 %v5668, %v5929
        %v6050 = vadd.f32 %v5671, %v5932
        %v6051 = vadd.f32 %v5676, %v5937
        %v6052 = vadd.f32 %v5679, %v5940
        %v6053 = vadd.f32 %v5684, %v5945
        %v6054 = vadd.f32 %v5687, %v5948
        %v6055 = vadd.f32 %v5692, %v5953
        %v6056 = vadd.f32 %v5695, %v5956
        %v6057 = vadd.f32 %v5700, %v5961
        %v6058 = vadd.f32 %v5703, %v5964
        %v6059 = vadd.f32 %v5708, %v5969
        %v6060 = vadd.f32 %v5711, %v5972
        %v6061 = vadd.f32 %v5716, %v5977
        %v6062 = vadd.f32 %v5719, %v5980
        %v6063 = vadd.f32 %v5724, %v5985
        %v6064 = vadd.f32 %v5727, %v5988
        %v6065 = vadd.f32 %v5732, %v5993
        %v6066 = vadd.f32 %v5735, %v5996
        %v6067 = vadd.f32 %v5740, %v6001
        %v6068 = vadd.f32 %v5743, %v6004
        %v6069 = vadd.f32 %v5748, %v6009
        %v6070 = vadd.f32 %v5751, %v6012
        %v6071 = vadd.f32 %v5756, %v6017
        %v6072 = vadd.f32 %v5759, %v6020
        %v6073 = vadd.f32 %v5764, %v6025
        %v6074 = vadd.f32 %v5767, %v6028
        %v6075 = vadd.f32 %v5772, %v6033
        %v6076 = vadd.f32 %v5775, %v6036
        %v6077 = vadd.f32 %v5780, %v6041
        %v6078 = vadd.f32 %v5783, %v6044
        %s6079 = scalar_lea.vmem %s6, 192
        %v6080 = vld [vmem:[%s6079] sm:$0xf]
        %v6081 = vld [vmem:[%s6079 + $0x4] sm:$0xf]
        %v6082 = vld [vmem:[%s6079 + $0x8] sm:$0xf]
        %v6083 = vld [vmem:[%s6079 + $0xc] sm:$0xf]
        %v6084 = vld [vmem:[%s6079 + $0x10] sm:$0xf]
        %v6085 = vld [vmem:[%s6079 + $0x14] sm:$0xf]
        %v6086 = vld [vmem:[%s6079 + $0x18] sm:$0xf]
        %v6087 = vld [vmem:[%s6079 + $0x1c] sm:$0xf]
        %v6088 = vld [vmem:[%s6079 + $0x20] sm:$0xf]
        %v6089 = vld [vmem:[%s6079 + $0x24] sm:$0xf]
        %v6090 = vld [vmem:[%s6079 + $0x28] sm:$0xf]
        %v6091 = vld [vmem:[%s6079 + $0x2c] sm:$0xf]
        %v6092 = vld [vmem:[%s6079 + $0x30] sm:$0xf]
        %v6093 = vld [vmem:[%s6079 + $0x34] sm:$0xf]
        %v6094 = vld [vmem:[%s6079 + $0x38] sm:$0xf]
        %v6095 = vld [vmem:[%s6079 + $0x3c] sm:$0xf]
        %v6096 = vld [vmem:[%s6079 + $0x40] sm:$0xf]
        %v6097 = vld [vmem:[%s6079 + $0x44] sm:$0xf]
        %v6098 = vld [vmem:[%s6079 + $0x48] sm:$0xf]
        %v6099 = vld [vmem:[%s6079 + $0x4c] sm:$0xf]
        %v6100 = vld [vmem:[%s6079 + $0x50] sm:$0xf]
        %v6101 = vld [vmem:[%s6079 + $0x54] sm:$0xf]
        %v6102 = vld [vmem:[%s6079 + $0x58] sm:$0xf]
        %v6103 = vld [vmem:[%s6079 + $0x5c] sm:$0xf]
        %v6128 = vunpack.c.l.b16 %v6080
        %v6129 = vunpack.c.l.b16 %v6081
        %v6130 = vunpack.c.l.b16 %v6082
        %v6131 = vunpack.c.l.b16 %v6083
        %v6132 = vunpack.c.l.b16 %v6084
        %v6133 = vunpack.c.l.b16 %v6085
        %v6134 = vunpack.c.l.b16 %v6086
        %v6135 = vunpack.c.l.b16 %v6087
        %v6136 = vunpack.c.l.b16 %v6088
        %v6137 = vunpack.c.l.b16 %v6089
        %v6138 = vunpack.c.l.b16 %v6090
        %v6139 = vunpack.c.l.b16 %v6091
        %v6140 = vunpack.c.l.b16 %v6092
        %v6141 = vunpack.c.l.b16 %v6093
        %v6142 = vunpack.c.l.b16 %v6094
        %v6143 = vunpack.c.l.b16 %v6095
        %v6144 = vunpack.c.l.b16 %v6096
        %v6145 = vunpack.c.l.b16 %v6097
        %v6146 = vunpack.c.l.b16 %v6098
        %v6147 = vunpack.c.l.b16 %v6099
        %v6148 = vunpack.c.l.b16 %v6100
        %v6149 = vunpack.c.l.b16 %v6101
        %v6150 = vunpack.c.l.b16 %v6102
        %v6151 = vunpack.c.l.b16 %v6103
        %v6152 = vpack.c.b16 %v6129, %v6128
        %v6153 = vpack.c.b16 %v6131, %v6130
        %v6154 = vpack.c.b16 %v6133, %v6132
        %v6155 = vpack.c.b16 %v6135, %v6134
        %v6156 = vpack.c.b16 %v6137, %v6136
        %v6157 = vpack.c.b16 %v6139, %v6138
        %v6158 = vpack.c.b16 %v6141, %v6140
        %v6159 = vpack.c.b16 %v6143, %v6142
        %v6160 = vpack.c.b16 %v6145, %v6144
        %v6161 = vpack.c.b16 %v6147, %v6146
        %v6162 = vpack.c.b16 %v6149, %v6148
        %v6163 = vpack.c.b16 %v6151, %v6150
        %v6177 = vsel %vm2509, %v5456, 0
        %6179 = vmatprep.subr.bf16.mxu0 0
        %6180 = vmatpush1.bf16.msra.mxu0 %v6159
        %6181 = vmatprep.subr.bf16.mxu0 0
        %6182 = vmatpush1.bf16.msra.mxu0 %v6158
        %6183 = vmatprep.subr.bf16.mxu0 0
        %6184 = vmatpush1.bf16.msra.mxu0 %v6157
        %6185 = vmatprep.subr.bf16.mxu0 0
        %6186 = vmatpush1.bf16.msra.mxu0 %v6156
        %6187 = vmatprep.subr.bf16.mxu0 0
        %6188 = vmatpush1.bf16.msra.mxu0 %v6155
        %6189 = vmatprep.subr.bf16.mxu0 0
        %6190 = vmatpush1.bf16.msra.mxu0 %v6154
        %6191 = vmatprep.subr.bf16.mxu0 0
        %6192 = vmatpush1.bf16.msra.mxu0 %v6153
        %6193 = vmatprep.subr.bf16.mxu0 0
        %6194 = vmatpush1.bf16.msra.mxu0 %v6152
        %6195 = vmatprep.subr.bf16.mxu0 0
        %6196 = vmatpush2.bf16.msra.mxu0 0
        %6197 = vmatprep.subr.bf16.mxu0 0
        %6198 = vmatpush2.bf16.msra.mxu0 0
        %6199 = vmatprep.subr.bf16.mxu0 0
        %6200 = vmatpush2.bf16.msra.mxu0 0
        %6201 = vmatprep.subr.bf16.mxu0 0
        %6202 = vmatpush2.bf16.msra.mxu0 0
        %6203 = vmatprep.subr.bf16.mxu0 0
        %6204 = vmatpush2.bf16.msra.mxu0 %v6163
        %6205 = vmatprep.subr.bf16.mxu0 0
        %6206 = vmatpush2.bf16.msra.mxu0 %v6162
        %6207 = vmatprep.subr.bf16.mxu0 0
        %6208 = vmatpush2.bf16.msra.mxu0 %v6161
        %6209 = vmatprep.subr.bf16.mxu0 0
        %6210 = vmatpush2.bf16.msra.mxu0 %v6160
        %6211 = vmatprep.mubr.bf16.mxu0 %v5584
        %6212 = vmatmul.mubr.bf16.gmra.mxu0 %v4959
        %v6213 = vpop.f32.mrf.mxu0
        %v6214 = vadd.f32 0.0, %v6213
        %v6215 = vpop.f32.mrf.mxu0
        %v6216 = vpop.f32.mrf.mxu0
        %v6217 = vadd.f32 0.0, %v6216
        %v6218 = vpop.f32.mrf.mxu0
        %6219 = vmatprep.mubr.bf16.mxu0 %v5587
        %6220 = vmatmul.mubr.bf16.gmra.mxu0 %v4991
        %v6221 = vpop.f32.mrf.mxu0
        %v6222 = vadd.f32 0.0, %v6221
        %v6223 = vpop.f32.mrf.mxu0
        %v6224 = vpop.f32.mrf.mxu0
        %v6225 = vadd.f32 0.0, %v6224
        %v6226 = vpop.f32.mrf.mxu0
        %6227 = vmatprep.mubr.bf16.mxu0 %v5590
        %6228 = vmatmul.mubr.bf16.gmra.mxu0 %v5023
        %v6229 = vpop.f32.mrf.mxu0
        %v6230 = vadd.f32 0.0, %v6229
        %v6231 = vpop.f32.mrf.mxu0
        %v6232 = vpop.f32.mrf.mxu0
        %v6233 = vadd.f32 0.0, %v6232
        %v6234 = vpop.f32.mrf.mxu0
        %6235 = vmatprep.mubr.bf16.mxu0 %v5593
        %6236 = vmatmul.mubr.bf16.gmra.mxu0 %v5055
        %v6237 = vpop.f32.mrf.mxu0
        %v6238 = vadd.f32 0.0, %v6237
        %v6239 = vpop.f32.mrf.mxu0
        %v6240 = vpop.f32.mrf.mxu0
        %v6241 = vadd.f32 0.0, %v6240
        %v6242 = vpop.f32.mrf.mxu0
        %6243 = vmatprep.mubr.bf16.mxu0 %v5596
        %6244 = vmatmul.mubr.bf16.gmra.mxu0 %v5087
        %v6245 = vpop.f32.mrf.mxu0
        %v6246 = vadd.f32 0.0, %v6245
        %v6247 = vpop.f32.mrf.mxu0
        %v6248 = vpop.f32.mrf.mxu0
        %v6249 = vadd.f32 0.0, %v6248
        %v6250 = vpop.f32.mrf.mxu0
        %6251 = vmatprep.mubr.bf16.mxu0 %v5599
        %6252 = vmatmul.mubr.bf16.gmra.mxu0 %v5119
        %v6253 = vpop.f32.mrf.mxu0
        %v6254 = vadd.f32 0.0, %v6253
        %v6255 = vpop.f32.mrf.mxu0
        %v6256 = vpop.f32.mrf.mxu0
        %v6257 = vadd.f32 0.0, %v6256
        %v6258 = vpop.f32.mrf.mxu0
        %6259 = vmatprep.mubr.bf16.mxu0 %v5602
        %6260 = vmatmul.mubr.bf16.gmra.mxu0 %v5151
        %v6261 = vpop.f32.mrf.mxu0
        %v6262 = vadd.f32 0.0, %v6261
        %v6263 = vpop.f32.mrf.mxu0
        %v6264 = vpop.f32.mrf.mxu0
        %v6265 = vadd.f32 0.0, %v6264
        %v6266 = vpop.f32.mrf.mxu0
        %6267 = vmatprep.mubr.bf16.mxu0 %v5605
        %6268 = vmatmul.mubr.bf16.gmra.mxu0 %v5183
        %v6269 = vpop.f32.mrf.mxu0
        %v6270 = vadd.f32 0.0, %v6269
        %v6271 = vpop.f32.mrf.mxu0
        %v6272 = vpop.f32.mrf.mxu0
        %v6273 = vadd.f32 0.0, %v6272
        %v6274 = vpop.f32.mrf.mxu0
        %6275 = vmatprep.mubr.bf16.mxu0 %v5608
        %6276 = vmatmul.mubr.bf16.gmra.mxu0 %v5215
        %v6277 = vpop.f32.mrf.mxu0
        %v6278 = vadd.f32 0.0, %v6277
        %v6279 = vpop.f32.mrf.mxu0
        %v6280 = vpop.f32.mrf.mxu0
        %v6281 = vadd.f32 0.0, %v6280
        %v6282 = vpop.f32.mrf.mxu0
        %6283 = vmatprep.mubr.bf16.mxu0 %v5611
        %6284 = vmatmul.mubr.bf16.gmra.mxu0 %v5247
        %v6285 = vpop.f32.mrf.mxu0
        %v6286 = vadd.f32 0.0, %v6285
        %v6287 = vpop.f32.mrf.mxu0
        %v6288 = vpop.f32.mrf.mxu0
        %v6289 = vadd.f32 0.0, %v6288
        %v6290 = vpop.f32.mrf.mxu0
        %6291 = vmatprep.mubr.bf16.mxu0 %v5614
        %6292 = vmatmul.mubr.bf16.gmra.mxu0 %v5279
        %v6293 = vpop.f32.mrf.mxu0
        %v6294 = vadd.f32 0.0, %v6293
        %v6295 = vpop.f32.mrf.mxu0
        %v6296 = vpop.f32.mrf.mxu0
        %v6297 = vadd.f32 0.0, %v6296
        %v6298 = vpop.f32.mrf.mxu0
        %6299 = vmatprep.mubr.bf16.mxu0 %v5617
        %6300 = vmatmul.mubr.bf16.gmra.mxu0 %v5311
        %v6301 = vpop.f32.mrf.mxu0
        %v6302 = vadd.f32 0.0, %v6301
        %v6303 = vpop.f32.mrf.mxu0
        %v6304 = vpop.f32.mrf.mxu0
        %v6305 = vadd.f32 0.0, %v6304
        %v6306 = vpop.f32.mrf.mxu0
        %6307 = vmatprep.mubr.bf16.mxu0 %v5620
        %6308 = vmatmul.mubr.bf16.gmra.mxu0 %v5343
        %v6309 = vpop.f32.mrf.mxu0
        %v6310 = vadd.f32 0.0, %v6309
        %v6311 = vpop.f32.mrf.mxu0
        %v6312 = vpop.f32.mrf.mxu0
        %v6313 = vadd.f32 0.0, %v6312
        %v6314 = vpop.f32.mrf.mxu0
        %6315 = vmatprep.mubr.bf16.mxu0 %v5623
        %6316 = vmatmul.mubr.bf16.gmra.mxu0 %v5375
        %v6317 = vpop.f32.mrf.mxu0
        %v6318 = vadd.f32 0.0, %v6317
        %v6319 = vpop.f32.mrf.mxu0
        %v6320 = vpop.f32.mrf.mxu0
        %v6321 = vadd.f32 0.0, %v6320
        %v6322 = vpop.f32.mrf.mxu0
        %6323 = vmatprep.mubr.bf16.mxu0 %v5884
        %6324 = vmatmul.mubr.bf16.gmra.mxu0 %v5407
        %v6325 = vpop.f32.mrf.mxu0
        %v6326 = vadd.f32 0.0, %v6325
        %v6327 = vpop.f32.mrf.mxu0
        %v6328 = vpop.f32.mrf.mxu0
        %v6329 = vadd.f32 0.0, %v6328
        %v6330 = vpop.f32.mrf.mxu0
        %6331 = vmatprep.mubr.bf16.mxu0 %v6177
        %6332 = vmatmul.mubr.bf16.gmra.mxu0 %v5439
        %v6333 = vpop.f32.mrf.mxu0
        %v6334 = vadd.f32 0.0, %v6333
        %v6335 = vpop.f32.mrf.mxu0
        %v6336 = vpop.f32.mrf.mxu0
        %v6337 = vadd.f32 0.0, %v6336
        %v6338 = vpop.f32.mrf.mxu0
        %6339 = vdwg.mxu0
        %v6340 = vadd.f32 %v6047, %v6214
        %v6341 = vadd.f32 %v6048, %v6217
        %v6342 = vadd.f32 %v6049, %v6222
        %v6343 = vadd.f32 %v6050, %v6225
        %v6344 = vadd.f32 %v6051, %v6230
        %v6345 = vadd.f32 %v6052, %v6233
        %v6346 = vadd.f32 %v6053, %v6238
        %v6347 = vadd.f32 %v6054, %v6241
        %v6348 = vadd.f32 %v6055, %v6246
        %v6349 = vadd.f32 %v6056, %v6249
        %v6350 = vadd.f32 %v6057, %v6254
        %v6351 = vadd.f32 %v6058, %v6257
        %v6352 = vadd.f32 %v6059, %v6262
        %v6353 = vadd.f32 %v6060, %v6265
        %v6354 = vadd.f32 %v6061, %v6270
        %v6355 = vadd.f32 %v6062, %v6273
        %v6356 = vadd.f32 %v6063, %v6278
        %v6357 = vadd.f32 %v6064, %v6281
        %v6358 = vadd.f32 %v6065, %v6286
        %v6359 = vadd.f32 %v6066, %v6289
        %v6360 = vadd.f32 %v6067, %v6294
        %v6361 = vadd.f32 %v6068, %v6297
        %v6362 = vadd.f32 %v6069, %v6302
        %v6363 = vadd.f32 %v6070, %v6305
        %v6364 = vadd.f32 %v6071, %v6310
        %v6365 = vadd.f32 %v6072, %v6313
        %v6366 = vadd.f32 %v6073, %v6318
        %v6367 = vadd.f32 %v6074, %v6321
        %v6368 = vadd.f32 %v6075, %v6326
        %v6369 = vadd.f32 %v6076, %v6329
        %v6370 = vadd.f32 %v6077, %v6334
        %v6371 = vadd.f32 %v6078, %v6337
        %v6372 = vmax.f32 %v6340, 0.0
        %v6373 = vmax.f32 %v6341, 0.0
        %v6374 = vmax.f32 %v6342, 0.0
        %v6375 = vmax.f32 %v6343, 0.0
        %v6376 = vmax.f32 %v6344, 0.0
        %v6377 = vmax.f32 %v6345, 0.0
        %v6378 = vmax.f32 %v6346, 0.0
        %v6379 = vmax.f32 %v6347, 0.0
        %v6380 = vmax.f32 %v6348, 0.0
        %v6381 = vmax.f32 %v6349, 0.0
        %v6382 = vmax.f32 %v6350, 0.0
        %v6383 = vmax.f32 %v6351, 0.0
        %v6384 = vmax.f32 %v6352, 0.0
        %v6385 = vmax.f32 %v6353, 0.0
        %v6386 = vmax.f32 %v6354, 0.0
        %v6387 = vmax.f32 %v6355, 0.0
        %v6388 = vmax.f32 %v6356, 0.0
        %v6389 = vmax.f32 %v6357, 0.0
        %v6390 = vmax.f32 %v6358, 0.0
        %v6391 = vmax.f32 %v6359, 0.0
        %v6392 = vmax.f32 %v6360, 0.0
        %v6393 = vmax.f32 %v6361, 0.0
        %v6394 = vmax.f32 %v6362, 0.0
        %v6395 = vmax.f32 %v6363, 0.0
        %v6396 = vmax.f32 %v6364, 0.0
        %v6397 = vmax.f32 %v6365, 0.0
        %v6398 = vmax.f32 %v6366, 0.0
        %v6399 = vmax.f32 %v6367, 0.0
        %v6400 = vmax.f32 %v6368, 0.0
        %v6401 = vmax.f32 %v6369, 0.0
        %v6402 = vmax.f32 %v6370, 0.0
        %v6403 = vmax.f32 %v6371, 0.0
        %v6404 = vpack.c.bf16 %v6373, %v6372
        %v6405 = vpack.c.bf16 %v6375, %v6374
        %v6406 = vpack.c.bf16 %v6377, %v6376
        %v6407 = vpack.c.bf16 %v6379, %v6378
        %v6408 = vpack.c.bf16 %v6381, %v6380
        %v6409 = vpack.c.bf16 %v6383, %v6382
        %v6410 = vpack.c.bf16 %v6385, %v6384
        %v6411 = vpack.c.bf16 %v6387, %v6386
        %v6412 = vpack.c.bf16 %v6389, %v6388
        %v6413 = vpack.c.bf16 %v6391, %v6390
        %v6414 = vpack.c.bf16 %v6393, %v6392
        %v6415 = vpack.c.bf16 %v6395, %v6394
        %v6416 = vpack.c.bf16 %v6397, %v6396
        %v6417 = vpack.c.bf16 %v6399, %v6398
        %v6418 = vpack.c.bf16 %v6401, %v6400
        %v6419 = vpack.c.bf16 %v6403, %v6402
        %v6436 = vunpack.c.l.b16 %v6404
        %v6437 = vunpack.c.h.b16 %v6404
        %v6438 = vunpack.c.l.b16 %v6405
        %v6439 = vunpack.c.h.b16 %v6405
        %v6440 = vunpack.c.l.b16 %v6406
        %v6441 = vunpack.c.h.b16 %v6406
        %v6442 = vunpack.c.l.b16 %v6407
        %v6443 = vunpack.c.h.b16 %v6407
        %v6444 = vunpack.c.l.b16 %v6408
        %v6445 = vunpack.c.h.b16 %v6408
        %v6446 = vunpack.c.l.b16 %v6409
        %v6447 = vunpack.c.h.b16 %v6409
        %v6448 = vunpack.c.l.b16 %v6410
        %v6449 = vunpack.c.h.b16 %v6410
        %v6450 = vunpack.c.l.b16 %v6411
        %v6451 = vunpack.c.h.b16 %v6411
        %v6452 = vunpack.c.l.b16 %v6412
        %v6453 = vunpack.c.h.b16 %v6412
        %v6454 = vunpack.c.l.b16 %v6413
        %v6455 = vunpack.c.h.b16 %v6413
        %v6456 = vunpack.c.l.b16 %v6414
        %v6457 = vunpack.c.h.b16 %v6414
        %v6458 = vunpack.c.l.b16 %v6415
        %v6459 = vunpack.c.h.b16 %v6415
        %v6460 = vunpack.c.l.b16 %v6416
        %v6461 = vunpack.c.h.b16 %v6416
        %v6462 = vunpack.c.l.b16 %v6417
        %v6463 = vunpack.c.h.b16 %v6417
        %v6464 = vunpack.c.l.b16 %v6418
        %v6465 = vunpack.c.h.b16 %v6418
        %v6466 = vunpack.c.l.b16 %v6419
        %v6467 = vunpack.c.h.b16 %v6419
        %v6468 = vpack.c.b16 %v6436, %v6436
        %v6469 = vpack.c.b16 %v6437, %v6437
        %v6470 = vpack.c.b16 %v6438, %v6438
        %v6471 = vpack.c.b16 %v6439, %v6439
        %v6472 = vpack.c.b16 %v6440, %v6440
        %v6473 = vpack.c.b16 %v6441, %v6441
        %v6474 = vpack.c.b16 %v6442, %v6442
        %v6475 = vpack.c.b16 %v6443, %v6443
        %v6476 = vpack.c.b16 %v6444, %v6444
        %v6477 = vpack.c.b16 %v6445, %v6445
        %v6478 = vpack.c.b16 %v6446, %v6446
        %v6479 = vpack.c.b16 %v6447, %v6447
        %v6480 = vpack.c.b16 %v6448, %v6448
        %v6481 = vpack.c.b16 %v6449, %v6449
        %v6482 = vpack.c.b16 %v6450, %v6450
        %v6483 = vpack.c.b16 %v6451, %v6451
        %v6484 = vpack.c.b16 %v6452, %v6452
        %v6485 = vpack.c.b16 %v6453, %v6453
        %v6486 = vpack.c.b16 %v6454, %v6454
        %v6487 = vpack.c.b16 %v6455, %v6455
        %v6488 = vpack.c.b16 %v6456, %v6456
        %v6489 = vpack.c.b16 %v6457, %v6457
        %v6490 = vpack.c.b16 %v6458, %v6458
        %v6491 = vpack.c.b16 %v6459, %v6459
        %v6492 = vpack.c.b16 %v6460, %v6460
        %v6493 = vpack.c.b16 %v6461, %v6461
        %v6494 = vpack.c.b16 %v6462, %v6462
        %v6495 = vpack.c.b16 %v6463, %v6463
        %v6496 = vpack.c.b16 %v6464, %v6464
        %v6497 = vpack.c.b16 %v6465, %v6465
        %v6498 = vpack.c.b16 %v6466, %v6466
        %v6499 = vpack.c.b16 %v6467, %v6467
        %6532 = vst.msk [vmem:[%s545 + $0x8] sm:$0xf] %vm528, %v6468
        %6533 = vst.msk [vmem:[%s545 + $0xc] sm:$0xf] %vm528, %v6469
        %6534 = vst.msk [vmem:[%s545 + $0x20] sm:$0xf] %vm528, %v6470
        %6535 = vst.msk [vmem:[%s545 + $0x24] sm:$0xf] %vm528, %v6471
        %6536 = vst.msk [vmem:[%s545 + $0x38] sm:$0xf] %vm528, %v6472
        %6537 = vst.msk [vmem:[%s545 + $0x3c] sm:$0xf] %vm528, %v6473
        %6538 = vst.msk [vmem:[%s545 + $0x50] sm:$0xf] %vm528, %v6474
        %6539 = vst.msk [vmem:[%s545 + $0x54] sm:$0xf] %vm528, %v6475
        %6540 = vst.msk [vmem:[%s545 + $0x68] sm:$0xf] %vm528, %v6476
        %6541 = vst.msk [vmem:[%s545 + $0x6c] sm:$0xf] %vm528, %v6477
        %6542 = vst.msk [vmem:[%s545 + $0x80] sm:$0xf] %vm528, %v6478
        %6543 = vst.msk [vmem:[%s545 + $0x84] sm:$0xf] %vm528, %v6479
        %6544 = vst.msk [vmem:[%s545 + $0x98] sm:$0xf] %vm528, %v6480
        %6545 = vst.msk [vmem:[%s545 + $0x9c] sm:$0xf] %vm528, %v6481
        %6546 = vst.msk [vmem:[%s545 + $0xb0] sm:$0xf] %vm528, %v6482
        %6547 = vst.msk [vmem:[%s545 + $0xb4] sm:$0xf] %vm528, %v6483
        %6548 = vst.msk [vmem:[%s545 + $0xc8] sm:$0xf] %vm528, %v6484
        %6549 = vst.msk [vmem:[%s545 + $0xcc] sm:$0xf] %vm528, %v6485
        %6550 = vst.msk [vmem:[%s545 + $0xe0] sm:$0xf] %vm528, %v6486
        %6551 = vst.msk [vmem:[%s545 + $0xe4] sm:$0xf] %vm528, %v6487
        %6552 = vst.msk [vmem:[%s545 + $0xf8] sm:$0xf] %vm528, %v6488
        %6553 = vst.msk [vmem:[%s545 + $0xfc] sm:$0xf] %vm528, %v6489
        %6554 = vst.msk [vmem:[%s545 + $0x110] sm:$0xf] %vm528, %v6490
        %6555 = vst.msk [vmem:[%s545 + $0x114] sm:$0xf] %vm528, %v6491
        %6556 = vst.msk [vmem:[%s545 + $0x128] sm:$0xf] %vm528, %v6492
        %6557 = vst.msk [vmem:[%s545 + $0x12c] sm:$0xf] %vm528, %v6493
        %6558 = vst.msk [vmem:[%s545 + $0x140] sm:$0xf] %vm528, %v6494
        %6559 = vst.msk [vmem:[%s545 + $0x144] sm:$0xf] %vm528, %v6495
        %6560 = vst.msk [vmem:[%s545 + $0x158] sm:$0xf] %vm528, %v6496
        %6561 = vst.msk [vmem:[%s545 + $0x15c] sm:$0xf] %vm528, %v6497
        %6562 = vst.msk [vmem:[%s545 + $0x170] sm:$0xf] %vm528, %v6498
        %6563 = vst.msk [vmem:[%s545 + $0x174] sm:$0xf] %vm528, %v6499
        %v6564 = vld [vmem:[%s9] sm:$0x1]
        %v6565 = vld [vmem:[#allocation4 + $0x4] sm:$0x8]
        %v6566 = vld [vmem:[#allocation4 + $0x8] sm:$0xf]
        %v6567 = vld [vmem:[#allocation4 + $0xc] sm:$0xf]
        %v6568 = vld [vmem:[#allocation4 + $0x1c] sm:$0x8]
        %v6569 = vld [vmem:[#allocation4 + $0x20] sm:$0xf]
        %v6570 = vld [vmem:[#allocation4 + $0x24] sm:$0xf]
        %v6571 = vld [vmem:[#allocation4 + $0x34] sm:$0x8]
        %v6572 = vld [vmem:[#allocation4 + $0x38] sm:$0xf]
        %v6573 = vld [vmem:[#allocation4 + $0x3c] sm:$0xf]
        %v6574 = vld [vmem:[#allocation4 + $0x4c] sm:$0x8]
        %v6575 = vld [vmem:[#allocation4 + $0x50] sm:$0xf]
        %v6576 = vld [vmem:[#allocation4 + $0x54] sm:$0xf]
        %v6577 = vld [vmem:[#allocation4 + $0x64] sm:$0x8]
        %v6578 = vld [vmem:[#allocation4 + $0x68] sm:$0xf]
        %v6579 = vld [vmem:[#allocation4 + $0x6c] sm:$0xf]
        %v6580 = vld [vmem:[#allocation4 + $0x7c] sm:$0x8]
        %v6581 = vld [vmem:[#allocation4 + $0x80] sm:$0xf]
        %v6582 = vld [vmem:[#allocation4 + $0x84] sm:$0xf]
        %v6583 = vld [vmem:[#allocation4 + $0x94] sm:$0x8]
        %v6584 = vld [vmem:[#allocation4 + $0x98] sm:$0xf]
        %v6585 = vld [vmem:[#allocation4 + $0x9c] sm:$0xf]
        %v6586 = vld [vmem:[#allocation4 + $0xac] sm:$0x8]
        %v6587 = vld [vmem:[#allocation4 + $0xb0] sm:$0xf]
        %v6588 = vld [vmem:[#allocation4 + $0xb4] sm:$0xf]
        %v6589 = vld [vmem:[#allocation4 + $0xc4] sm:$0x8]
        %v6590 = vld [vmem:[#allocation4 + $0xc8] sm:$0xf]
        %v6591 = vld [vmem:[#allocation4 + $0xcc] sm:$0xf]
        %v6592 = vld [vmem:[#allocation4 + $0xdc] sm:$0x8]
        %v6593 = vld [vmem:[#allocation4 + $0xe0] sm:$0xf]
        %v6594 = vld [vmem:[#allocation4 + $0xe4] sm:$0xf]
        %v6595 = vld [vmem:[#allocation4 + $0xf4] sm:$0x8]
        %v6596 = vld [vmem:[#allocation4 + $0xf8] sm:$0xf]
        %v6597 = vld [vmem:[#allocation4 + $0xfc] sm:$0xf]
        %v6598 = vld [vmem:[#allocation4 + $0x10c] sm:$0x8]
        %v6599 = vld [vmem:[#allocation4 + $0x110] sm:$0xf]
        %v6600 = vld [vmem:[#allocation4 + $0x114] sm:$0xf]
        %v6601 = vld [vmem:[#allocation4 + $0x124] sm:$0x8]
        %v6602 = vld [vmem:[#allocation4 + $0x128] sm:$0xf]
        %v6603 = vld [vmem:[#allocation4 + $0x12c] sm:$0xf]
        %v6604 = vld [vmem:[#allocation4 + $0x13c] sm:$0x8]
        %v6605 = vld [vmem:[#allocation4 + $0x140] sm:$0xf]
        %v6606 = vld [vmem:[#allocation4 + $0x144] sm:$0xf]
        %v6607 = vld [vmem:[#allocation4 + $0x154] sm:$0x8]
        %v6608 = vld [vmem:[#allocation4 + $0x158] sm:$0xf]
        %v6609 = vld [vmem:[#allocation4 + $0x15c] sm:$0xf]
        %v6610 = vld [vmem:[#allocation4 + $0x16c] sm:$0x8]
        %v6611 = vld [vmem:[#allocation4 + $0x170] sm:$0xf]
        %v6612 = vld [vmem:[#allocation4 + $0x174] sm:$0xf]
        %v6613 = vld [vmem:[#allocation4 + $0x184] sm:$0x8]
        %v6614 = vld [vmem:[#allocation4 + $0x188] sm:$0xf]
        %v6615 = vld [vmem:[#allocation4 + $0x18c] sm:$0xf]
        %v6616 = vld [vmem:[#allocation4 + $0x19c] sm:$0x8]
        %v6617 = vld [vmem:[#allocation4 + $0x1a0] sm:$0xf]
        %v6618 = vld [vmem:[#allocation4 + $0x1a4] sm:$0xf]
        %v6619 = vld [vmem:[#allocation4 + $0x10] sm:$0x1]
        %v6620 = vld [vmem:[#allocation4 + $0x28] sm:$0x1]
        %v6621 = vld [vmem:[#allocation4 + $0x40] sm:$0x1]
        %v6622 = vld [vmem:[#allocation4 + $0x58] sm:$0x1]
        %v6623 = vld [vmem:[#allocation4 + $0x70] sm:$0x1]
        %v6624 = vld [vmem:[#allocation4 + $0x88] sm:$0x1]
        %v6625 = vld [vmem:[#allocation4 + $0xa0] sm:$0x1]
        %v6626 = vld [vmem:[#allocation4 + $0xb8] sm:$0x1]
        %v6627 = vld [vmem:[#allocation4 + $0xd0] sm:$0x1]
        %v6628 = vld [vmem:[#allocation4 + $0xe8] sm:$0x1]
        %v6629 = vld [vmem:[#allocation4 + $0x100] sm:$0x1]
        %v6630 = vld [vmem:[#allocation4 + $0x118] sm:$0x1]
        %v6631 = vld [vmem:[#allocation4 + $0x130] sm:$0x1]
        %v6632 = vld [vmem:[#allocation4 + $0x148] sm:$0x1]
        %v6633 = vld [vmem:[#allocation4 + $0x160] sm:$0x1]
        %v6634 = vld [vmem:[#allocation4 + $0x178] sm:$0x1]
        %v6635 = vld [vmem:[#allocation4 + $0x190] sm:$0x1]
        %v6636 = vld [vmem:[#allocation4 + $0x1a8] sm:$0x1]
        %v6691 = vunpack.c.l.b16 %v6565
        %v6692 = vunpack.c.l.b16 %v6566
        %v6693 = vunpack.c.l.b16 %v6567
        %v6694 = vunpack.c.l.b16 %v6568
        %v6695 = vunpack.c.l.b16 %v6569
        %v6696 = vunpack.c.l.b16 %v6570
        %v6697 = vunpack.c.l.b16 %v6571
        %v6698 = vunpack.c.l.b16 %v6572
        %v6699 = vunpack.c.l.b16 %v6573
        %v6700 = vunpack.c.l.b16 %v6574
        %v6701 = vunpack.c.l.b16 %v6575
        %v6702 = vunpack.c.l.b16 %v6576
        %v6703 = vunpack.c.l.b16 %v6577
        %v6704 = vunpack.c.l.b16 %v6578
        %v6705 = vunpack.c.l.b16 %v6579
        %v6706 = vunpack.c.l.b16 %v6580
        %v6707 = vunpack.c.l.b16 %v6581
        %v6708 = vunpack.c.l.b16 %v6582
        %v6709 = vunpack.c.l.b16 %v6583
        %v6710 = vunpack.c.l.b16 %v6584
        %v6711 = vunpack.c.l.b16 %v6585
        %v6712 = vunpack.c.l.b16 %v6586
        %v6713 = vunpack.c.l.b16 %v6587
        %v6714 = vunpack.c.l.b16 %v6588
        %v6715 = vunpack.c.l.b16 %v6589
        %v6716 = vunpack.c.l.b16 %v6590
        %v6717 = vunpack.c.l.b16 %v6591
        %v6718 = vunpack.c.l.b16 %v6592
        %v6719 = vunpack.c.l.b16 %v6593
        %v6720 = vunpack.c.l.b16 %v6594
        %v6721 = vunpack.c.l.b16 %v6595
        %v6722 = vunpack.c.l.b16 %v6596
        %v6723 = vunpack.c.l.b16 %v6597
        %v6724 = vunpack.c.l.b16 %v6598
        %v6725 = vunpack.c.l.b16 %v6599
        %v6726 = vunpack.c.l.b16 %v6600
        %v6727 = vunpack.c.l.b16 %v6601
        %v6728 = vunpack.c.l.b16 %v6602
        %v6729 = vunpack.c.l.b16 %v6603
        %v6730 = vunpack.c.l.b16 %v6604
        %v6731 = vunpack.c.l.b16 %v6605
        %v6732 = vunpack.c.l.b16 %v6606
        %v6733 = vunpack.c.l.b16 %v6607
        %v6734 = vunpack.c.l.b16 %v6608
        %v6735 = vunpack.c.l.b16 %v6609
        %v6736 = vunpack.c.l.b16 %v6610
        %v6737 = vunpack.c.l.b16 %v6611
        %v6738 = vunpack.c.l.b16 %v6612
        %v6739 = vunpack.c.l.b16 %v6613
        %v6740 = vunpack.c.l.b16 %v6614
        %v6741 = vunpack.c.l.b16 %v6615
        %v6742 = vunpack.c.l.b16 %v6616
        %v6743 = vunpack.c.l.b16 %v6617
        %v6744 = vunpack.c.l.b16 %v6618
        %v6745 = vpack.c.b16 %v6692, %v6691
        %v6746 = vpack.c.b16 %v6693, %v6693
        %v6747 = vpack.c.b16 %v6695, %v6694
        %v6748 = vpack.c.b16 %v6696, %v6696
        %v6749 = vpack.c.b16 %v6698, %v6697
        %v6750 = vpack.c.b16 %v6699, %v6699
        %v6751 = vpack.c.b16 %v6701, %v6700
        %v6752 = vpack.c.b16 %v6702, %v6702
        %v6753 = vpack.c.b16 %v6704, %v6703
        %v6754 = vpack.c.b16 %v6705, %v6705
        %v6755 = vpack.c.b16 %v6707, %v6706
        %v6756 = vpack.c.b16 %v6708, %v6708
        %v6757 = vpack.c.b16 %v6710, %v6709
        %v6758 = vpack.c.b16 %v6711, %v6711
        %v6759 = vpack.c.b16 %v6713, %v6712
        %v6760 = vpack.c.b16 %v6714, %v6714
        %v6761 = vpack.c.b16 %v6716, %v6715
        %v6762 = vpack.c.b16 %v6717, %v6717
        %v6763 = vpack.c.b16 %v6719, %v6718
        %v6764 = vpack.c.b16 %v6720, %v6720
        %v6765 = vpack.c.b16 %v6722, %v6721
        %v6766 = vpack.c.b16 %v6723, %v6723
        %v6767 = vpack.c.b16 %v6725, %v6724
        %v6768 = vpack.c.b16 %v6726, %v6726
        %v6769 = vpack.c.b16 %v6728, %v6727
        %v6770 = vpack.c.b16 %v6729, %v6729
        %v6771 = vpack.c.b16 %v6731, %v6730
        %v6772 = vpack.c.b16 %v6732, %v6732
        %v6773 = vpack.c.b16 %v6734, %v6733
        %v6774 = vpack.c.b16 %v6735, %v6735
        %v6775 = vpack.c.b16 %v6737, %v6736
        %v6776 = vpack.c.b16 %v6738, %v6738
        %v6777 = vpack.c.b16 %v6740, %v6739
        %v6778 = vpack.c.b16 %v6741, %v6741
        %v6779 = vpack.c.b16 %v6743, %v6742
        %v6780 = vpack.c.b16 %v6744, %v6744
        %v6781 = vpack.c.b16 %v6693, %v6692
        %v6782 = vpack.c.b16 %v6696, %v6695
        %v6783 = vpack.c.b16 %v6699, %v6698
        %v6784 = vpack.c.b16 %v6702, %v6701
        %v6785 = vpack.c.b16 %v6705, %v6704
        %v6786 = vpack.c.b16 %v6708, %v6707
        %v6787 = vpack.c.b16 %v6711, %v6710
        %v6788 = vpack.c.b16 %v6714, %v6713
        %v6789 = vpack.c.b16 %v6717, %v6716
        %v6790 = vpack.c.b16 %v6720, %v6719
        %v6791 = vpack.c.b16 %v6723, %v6722
        %v6792 = vpack.c.b16 %v6726, %v6725
        %v6793 = vpack.c.b16 %v6729, %v6728
        %v6794 = vpack.c.b16 %v6732, %v6731
        %v6795 = vpack.c.b16 %v6735, %v6734
        %v6796 = vpack.c.b16 %v6738, %v6737
        %v6797 = vpack.c.b16 %v6741, %v6740
        %v6798 = vpack.c.b16 %v6744, %v6743
        %v6800 = vshrl.u32 %v6781, 16
        %v6802 = vrot.slane %v6800, 4
        %v6803 = vshll.u32 %v6781, 16
        %v6805 = vrot.slane %v6803, 5
        %v6806 = vor.u32 %v6802, %v6805
        %v6808 = vshrl.u32 %v6782, 16
        %v6810 = vrot.slane %v6808, 4
        %v6811 = vshll.u32 %v6782, 16
        %v6813 = vrot.slane %v6811, 5
        %v6814 = vor.u32 %v6810, %v6813
        %v6816 = vshrl.u32 %v6783, 16
        %v6818 = vrot.slane %v6816, 4
        %v6819 = vshll.u32 %v6783, 16
        %v6821 = vrot.slane %v6819, 5
        %v6822 = vor.u32 %v6818, %v6821
        %v6824 = vshrl.u32 %v6784, 16
        %v6826 = vrot.slane %v6824, 4
        %v6827 = vshll.u32 %v6784, 16
        %v6829 = vrot.slane %v6827, 5
        %v6830 = vor.u32 %v6826, %v6829
        %v6832 = vshrl.u32 %v6785, 16
        %v6834 = vrot.slane %v6832, 4
        %v6835 = vshll.u32 %v6785, 16
        %v6837 = vrot.slane %v6835, 5
        %v6838 = vor.u32 %v6834, %v6837
        %v6840 = vshrl.u32 %v6786, 16
        %v6842 = vrot.slane %v6840, 4
        %v6843 = vshll.u32 %v6786, 16
        %v6845 = vrot.slane %v6843, 5
        %v6846 = vor.u32 %v6842, %v6845
        %v6848 = vshrl.u32 %v6787, 16
        %v6850 = vrot.slane %v6848, 4
        %v6851 = vshll.u32 %v6787, 16
        %v6853 = vrot.slane %v6851, 5
        %v6854 = vor.u32 %v6850, %v6853
        %v6856 = vshrl.u32 %v6788, 16
        %v6858 = vrot.slane %v6856, 4
        %v6859 = vshll.u32 %v6788, 16
        %v6861 = vrot.slane %v6859, 5
        %v6862 = vor.u32 %v6858, %v6861
        %v6864 = vshrl.u32 %v6789, 16
        %v6866 = vrot.slane %v6864, 4
        %v6867 = vshll.u32 %v6789, 16
        %v6869 = vrot.slane %v6867, 5
        %v6870 = vor.u32 %v6866, %v6869
        %v6872 = vshrl.u32 %v6790, 16
        %v6874 = vrot.slane %v6872, 4
        %v6875 = vshll.u32 %v6790, 16
        %v6877 = vrot.slane %v6875, 5
        %v6878 = vor.u32 %v6874, %v6877
        %v6880 = vshrl.u32 %v6791, 16
        %v6882 = vrot.slane %v6880, 4
        %v6883 = vshll.u32 %v6791, 16
        %v6885 = vrot.slane %v6883, 5
        %v6886 = vor.u32 %v6882, %v6885
        %v6888 = vshrl.u32 %v6792, 16
        %v6890 = vrot.slane %v6888, 4
        %v6891 = vshll.u32 %v6792, 16
        %v6893 = vrot.slane %v6891, 5
        %v6894 = vor.u32 %v6890, %v6893
        %v6896 = vshrl.u32 %v6793, 16
        %v6898 = vrot.slane %v6896, 4
        %v6899 = vshll.u32 %v6793, 16
        %v6901 = vrot.slane %v6899, 5
        %v6902 = vor.u32 %v6898, %v6901
        %v6904 = vshrl.u32 %v6794, 16
        %v6906 = vrot.slane %v6904, 4
        %v6907 = vshll.u32 %v6794, 16
        %v6909 = vrot.slane %v6907, 5
        %v6910 = vor.u32 %v6906, %v6909
        %v6912 = vshrl.u32 %v6795, 16
        %v6914 = vrot.slane %v6912, 4
        %v6915 = vshll.u32 %v6795, 16
        %v6917 = vrot.slane %v6915, 5
        %v6918 = vor.u32 %v6914, %v6917
        %v6920 = vshrl.u32 %v6796, 16
        %v6922 = vrot.slane %v6920, 4
        %v6923 = vshll.u32 %v6796, 16
        %v6925 = vrot.slane %v6923, 5
        %v6926 = vor.u32 %v6922, %v6925
        %v6928 = vshrl.u32 %v6797, 16
        %v6930 = vrot.slane %v6928, 4
        %v6931 = vshll.u32 %v6797, 16
        %v6933 = vrot.slane %v6931, 5
        %v6934 = vor.u32 %v6930, %v6933
        %v6936 = vshrl.u32 %v6798, 16
        %v6938 = vrot.slane %v6936, 4
        %v6939 = vshll.u32 %v6798, 16
        %v6941 = vrot.slane %v6939, 5
        %v6942 = vor.u32 %v6938, %v6941
        %6943 = vrot.lane.b32.xlu0 %v6806, 96
        %v6944 = vpop.permute.xlu0 %6943
        %6945 = vrot.lane.b32.xlu0 %v6814, 96
        %v6946 = vpop.permute.xlu0 %6945
        %6947 = vrot.lane.b32.xlu0 %v6822, 96
        %v6948 = vpop.permute.xlu0 %6947
        %6949 = vrot.lane.b32.xlu0 %v6830, 96
        %v6950 = vpop.permute.xlu0 %6949
        %6951 = vrot.lane.b32.xlu0 %v6838, 96
        %v6952 = vpop.permute.xlu0 %6951
        %6953 = vrot.lane.b32.xlu0 %v6846, 96
        %v6954 = vpop.permute.xlu0 %6953
        %6955 = vrot.lane.b32.xlu0 %v6854, 96
        %v6956 = vpop.permute.xlu0 %6955
        %6957 = vrot.lane.b32.xlu0 %v6862, 96
        %v6958 = vpop.permute.xlu0 %6957
        %6959 = vrot.lane.b32.xlu0 %v6870, 96
        %v6960 = vpop.permute.xlu0 %6959
        %6961 = vrot.lane.b32.xlu0 %v6878, 96
        %v6962 = vpop.permute.xlu0 %6961
        %6963 = vrot.lane.b32.xlu0 %v6886, 96
        %v6964 = vpop.permute.xlu0 %6963
        %6965 = vrot.lane.b32.xlu0 %v6894, 96
        %v6966 = vpop.permute.xlu0 %6965
        %6967 = vrot.lane.b32.xlu0 %v6902, 96
        %v6968 = vpop.permute.xlu0 %6967
        %6969 = vrot.lane.b32.xlu0 %v6910, 96
        %v6970 = vpop.permute.xlu0 %6969
        %6971 = vrot.lane.b32.xlu0 %v6918, 96
        %v6972 = vpop.permute.xlu0 %6971
        %6973 = vrot.lane.b32.xlu0 %v6926, 96
        %v6974 = vpop.permute.xlu0 %6973
        %6975 = vrot.lane.b32.xlu0 %v6934, 96
        %v6976 = vpop.permute.xlu0 %6975
        %6977 = vrot.lane.b32.xlu0 %v6942, 96
        %v6978 = vpop.permute.xlu0 %6977
        %v6997 = vunpack.c.l.b16 %v6619
        %v6998 = vunpack.c.l.b16 %v6620
        %v6999 = vunpack.c.l.b16 %v6621
        %v7000 = vunpack.c.l.b16 %v6622
        %v7001 = vunpack.c.l.b16 %v6623
        %v7002 = vunpack.c.l.b16 %v6624
        %v7003 = vunpack.c.l.b16 %v6625
        %v7004 = vunpack.c.l.b16 %v6626
        %v7005 = vunpack.c.l.b16 %v6627
        %v7006 = vunpack.c.l.b16 %v6628
        %v7007 = vunpack.c.l.b16 %v6629
        %v7008 = vunpack.c.l.b16 %v6630
        %v7009 = vunpack.c.l.b16 %v6631
        %v7010 = vunpack.c.l.b16 %v6632
        %v7011 = vunpack.c.l.b16 %v6633
        %v7012 = vunpack.c.l.b16 %v6634
        %v7013 = vunpack.c.l.b16 %v6635
        %v7014 = vunpack.c.l.b16 %v6636
        %v7015 = vpack.c.b16 %v6997, %v6997
        %v7016 = vpack.c.b16 %v6998, %v6998
        %v7017 = vpack.c.b16 %v6999, %v6999
        %v7018 = vpack.c.b16 %v7000, %v7000
        %v7019 = vpack.c.b16 %v7001, %v7001
        %v7020 = vpack.c.b16 %v7002, %v7002
        %v7021 = vpack.c.b16 %v7003, %v7003
        %v7022 = vpack.c.b16 %v7004, %v7004
        %v7023 = vpack.c.b16 %v7005, %v7005
        %v7024 = vpack.c.b16 %v7006, %v7006
        %v7025 = vpack.c.b16 %v7007, %v7007
        %v7026 = vpack.c.b16 %v7008, %v7008
        %v7027 = vpack.c.b16 %v7009, %v7009
        %v7028 = vpack.c.b16 %v7010, %v7010
        %v7029 = vpack.c.b16 %v7011, %v7011
        %v7030 = vpack.c.b16 %v7012, %v7012
        %v7031 = vpack.c.b16 %v7013, %v7013
        %v7032 = vpack.c.b16 %v7014, %v7014
        %v7033 = vrot.slane %v6781, 5
        %v7034 = vrot.slane %v7015, 5
        %v7035 = vsel %vm2454, %v7033, %v7034
        %v7036 = vrot.slane %v6782, 5
        %v7037 = vrot.slane %v7016, 5
        %v7038 = vsel %vm2454, %v7036, %v7037
        %v7039 = vrot.slane %v6783, 5
        %v7040 = vrot.slane %v7017, 5
        %v7041 = vsel %vm2454, %v7039, %v7040
        %v7042 = vrot.slane %v6784, 5
        %v7043 = vrot.slane %v7018, 5
        %v7044 = vsel %vm2454, %v7042, %v7043
        %v7045 = vrot.slane %v6785, 5
        %v7046 = vrot.slane %v7019, 5
        %v7047 = vsel %vm2454, %v7045, %v7046
        %v7048 = vrot.slane %v6786, 5
        %v7049 = vrot.slane %v7020, 5
        %v7050 = vsel %vm2454, %v7048, %v7049
        %v7051 = vrot.slane %v6787, 5
        %v7052 = vrot.slane %v7021, 5
        %v7053 = vsel %vm2454, %v7051, %v7052
        %v7054 = vrot.slane %v6788, 5
        %v7055 = vrot.slane %v7022, 5
        %v7056 = vsel %vm2454, %v7054, %v7055
        %v7057 = vrot.slane %v6789, 5
        %v7058 = vrot.slane %v7023, 5
        %v7059 = vsel %vm2454, %v7057, %v7058
        %v7060 = vrot.slane %v6790, 5
        %v7061 = vrot.slane %v7024, 5
        %v7062 = vsel %vm2454, %v7060, %v7061
        %v7063 = vrot.slane %v6791, 5
        %v7064 = vrot.slane %v7025, 5
        %v7065 = vsel %vm2454, %v7063, %v7064
        %v7066 = vrot.slane %v6792, 5
        %v7067 = vrot.slane %v7026, 5
        %v7068 = vsel %vm2454, %v7066, %v7067
        %v7069 = vrot.slane %v6793, 5
        %v7070 = vrot.slane %v7027, 5
        %v7071 = vsel %vm2454, %v7069, %v7070
        %v7072 = vrot.slane %v6794, 5
        %v7073 = vrot.slane %v7028, 5
        %v7074 = vsel %vm2454, %v7072, %v7073
        %v7075 = vrot.slane %v6795, 5
        %v7076 = vrot.slane %v7029, 5
        %v7077 = vsel %vm2454, %v7075, %v7076
        %v7078 = vrot.slane %v6796, 5
        %v7079 = vrot.slane %v7030, 5
        %v7080 = vsel %vm2454, %v7078, %v7079
        %v7081 = vrot.slane %v6797, 5
        %v7082 = vrot.slane %v7031, 5
        %v7083 = vsel %vm2454, %v7081, %v7082
        %v7084 = vrot.slane %v6798, 5
        %v7085 = vrot.slane %v7032, 5
        %v7086 = vsel %vm2454, %v7084, %v7085
        %7087 = vrot.lane.b32.xlu0 %v7033, 64
        %v7088 = vpop.permute.xlu0 %7087
        %7089 = vrot.lane.b32.xlu0 %v7035, 64
        %v7090 = vpop.permute.xlu0 %7089
        %7091 = vrot.lane.b32.xlu0 %v7036, 64
        %v7092 = vpop.permute.xlu0 %7091
        %7093 = vrot.lane.b32.xlu0 %v7038, 64
        %v7094 = vpop.permute.xlu0 %7093
        %7095 = vrot.lane.b32.xlu0 %v7039, 64
        %v7096 = vpop.permute.xlu0 %7095
        %7097 = vrot.lane.b32.xlu0 %v7041, 64
        %v7098 = vpop.permute.xlu0 %7097
        %7099 = vrot.lane.b32.xlu0 %v7042, 64
        %v7100 = vpop.permute.xlu0 %7099
        %7101 = vrot.lane.b32.xlu0 %v7044, 64
        %v7102 = vpop.permute.xlu0 %7101
        %7103 = vrot.lane.b32.xlu0 %v7045, 64
        %v7104 = vpop.permute.xlu0 %7103
        %7105 = vrot.lane.b32.xlu0 %v7047, 64
        %v7106 = vpop.permute.xlu0 %7105
        %7107 = vrot.lane.b32.xlu0 %v7048, 64
        %v7108 = vpop.permute.xlu0 %7107
        %7109 = vrot.lane.b32.xlu0 %v7050, 64
        %v7110 = vpop.permute.xlu0 %7109
        %7111 = vrot.lane.b32.xlu0 %v7051, 64
        %v7112 = vpop.permute.xlu0 %7111
        %7113 = vrot.lane.b32.xlu0 %v7053, 64
        %v7114 = vpop.permute.xlu0 %7113
        %7115 = vrot.lane.b32.xlu0 %v7054, 64
        %v7116 = vpop.permute.xlu0 %7115
        %7117 = vrot.lane.b32.xlu0 %v7056, 64
        %v7118 = vpop.permute.xlu0 %7117
        %7119 = vrot.lane.b32.xlu0 %v7057, 64
        %v7120 = vpop.permute.xlu0 %7119
        %7121 = vrot.lane.b32.xlu0 %v7059, 64
        %v7122 = vpop.permute.xlu0 %7121
        %7123 = vrot.lane.b32.xlu0 %v7060, 64
        %v7124 = vpop.permute.xlu0 %7123
        %7125 = vrot.lane.b32.xlu0 %v7062, 64
        %v7126 = vpop.permute.xlu0 %7125
        %7127 = vrot.lane.b32.xlu0 %v7063, 64
        %v7128 = vpop.permute.xlu0 %7127
        %7129 = vrot.lane.b32.xlu0 %v7065, 64
        %v7130 = vpop.permute.xlu0 %7129
        %7131 = vrot.lane.b32.xlu0 %v7066, 64
        %v7132 = vpop.permute.xlu0 %7131
        %7133 = vrot.lane.b32.xlu0 %v7068, 64
        %v7134 = vpop.permute.xlu0 %7133
        %7135 = vrot.lane.b32.xlu0 %v7069, 64
        %v7136 = vpop.permute.xlu0 %7135
        %7137 = vrot.lane.b32.xlu0 %v7071, 64
        %v7138 = vpop.permute.xlu0 %7137
        %7139 = vrot.lane.b32.xlu0 %v7072, 64
        %v7140 = vpop.permute.xlu0 %7139
        %7141 = vrot.lane.b32.xlu0 %v7074, 64
        %v7142 = vpop.permute.xlu0 %7141
        %7143 = vrot.lane.b32.xlu0 %v7075, 64
        %v7144 = vpop.permute.xlu0 %7143
        %7145 = vrot.lane.b32.xlu0 %v7077, 64
        %v7146 = vpop.permute.xlu0 %7145
        %7147 = vrot.lane.b32.xlu0 %v7078, 64
        %v7148 = vpop.permute.xlu0 %7147
        %7149 = vrot.lane.b32.xlu0 %v7080, 64
        %v7150 = vpop.permute.xlu0 %7149
        %7151 = vrot.lane.b32.xlu0 %v7081, 64
        %v7152 = vpop.permute.xlu0 %7151
        %7153 = vrot.lane.b32.xlu0 %v7083, 64
        %v7154 = vpop.permute.xlu0 %7153
        %7155 = vrot.lane.b32.xlu0 %v7084, 64
        %v7156 = vpop.permute.xlu0 %7155
        %7157 = vrot.lane.b32.xlu0 %v7086, 64
        %v7158 = vpop.permute.xlu0 %7157
        %v7161 = vsel %vm359, %v6745, %v6944
        %v7163 = vsel %vm359, %v6746, %v6944
        %v7166 = vsel %vm359, %v6747, %v6946
        %v7168 = vsel %vm359, %v6748, %v6946
        %v7171 = vsel %vm359, %v6749, %v6948
        %v7173 = vsel %vm359, %v6750, %v6948
        %v7176 = vsel %vm359, %v6751, %v6950
        %v7178 = vsel %vm359, %v6752, %v6950
        %v7181 = vsel %vm359, %v6753, %v6952
        %v7183 = vsel %vm359, %v6754, %v6952
        %v7186 = vsel %vm359, %v6755, %v6954
        %v7188 = vsel %vm359, %v6756, %v6954
        %v7191 = vsel %vm359, %v6757, %v6956
        %v7193 = vsel %vm359, %v6758, %v6956
        %v7196 = vsel %vm359, %v6759, %v6958
        %v7198 = vsel %vm359, %v6760, %v6958
        %v7201 = vsel %vm359, %v6761, %v6960
        %v7203 = vsel %vm359, %v6762, %v6960
        %v7206 = vsel %vm359, %v6763, %v6962
        %v7208 = vsel %vm359, %v6764, %v6962
        %v7211 = vsel %vm359, %v6765, %v6964
        %v7213 = vsel %vm359, %v6766, %v6964
        %v7216 = vsel %vm359, %v6767, %v6966
        %v7218 = vsel %vm359, %v6768, %v6966
        %v7221 = vsel %vm359, %v6769, %v6968
        %v7223 = vsel %vm359, %v6770, %v6968
        %v7226 = vsel %vm359, %v6771, %v6970
        %v7228 = vsel %vm359, %v6772, %v6970
        %v7231 = vsel %vm359, %v6773, %v6972
        %v7233 = vsel %vm359, %v6774, %v6972
        %v7236 = vsel %vm359, %v6775, %v6974
        %v7238 = vsel %vm359, %v6776, %v6974
        %v7241 = vsel %vm359, %v6777, %v6976
        %v7243 = vsel %vm359, %v6778, %v6976
        %v7246 = vsel %vm359, %v6779, %v6978
        %v7248 = vsel %vm359, %v6780, %v6978
        %v7250 = vsel %vm2509, %v6944, %v7088
        %v7252 = vsel %vm2509, %v6944, %v7090
        %v7254 = vsel %vm2509, %v6946, %v7092
        %v7256 = vsel %vm2509, %v6946, %v7094
        %v7258 = vsel %vm2509, %v6948, %v7096
        %v7260 = vsel %vm2509, %v6948, %v7098
        %v7262 = vsel %vm2509, %v6950, %v7100
        %v7264 = vsel %vm2509, %v6950, %v7102
        %v7266 = vsel %vm2509, %v6952, %v7104
        %v7268 = vsel %vm2509, %v6952, %v7106
        %v7270 = vsel %vm2509, %v6954, %v7108
        %v7272 = vsel %vm2509, %v6954, %v7110
        %v7274 = vsel %vm2509, %v6956, %v7112
        %v7276 = vsel %vm2509, %v6956, %v7114
        %v7278 = vsel %vm2509, %v6958, %v7116
        %v7280 = vsel %vm2509, %v6958, %v7118
        %v7282 = vsel %vm2509, %v6960, %v7120
        %v7284 = vsel %vm2509, %v6960, %v7122
        %v7286 = vsel %vm2509, %v6962, %v7124
        %v7288 = vsel %vm2509, %v6962, %v7126
        %v7290 = vsel %vm2509, %v6964, %v7128
        %v7292 = vsel %vm2509, %v6964, %v7130
        %v7294 = vsel %vm2509, %v6966, %v7132
        %v7296 = vsel %vm2509, %v6966, %v7134
        %v7298 = vsel %vm2509, %v6968, %v7136
        %v7300 = vsel %vm2509, %v6968, %v7138
        %v7302 = vsel %vm2509, %v6970, %v7140
        %v7304 = vsel %vm2509, %v6970, %v7142
        %v7306 = vsel %vm2509, %v6972, %v7144
        %v7308 = vsel %vm2509, %v6972, %v7146
        %v7310 = vsel %vm2509, %v6974, %v7148
        %v7312 = vsel %vm2509, %v6974, %v7150
        %v7314 = vsel %vm2509, %v6976, %v7152
        %v7316 = vsel %vm2509, %v6976, %v7154
        %v7318 = vsel %vm2509, %v6978, %v7156
        %v7320 = vsel %vm2509, %v6978, %v7158
        %v7321 = vshrl.u32 %v7161, 16
        %v7323 = vrot.slane %v7321, 3
        %v7324 = vshll.u32 %v7161, 16
        %v7326 = vrot.slane %v7324, 4
        %v7327 = vor.u32 %v7323, %v7326
        %v7328 = vshrl.u32 %v7163, 16
        %v7330 = vrot.slane %v7328, 3
        %v7331 = vshll.u32 %v7163, 16
        %v7333 = vrot.slane %v7331, 4
        %v7334 = vor.u32 %v7330, %v7333
        %v7335 = vsel %vm2600, %v7327, %v7334
        %v7336 = vshrl.u32 %v7250, 16
        %v7338 = vrot.slane %v7336, 3
        %v7339 = vshll.u32 %v7250, 16
        %v7341 = vrot.slane %v7339, 4
        %v7342 = vor.u32 %v7338, %v7341
        %v7343 = vshrl.u32 %v7252, 16
        %v7345 = vrot.slane %v7343, 3
        %v7346 = vshll.u32 %v7252, 16
        %v7348 = vrot.slane %v7346, 4
        %v7349 = vor.u32 %v7345, %v7348
        %v7350 = vsel %vm2600, %v7342, %v7349
        %v7351 = vshrl.u32 %v7088, 16
        %v7353 = vrot.slane %v7351, 3
        %v7354 = vshll.u32 %v7088, 16
        %v7356 = vrot.slane %v7354, 4
        %v7357 = vor.u32 %v7353, %v7356
        %v7358 = vshrl.u32 %v7090, 16
        %v7360 = vrot.slane %v7358, 3
        %v7361 = vshll.u32 %v7090, 16
        %v7363 = vrot.slane %v7361, 4
        %v7364 = vor.u32 %v7360, %v7363
        %v7365 = vsel %vm2600, %v7357, %v7364
        %v7366 = vshrl.u32 %v7166, 16
        %v7368 = vrot.slane %v7366, 3
        %v7369 = vshll.u32 %v7166, 16
        %v7371 = vrot.slane %v7369, 4
        %v7372 = vor.u32 %v7368, %v7371
        %v7373 = vshrl.u32 %v7168, 16
        %v7375 = vrot.slane %v7373, 3
        %v7376 = vshll.u32 %v7168, 16
        %v7378 = vrot.slane %v7376, 4
        %v7379 = vor.u32 %v7375, %v7378
        %v7380 = vsel %vm2600, %v7372, %v7379
        %v7381 = vshrl.u32 %v7254, 16
        %v7383 = vrot.slane %v7381, 3
        %v7384 = vshll.u32 %v7254, 16
        %v7386 = vrot.slane %v7384, 4
        %v7387 = vor.u32 %v7383, %v7386
        %v7388 = vshrl.u32 %v7256, 16
        %v7390 = vrot.slane %v7388, 3
        %v7391 = vshll.u32 %v7256, 16
        %v7393 = vrot.slane %v7391, 4
        %v7394 = vor.u32 %v7390, %v7393
        %v7395 = vsel %vm2600, %v7387, %v7394
        %v7396 = vshrl.u32 %v7092, 16
        %v7398 = vrot.slane %v7396, 3
        %v7399 = vshll.u32 %v7092, 16
        %v7401 = vrot.slane %v7399, 4
        %v7402 = vor.u32 %v7398, %v7401
        %v7403 = vshrl.u32 %v7094, 16
        %v7405 = vrot.slane %v7403, 3
        %v7406 = vshll.u32 %v7094, 16
        %v7408 = vrot.slane %v7406, 4
        %v7409 = vor.u32 %v7405, %v7408
        %v7410 = vsel %vm2600, %v7402, %v7409
        %v7411 = vshrl.u32 %v7171, 16
        %v7413 = vrot.slane %v7411, 3
        %v7414 = vshll.u32 %v7171, 16
        %v7416 = vrot.slane %v7414, 4
        %v7417 = vor.u32 %v7413, %v7416
        %v7418 = vshrl.u32 %v7173, 16
        %v7420 = vrot.slane %v7418, 3
        %v7421 = vshll.u32 %v7173, 16
        %v7423 = vrot.slane %v7421, 4
        %v7424 = vor.u32 %v7420, %v7423
        %v7425 = vsel %vm2600, %v7417, %v7424
        %v7426 = vshrl.u32 %v7258, 16
        %v7428 = vrot.slane %v7426, 3
        %v7429 = vshll.u32 %v7258, 16
        %v7431 = vrot.slane %v7429, 4
        %v7432 = vor.u32 %v7428, %v7431
        %v7433 = vshrl.u32 %v7260, 16
        %v7435 = vrot.slane %v7433, 3
        %v7436 = vshll.u32 %v7260, 16
        %v7438 = vrot.slane %v7436, 4
        %v7439 = vor.u32 %v7435, %v7438
        %v7440 = vsel %vm2600, %v7432, %v7439
        %v7441 = vshrl.u32 %v7096, 16
        %v7443 = vrot.slane %v7441, 3
        %v7444 = vshll.u32 %v7096, 16
        %v7446 = vrot.slane %v7444, 4
        %v7447 = vor.u32 %v7443, %v7446
        %v7448 = vshrl.u32 %v7098, 16
        %v7450 = vrot.slane %v7448, 3
        %v7451 = vshll.u32 %v7098, 16
        %v7453 = vrot.slane %v7451, 4
        %v7454 = vor.u32 %v7450, %v7453
        %v7455 = vsel %vm2600, %v7447, %v7454
        %v7456 = vshrl.u32 %v7176, 16
        %v7458 = vrot.slane %v7456, 3
        %v7459 = vshll.u32 %v7176, 16
        %v7461 = vrot.slane %v7459, 4
        %v7462 = vor.u32 %v7458, %v7461
        %v7463 = vshrl.u32 %v7178, 16
        %v7465 = vrot.slane %v7463, 3
        %v7466 = vshll.u32 %v7178, 16
        %v7468 = vrot.slane %v7466, 4
        %v7469 = vor.u32 %v7465, %v7468
        %v7470 = vsel %vm2600, %v7462, %v7469
        %v7471 = vshrl.u32 %v7262, 16
        %v7473 = vrot.slane %v7471, 3
        %v7474 = vshll.u32 %v7262, 16
        %v7476 = vrot.slane %v7474, 4
        %v7477 = vor.u32 %v7473, %v7476
        %v7478 = vshrl.u32 %v7264, 16
        %v7480 = vrot.slane %v7478, 3
        %v7481 = vshll.u32 %v7264, 16
        %v7483 = vrot.slane %v7481, 4
        %v7484 = vor.u32 %v7480, %v7483
        %v7485 = vsel %vm2600, %v7477, %v7484
        %v7486 = vshrl.u32 %v7100, 16
        %v7488 = vrot.slane %v7486, 3
        %v7489 = vshll.u32 %v7100, 16
        %v7491 = vrot.slane %v7489, 4
        %v7492 = vor.u32 %v7488, %v7491
        %v7493 = vshrl.u32 %v7102, 16
        %v7495 = vrot.slane %v7493, 3
        %v7496 = vshll.u32 %v7102, 16
        %v7498 = vrot.slane %v7496, 4
        %v7499 = vor.u32 %v7495, %v7498
        %v7500 = vsel %vm2600, %v7492, %v7499
        %v7501 = vshrl.u32 %v7181, 16
        %v7503 = vrot.slane %v7501, 3
        %v7504 = vshll.u32 %v7181, 16
        %v7506 = vrot.slane %v7504, 4
        %v7507 = vor.u32 %v7503, %v7506
        %v7508 = vshrl.u32 %v7183, 16
        %v7510 = vrot.slane %v7508, 3
        %v7511 = vshll.u32 %v7183, 16
        %v7513 = vrot.slane %v7511, 4
        %v7514 = vor.u32 %v7510, %v7513
        %v7515 = vsel %vm2600, %v7507, %v7514
        %v7516 = vshrl.u32 %v7266, 16
        %v7518 = vrot.slane %v7516, 3
        %v7519 = vshll.u32 %v7266, 16
        %v7521 = vrot.slane %v7519, 4
        %v7522 = vor.u32 %v7518, %v7521
        %v7523 = vshrl.u32 %v7268, 16
        %v7525 = vrot.slane %v7523, 3
        %v7526 = vshll.u32 %v7268, 16
        %v7528 = vrot.slane %v7526, 4
        %v7529 = vor.u32 %v7525, %v7528
        %v7530 = vsel %vm2600, %v7522, %v7529
        %v7531 = vshrl.u32 %v7104, 16
        %v7533 = vrot.slane %v7531, 3
        %v7534 = vshll.u32 %v7104, 16
        %v7536 = vrot.slane %v7534, 4
        %v7537 = vor.u32 %v7533, %v7536
        %v7538 = vshrl.u32 %v7106, 16
        %v7540 = vrot.slane %v7538, 3
        %v7541 = vshll.u32 %v7106, 16
        %v7543 = vrot.slane %v7541, 4
        %v7544 = vor.u32 %v7540, %v7543
        %v7545 = vsel %vm2600, %v7537, %v7544
        %v7546 = vshrl.u32 %v7186, 16
        %v7548 = vrot.slane %v7546, 3
        %v7549 = vshll.u32 %v7186, 16
        %v7551 = vrot.slane %v7549, 4
        %v7552 = vor.u32 %v7548, %v7551
        %v7553 = vshrl.u32 %v7188, 16
        %v7555 = vrot.slane %v7553, 3
        %v7556 = vshll.u32 %v7188, 16
        %v7558 = vrot.slane %v7556, 4
        %v7559 = vor.u32 %v7555, %v7558
        %v7560 = vsel %vm2600, %v7552, %v7559
        %v7561 = vshrl.u32 %v7270, 16
        %v7563 = vrot.slane %v7561, 3
        %v7564 = vshll.u32 %v7270, 16
        %v7566 = vrot.slane %v7564, 4
        %v7567 = vor.u32 %v7563, %v7566
        %v7568 = vshrl.u32 %v7272, 16
        %v7570 = vrot.slane %v7568, 3
        %v7571 = vshll.u32 %v7272, 16
        %v7573 = vrot.slane %v7571, 4
        %v7574 = vor.u32 %v7570, %v7573
        %v7575 = vsel %vm2600, %v7567, %v7574
        %v7576 = vshrl.u32 %v7108, 16
        %v7578 = vrot.slane %v7576, 3
        %v7579 = vshll.u32 %v7108, 16
        %v7581 = vrot.slane %v7579, 4
        %v7582 = vor.u32 %v7578, %v7581
        %v7583 = vshrl.u32 %v7110, 16
        %v7585 = vrot.slane %v7583, 3
        %v7586 = vshll.u32 %v7110, 16
        %v7588 = vrot.slane %v7586, 4
        %v7589 = vor.u32 %v7585, %v7588
        %v7590 = vsel %vm2600, %v7582, %v7589
        %v7591 = vshrl.u32 %v7191, 16
        %v7593 = vrot.slane %v7591, 3
        %v7594 = vshll.u32 %v7191, 16
        %v7596 = vrot.slane %v7594, 4
        %v7597 = vor.u32 %v7593, %v7596
        %v7598 = vshrl.u32 %v7193, 16
        %v7600 = vrot.slane %v7598, 3
        %v7601 = vshll.u32 %v7193, 16
        %v7603 = vrot.slane %v7601, 4
        %v7604 = vor.u32 %v7600, %v7603
        %v7605 = vsel %vm2600, %v7597, %v7604
        %v7606 = vshrl.u32 %v7274, 16
        %v7608 = vrot.slane %v7606, 3
        %v7609 = vshll.u32 %v7274, 16
        %v7611 = vrot.slane %v7609, 4
        %v7612 = vor.u32 %v7608, %v7611
        %v7613 = vshrl.u32 %v7276, 16
        %v7615 = vrot.slane %v7613, 3
        %v7616 = vshll.u32 %v7276, 16
        %v7618 = vrot.slane %v7616, 4
        %v7619 = vor.u32 %v7615, %v7618
        %v7620 = vsel %vm2600, %v7612, %v7619
        %v7621 = vshrl.u32 %v7112, 16
        %v7623 = vrot.slane %v7621, 3
        %v7624 = vshll.u32 %v7112, 16
        %v7626 = vrot.slane %v7624, 4
        %v7627 = vor.u32 %v7623, %v7626
        %v7628 = vshrl.u32 %v7114, 16
        %v7630 = vrot.slane %v7628, 3
        %v7631 = vshll.u32 %v7114, 16
        %v7633 = vrot.slane %v7631, 4
        %v7634 = vor.u32 %v7630, %v7633
        %v7635 = vsel %vm2600, %v7627, %v7634
        %v7636 = vshrl.u32 %v7196, 16
        %v7638 = vrot.slane %v7636, 3
        %v7639 = vshll.u32 %v7196, 16
        %v7641 = vrot.slane %v7639, 4
        %v7642 = vor.u32 %v7638, %v7641
        %v7643 = vshrl.u32 %v7198, 16
        %v7645 = vrot.slane %v7643, 3
        %v7646 = vshll.u32 %v7198, 16
        %v7648 = vrot.slane %v7646, 4
        %v7649 = vor.u32 %v7645, %v7648
        %v7650 = vsel %vm2600, %v7642, %v7649
        %v7651 = vshrl.u32 %v7278, 16
        %v7653 = vrot.slane %v7651, 3
        %v7654 = vshll.u32 %v7278, 16
        %v7656 = vrot.slane %v7654, 4
        %v7657 = vor.u32 %v7653, %v7656
        %v7658 = vshrl.u32 %v7280, 16
        %v7660 = vrot.slane %v7658, 3
        %v7661 = vshll.u32 %v7280, 16
        %v7663 = vrot.slane %v7661, 4
        %v7664 = vor.u32 %v7660, %v7663
        %v7665 = vsel %vm2600, %v7657, %v7664
        %v7666 = vshrl.u32 %v7116, 16
        %v7668 = vrot.slane %v7666, 3
        %v7669 = vshll.u32 %v7116, 16
        %v7671 = vrot.slane %v7669, 4
        %v7672 = vor.u32 %v7668, %v7671
        %v7673 = vshrl.u32 %v7118, 16
        %v7675 = vrot.slane %v7673, 3
        %v7676 = vshll.u32 %v7118, 16
        %v7678 = vrot.slane %v7676, 4
        %v7679 = vor.u32 %v7675, %v7678
        %v7680 = vsel %vm2600, %v7672, %v7679
        %v7681 = vshrl.u32 %v7201, 16
        %v7683 = vrot.slane %v7681, 3
        %v7684 = vshll.u32 %v7201, 16
        %v7686 = vrot.slane %v7684, 4
        %v7687 = vor.u32 %v7683, %v7686
        %v7688 = vshrl.u32 %v7203, 16
        %v7690 = vrot.slane %v7688, 3
        %v7691 = vshll.u32 %v7203, 16
        %v7693 = vrot.slane %v7691, 4
        %v7694 = vor.u32 %v7690, %v7693
        %v7695 = vsel %vm2600, %v7687, %v7694
        %v7696 = vshrl.u32 %v7282, 16
        %v7698 = vrot.slane %v7696, 3
        %v7699 = vshll.u32 %v7282, 16
        %v7701 = vrot.slane %v7699, 4
        %v7702 = vor.u32 %v7698, %v7701
        %v7703 = vshrl.u32 %v7284, 16
        %v7705 = vrot.slane %v7703, 3
        %v7706 = vshll.u32 %v7284, 16
        %v7708 = vrot.slane %v7706, 4
        %v7709 = vor.u32 %v7705, %v7708
        %v7710 = vsel %vm2600, %v7702, %v7709
        %v7711 = vshrl.u32 %v7120, 16
        %v7713 = vrot.slane %v7711, 3
        %v7714 = vshll.u32 %v7120, 16
        %v7716 = vrot.slane %v7714, 4
        %v7717 = vor.u32 %v7713, %v7716
        %v7718 = vshrl.u32 %v7122, 16
        %v7720 = vrot.slane %v7718, 3
        %v7721 = vshll.u32 %v7122, 16
        %v7723 = vrot.slane %v7721, 4
        %v7724 = vor.u32 %v7720, %v7723
        %v7725 = vsel %vm2600, %v7717, %v7724
        %v7726 = vshrl.u32 %v7206, 16
        %v7728 = vrot.slane %v7726, 3
        %v7729 = vshll.u32 %v7206, 16
        %v7731 = vrot.slane %v7729, 4
        %v7732 = vor.u32 %v7728, %v7731
        %v7733 = vshrl.u32 %v7208, 16
        %v7735 = vrot.slane %v7733, 3
        %v7736 = vshll.u32 %v7208, 16
        %v7738 = vrot.slane %v7736, 4
        %v7739 = vor.u32 %v7735, %v7738
        %v7740 = vsel %vm2600, %v7732, %v7739
        %v7741 = vshrl.u32 %v7286, 16
        %v7743 = vrot.slane %v7741, 3
        %v7744 = vshll.u32 %v7286, 16
        %v7746 = vrot.slane %v7744, 4
        %v7747 = vor.u32 %v7743, %v7746
        %v7748 = vshrl.u32 %v7288, 16
        %v7750 = vrot.slane %v7748, 3
        %v7751 = vshll.u32 %v7288, 16
        %v7753 = vrot.slane %v7751, 4
        %v7754 = vor.u32 %v7750, %v7753
        %v7755 = vsel %vm2600, %v7747, %v7754
        %v7756 = vshrl.u32 %v7124, 16
        %v7758 = vrot.slane %v7756, 3
        %v7759 = vshll.u32 %v7124, 16
        %v7761 = vrot.slane %v7759, 4
        %v7762 = vor.u32 %v7758, %v7761
        %v7763 = vshrl.u32 %v7126, 16
        %v7765 = vrot.slane %v7763, 3
        %v7766 = vshll.u32 %v7126, 16
        %v7768 = vrot.slane %v7766, 4
        %v7769 = vor.u32 %v7765, %v7768
        %v7770 = vsel %vm2600, %v7762, %v7769
        %v7771 = vshrl.u32 %v7211, 16
        %v7773 = vrot.slane %v7771, 3
        %v7774 = vshll.u32 %v7211, 16
        %v7776 = vrot.slane %v7774, 4
        %v7777 = vor.u32 %v7773, %v7776
        %v7778 = vshrl.u32 %v7213, 16
        %v7780 = vrot.slane %v7778, 3
        %v7781 = vshll.u32 %v7213, 16
        %v7783 = vrot.slane %v7781, 4
        %v7784 = vor.u32 %v7780, %v7783
        %v7785 = vsel %vm2600, %v7777, %v7784
        %v7786 = vshrl.u32 %v7290, 16
        %v7788 = vrot.slane %v7786, 3
        %v7789 = vshll.u32 %v7290, 16
        %v7791 = vrot.slane %v7789, 4
        %v7792 = vor.u32 %v7788, %v7791
        %v7793 = vshrl.u32 %v7292, 16
        %v7795 = vrot.slane %v7793, 3
        %v7796 = vshll.u32 %v7292, 16
        %v7798 = vrot.slane %v7796, 4
        %v7799 = vor.u32 %v7795, %v7798
        %v7800 = vsel %vm2600, %v7792, %v7799
        %v7801 = vshrl.u32 %v7128, 16
        %v7803 = vrot.slane %v7801, 3
        %v7804 = vshll.u32 %v7128, 16
        %v7806 = vrot.slane %v7804, 4
        %v7807 = vor.u32 %v7803, %v7806
        %v7808 = vshrl.u32 %v7130, 16
        %v7810 = vrot.slane %v7808, 3
        %v7811 = vshll.u32 %v7130, 16
        %v7813 = vrot.slane %v7811, 4
        %v7814 = vor.u32 %v7810, %v7813
        %v7815 = vsel %vm2600, %v7807, %v7814
        %v7816 = vshrl.u32 %v7216, 16
        %v7818 = vrot.slane %v7816, 3
        %v7819 = vshll.u32 %v7216, 16
        %v7821 = vrot.slane %v7819, 4
        %v7822 = vor.u32 %v7818, %v7821
        %v7823 = vshrl.u32 %v7218, 16
        %v7825 = vrot.slane %v7823, 3
        %v7826 = vshll.u32 %v7218, 16
        %v7828 = vrot.slane %v7826, 4
        %v7829 = vor.u32 %v7825, %v7828
        %v7830 = vsel %vm2600, %v7822, %v7829
        %v7831 = vshrl.u32 %v7294, 16
        %v7833 = vrot.slane %v7831, 3
        %v7834 = vshll.u32 %v7294, 16
        %v7836 = vrot.slane %v7834, 4
        %v7837 = vor.u32 %v7833, %v7836
        %v7838 = vshrl.u32 %v7296, 16
        %v7840 = vrot.slane %v7838, 3
        %v7841 = vshll.u32 %v7296, 16
        %v7843 = vrot.slane %v7841, 4
        %v7844 = vor.u32 %v7840, %v7843
        %v7845 = vsel %vm2600, %v7837, %v7844
        %v7846 = vshrl.u32 %v7132, 16
        %v7848 = vrot.slane %v7846, 3
        %v7849 = vshll.u32 %v7132, 16
        %v7851 = vrot.slane %v7849, 4
        %v7852 = vor.u32 %v7848, %v7851
        %v7853 = vshrl.u32 %v7134, 16
        %v7855 = vrot.slane %v7853, 3
        %v7856 = vshll.u32 %v7134, 16
        %v7858 = vrot.slane %v7856, 4
        %v7859 = vor.u32 %v7855, %v7858
        %v7860 = vsel %vm2600, %v7852, %v7859
        %v7861 = vshrl.u32 %v7221, 16
        %v7863 = vrot.slane %v7861, 3
        %v7864 = vshll.u32 %v7221, 16
        %v7866 = vrot.slane %v7864, 4
        %v7867 = vor.u32 %v7863, %v7866
        %v7868 = vshrl.u32 %v7223, 16
        %v7870 = vrot.slane %v7868, 3
        %v7871 = vshll.u32 %v7223, 16
        %v7873 = vrot.slane %v7871, 4
        %v7874 = vor.u32 %v7870, %v7873
        %v7875 = vsel %vm2600, %v7867, %v7874
        %v7876 = vshrl.u32 %v7298, 16
        %v7878 = vrot.slane %v7876, 3
        %v7879 = vshll.u32 %v7298, 16
        %v7881 = vrot.slane %v7879, 4
        %v7882 = vor.u32 %v7878, %v7881
        %v7883 = vshrl.u32 %v7300, 16
        %v7885 = vrot.slane %v7883, 3
        %v7886 = vshll.u32 %v7300, 16
        %v7888 = vrot.slane %v7886, 4
        %v7889 = vor.u32 %v7885, %v7888
        %v7890 = vsel %vm2600, %v7882, %v7889
        %v7891 = vshrl.u32 %v7136, 16
        %v7893 = vrot.slane %v7891, 3
        %v7894 = vshll.u32 %v7136, 16
        %v7896 = vrot.slane %v7894, 4
        %v7897 = vor.u32 %v7893, %v7896
        %v7898 = vshrl.u32 %v7138, 16
        %v7900 = vrot.slane %v7898, 3
        %v7901 = vshll.u32 %v7138, 16
        %v7903 = vrot.slane %v7901, 4
        %v7904 = vor.u32 %v7900, %v7903
        %v7905 = vsel %vm2600, %v7897, %v7904
        %v7906 = vshrl.u32 %v7226, 16
        %v7908 = vrot.slane %v7906, 3
        %v7909 = vshll.u32 %v7226, 16
        %v7911 = vrot.slane %v7909, 4
        %v7912 = vor.u32 %v7908, %v7911
        %v7913 = vshrl.u32 %v7228, 16
        %v7915 = vrot.slane %v7913, 3
        %v7916 = vshll.u32 %v7228, 16
        %v7918 = vrot.slane %v7916, 4
        %v7919 = vor.u32 %v7915, %v7918
        %v7920 = vsel %vm2600, %v7912, %v7919
        %v7921 = vshrl.u32 %v7302, 16
        %v7923 = vrot.slane %v7921, 3
        %v7924 = vshll.u32 %v7302, 16
        %v7926 = vrot.slane %v7924, 4
        %v7927 = vor.u32 %v7923, %v7926
        %v7928 = vshrl.u32 %v7304, 16
        %v7930 = vrot.slane %v7928, 3
        %v7931 = vshll.u32 %v7304, 16
        %v7933 = vrot.slane %v7931, 4
        %v7934 = vor.u32 %v7930, %v7933
        %v7935 = vsel %vm2600, %v7927, %v7934
        %v7936 = vshrl.u32 %v7140, 16
        %v7938 = vrot.slane %v7936, 3
        %v7939 = vshll.u32 %v7140, 16
        %v7941 = vrot.slane %v7939, 4
        %v7942 = vor.u32 %v7938, %v7941
        %v7943 = vshrl.u32 %v7142, 16
        %v7945 = vrot.slane %v7943, 3
        %v7946 = vshll.u32 %v7142, 16
        %v7948 = vrot.slane %v7946, 4
        %v7949 = vor.u32 %v7945, %v7948
        %v7950 = vsel %vm2600, %v7942, %v7949
        %v7951 = vshrl.u32 %v7231, 16
        %v7953 = vrot.slane %v7951, 3
        %v7954 = vshll.u32 %v7231, 16
        %v7956 = vrot.slane %v7954, 4
        %v7957 = vor.u32 %v7953, %v7956
        %v7958 = vshrl.u32 %v7233, 16
        %v7960 = vrot.slane %v7958, 3
        %v7961 = vshll.u32 %v7233, 16
        %v7963 = vrot.slane %v7961, 4
        %v7964 = vor.u32 %v7960, %v7963
        %v7965 = vsel %vm2600, %v7957, %v7964
        %v7966 = vshrl.u32 %v7306, 16
        %v7968 = vrot.slane %v7966, 3
        %v7969 = vshll.u32 %v7306, 16
        %v7971 = vrot.slane %v7969, 4
        %v7972 = vor.u32 %v7968, %v7971
        %v7973 = vshrl.u32 %v7308, 16
        %v7975 = vrot.slane %v7973, 3
        %v7976 = vshll.u32 %v7308, 16
        %v7978 = vrot.slane %v7976, 4
        %v7979 = vor.u32 %v7975, %v7978
        %v7980 = vsel %vm2600, %v7972, %v7979
        %v7981 = vshrl.u32 %v7144, 16
        %v7983 = vrot.slane %v7981, 3
        %v7984 = vshll.u32 %v7144, 16
        %v7986 = vrot.slane %v7984, 4
        %v7987 = vor.u32 %v7983, %v7986
        %v7988 = vshrl.u32 %v7146, 16
        %v7990 = vrot.slane %v7988, 3
        %v7991 = vshll.u32 %v7146, 16
        %v7993 = vrot.slane %v7991, 4
        %v7994 = vor.u32 %v7990, %v7993
        %v7995 = vsel %vm2600, %v7987, %v7994
        %v7996 = vshrl.u32 %v7236, 16
        %v7998 = vrot.slane %v7996, 3
        %v7999 = vshll.u32 %v7236, 16
        %v8001 = vrot.slane %v7999, 4
        %v8002 = vor.u32 %v7998, %v8001
        %v8003 = vshrl.u32 %v7238, 16
        %v8005 = vrot.slane %v8003, 3
        %v8006 = vshll.u32 %v7238, 16
        %v8008 = vrot.slane %v8006, 4
        %v8009 = vor.u32 %v8005, %v8008
        %v8010 = vsel %vm2600, %v8002, %v8009
        %v8011 = vshrl.u32 %v7310, 16
        %v8013 = vrot.slane %v8011, 3
        %v8014 = vshll.u32 %v7310, 16
        %v8016 = vrot.slane %v8014, 4
        %v8017 = vor.u32 %v8013, %v8016
        %v8018 = vshrl.u32 %v7312, 16
        %v8020 = vrot.slane %v8018, 3
        %v8021 = vshll.u32 %v7312, 16
        %v8023 = vrot.slane %v8021, 4
        %v8024 = vor.u32 %v8020, %v8023
        %v8025 = vsel %vm2600, %v8017, %v8024
        %v8026 = vshrl.u32 %v7148, 16
        %v8028 = vrot.slane %v8026, 3
        %v8029 = vshll.u32 %v7148, 16
        %v8031 = vrot.slane %v8029, 4
        %v8032 = vor.u32 %v8028, %v8031
        %v8033 = vshrl.u32 %v7150, 16
        %v8035 = vrot.slane %v8033, 3
        %v8036 = vshll.u32 %v7150, 16
        %v8038 = vrot.slane %v8036, 4
        %v8039 = vor.u32 %v8035, %v8038
        %v8040 = vsel %vm2600, %v8032, %v8039
        %v8041 = vshrl.u32 %v7241, 16
        %v8043 = vrot.slane %v8041, 3
        %v8044 = vshll.u32 %v7241, 16
        %v8046 = vrot.slane %v8044, 4
        %v8047 = vor.u32 %v8043, %v8046
        %v8048 = vshrl.u32 %v7243, 16
        %v8050 = vrot.slane %v8048, 3
        %v8051 = vshll.u32 %v7243, 16
        %v8053 = vrot.slane %v8051, 4
        %v8054 = vor.u32 %v8050, %v8053
        %v8055 = vsel %vm2600, %v8047, %v8054
        %v8056 = vshrl.u32 %v7314, 16
        %v8058 = vrot.slane %v8056, 3
        %v8059 = vshll.u32 %v7314, 16
        %v8061 = vrot.slane %v8059, 4
        %v8062 = vor.u32 %v8058, %v8061
        %v8063 = vshrl.u32 %v7316, 16
        %v8065 = vrot.slane %v8063, 3
        %v8066 = vshll.u32 %v7316, 16
        %v8068 = vrot.slane %v8066, 4
        %v8069 = vor.u32 %v8065, %v8068
        %v8070 = vsel %vm2600, %v8062, %v8069
        %v8071 = vshrl.u32 %v7152, 16
        %v8073 = vrot.slane %v8071, 3
        %v8074 = vshll.u32 %v7152, 16
        %v8076 = vrot.slane %v8074, 4
        %v8077 = vor.u32 %v8073, %v8076
        %v8078 = vshrl.u32 %v7154, 16
        %v8080 = vrot.slane %v8078, 3
        %v8081 = vshll.u32 %v7154, 16
        %v8083 = vrot.slane %v8081, 4
        %v8084 = vor.u32 %v8080, %v8083
        %v8085 = vsel %vm2600, %v8077, %v8084
        %v8086 = vshrl.u32 %v7246, 16
        %v8088 = vrot.slane %v8086, 3
        %v8089 = vshll.u32 %v7246, 16
        %v8091 = vrot.slane %v8089, 4
        %v8092 = vor.u32 %v8088, %v8091
        %v8093 = vshrl.u32 %v7248, 16
        %v8095 = vrot.slane %v8093, 3
        %v8096 = vshll.u32 %v7248, 16
        %v8098 = vrot.slane %v8096, 4
        %v8099 = vor.u32 %v8095, %v8098
        %v8100 = vsel %vm2600, %v8092, %v8099
        %v8101 = vshrl.u32 %v7318, 16
        %v8103 = vrot.slane %v8101, 3
        %v8104 = vshll.u32 %v7318, 16
        %v8106 = vrot.slane %v8104, 4
        %v8107 = vor.u32 %v8103, %v8106
        %v8108 = vshrl.u32 %v7320, 16
        %v8110 = vrot.slane %v8108, 3
        %v8111 = vshll.u32 %v7320, 16
        %v8113 = vrot.slane %v8111, 4
        %v8114 = vor.u32 %v8110, %v8113
        %v8115 = vsel %vm2600, %v8107, %v8114
        %v8116 = vshrl.u32 %v7156, 16
        %v8118 = vrot.slane %v8116, 3
        %v8119 = vshll.u32 %v7156, 16
        %v8121 = vrot.slane %v8119, 4
        %v8122 = vor.u32 %v8118, %v8121
        %v8123 = vshrl.u32 %v7158, 16
        %v8125 = vrot.slane %v8123, 3
        %v8126 = vshll.u32 %v7158, 16
        %v8128 = vrot.slane %v8126, 4
        %v8129 = vor.u32 %v8125, %v8128
        %v8130 = vsel %vm2600, %v8122, %v8129
        %v8167 = vld [vmem:[%s8] sm:$0xf]
        %v8168 = vld [vmem:[%s8 + $0x4] sm:$0xf]
        %v8169 = vld [vmem:[%s8 + $0x8] sm:$0xf]
        %v8170 = vld [vmem:[%s8 + $0xc] sm:$0xf]
        %v8171 = vld [vmem:[%s8 + $0x10] sm:$0xf]
        %v8172 = vld [vmem:[%s8 + $0x14] sm:$0xf]
        %v8173 = vld [vmem:[%s8 + $0x18] sm:$0xf]
        %v8174 = vld [vmem:[%s8 + $0x1c] sm:$0xf]
        %v8175 = vld [vmem:[%s8 + $0x20] sm:$0xf]
        %v8176 = vld [vmem:[%s8 + $0x24] sm:$0xf]
        %v8177 = vld [vmem:[%s8 + $0x28] sm:$0xf]
        %v8178 = vld [vmem:[%s8 + $0x2c] sm:$0xf]
        %v8179 = vld [vmem:[%s8 + $0x30] sm:$0xf]
        %v8180 = vld [vmem:[%s8 + $0x34] sm:$0xf]
        %v8181 = vld [vmem:[%s8 + $0x38] sm:$0xf]
        %v8182 = vld [vmem:[%s8 + $0x3c] sm:$0xf]
        %v8183 = vld [vmem:[%s8 + $0x40] sm:$0xf]
        %v8184 = vld [vmem:[%s8 + $0x44] sm:$0xf]
        %v8185 = vld [vmem:[%s8 + $0x48] sm:$0xf]
        %v8186 = vld [vmem:[%s8 + $0x4c] sm:$0xf]
        %v8187 = vld [vmem:[%s8 + $0x50] sm:$0xf]
        %v8188 = vld [vmem:[%s8 + $0x54] sm:$0xf]
        %v8189 = vld [vmem:[%s8 + $0x58] sm:$0xf]
        %v8190 = vld [vmem:[%s8 + $0x5c] sm:$0xf]
        %v8191 = vld [vmem:[%s8 + $0x60] sm:$0xf]
        %v8192 = vld [vmem:[%s8 + $0x64] sm:$0xf]
        %v8193 = vld [vmem:[%s8 + $0x68] sm:$0xf]
        %v8194 = vld [vmem:[%s8 + $0x6c] sm:$0xf]
        %v8195 = vld [vmem:[%s8 + $0x70] sm:$0xf]
        %v8196 = vld [vmem:[%s8 + $0x74] sm:$0xf]
        %v8197 = vld [vmem:[%s8 + $0x78] sm:$0xf]
        %v8198 = vld [vmem:[%s8 + $0x7c] sm:$0xf]
        %v8199 = vld [vmem:[%s8 + $0x80] sm:$0xf]
        %v8200 = vld [vmem:[%s8 + $0x84] sm:$0xf]
        %v8201 = vld [vmem:[%s8 + $0x88] sm:$0xf]
        %v8202 = vld [vmem:[%s8 + $0x8c] sm:$0xf]
        %v8204 = vlaneseq
        %v8205 = vshrl.u32 %v8204, 7
        %v8206 = vsub.s32 0, %v8205
        %v8207 = vrot.slane %v6564, %v8206
        %v8245 = vunpack.c.l.b16 %v8167
        %v8246 = vunpack.c.l.b16 %v8168
        %v8247 = vunpack.c.l.b16 %v8169
        %v8248 = vunpack.c.l.b16 %v8170
        %v8249 = vunpack.c.l.b16 %v8171
        %v8250 = vunpack.c.l.b16 %v8172
        %v8251 = vunpack.c.l.b16 %v8173
        %v8252 = vunpack.c.l.b16 %v8174
        %v8253 = vunpack.c.l.b16 %v8175
        %v8254 = vunpack.c.l.b16 %v8176
        %v8255 = vunpack.c.l.b16 %v8177
        %v8256 = vunpack.c.l.b16 %v8178
        %v8257 = vunpack.c.l.b16 %v8179
        %v8258 = vunpack.c.l.b16 %v8180
        %v8259 = vunpack.c.l.b16 %v8181
        %v8260 = vunpack.c.l.b16 %v8182
        %v8261 = vunpack.c.l.b16 %v8183
        %v8262 = vunpack.c.l.b16 %v8184
        %v8263 = vunpack.c.l.b16 %v8185
        %v8264 = vunpack.c.l.b16 %v8186
        %v8265 = vunpack.c.l.b16 %v8187
        %v8266 = vunpack.c.l.b16 %v8188
        %v8267 = vunpack.c.l.b16 %v8189
        %v8268 = vunpack.c.l.b16 %v8190
        %v8269 = vunpack.c.l.b16 %v8191
        %v8270 = vunpack.c.l.b16 %v8192
        %v8271 = vunpack.c.l.b16 %v8193
        %v8272 = vunpack.c.l.b16 %v8194
        %v8273 = vunpack.c.l.b16 %v8195
        %v8274 = vunpack.c.l.b16 %v8196
        %v8275 = vunpack.c.l.b16 %v8197
        %v8276 = vunpack.c.l.b16 %v8198
        %v8277 = vunpack.c.l.b16 %v8199
        %v8278 = vunpack.c.l.b16 %v8200
        %v8279 = vunpack.c.l.b16 %v8201
        %v8280 = vunpack.c.l.b16 %v8202
        %v8281 = vpack.c.b16 %v8246, %v8245
        %v8282 = vpack.c.b16 %v8248, %v8247
        %v8283 = vpack.c.b16 %v8250, %v8249
        %v8284 = vpack.c.b16 %v8252, %v8251
        %v8285 = vpack.c.b16 %v8254, %v8253
        %v8286 = vpack.c.b16 %v8256, %v8255
        %v8287 = vpack.c.b16 %v8258, %v8257
        %v8288 = vpack.c.b16 %v8260, %v8259
        %v8289 = vpack.c.b16 %v8262, %v8261
        %v8290 = vpack.c.b16 %v8264, %v8263
        %v8291 = vpack.c.b16 %v8266, %v8265
        %v8292 = vpack.c.b16 %v8268, %v8267
        %v8293 = vpack.c.b16 %v8270, %v8269
        %v8294 = vpack.c.b16 %v8272, %v8271
        %v8295 = vpack.c.b16 %v8274, %v8273
        %v8296 = vpack.c.b16 %v8276, %v8275
        %v8297 = vpack.c.b16 %v8278, %v8277
        %v8298 = vpack.c.b16 %v8280, %v8279
        %vm8317 = vcmask 261120
        %v8319 = vsel %vm8317, %v7365, 0
        %v8322 = vsel %vm8317, %v7410, 0
        %v8325 = vsel %vm8317, %v7455, 0
        %v8328 = vsel %vm8317, %v7500, 0
        %v8331 = vsel %vm8317, %v7545, 0
        %v8334 = vsel %vm8317, %v7590, 0
        %v8337 = vsel %vm8317, %v7635, 0
        %v8340 = vsel %vm8317, %v7680, 0
        %v8343 = vsel %vm8317, %v7725, 0
        %v8346 = vsel %vm8317, %v7770, 0
        %v8349 = vsel %vm8317, %v7815, 0
        %v8352 = vsel %vm8317, %v7860, 0
        %v8355 = vsel %vm8317, %v7905, 0
        %v8358 = vsel %vm8317, %v7950, 0
        %v8361 = vsel %vm8317, %v7995, 0
        %v8364 = vsel %vm8317, %v8040, 0
        %8366 = vmatprep.subr.bf16.mxu0 0
        %8367 = vmatpush1.bf16.msra.mxu0 %v8288
        %8368 = vmatprep.subr.bf16.mxu0 0
        %8369 = vmatpush1.bf16.msra.mxu0 %v8287
        %8370 = vmatprep.subr.bf16.mxu0 0
        %8371 = vmatpush1.bf16.msra.mxu0 %v8286
        %8372 = vmatprep.subr.bf16.mxu0 0
        %8373 = vmatpush1.bf16.msra.mxu0 %v8285
        %8374 = vmatprep.subr.bf16.mxu0 0
        %8375 = vmatpush1.bf16.msra.mxu0 %v8284
        %8376 = vmatprep.subr.bf16.mxu0 0
        %8377 = vmatpush1.bf16.msra.mxu0 %v8283
        %8378 = vmatprep.subr.bf16.mxu0 0
        %8379 = vmatpush1.bf16.msra.mxu0 %v8282
        %8380 = vmatprep.subr.bf16.mxu0 0
        %8381 = vmatpush1.bf16.msra.mxu0 %v8281
        %8382 = vmatprep.subr.bf16.mxu0 0
        %8383 = vmatpush2.bf16.msra.mxu0 %v8296
        %8384 = vmatprep.subr.bf16.mxu0 0
        %8385 = vmatpush2.bf16.msra.mxu0 %v8295
        %8386 = vmatprep.subr.bf16.mxu0 0
        %8387 = vmatpush2.bf16.msra.mxu0 %v8294
        %8388 = vmatprep.subr.bf16.mxu0 0
        %8389 = vmatpush2.bf16.msra.mxu0 %v8293
        %8390 = vmatprep.subr.bf16.mxu0 0
        %8391 = vmatpush2.bf16.msra.mxu0 %v8292
        %8392 = vmatprep.subr.bf16.mxu0 0
        %8393 = vmatpush2.bf16.msra.mxu0 %v8291
        %8394 = vmatprep.subr.bf16.mxu0 0
        %8395 = vmatpush2.bf16.msra.mxu0 %v8290
        %8396 = vmatprep.subr.bf16.mxu0 0
        %8397 = vmatpush2.bf16.msra.mxu0 %v8289
        %8398 = vmatprep.mubr.bf16.mxu0 %v7350
        %8399 = vmatmul.mubr.bf16.gmra.mxu0 %v7335
        %v8400 = vpop.f32.mrf.mxu0
        %v8401 = vadd.f32 %v8207, %v8400
        %v8402 = vpop.f32.mrf.mxu0
        %v8403 = vpop.f32.mrf.mxu0
        %v8404 = vadd.f32 %v8207, %v8403
        %v8405 = vpop.f32.mrf.mxu0
        %8406 = vmatprep.mubr.bf16.mxu0 %v7395
        %8407 = vmatmul.mubr.bf16.gmra.mxu0 %v7380
        %v8408 = vpop.f32.mrf.mxu0
        %v8409 = vadd.f32 %v8207, %v8408
        %v8410 = vpop.f32.mrf.mxu0
        %v8411 = vpop.f32.mrf.mxu0
        %v8412 = vadd.f32 %v8207, %v8411
        %v8413 = vpop.f32.mrf.mxu0
        %8414 = vmatprep.mubr.bf16.mxu0 %v7440
        %8415 = vmatmul.mubr.bf16.gmra.mxu0 %v7425
        %v8416 = vpop.f32.mrf.mxu0
        %v8417 = vadd.f32 %v8207, %v8416
        %v8418 = vpop.f32.mrf.mxu0
        %v8419 = vpop.f32.mrf.mxu0
        %v8420 = vadd.f32 %v8207, %v8419
        %v8421 = vpop.f32.mrf.mxu0
        %8422 = vmatprep.mubr.bf16.mxu0 %v7485
        %8423 = vmatmul.mubr.bf16.gmra.mxu0 %v7470
        %v8424 = vpop.f32.mrf.mxu0
        %v8425 = vadd.f32 %v8207, %v8424
        %v8426 = vpop.f32.mrf.mxu0
        %v8427 = vpop.f32.mrf.mxu0
        %v8428 = vadd.f32 %v8207, %v8427
        %v8429 = vpop.f32.mrf.mxu0
        %8430 = vmatprep.mubr.bf16.mxu0 %v7530
        %8431 = vmatmul.mubr.bf16.gmra.mxu0 %v7515
        %v8432 = vpop.f32.mrf.mxu0
        %v8433 = vadd.f32 %v8207, %v8432
        %v8434 = vpop.f32.mrf.mxu0
        %v8435 = vpop.f32.mrf.mxu0
        %v8436 = vadd.f32 %v8207, %v8435
        %v8437 = vpop.f32.mrf.mxu0
        %8438 = vmatprep.mubr.bf16.mxu0 %v7575
        %8439 = vmatmul.mubr.bf16.gmra.mxu0 %v7560
        %v8440 = vpop.f32.mrf.mxu0
        %v8441 = vadd.f32 %v8207, %v8440
        %v8442 = vpop.f32.mrf.mxu0
        %v8443 = vpop.f32.mrf.mxu0
        %v8444 = vadd.f32 %v8207, %v8443
        %v8445 = vpop.f32.mrf.mxu0
        %8446 = vmatprep.mubr.bf16.mxu0 %v7620
        %8447 = vmatmul.mubr.bf16.gmra.mxu0 %v7605
        %v8448 = vpop.f32.mrf.mxu0
        %v8449 = vadd.f32 %v8207, %v8448
        %v8450 = vpop.f32.mrf.mxu0
        %v8451 = vpop.f32.mrf.mxu0
        %v8452 = vadd.f32 %v8207, %v8451
        %v8453 = vpop.f32.mrf.mxu0
        %8454 = vmatprep.mubr.bf16.mxu0 %v7665
        %8455 = vmatmul.mubr.bf16.gmra.mxu0 %v7650
        %v8456 = vpop.f32.mrf.mxu0
        %v8457 = vadd.f32 %v8207, %v8456
        %v8458 = vpop.f32.mrf.mxu0
        %v8459 = vpop.f32.mrf.mxu0
        %v8460 = vadd.f32 %v8207, %v8459
        %v8461 = vpop.f32.mrf.mxu0
        %8462 = vmatprep.mubr.bf16.mxu0 %v7710
        %8463 = vmatmul.mubr.bf16.gmra.mxu0 %v7695
        %v8464 = vpop.f32.mrf.mxu0
        %v8465 = vadd.f32 %v8207, %v8464
        %v8466 = vpop.f32.mrf.mxu0
        %v8467 = vpop.f32.mrf.mxu0
        %v8468 = vadd.f32 %v8207, %v8467
        %v8469 = vpop.f32.mrf.mxu0
        %8470 = vmatprep.mubr.bf16.mxu0 %v7755
        %8471 = vmatmul.mubr.bf16.gmra.mxu0 %v7740
        %v8472 = vpop.f32.mrf.mxu0
        %v8473 = vadd.f32 %v8207, %v8472
        %v8474 = vpop.f32.mrf.mxu0
        %v8475 = vpop.f32.mrf.mxu0
        %v8476 = vadd.f32 %v8207, %v8475
        %v8477 = vpop.f32.mrf.mxu0
        %8478 = vmatprep.mubr.bf16.mxu0 %v7800
        %8479 = vmatmul.mubr.bf16.gmra.mxu0 %v7785
        %v8480 = vpop.f32.mrf.mxu0
        %v8481 = vadd.f32 %v8207, %v8480
        %v8482 = vpop.f32.mrf.mxu0
        %v8483 = vpop.f32.mrf.mxu0
        %v8484 = vadd.f32 %v8207, %v8483
        %v8485 = vpop.f32.mrf.mxu0
        %8486 = vmatprep.mubr.bf16.mxu0 %v7845
        %8487 = vmatmul.mubr.bf16.gmra.mxu0 %v7830
        %v8488 = vpop.f32.mrf.mxu0
        %v8489 = vadd.f32 %v8207, %v8488
        %v8490 = vpop.f32.mrf.mxu0
        %v8491 = vpop.f32.mrf.mxu0
        %v8492 = vadd.f32 %v8207, %v8491
        %v8493 = vpop.f32.mrf.mxu0
        %8494 = vmatprep.mubr.bf16.mxu0 %v7890
        %8495 = vmatmul.mubr.bf16.gmra.mxu0 %v7875
        %v8496 = vpop.f32.mrf.mxu0
        %v8497 = vadd.f32 %v8207, %v8496
        %v8498 = vpop.f32.mrf.mxu0
        %v8499 = vpop.f32.mrf.mxu0
        %v8500 = vadd.f32 %v8207, %v8499
        %v8501 = vpop.f32.mrf.mxu0
        %8502 = vmatprep.mubr.bf16.mxu0 %v7935
        %8503 = vmatmul.mubr.bf16.gmra.mxu0 %v7920
        %v8504 = vpop.f32.mrf.mxu0
        %v8505 = vadd.f32 %v8207, %v8504
        %v8506 = vpop.f32.mrf.mxu0
        %v8507 = vpop.f32.mrf.mxu0
        %v8508 = vadd.f32 %v8207, %v8507
        %v8509 = vpop.f32.mrf.mxu0
        %8510 = vmatprep.mubr.bf16.mxu0 %v7980
        %8511 = vmatmul.mubr.bf16.gmra.mxu0 %v7965
        %v8512 = vpop.f32.mrf.mxu0
        %v8513 = vadd.f32 %v8207, %v8512
        %v8514 = vpop.f32.mrf.mxu0
        %v8515 = vpop.f32.mrf.mxu0
        %v8516 = vadd.f32 %v8207, %v8515
        %v8517 = vpop.f32.mrf.mxu0
        %8518 = vmatprep.mubr.bf16.mxu0 %v8025
        %8519 = vmatmul.mubr.bf16.gmra.mxu0 %v8010
        %v8520 = vpop.f32.mrf.mxu0
        %v8521 = vadd.f32 %v8207, %v8520
        %v8522 = vpop.f32.mrf.mxu0
        %v8523 = vpop.f32.mrf.mxu0
        %v8524 = vadd.f32 %v8207, %v8523
        %v8525 = vpop.f32.mrf.mxu0
        %8526 = vdwg.mxu0
        %8527 = vmatprep.subr.bf16.mxu0 0
        %8528 = vmatpush1.bf16.msra.mxu0 0
        %8529 = vmatprep.subr.bf16.mxu0 0
        %8530 = vmatpush1.bf16.msra.mxu0 0
        %8531 = vmatprep.subr.bf16.mxu0 0
        %8532 = vmatpush1.bf16.msra.mxu0 0
        %8533 = vmatprep.subr.bf16.mxu0 0
        %8534 = vmatpush1.bf16.msra.mxu0 0
        %8535 = vmatprep.subr.bf16.mxu0 0
        %8536 = vmatpush1.bf16.msra.mxu0 0
        %8537 = vmatprep.subr.bf16.mxu0 0
        %8538 = vmatpush1.bf16.msra.mxu0 0
        %8539 = vmatprep.subr.bf16.mxu0 0
        %8540 = vmatpush1.bf16.msra.mxu0 %v8298
        %8541 = vmatprep.subr.bf16.mxu0 0
        %8542 = vmatpush1.bf16.msra.mxu0 %v8297
        %8543 = vmatprep.subr.bf16.mxu0 0
        %8544 = vmatpush2.bf16.msra.mxu0 0
        %8545 = vmatprep.subr.bf16.mxu0 0
        %8546 = vmatpush2.bf16.msra.mxu0 0
        %8547 = vmatprep.subr.bf16.mxu0 0
        %8548 = vmatpush2.bf16.msra.mxu0 0
        %8549 = vmatprep.subr.bf16.mxu0 0
        %8550 = vmatpush2.bf16.msra.mxu0 0
        %8551 = vmatprep.subr.bf16.mxu0 0
        %8552 = vmatpush2.bf16.msra.mxu0 0
        %8553 = vmatprep.subr.bf16.mxu0 0
        %8554 = vmatpush2.bf16.msra.mxu0 0
        %8555 = vmatprep.subr.bf16.mxu0 0
        %8556 = vmatpush2.bf16.msra.mxu0 0
        %8557 = vmatprep.subr.bf16.mxu0 0
        %8558 = vmatpush2.bf16.msra.mxu0 0
        %8559 = vmatprep.mubr.bf16.mxu0 0
        %8560 = vmatmul.mubr.bf16.gmra.mxu0 %v8319
        %v8561 = vpop.f32.mrf.mxu0
        %v8562 = vadd.f32 %v8401, %v8561
        %v8563 = vpop.f32.mrf.mxu0
        %v8564 = vpop.f32.mrf.mxu0
        %v8565 = vadd.f32 %v8404, %v8564
        %v8566 = vpop.f32.mrf.mxu0
        %8567 = vmatprep.mubr.bf16.mxu0 0
        %8568 = vmatmul.mubr.bf16.gmra.mxu0 %v8322
        %v8569 = vpop.f32.mrf.mxu0
        %v8570 = vadd.f32 %v8409, %v8569
        %v8571 = vpop.f32.mrf.mxu0
        %v8572 = vpop.f32.mrf.mxu0
        %v8573 = vadd.f32 %v8412, %v8572
        %v8574 = vpop.f32.mrf.mxu0
        %8575 = vmatprep.mubr.bf16.mxu0 0
        %8576 = vmatmul.mubr.bf16.gmra.mxu0 %v8325
        %v8577 = vpop.f32.mrf.mxu0
        %v8578 = vadd.f32 %v8417, %v8577
        %v8579 = vpop.f32.mrf.mxu0
        %v8580 = vpop.f32.mrf.mxu0
        %v8581 = vadd.f32 %v8420, %v8580
        %v8582 = vpop.f32.mrf.mxu0
        %8583 = vmatprep.mubr.bf16.mxu0 0
        %8584 = vmatmul.mubr.bf16.gmra.mxu0 %v8328
        %v8585 = vpop.f32.mrf.mxu0
        %v8586 = vadd.f32 %v8425, %v8585
        %v8587 = vpop.f32.mrf.mxu0
        %v8588 = vpop.f32.mrf.mxu0
        %v8589 = vadd.f32 %v8428, %v8588
        %v8590 = vpop.f32.mrf.mxu0
        %8591 = vmatprep.mubr.bf16.mxu0 0
        %8592 = vmatmul.mubr.bf16.gmra.mxu0 %v8331
        %v8593 = vpop.f32.mrf.mxu0
        %v8594 = vadd.f32 %v8433, %v8593
        %v8595 = vpop.f32.mrf.mxu0
        %v8596 = vpop.f32.mrf.mxu0
        %v8597 = vadd.f32 %v8436, %v8596
        %v8598 = vpop.f32.mrf.mxu0
        %8599 = vmatprep.mubr.bf16.mxu0 0
        %8600 = vmatmul.mubr.bf16.gmra.mxu0 %v8334
        %v8601 = vpop.f32.mrf.mxu0
        %v8602 = vadd.f32 %v8441, %v8601
        %v8603 = vpop.f32.mrf.mxu0
        %v8604 = vpop.f32.mrf.mxu0
        %v8605 = vadd.f32 %v8444, %v8604
        %v8606 = vpop.f32.mrf.mxu0
        %8607 = vmatprep.mubr.bf16.mxu0 0
        %8608 = vmatmul.mubr.bf16.gmra.mxu0 %v8337
        %v8609 = vpop.f32.mrf.mxu0
        %v8610 = vadd.f32 %v8449, %v8609
        %v8611 = vpop.f32.mrf.mxu0
        %v8612 = vpop.f32.mrf.mxu0
        %v8613 = vadd.f32 %v8452, %v8612
        %v8614 = vpop.f32.mrf.mxu0
        %8615 = vmatprep.mubr.bf16.mxu0 0
        %8616 = vmatmul.mubr.bf16.gmra.mxu0 %v8340
        %v8617 = vpop.f32.mrf.mxu0
        %v8618 = vadd.f32 %v8457, %v8617
        %v8619 = vpop.f32.mrf.mxu0
        %v8620 = vpop.f32.mrf.mxu0
        %v8621 = vadd.f32 %v8460, %v8620
        %v8622 = vpop.f32.mrf.mxu0
        %8623 = vmatprep.mubr.bf16.mxu0 0
        %8624 = vmatmul.mubr.bf16.gmra.mxu0 %v8343
        %v8625 = vpop.f32.mrf.mxu0
        %v8626 = vadd.f32 %v8465, %v8625
        %v8627 = vpop.f32.mrf.mxu0
        %v8628 = vpop.f32.mrf.mxu0
        %v8629 = vadd.f32 %v8468, %v8628
        %v8630 = vpop.f32.mrf.mxu0
        %8631 = vmatprep.mubr.bf16.mxu0 0
        %8632 = vmatmul.mubr.bf16.gmra.mxu0 %v8346
        %v8633 = vpop.f32.mrf.mxu0
        %v8634 = vadd.f32 %v8473, %v8633
        %v8635 = vpop.f32.mrf.mxu0
        %v8636 = vpop.f32.mrf.mxu0
        %v8637 = vadd.f32 %v8476, %v8636
        %v8638 = vpop.f32.mrf.mxu0
        %8639 = vmatprep.mubr.bf16.mxu0 0
        %8640 = vmatmul.mubr.bf16.gmra.mxu0 %v8349
        %v8641 = vpop.f32.mrf.mxu0
        %v8642 = vadd.f32 %v8481, %v8641
        %v8643 = vpop.f32.mrf.mxu0
        %v8644 = vpop.f32.mrf.mxu0
        %v8645 = vadd.f32 %v8484, %v8644
        %v8646 = vpop.f32.mrf.mxu0
        %8647 = vmatprep.mubr.bf16.mxu0 0
        %8648 = vmatmul.mubr.bf16.gmra.mxu0 %v8352
        %v8649 = vpop.f32.mrf.mxu0
        %v8650 = vadd.f32 %v8489, %v8649
        %v8651 = vpop.f32.mrf.mxu0
        %v8652 = vpop.f32.mrf.mxu0
        %v8653 = vadd.f32 %v8492, %v8652
        %v8654 = vpop.f32.mrf.mxu0
        %8655 = vmatprep.mubr.bf16.mxu0 0
        %8656 = vmatmul.mubr.bf16.gmra.mxu0 %v8355
        %v8657 = vpop.f32.mrf.mxu0
        %v8658 = vadd.f32 %v8497, %v8657
        %v8659 = vpop.f32.mrf.mxu0
        %v8660 = vpop.f32.mrf.mxu0
        %v8661 = vadd.f32 %v8500, %v8660
        %v8662 = vpop.f32.mrf.mxu0
        %8663 = vmatprep.mubr.bf16.mxu0 0
        %8664 = vmatmul.mubr.bf16.gmra.mxu0 %v8358
        %v8665 = vpop.f32.mrf.mxu0
        %v8666 = vadd.f32 %v8505, %v8665
        %v8667 = vpop.f32.mrf.mxu0
        %v8668 = vpop.f32.mrf.mxu0
        %v8669 = vadd.f32 %v8508, %v8668
        %v8670 = vpop.f32.mrf.mxu0
        %8671 = vmatprep.mubr.bf16.mxu0 0
        %8672 = vmatmul.mubr.bf16.gmra.mxu0 %v8361
        %v8673 = vpop.f32.mrf.mxu0
        %v8674 = vadd.f32 %v8513, %v8673
        %v8675 = vpop.f32.mrf.mxu0
        %v8676 = vpop.f32.mrf.mxu0
        %v8677 = vadd.f32 %v8516, %v8676
        %v8678 = vpop.f32.mrf.mxu0
        %8679 = vmatprep.mubr.bf16.mxu0 0
        %8680 = vmatmul.mubr.bf16.gmra.mxu0 %v8364
        %v8681 = vpop.f32.mrf.mxu0
        %v8682 = vadd.f32 %v8521, %v8681
        %v8683 = vpop.f32.mrf.mxu0
        %v8684 = vpop.f32.mrf.mxu0
        %v8685 = vadd.f32 %v8524, %v8684
        %v8686 = vpop.f32.mrf.mxu0
        %8687 = vdwg.mxu0
        %s8688 = scalar_lea.vmem %s8, 144
        %v8689 = vld [vmem:[%s8688] sm:$0xf]
        %v8690 = vld [vmem:[%s8688 + $0x4] sm:$0xf]
        %v8691 = vld [vmem:[%s8688 + $0x8] sm:$0xf]
        %v8692 = vld [vmem:[%s8688 + $0xc] sm:$0xf]
        %v8693 = vld [vmem:[%s8688 + $0x10] sm:$0xf]
        %v8694 = vld [vmem:[%s8688 + $0x14] sm:$0xf]
        %v8695 = vld [vmem:[%s8688 + $0x18] sm:$0xf]
        %v8696 = vld [vmem:[%s8688 + $0x1c] sm:$0xf]
        %v8697 = vld [vmem:[%s8688 + $0x20] sm:$0xf]
        %v8698 = vld [vmem:[%s8688 + $0x24] sm:$0xf]
        %v8699 = vld [vmem:[%s8688 + $0x28] sm:$0xf]
        %v8700 = vld [vmem:[%s8688 + $0x2c] sm:$0xf]
        %v8701 = vld [vmem:[%s8688 + $0x30] sm:$0xf]
        %v8702 = vld [vmem:[%s8688 + $0x34] sm:$0xf]
        %v8703 = vld [vmem:[%s8688 + $0x38] sm:$0xf]
        %v8704 = vld [vmem:[%s8688 + $0x3c] sm:$0xf]
        %v8705 = vld [vmem:[%s8688 + $0x40] sm:$0xf]
        %v8706 = vld [vmem:[%s8688 + $0x44] sm:$0xf]
        %v8707 = vld [vmem:[%s8688 + $0x48] sm:$0xf]
        %v8708 = vld [vmem:[%s8688 + $0x4c] sm:$0xf]
        %v8709 = vld [vmem:[%s8688 + $0x50] sm:$0xf]
        %v8710 = vld [vmem:[%s8688 + $0x54] sm:$0xf]
        %v8711 = vld [vmem:[%s8688 + $0x58] sm:$0xf]
        %v8712 = vld [vmem:[%s8688 + $0x5c] sm:$0xf]
        %v8713 = vld [vmem:[%s8688 + $0x60] sm:$0xf]
        %v8714 = vld [vmem:[%s8688 + $0x64] sm:$0xf]
        %v8715 = vld [vmem:[%s8688 + $0x68] sm:$0xf]
        %v8716 = vld [vmem:[%s8688 + $0x6c] sm:$0xf]
        %v8717 = vld [vmem:[%s8688 + $0x70] sm:$0xf]
        %v8718 = vld [vmem:[%s8688 + $0x74] sm:$0xf]
        %v8719 = vld [vmem:[%s8688 + $0x78] sm:$0xf]
        %v8720 = vld [vmem:[%s8688 + $0x7c] sm:$0xf]
        %v8721 = vld [vmem:[%s8688 + $0x80] sm:$0xf]
        %v8722 = vld [vmem:[%s8688 + $0x84] sm:$0xf]
        %v8723 = vld [vmem:[%s8688 + $0x88] sm:$0xf]
        %v8724 = vld [vmem:[%s8688 + $0x8c] sm:$0xf]
        %v8761 = vunpack.c.l.b16 %v8689
        %v8762 = vunpack.c.l.b16 %v8690
        %v8763 = vunpack.c.l.b16 %v8691
        %v8764 = vunpack.c.l.b16 %v8692
        %v8765 = vunpack.c.l.b16 %v8693
        %v8766 = vunpack.c.l.b16 %v8694
        %v8767 = vunpack.c.l.b16 %v8695
        %v8768 = vunpack.c.l.b16 %v8696
        %v8769 = vunpack.c.l.b16 %v8697
        %v8770 = vunpack.c.l.b16 %v8698
        %v8771 = vunpack.c.l.b16 %v8699
        %v8772 = vunpack.c.l.b16 %v8700
        %v8773 = vunpack.c.l.b16 %v8701
        %v8774 = vunpack.c.l.b16 %v8702
        %v8775 = vunpack.c.l.b16 %v8703
        %v8776 = vunpack.c.l.b16 %v8704
        %v8777 = vunpack.c.l.b16 %v8705
        %v8778 = vunpack.c.l.b16 %v8706
        %v8779 = vunpack.c.l.b16 %v8707
        %v8780 = vunpack.c.l.b16 %v8708
        %v8781 = vunpack.c.l.b16 %v8709
        %v8782 = vunpack.c.l.b16 %v8710
        %v8783 = vunpack.c.l.b16 %v8711
        %v8784 = vunpack.c.l.b16 %v8712
        %v8785 = vunpack.c.l.b16 %v8713
        %v8786 = vunpack.c.l.b16 %v8714
        %v8787 = vunpack.c.l.b16 %v8715
        %v8788 = vunpack.c.l.b16 %v8716
        %v8789 = vunpack.c.l.b16 %v8717
        %v8790 = vunpack.c.l.b16 %v8718
        %v8791 = vunpack.c.l.b16 %v8719
        %v8792 = vunpack.c.l.b16 %v8720
        %v8793 = vunpack.c.l.b16 %v8721
        %v8794 = vunpack.c.l.b16 %v8722
        %v8795 = vunpack.c.l.b16 %v8723
        %v8796 = vunpack.c.l.b16 %v8724
        %v8797 = vpack.c.b16 %v8762, %v8761
        %v8798 = vpack.c.b16 %v8764, %v8763
        %v8799 = vpack.c.b16 %v8766, %v8765
        %v8800 = vpack.c.b16 %v8768, %v8767
        %v8801 = vpack.c.b16 %v8770, %v8769
        %v8802 = vpack.c.b16 %v8772, %v8771
        %v8803 = vpack.c.b16 %v8774, %v8773
        %v8804 = vpack.c.b16 %v8776, %v8775
        %v8805 = vpack.c.b16 %v8778, %v8777
        %v8806 = vpack.c.b16 %v8780, %v8779
        %v8807 = vpack.c.b16 %v8782, %v8781
        %v8808 = vpack.c.b16 %v8784, %v8783
        %v8809 = vpack.c.b16 %v8786, %v8785
        %v8810 = vpack.c.b16 %v8788, %v8787
        %v8811 = vpack.c.b16 %v8790, %v8789
        %v8812 = vpack.c.b16 %v8792, %v8791
        %v8813 = vpack.c.b16 %v8794, %v8793
        %v8814 = vpack.c.b16 %v8796, %v8795
        %v8834 = vsel %vm8317, %v8085, 0
        %8836 = vmatprep.subr.bf16.mxu0 0
        %8837 = vmatpush1.bf16.msra.mxu0 %v8804
        %8838 = vmatprep.subr.bf16.mxu0 0
        %8839 = vmatpush1.bf16.msra.mxu0 %v8803
        %8840 = vmatprep.subr.bf16.mxu0 0
        %8841 = vmatpush1.bf16.msra.mxu0 %v8802
        %8842 = vmatprep.subr.bf16.mxu0 0
        %8843 = vmatpush1.bf16.msra.mxu0 %v8801
        %8844 = vmatprep.subr.bf16.mxu0 0
        %8845 = vmatpush1.bf16.msra.mxu0 %v8800
        %8846 = vmatprep.subr.bf16.mxu0 0
        %8847 = vmatpush1.bf16.msra.mxu0 %v8799
        %8848 = vmatprep.subr.bf16.mxu0 0
        %8849 = vmatpush1.bf16.msra.mxu0 %v8798
        %8850 = vmatprep.subr.bf16.mxu0 0
        %8851 = vmatpush1.bf16.msra.mxu0 %v8797
        %8852 = vmatprep.subr.bf16.mxu0 0
        %8853 = vmatpush2.bf16.msra.mxu0 %v8812
        %8854 = vmatprep.subr.bf16.mxu0 0
        %8855 = vmatpush2.bf16.msra.mxu0 %v8811
        %8856 = vmatprep.subr.bf16.mxu0 0
        %8857 = vmatpush2.bf16.msra.mxu0 %v8810
        %8858 = vmatprep.subr.bf16.mxu0 0
        %8859 = vmatpush2.bf16.msra.mxu0 %v8809
        %8860 = vmatprep.subr.bf16.mxu0 0
        %8861 = vmatpush2.bf16.msra.mxu0 %v8808
        %8862 = vmatprep.subr.bf16.mxu0 0
        %8863 = vmatpush2.bf16.msra.mxu0 %v8807
        %8864 = vmatprep.subr.bf16.mxu0 0
        %8865 = vmatpush2.bf16.msra.mxu0 %v8806
        %8866 = vmatprep.subr.bf16.mxu0 0
        %8867 = vmatpush2.bf16.msra.mxu0 %v8805
        %8868 = vmatprep.mubr.bf16.mxu0 %v7395
        %8869 = vmatmul.mubr.bf16.gmra.mxu0 %v7380
        %v8870 = vpop.f32.mrf.mxu0
        %v8871 = vadd.f32 0.0, %v8870
        %v8872 = vpop.f32.mrf.mxu0
        %v8873 = vpop.f32.mrf.mxu0
        %v8874 = vadd.f32 0.0, %v8873
        %v8875 = vpop.f32.mrf.mxu0
        %8876 = vmatprep.mubr.bf16.mxu0 %v7440
        %8877 = vmatmul.mubr.bf16.gmra.mxu0 %v7425
        %v8878 = vpop.f32.mrf.mxu0
        %v8879 = vadd.f32 0.0, %v8878
        %v8880 = vpop.f32.mrf.mxu0
        %v8881 = vpop.f32.mrf.mxu0
        %v8882 = vadd.f32 0.0, %v8881
        %v8883 = vpop.f32.mrf.mxu0
        %8884 = vmatprep.mubr.bf16.mxu0 %v7485
        %8885 = vmatmul.mubr.bf16.gmra.mxu0 %v7470
        %v8886 = vpop.f32.mrf.mxu0
        %v8887 = vadd.f32 0.0, %v8886
        %v8888 = vpop.f32.mrf.mxu0
        %v8889 = vpop.f32.mrf.mxu0
        %v8890 = vadd.f32 0.0, %v8889
        %v8891 = vpop.f32.mrf.mxu0
        %8892 = vmatprep.mubr.bf16.mxu0 %v7530
        %8893 = vmatmul.mubr.bf16.gmra.mxu0 %v7515
        %v8894 = vpop.f32.mrf.mxu0
        %v8895 = vadd.f32 0.0, %v8894
        %v8896 = vpop.f32.mrf.mxu0
        %v8897 = vpop.f32.mrf.mxu0
        %v8898 = vadd.f32 0.0, %v8897
        %v8899 = vpop.f32.mrf.mxu0
        %8900 = vmatprep.mubr.bf16.mxu0 %v7575
        %8901 = vmatmul.mubr.bf16.gmra.mxu0 %v7560
        %v8902 = vpop.f32.mrf.mxu0
        %v8903 = vadd.f32 0.0, %v8902
        %v8904 = vpop.f32.mrf.mxu0
        %v8905 = vpop.f32.mrf.mxu0
        %v8906 = vadd.f32 0.0, %v8905
        %v8907 = vpop.f32.mrf.mxu0
        %8908 = vmatprep.mubr.bf16.mxu0 %v7620
        %8909 = vmatmul.mubr.bf16.gmra.mxu0 %v7605
        %v8910 = vpop.f32.mrf.mxu0
        %v8911 = vadd.f32 0.0, %v8910
        %v8912 = vpop.f32.mrf.mxu0
        %v8913 = vpop.f32.mrf.mxu0
        %v8914 = vadd.f32 0.0, %v8913
        %v8915 = vpop.f32.mrf.mxu0
        %8916 = vmatprep.mubr.bf16.mxu0 %v7665
        %8917 = vmatmul.mubr.bf16.gmra.mxu0 %v7650
        %v8918 = vpop.f32.mrf.mxu0
        %v8919 = vadd.f32 0.0, %v8918
        %v8920 = vpop.f32.mrf.mxu0
        %v8921 = vpop.f32.mrf.mxu0
        %v8922 = vadd.f32 0.0, %v8921
        %v8923 = vpop.f32.mrf.mxu0
        %8924 = vmatprep.mubr.bf16.mxu0 %v7710
        %8925 = vmatmul.mubr.bf16.gmra.mxu0 %v7695
        %v8926 = vpop.f32.mrf.mxu0
        %v8927 = vadd.f32 0.0, %v8926
        %v8928 = vpop.f32.mrf.mxu0
        %v8929 = vpop.f32.mrf.mxu0
        %v8930 = vadd.f32 0.0, %v8929
        %v8931 = vpop.f32.mrf.mxu0
        %8932 = vmatprep.mubr.bf16.mxu0 %v7755
        %8933 = vmatmul.mubr.bf16.gmra.mxu0 %v7740
        %v8934 = vpop.f32.mrf.mxu0
        %v8935 = vadd.f32 0.0, %v8934
        %v8936 = vpop.f32.mrf.mxu0
        %v8937 = vpop.f32.mrf.mxu0
        %v8938 = vadd.f32 0.0, %v8937
        %v8939 = vpop.f32.mrf.mxu0
        %8940 = vmatprep.mubr.bf16.mxu0 %v7800
        %8941 = vmatmul.mubr.bf16.gmra.mxu0 %v7785
        %v8942 = vpop.f32.mrf.mxu0
        %v8943 = vadd.f32 0.0, %v8942
        %v8944 = vpop.f32.mrf.mxu0
        %v8945 = vpop.f32.mrf.mxu0
        %v8946 = vadd.f32 0.0, %v8945
        %v8947 = vpop.f32.mrf.mxu0
        %8948 = vmatprep.mubr.bf16.mxu0 %v7845
        %8949 = vmatmul.mubr.bf16.gmra.mxu0 %v7830
        %v8950 = vpop.f32.mrf.mxu0
        %v8951 = vadd.f32 0.0, %v8950
        %v8952 = vpop.f32.mrf.mxu0
        %v8953 = vpop.f32.mrf.mxu0
        %v8954 = vadd.f32 0.0, %v8953
        %v8955 = vpop.f32.mrf.mxu0
        %8956 = vmatprep.mubr.bf16.mxu0 %v7890
        %8957 = vmatmul.mubr.bf16.gmra.mxu0 %v7875
        %v8958 = vpop.f32.mrf.mxu0
        %v8959 = vadd.f32 0.0, %v8958
        %v8960 = vpop.f32.mrf.mxu0
        %v8961 = vpop.f32.mrf.mxu0
        %v8962 = vadd.f32 0.0, %v8961
        %v8963 = vpop.f32.mrf.mxu0
        %8964 = vmatprep.mubr.bf16.mxu0 %v7935
        %8965 = vmatmul.mubr.bf16.gmra.mxu0 %v7920
        %v8966 = vpop.f32.mrf.mxu0
        %v8967 = vadd.f32 0.0, %v8966
        %v8968 = vpop.f32.mrf.mxu0
        %v8969 = vpop.f32.mrf.mxu0
        %v8970 = vadd.f32 0.0, %v8969
        %v8971 = vpop.f32.mrf.mxu0
        %8972 = vmatprep.mubr.bf16.mxu0 %v7980
        %8973 = vmatmul.mubr.bf16.gmra.mxu0 %v7965
        %v8974 = vpop.f32.mrf.mxu0
        %v8975 = vadd.f32 0.0, %v8974
        %v8976 = vpop.f32.mrf.mxu0
        %v8977 = vpop.f32.mrf.mxu0
        %v8978 = vadd.f32 0.0, %v8977
        %v8979 = vpop.f32.mrf.mxu0
        %8980 = vmatprep.mubr.bf16.mxu0 %v8025
        %8981 = vmatmul.mubr.bf16.gmra.mxu0 %v8010
        %v8982 = vpop.f32.mrf.mxu0
        %v8983 = vadd.f32 0.0, %v8982
        %v8984 = vpop.f32.mrf.mxu0
        %v8985 = vpop.f32.mrf.mxu0
        %v8986 = vadd.f32 0.0, %v8985
        %v8987 = vpop.f32.mrf.mxu0
        %8988 = vmatprep.mubr.bf16.mxu0 %v8070
        %8989 = vmatmul.mubr.bf16.gmra.mxu0 %v8055
        %v8990 = vpop.f32.mrf.mxu0
        %v8991 = vadd.f32 0.0, %v8990
        %v8992 = vpop.f32.mrf.mxu0
        %v8993 = vpop.f32.mrf.mxu0
        %v8994 = vadd.f32 0.0, %v8993
        %v8995 = vpop.f32.mrf.mxu0
        %8996 = vdwg.mxu0
        %8997 = vmatprep.subr.bf16.mxu0 0
        %8998 = vmatpush1.bf16.msra.mxu0 0
        %8999 = vmatprep.subr.bf16.mxu0 0
        %9000 = vmatpush1.bf16.msra.mxu0 0
        %9001 = vmatprep.subr.bf16.mxu0 0
        %9002 = vmatpush1.bf16.msra.mxu0 0
        %9003 = vmatprep.subr.bf16.mxu0 0
        %9004 = vmatpush1.bf16.msra.mxu0 0
        %9005 = vmatprep.subr.bf16.mxu0 0
        %9006 = vmatpush1.bf16.msra.mxu0 0
        %9007 = vmatprep.subr.bf16.mxu0 0
        %9008 = vmatpush1.bf16.msra.mxu0 0
        %9009 = vmatprep.subr.bf16.mxu0 0
        %9010 = vmatpush1.bf16.msra.mxu0 %v8814
        %9011 = vmatprep.subr.bf16.mxu0 0
        %9012 = vmatpush1.bf16.msra.mxu0 %v8813
        %9013 = vmatprep.subr.bf16.mxu0 0
        %9014 = vmatpush2.bf16.msra.mxu0 0
        %9015 = vmatprep.subr.bf16.mxu0 0
        %9016 = vmatpush2.bf16.msra.mxu0 0
        %9017 = vmatprep.subr.bf16.mxu0 0
        %9018 = vmatpush2.bf16.msra.mxu0 0
        %9019 = vmatprep.subr.bf16.mxu0 0
        %9020 = vmatpush2.bf16.msra.mxu0 0
        %9021 = vmatprep.subr.bf16.mxu0 0
        %9022 = vmatpush2.bf16.msra.mxu0 0
        %9023 = vmatprep.subr.bf16.mxu0 0
        %9024 = vmatpush2.bf16.msra.mxu0 0
        %9025 = vmatprep.subr.bf16.mxu0 0
        %9026 = vmatpush2.bf16.msra.mxu0 0
        %9027 = vmatprep.subr.bf16.mxu0 0
        %9028 = vmatpush2.bf16.msra.mxu0 0
        %9029 = vmatprep.mubr.bf16.mxu0 0
        %9030 = vmatmul.mubr.bf16.gmra.mxu0 %v8322
        %v9031 = vpop.f32.mrf.mxu0
        %v9032 = vadd.f32 %v8871, %v9031
        %v9033 = vpop.f32.mrf.mxu0
        %v9034 = vpop.f32.mrf.mxu0
        %v9035 = vadd.f32 %v8874, %v9034
        %v9036 = vpop.f32.mrf.mxu0
        %9037 = vmatprep.mubr.bf16.mxu0 0
        %9038 = vmatmul.mubr.bf16.gmra.mxu0 %v8325
        %v9039 = vpop.f32.mrf.mxu0
        %v9040 = vadd.f32 %v8879, %v9039
        %v9041 = vpop.f32.mrf.mxu0
        %v9042 = vpop.f32.mrf.mxu0
        %v9043 = vadd.f32 %v8882, %v9042
        %v9044 = vpop.f32.mrf.mxu0
        %9045 = vmatprep.mubr.bf16.mxu0 0
        %9046 = vmatmul.mubr.bf16.gmra.mxu0 %v8328
        %v9047 = vpop.f32.mrf.mxu0
        %v9048 = vadd.f32 %v8887, %v9047
        %v9049 = vpop.f32.mrf.mxu0
        %v9050 = vpop.f32.mrf.mxu0
        %v9051 = vadd.f32 %v8890, %v9050
        %v9052 = vpop.f32.mrf.mxu0
        %9053 = vmatprep.mubr.bf16.mxu0 0
        %9054 = vmatmul.mubr.bf16.gmra.mxu0 %v8331
        %v9055 = vpop.f32.mrf.mxu0
        %v9056 = vadd.f32 %v8895, %v9055
        %v9057 = vpop.f32.mrf.mxu0
        %v9058 = vpop.f32.mrf.mxu0
        %v9059 = vadd.f32 %v8898, %v9058
        %v9060 = vpop.f32.mrf.mxu0
        %9061 = vmatprep.mubr.bf16.mxu0 0
        %9062 = vmatmul.mubr.bf16.gmra.mxu0 %v8334
        %v9063 = vpop.f32.mrf.mxu0
        %v9064 = vadd.f32 %v8903, %v9063
        %v9065 = vpop.f32.mrf.mxu0
        %v9066 = vpop.f32.mrf.mxu0
        %v9067 = vadd.f32 %v8906, %v9066
        %v9068 = vpop.f32.mrf.mxu0
        %9069 = vmatprep.mubr.bf16.mxu0 0
        %9070 = vmatmul.mubr.bf16.gmra.mxu0 %v8337
        %v9071 = vpop.f32.mrf.mxu0
        %v9072 = vadd.f32 %v8911, %v9071
        %v9073 = vpop.f32.mrf.mxu0
        %v9074 = vpop.f32.mrf.mxu0
        %v9075 = vadd.f32 %v8914, %v9074
        %v9076 = vpop.f32.mrf.mxu0
        %9077 = vmatprep.mubr.bf16.mxu0 0
        %9078 = vmatmul.mubr.bf16.gmra.mxu0 %v8340
        %v9079 = vpop.f32.mrf.mxu0
        %v9080 = vadd.f32 %v8919, %v9079
        %v9081 = vpop.f32.mrf.mxu0
        %v9082 = vpop.f32.mrf.mxu0
        %v9083 = vadd.f32 %v8922, %v9082
        %v9084 = vpop.f32.mrf.mxu0
        %9085 = vmatprep.mubr.bf16.mxu0 0
        %9086 = vmatmul.mubr.bf16.gmra.mxu0 %v8343
        %v9087 = vpop.f32.mrf.mxu0
        %v9088 = vadd.f32 %v8927, %v9087
        %v9089 = vpop.f32.mrf.mxu0
        %v9090 = vpop.f32.mrf.mxu0
        %v9091 = vadd.f32 %v8930, %v9090
        %v9092 = vpop.f32.mrf.mxu0
        %9093 = vmatprep.mubr.bf16.mxu0 0
        %9094 = vmatmul.mubr.bf16.gmra.mxu0 %v8346
        %v9095 = vpop.f32.mrf.mxu0
        %v9096 = vadd.f32 %v8935, %v9095
        %v9097 = vpop.f32.mrf.mxu0
        %v9098 = vpop.f32.mrf.mxu0
        %v9099 = vadd.f32 %v8938, %v9098
        %v9100 = vpop.f32.mrf.mxu0
        %9101 = vmatprep.mubr.bf16.mxu0 0
        %9102 = vmatmul.mubr.bf16.gmra.mxu0 %v8349
        %v9103 = vpop.f32.mrf.mxu0
        %v9104 = vadd.f32 %v8943, %v9103
        %v9105 = vpop.f32.mrf.mxu0
        %v9106 = vpop.f32.mrf.mxu0
        %v9107 = vadd.f32 %v8946, %v9106
        %v9108 = vpop.f32.mrf.mxu0
        %9109 = vmatprep.mubr.bf16.mxu0 0
        %9110 = vmatmul.mubr.bf16.gmra.mxu0 %v8352
        %v9111 = vpop.f32.mrf.mxu0
        %v9112 = vadd.f32 %v8951, %v9111
        %v9113 = vpop.f32.mrf.mxu0
        %v9114 = vpop.f32.mrf.mxu0
        %v9115 = vadd.f32 %v8954, %v9114
        %v9116 = vpop.f32.mrf.mxu0
        %9117 = vmatprep.mubr.bf16.mxu0 0
        %9118 = vmatmul.mubr.bf16.gmra.mxu0 %v8355
        %v9119 = vpop.f32.mrf.mxu0
        %v9120 = vadd.f32 %v8959, %v9119
        %v9121 = vpop.f32.mrf.mxu0
        %v9122 = vpop.f32.mrf.mxu0
        %v9123 = vadd.f32 %v8962, %v9122
        %v9124 = vpop.f32.mrf.mxu0
        %9125 = vmatprep.mubr.bf16.mxu0 0
        %9126 = vmatmul.mubr.bf16.gmra.mxu0 %v8358
        %v9127 = vpop.f32.mrf.mxu0
        %v9128 = vadd.f32 %v8967, %v9127
        %v9129 = vpop.f32.mrf.mxu0
        %v9130 = vpop.f32.mrf.mxu0
        %v9131 = vadd.f32 %v8970, %v9130
        %v9132 = vpop.f32.mrf.mxu0
        %9133 = vmatprep.mubr.bf16.mxu0 0
        %9134 = vmatmul.mubr.bf16.gmra.mxu0 %v8361
        %v9135 = vpop.f32.mrf.mxu0
        %v9136 = vadd.f32 %v8975, %v9135
        %v9137 = vpop.f32.mrf.mxu0
        %v9138 = vpop.f32.mrf.mxu0
        %v9139 = vadd.f32 %v8978, %v9138
        %v9140 = vpop.f32.mrf.mxu0
        %9141 = vmatprep.mubr.bf16.mxu0 0
        %9142 = vmatmul.mubr.bf16.gmra.mxu0 %v8364
        %v9143 = vpop.f32.mrf.mxu0
        %v9144 = vadd.f32 %v8983, %v9143
        %v9145 = vpop.f32.mrf.mxu0
        %v9146 = vpop.f32.mrf.mxu0
        %v9147 = vadd.f32 %v8986, %v9146
        %v9148 = vpop.f32.mrf.mxu0
        %9149 = vmatprep.mubr.bf16.mxu0 0
        %9150 = vmatmul.mubr.bf16.gmra.mxu0 %v8834
        %v9151 = vpop.f32.mrf.mxu0
        %v9152 = vadd.f32 %v8991, %v9151
        %v9153 = vpop.f32.mrf.mxu0
        %v9154 = vpop.f32.mrf.mxu0
        %v9155 = vadd.f32 %v8994, %v9154
        %v9156 = vpop.f32.mrf.mxu0
        %9157 = vdwg.mxu0
        %v9158 = vadd.f32 %v8562, %v9032
        %v9159 = vadd.f32 %v8565, %v9035
        %v9160 = vadd.f32 %v8570, %v9040
        %v9161 = vadd.f32 %v8573, %v9043
        %v9162 = vadd.f32 %v8578, %v9048
        %v9163 = vadd.f32 %v8581, %v9051
        %v9164 = vadd.f32 %v8586, %v9056
        %v9165 = vadd.f32 %v8589, %v9059
        %v9166 = vadd.f32 %v8594, %v9064
        %v9167 = vadd.f32 %v8597, %v9067
        %v9168 = vadd.f32 %v8602, %v9072
        %v9169 = vadd.f32 %v8605, %v9075
        %v9170 = vadd.f32 %v8610, %v9080
        %v9171 = vadd.f32 %v8613, %v9083
        %v9172 = vadd.f32 %v8618, %v9088
        %v9173 = vadd.f32 %v8621, %v9091
        %v9174 = vadd.f32 %v8626, %v9096
        %v9175 = vadd.f32 %v8629, %v9099
        %v9176 = vadd.f32 %v8634, %v9104
        %v9177 = vadd.f32 %v8637, %v9107
        %v9178 = vadd.f32 %v8642, %v9112
        %v9179 = vadd.f32 %v8645, %v9115
        %v9180 = vadd.f32 %v8650, %v9120
        %v9181 = vadd.f32 %v8653, %v9123
        %v9182 = vadd.f32 %v8658, %v9128
        %v9183 = vadd.f32 %v8661, %v9131
        %v9184 = vadd.f32 %v8666, %v9136
        %v9185 = vadd.f32 %v8669, %v9139
        %v9186 = vadd.f32 %v8674, %v9144
        %v9187 = vadd.f32 %v8677, %v9147
        %v9188 = vadd.f32 %v8682, %v9152
        %v9189 = vadd.f32 %v8685, %v9155
        %s9190 = scalar_lea.vmem %s8, 288
        %v9191 = vld [vmem:[%s9190] sm:$0xf]
        %v9192 = vld [vmem:[%s9190 + $0x4] sm:$0xf]
        %v9193 = vld [vmem:[%s9190 + $0x8] sm:$0xf]
        %v9194 = vld [vmem:[%s9190 + $0xc] sm:$0xf]
        %v9195 = vld [vmem:[%s9190 + $0x10] sm:$0xf]
        %v9196 = vld [vmem:[%s9190 + $0x14] sm:$0xf]
        %v9197 = vld [vmem:[%s9190 + $0x18] sm:$0xf]
        %v9198 = vld [vmem:[%s9190 + $0x1c] sm:$0xf]
        %v9199 = vld [vmem:[%s9190 + $0x20] sm:$0xf]
        %v9200 = vld [vmem:[%s9190 + $0x24] sm:$0xf]
        %v9201 = vld [vmem:[%s9190 + $0x28] sm:$0xf]
        %v9202 = vld [vmem:[%s9190 + $0x2c] sm:$0xf]
        %v9203 = vld [vmem:[%s9190 + $0x30] sm:$0xf]
        %v9204 = vld [vmem:[%s9190 + $0x34] sm:$0xf]
        %v9205 = vld [vmem:[%s9190 + $0x38] sm:$0xf]
        %v9206 = vld [vmem:[%s9190 + $0x3c] sm:$0xf]
        %v9207 = vld [vmem:[%s9190 + $0x40] sm:$0xf]
        %v9208 = vld [vmem:[%s9190 + $0x44] sm:$0xf]
        %v9209 = vld [vmem:[%s9190 + $0x48] sm:$0xf]
        %v9210 = vld [vmem:[%s9190 + $0x4c] sm:$0xf]
        %v9211 = vld [vmem:[%s9190 + $0x50] sm:$0xf]
        %v9212 = vld [vmem:[%s9190 + $0x54] sm:$0xf]
        %v9213 = vld [vmem:[%s9190 + $0x58] sm:$0xf]
        %v9214 = vld [vmem:[%s9190 + $0x5c] sm:$0xf]
        %v9215 = vld [vmem:[%s9190 + $0x60] sm:$0xf]
        %v9216 = vld [vmem:[%s9190 + $0x64] sm:$0xf]
        %v9217 = vld [vmem:[%s9190 + $0x68] sm:$0xf]
        %v9218 = vld [vmem:[%s9190 + $0x6c] sm:$0xf]
        %v9219 = vld [vmem:[%s9190 + $0x70] sm:$0xf]
        %v9220 = vld [vmem:[%s9190 + $0x74] sm:$0xf]
        %v9221 = vld [vmem:[%s9190 + $0x78] sm:$0xf]
        %v9222 = vld [vmem:[%s9190 + $0x7c] sm:$0xf]
        %v9223 = vld [vmem:[%s9190 + $0x80] sm:$0xf]
        %v9224 = vld [vmem:[%s9190 + $0x84] sm:$0xf]
        %v9225 = vld [vmem:[%s9190 + $0x88] sm:$0xf]
        %v9226 = vld [vmem:[%s9190 + $0x8c] sm:$0xf]
        %v9263 = vunpack.c.l.b16 %v9191
        %v9264 = vunpack.c.l.b16 %v9192
        %v9265 = vunpack.c.l.b16 %v9193
        %v9266 = vunpack.c.l.b16 %v9194
        %v9267 = vunpack.c.l.b16 %v9195
        %v9268 = vunpack.c.l.b16 %v9196
        %v9269 = vunpack.c.l.b16 %v9197
        %v9270 = vunpack.c.l.b16 %v9198
        %v9271 = vunpack.c.l.b16 %v9199
        %v9272 = vunpack.c.l.b16 %v9200
        %v9273 = vunpack.c.l.b16 %v9201
        %v9274 = vunpack.c.l.b16 %v9202
        %v9275 = vunpack.c.l.b16 %v9203
        %v9276 = vunpack.c.l.b16 %v9204
        %v9277 = vunpack.c.l.b16 %v9205
        %v9278 = vunpack.c.l.b16 %v9206
        %v9279 = vunpack.c.l.b16 %v9207
        %v9280 = vunpack.c.l.b16 %v9208
        %v9281 = vunpack.c.l.b16 %v9209
        %v9282 = vunpack.c.l.b16 %v9210
        %v9283 = vunpack.c.l.b16 %v9211
        %v9284 = vunpack.c.l.b16 %v9212
        %v9285 = vunpack.c.l.b16 %v9213
        %v9286 = vunpack.c.l.b16 %v9214
        %v9287 = vunpack.c.l.b16 %v9215
        %v9288 = vunpack.c.l.b16 %v9216
        %v9289 = vunpack.c.l.b16 %v9217
        %v9290 = vunpack.c.l.b16 %v9218
        %v9291 = vunpack.c.l.b16 %v9219
        %v9292 = vunpack.c.l.b16 %v9220
        %v9293 = vunpack.c.l.b16 %v9221
        %v9294 = vunpack.c.l.b16 %v9222
        %v9295 = vunpack.c.l.b16 %v9223
        %v9296 = vunpack.c.l.b16 %v9224
        %v9297 = vunpack.c.l.b16 %v9225
        %v9298 = vunpack.c.l.b16 %v9226
        %v9299 = vpack.c.b16 %v9264, %v9263
        %v9300 = vpack.c.b16 %v9266, %v9265
        %v9301 = vpack.c.b16 %v9268, %v9267
        %v9302 = vpack.c.b16 %v9270, %v9269
        %v9303 = vpack.c.b16 %v9272, %v9271
        %v9304 = vpack.c.b16 %v9274, %v9273
        %v9305 = vpack.c.b16 %v9276, %v9275
        %v9306 = vpack.c.b16 %v9278, %v9277
        %v9307 = vpack.c.b16 %v9280, %v9279
        %v9308 = vpack.c.b16 %v9282, %v9281
        %v9309 = vpack.c.b16 %v9284, %v9283
        %v9310 = vpack.c.b16 %v9286, %v9285
        %v9311 = vpack.c.b16 %v9288, %v9287
        %v9312 = vpack.c.b16 %v9290, %v9289
        %v9313 = vpack.c.b16 %v9292, %v9291
        %v9314 = vpack.c.b16 %v9294, %v9293
        %v9315 = vpack.c.b16 %v9296, %v9295
        %v9316 = vpack.c.b16 %v9298, %v9297
        %v9336 = vsel %vm8317, %v8130, 0
        %9338 = vmatprep.subr.bf16.mxu0 0
        %9339 = vmatpush1.bf16.msra.mxu0 %v9306
        %9340 = vmatprep.subr.bf16.mxu0 0
        %9341 = vmatpush1.bf16.msra.mxu0 %v9305
        %9342 = vmatprep.subr.bf16.mxu0 0
        %9343 = vmatpush1.bf16.msra.mxu0 %v9304
        %9344 = vmatprep.subr.bf16.mxu0 0
        %9345 = vmatpush1.bf16.msra.mxu0 %v9303
        %9346 = vmatprep.subr.bf16.mxu0 0
        %9347 = vmatpush1.bf16.msra.mxu0 %v9302
        %9348 = vmatprep.subr.bf16.mxu0 0
        %9349 = vmatpush1.bf16.msra.mxu0 %v9301
        %9350 = vmatprep.subr.bf16.mxu0 0
        %9351 = vmatpush1.bf16.msra.mxu0 %v9300
        %9352 = vmatprep.subr.bf16.mxu0 0
        %9353 = vmatpush1.bf16.msra.mxu0 %v9299
        %9354 = vmatprep.subr.bf16.mxu0 0
        %9355 = vmatpush2.bf16.msra.mxu0 %v9314
        %9356 = vmatprep.subr.bf16.mxu0 0
        %9357 = vmatpush2.bf16.msra.mxu0 %v9313
        %9358 = vmatprep.subr.bf16.mxu0 0
        %9359 = vmatpush2.bf16.msra.mxu0 %v9312
        %9360 = vmatprep.subr.bf16.mxu0 0
        %9361 = vmatpush2.bf16.msra.mxu0 %v9311
        %9362 = vmatprep.subr.bf16.mxu0 0
        %9363 = vmatpush2.bf16.msra.mxu0 %v9310
        %9364 = vmatprep.subr.bf16.mxu0 0
        %9365 = vmatpush2.bf16.msra.mxu0 %v9309
        %9366 = vmatprep.subr.bf16.mxu0 0
        %9367 = vmatpush2.bf16.msra.mxu0 %v9308
        %9368 = vmatprep.subr.bf16.mxu0 0
        %9369 = vmatpush2.bf16.msra.mxu0 %v9307
        %9370 = vmatprep.mubr.bf16.mxu0 %v7440
        %9371 = vmatmul.mubr.bf16.gmra.mxu0 %v7425
        %v9372 = vpop.f32.mrf.mxu0
        %v9373 = vadd.f32 0.0, %v9372
        %v9374 = vpop.f32.mrf.mxu0
        %v9375 = vpop.f32.mrf.mxu0
        %v9376 = vadd.f32 0.0, %v9375
        %v9377 = vpop.f32.mrf.mxu0
        %9378 = vmatprep.mubr.bf16.mxu0 %v7485
        %9379 = vmatmul.mubr.bf16.gmra.mxu0 %v7470
        %v9380 = vpop.f32.mrf.mxu0
        %v9381 = vadd.f32 0.0, %v9380
        %v9382 = vpop.f32.mrf.mxu0
        %v9383 = vpop.f32.mrf.mxu0
        %v9384 = vadd.f32 0.0, %v9383
        %v9385 = vpop.f32.mrf.mxu0
        %9386 = vmatprep.mubr.bf16.mxu0 %v7530
        %9387 = vmatmul.mubr.bf16.gmra.mxu0 %v7515
        %v9388 = vpop.f32.mrf.mxu0
        %v9389 = vadd.f32 0.0, %v9388
        %v9390 = vpop.f32.mrf.mxu0
        %v9391 = vpop.f32.mrf.mxu0
        %v9392 = vadd.f32 0.0, %v9391
        %v9393 = vpop.f32.mrf.mxu0
        %9394 = vmatprep.mubr.bf16.mxu0 %v7575
        %9395 = vmatmul.mubr.bf16.gmra.mxu0 %v7560
        %v9396 = vpop.f32.mrf.mxu0
        %v9397 = vadd.f32 0.0, %v9396
        %v9398 = vpop.f32.mrf.mxu0
        %v9399 = vpop.f32.mrf.mxu0
        %v9400 = vadd.f32 0.0, %v9399
        %v9401 = vpop.f32.mrf.mxu0
        %9402 = vmatprep.mubr.bf16.mxu0 %v7620
        %9403 = vmatmul.mubr.bf16.gmra.mxu0 %v7605
        %v9404 = vpop.f32.mrf.mxu0
        %v9405 = vadd.f32 0.0, %v9404
        %v9406 = vpop.f32.mrf.mxu0
        %v9407 = vpop.f32.mrf.mxu0
        %v9408 = vadd.f32 0.0, %v9407
        %v9409 = vpop.f32.mrf.mxu0
        %9410 = vmatprep.mubr.bf16.mxu0 %v7665
        %9411 = vmatmul.mubr.bf16.gmra.mxu0 %v7650
        %v9412 = vpop.f32.mrf.mxu0
        %v9413 = vadd.f32 0.0, %v9412
        %v9414 = vpop.f32.mrf.mxu0
        %v9415 = vpop.f32.mrf.mxu0
        %v9416 = vadd.f32 0.0, %v9415
        %v9417 = vpop.f32.mrf.mxu0
        %9418 = vmatprep.mubr.bf16.mxu0 %v7710
        %9419 = vmatmul.mubr.bf16.gmra.mxu0 %v7695
        %v9420 = vpop.f32.mrf.mxu0
        %v9421 = vadd.f32 0.0, %v9420
        %v9422 = vpop.f32.mrf.mxu0
        %v9423 = vpop.f32.mrf.mxu0
        %v9424 = vadd.f32 0.0, %v9423
        %v9425 = vpop.f32.mrf.mxu0
        %9426 = vmatprep.mubr.bf16.mxu0 %v7755
        %9427 = vmatmul.mubr.bf16.gmra.mxu0 %v7740
        %v9428 = vpop.f32.mrf.mxu0
        %v9429 = vadd.f32 0.0, %v9428
        %v9430 = vpop.f32.mrf.mxu0
        %v9431 = vpop.f32.mrf.mxu0
        %v9432 = vadd.f32 0.0, %v9431
        %v9433 = vpop.f32.mrf.mxu0
        %9434 = vmatprep.mubr.bf16.mxu0 %v7800
        %9435 = vmatmul.mubr.bf16.gmra.mxu0 %v7785
        %v9436 = vpop.f32.mrf.mxu0
        %v9437 = vadd.f32 0.0, %v9436
        %v9438 = vpop.f32.mrf.mxu0
        %v9439 = vpop.f32.mrf.mxu0
        %v9440 = vadd.f32 0.0, %v9439
        %v9441 = vpop.f32.mrf.mxu0
        %9442 = vmatprep.mubr.bf16.mxu0 %v7845
        %9443 = vmatmul.mubr.bf16.gmra.mxu0 %v7830
        %v9444 = vpop.f32.mrf.mxu0
        %v9445 = vadd.f32 0.0, %v9444
        %v9446 = vpop.f32.mrf.mxu0
        %v9447 = vpop.f32.mrf.mxu0
        %v9448 = vadd.f32 0.0, %v9447
        %v9449 = vpop.f32.mrf.mxu0
        %9450 = vmatprep.mubr.bf16.mxu0 %v7890
        %9451 = vmatmul.mubr.bf16.gmra.mxu0 %v7875
        %v9452 = vpop.f32.mrf.mxu0
        %v9453 = vadd.f32 0.0, %v9452
        %v9454 = vpop.f32.mrf.mxu0
        %v9455 = vpop.f32.mrf.mxu0
        %v9456 = vadd.f32 0.0, %v9455
        %v9457 = vpop.f32.mrf.mxu0
        %9458 = vmatprep.mubr.bf16.mxu0 %v7935
        %9459 = vmatmul.mubr.bf16.gmra.mxu0 %v7920
        %v9460 = vpop.f32.mrf.mxu0
        %v9461 = vadd.f32 0.0, %v9460
        %v9462 = vpop.f32.mrf.mxu0
        %v9463 = vpop.f32.mrf.mxu0
        %v9464 = vadd.f32 0.0, %v9463
        %v9465 = vpop.f32.mrf.mxu0
        %9466 = vmatprep.mubr.bf16.mxu0 %v7980
        %9467 = vmatmul.mubr.bf16.gmra.mxu0 %v7965
        %v9468 = vpop.f32.mrf.mxu0
        %v9469 = vadd.f32 0.0, %v9468
        %v9470 = vpop.f32.mrf.mxu0
        %v9471 = vpop.f32.mrf.mxu0
        %v9472 = vadd.f32 0.0, %v9471
        %v9473 = vpop.f32.mrf.mxu0
        %9474 = vmatprep.mubr.bf16.mxu0 %v8025
        %9475 = vmatmul.mubr.bf16.gmra.mxu0 %v8010
        %v9476 = vpop.f32.mrf.mxu0
        %v9477 = vadd.f32 0.0, %v9476
        %v9478 = vpop.f32.mrf.mxu0
        %v9479 = vpop.f32.mrf.mxu0
        %v9480 = vadd.f32 0.0, %v9479
        %v9481 = vpop.f32.mrf.mxu0
        %9482 = vmatprep.mubr.bf16.mxu0 %v8070
        %9483 = vmatmul.mubr.bf16.gmra.mxu0 %v8055
        %v9484 = vpop.f32.mrf.mxu0
        %v9485 = vadd.f32 0.0, %v9484
        %v9486 = vpop.f32.mrf.mxu0
        %v9487 = vpop.f32.mrf.mxu0
        %v9488 = vadd.f32 0.0, %v9487
        %v9489 = vpop.f32.mrf.mxu0
        %9490 = vmatprep.mubr.bf16.mxu0 %v8115
        %9491 = vmatmul.mubr.bf16.gmra.mxu0 %v8100
        %v9492 = vpop.f32.mrf.mxu0
        %v9493 = vadd.f32 0.0, %v9492
        %v9494 = vpop.f32.mrf.mxu0
        %v9495 = vpop.f32.mrf.mxu0
        %v9496 = vadd.f32 0.0, %v9495
        %v9497 = vpop.f32.mrf.mxu0
        %9498 = vdwg.mxu0
        %9499 = vmatprep.subr.bf16.mxu0 0
        %9500 = vmatpush1.bf16.msra.mxu0 0
        %9501 = vmatprep.subr.bf16.mxu0 0
        %9502 = vmatpush1.bf16.msra.mxu0 0
        %9503 = vmatprep.subr.bf16.mxu0 0
        %9504 = vmatpush1.bf16.msra.mxu0 0
        %9505 = vmatprep.subr.bf16.mxu0 0
        %9506 = vmatpush1.bf16.msra.mxu0 0
        %9507 = vmatprep.subr.bf16.mxu0 0
        %9508 = vmatpush1.bf16.msra.mxu0 0
        %9509 = vmatprep.subr.bf16.mxu0 0
        %9510 = vmatpush1.bf16.msra.mxu0 0
        %9511 = vmatprep.subr.bf16.mxu0 0
        %9512 = vmatpush1.bf16.msra.mxu0 %v9316
        %9513 = vmatprep.subr.bf16.mxu0 0
        %9514 = vmatpush1.bf16.msra.mxu0 %v9315
        %9515 = vmatprep.subr.bf16.mxu0 0
        %9516 = vmatpush2.bf16.msra.mxu0 0
        %9517 = vmatprep.subr.bf16.mxu0 0
        %9518 = vmatpush2.bf16.msra.mxu0 0
        %9519 = vmatprep.subr.bf16.mxu0 0
        %9520 = vmatpush2.bf16.msra.mxu0 0
        %9521 = vmatprep.subr.bf16.mxu0 0
        %9522 = vmatpush2.bf16.msra.mxu0 0
        %9523 = vmatprep.subr.bf16.mxu0 0
        %9524 = vmatpush2.bf16.msra.mxu0 0
        %9525 = vmatprep.subr.bf16.mxu0 0
        %9526 = vmatpush2.bf16.msra.mxu0 0
        %9527 = vmatprep.subr.bf16.mxu0 0
        %9528 = vmatpush2.bf16.msra.mxu0 0
        %9529 = vmatprep.subr.bf16.mxu0 0
        %9530 = vmatpush2.bf16.msra.mxu0 0
        %9531 = vmatprep.mubr.bf16.mxu0 0
        %9532 = vmatmul.mubr.bf16.gmra.mxu0 %v8325
        %v9533 = vpop.f32.mrf.mxu0
        %v9534 = vadd.f32 %v9373, %v9533
        %v9535 = vpop.f32.mrf.mxu0
        %v9536 = vpop.f32.mrf.mxu0
        %v9537 = vadd.f32 %v9376, %v9536
        %v9538 = vpop.f32.mrf.mxu0
        %9539 = vmatprep.mubr.bf16.mxu0 0
        %9540 = vmatmul.mubr.bf16.gmra.mxu0 %v8328
        %v9541 = vpop.f32.mrf.mxu0
        %v9542 = vadd.f32 %v9381, %v9541
        %v9543 = vpop.f32.mrf.mxu0
        %v9544 = vpop.f32.mrf.mxu0
        %v9545 = vadd.f32 %v9384, %v9544
        %v9546 = vpop.f32.mrf.mxu0
        %9547 = vmatprep.mubr.bf16.mxu0 0
        %9548 = vmatmul.mubr.bf16.gmra.mxu0 %v8331
        %v9549 = vpop.f32.mrf.mxu0
        %v9550 = vadd.f32 %v9389, %v9549
        %v9551 = vpop.f32.mrf.mxu0
        %v9552 = vpop.f32.mrf.mxu0
        %v9553 = vadd.f32 %v9392, %v9552
        %v9554 = vpop.f32.mrf.mxu0
        %9555 = vmatprep.mubr.bf16.mxu0 0
        %9556 = vmatmul.mubr.bf16.gmra.mxu0 %v8334
        %v9557 = vpop.f32.mrf.mxu0
        %v9558 = vadd.f32 %v9397, %v9557
        %v9559 = vpop.f32.mrf.mxu0
        %v9560 = vpop.f32.mrf.mxu0
        %v9561 = vadd.f32 %v9400, %v9560
        %v9562 = vpop.f32.mrf.mxu0
        %9563 = vmatprep.mubr.bf16.mxu0 0
        %9564 = vmatmul.mubr.bf16.gmra.mxu0 %v8337
        %v9565 = vpop.f32.mrf.mxu0
        %v9566 = vadd.f32 %v9405, %v9565
        %v9567 = vpop.f32.mrf.mxu0
        %v9568 = vpop.f32.mrf.mxu0
        %v9569 = vadd.f32 %v9408, %v9568
        %v9570 = vpop.f32.mrf.mxu0
        %9571 = vmatprep.mubr.bf16.mxu0 0
        %9572 = vmatmul.mubr.bf16.gmra.mxu0 %v8340
        %v9573 = vpop.f32.mrf.mxu0
        %v9574 = vadd.f32 %v9413, %v9573
        %v9575 = vpop.f32.mrf.mxu0
        %v9576 = vpop.f32.mrf.mxu0
        %v9577 = vadd.f32 %v9416, %v9576
        %v9578 = vpop.f32.mrf.mxu0
        %9579 = vmatprep.mubr.bf16.mxu0 0
        %9580 = vmatmul.mubr.bf16.gmra.mxu0 %v8343
        %v9581 = vpop.f32.mrf.mxu0
        %v9582 = vadd.f32 %v9421, %v9581
        %v9583 = vpop.f32.mrf.mxu0
        %v9584 = vpop.f32.mrf.mxu0
        %v9585 = vadd.f32 %v9424, %v9584
        %v9586 = vpop.f32.mrf.mxu0
        %9587 = vmatprep.mubr.bf16.mxu0 0
        %9588 = vmatmul.mubr.bf16.gmra.mxu0 %v8346
        %v9589 = vpop.f32.mrf.mxu0
        %v9590 = vadd.f32 %v9429, %v9589
        %v9591 = vpop.f32.mrf.mxu0
        %v9592 = vpop.f32.mrf.mxu0
        %v9593 = vadd.f32 %v9432, %v9592
        %v9594 = vpop.f32.mrf.mxu0
        %9595 = vmatprep.mubr.bf16.mxu0 0
        %9596 = vmatmul.mubr.bf16.gmra.mxu0 %v8349
        %v9597 = vpop.f32.mrf.mxu0
        %v9598 = vadd.f32 %v9437, %v9597
        %v9599 = vpop.f32.mrf.mxu0
        %v9600 = vpop.f32.mrf.mxu0
        %v9601 = vadd.f32 %v9440, %v9600
        %v9602 = vpop.f32.mrf.mxu0
        %9603 = vmatprep.mubr.bf16.mxu0 0
        %9604 = vmatmul.mubr.bf16.gmra.mxu0 %v8352
        %v9605 = vpop.f32.mrf.mxu0
        %v9606 = vadd.f32 %v9445, %v9605
        %v9607 = vpop.f32.mrf.mxu0
        %v9608 = vpop.f32.mrf.mxu0
        %v9609 = vadd.f32 %v9448, %v9608
        %v9610 = vpop.f32.mrf.mxu0
        %9611 = vmatprep.mubr.bf16.mxu0 0
        %9612 = vmatmul.mubr.bf16.gmra.mxu0 %v8355
        %v9613 = vpop.f32.mrf.mxu0
        %v9614 = vadd.f32 %v9453, %v9613
        %v9615 = vpop.f32.mrf.mxu0
        %v9616 = vpop.f32.mrf.mxu0
        %v9617 = vadd.f32 %v9456, %v9616
        %v9618 = vpop.f32.mrf.mxu0
        %9619 = vmatprep.mubr.bf16.mxu0 0
        %9620 = vmatmul.mubr.bf16.gmra.mxu0 %v8358
        %v9621 = vpop.f32.mrf.mxu0
        %v9622 = vadd.f32 %v9461, %v9621
        %v9623 = vpop.f32.mrf.mxu0
        %v9624 = vpop.f32.mrf.mxu0
        %v9625 = vadd.f32 %v9464, %v9624
        %v9626 = vpop.f32.mrf.mxu0
        %9627 = vmatprep.mubr.bf16.mxu0 0
        %9628 = vmatmul.mubr.bf16.gmra.mxu0 %v8361
        %v9629 = vpop.f32.mrf.mxu0
        %v9630 = vadd.f32 %v9469, %v9629
        %v9631 = vpop.f32.mrf.mxu0
        %v9632 = vpop.f32.mrf.mxu0
        %v9633 = vadd.f32 %v9472, %v9632
        %v9634 = vpop.f32.mrf.mxu0
        %9635 = vmatprep.mubr.bf16.mxu0 0
        %9636 = vmatmul.mubr.bf16.gmra.mxu0 %v8364
        %v9637 = vpop.f32.mrf.mxu0
        %v9638 = vadd.f32 %v9477, %v9637
        %v9639 = vpop.f32.mrf.mxu0
        %v9640 = vpop.f32.mrf.mxu0
        %v9641 = vadd.f32 %v9480, %v9640
        %v9642 = vpop.f32.mrf.mxu0
        %9643 = vmatprep.mubr.bf16.mxu0 0
        %9644 = vmatmul.mubr.bf16.gmra.mxu0 %v8834
        %v9645 = vpop.f32.mrf.mxu0
        %v9646 = vadd.f32 %v9485, %v9645
        %v9647 = vpop.f32.mrf.mxu0
        %v9648 = vpop.f32.mrf.mxu0
        %v9649 = vadd.f32 %v9488, %v9648
        %v9650 = vpop.f32.mrf.mxu0
        %9651 = vmatprep.mubr.bf16.mxu0 0
        %9652 = vmatmul.mubr.bf16.gmra.mxu0 %v9336
        %v9653 = vpop.f32.mrf.mxu0
        %v9654 = vadd.f32 %v9493, %v9653
        %v9655 = vpop.f32.mrf.mxu0
        %v9656 = vpop.f32.mrf.mxu0
        %v9657 = vadd.f32 %v9496, %v9656
        %v9658 = vpop.f32.mrf.mxu0
        %9659 = vdwg.mxu0
        %v9660 = vadd.f32 %v9158, %v9534
        %v9661 = vadd.f32 %v9159, %v9537
        %v9662 = vadd.f32 %v9160, %v9542
        %v9663 = vadd.f32 %v9161, %v9545
        %v9664 = vadd.f32 %v9162, %v9550
        %v9665 = vadd.f32 %v9163, %v9553
        %v9666 = vadd.f32 %v9164, %v9558
        %v9667 = vadd.f32 %v9165, %v9561
        %v9668 = vadd.f32 %v9166, %v9566
        %v9669 = vadd.f32 %v9167, %v9569
        %v9670 = vadd.f32 %v9168, %v9574
        %v9671 = vadd.f32 %v9169, %v9577
        %v9672 = vadd.f32 %v9170, %v9582
        %v9673 = vadd.f32 %v9171, %v9585
        %v9674 = vadd.f32 %v9172, %v9590
        %v9675 = vadd.f32 %v9173, %v9593
        %v9676 = vadd.f32 %v9174, %v9598
        %v9677 = vadd.f32 %v9175, %v9601
        %v9678 = vadd.f32 %v9176, %v9606
        %v9679 = vadd.f32 %v9177, %v9609
        %v9680 = vadd.f32 %v9178, %v9614
        %v9681 = vadd.f32 %v9179, %v9617
        %v9682 = vadd.f32 %v9180, %v9622
        %v9683 = vadd.f32 %v9181, %v9625
        %v9684 = vadd.f32 %v9182, %v9630
        %v9685 = vadd.f32 %v9183, %v9633
        %v9686 = vadd.f32 %v9184, %v9638
        %v9687 = vadd.f32 %v9185, %v9641
        %v9688 = vadd.f32 %v9186, %v9646
        %v9689 = vadd.f32 %v9187, %v9649
        %v9690 = vadd.f32 %v9188, %v9654
        %v9691 = vadd.f32 %v9189, %v9657
        %v9692 = vmax.f32 %v9660, 0.0
        %v9693 = vmax.f32 %v9661, 0.0
        %v9694 = vmax.f32 %v9662, 0.0
        %v9695 = vmax.f32 %v9663, 0.0
        %v9696 = vmax.f32 %v9664, 0.0
        %v9697 = vmax.f32 %v9665, 0.0
        %v9698 = vmax.f32 %v9666, 0.0
        %v9699 = vmax.f32 %v9667, 0.0
        %v9700 = vmax.f32 %v9668, 0.0
        %v9701 = vmax.f32 %v9669, 0.0
        %v9702 = vmax.f32 %v9670, 0.0
        %v9703 = vmax.f32 %v9671, 0.0
        %v9704 = vmax.f32 %v9672, 0.0
        %v9705 = vmax.f32 %v9673, 0.0
        %v9706 = vmax.f32 %v9674, 0.0
        %v9707 = vmax.f32 %v9675, 0.0
        %v9708 = vmax.f32 %v9676, 0.0
        %v9709 = vmax.f32 %v9677, 0.0
        %v9710 = vmax.f32 %v9678, 0.0
        %v9711 = vmax.f32 %v9679, 0.0
        %v9712 = vmax.f32 %v9680, 0.0
        %v9713 = vmax.f32 %v9681, 0.0
        %v9714 = vmax.f32 %v9682, 0.0
        %v9715 = vmax.f32 %v9683, 0.0
        %v9716 = vmax.f32 %v9684, 0.0
        %v9717 = vmax.f32 %v9685, 0.0
        %v9718 = vmax.f32 %v9686, 0.0
        %v9719 = vmax.f32 %v9687, 0.0
        %v9720 = vmax.f32 %v9688, 0.0
        %v9721 = vmax.f32 %v9689, 0.0
        %v9722 = vmax.f32 %v9690, 0.0
        %v9723 = vmax.f32 %v9691, 0.0
        %v9724 = vpack.c.bf16 %v1810, %v1809
        %v9725 = vpack.c.bf16 %v1812, %v1811
        %v9726 = vpack.c.bf16 %v1814, %v1813
        %v9727 = vpack.c.bf16 %v1816, %v1815
        %v9728 = vpack.c.bf16 %v1818, %v1817
        %v9729 = vpack.c.bf16 %v1820, %v1819
        %v9730 = vpack.c.bf16 %v1822, %v1821
        %v9731 = vpack.c.bf16 %v1824, %v1823
        %v9732 = vpack.c.bf16 %v1826, %v1825
        %v9733 = vpack.c.bf16 %v1828, %v1827
        %v9734 = vpack.c.bf16 %v1830, %v1829
        %v9735 = vpack.c.bf16 %v1832, %v1831
        %v9736 = vpack.c.bf16 %v1834, %v1833
        %v9737 = vpack.c.bf16 %v1836, %v1835
        %v9738 = vpack.c.bf16 %v1838, %v1837
        %v9739 = vpack.c.bf16 %v1840, %v1839
        %v9740 = vpack.c.bf16 %v1337, %v1334
        %v9741 = vpack.c.bf16 %v1343, %v1340
        %v9742 = vpack.c.bf16 %v1349, %v1346
        %v9743 = vpack.c.bf16 %v1355, %v1352
        %v9744 = vpack.c.bf16 %v1361, %v1358
        %v9745 = vpack.c.bf16 %v1367, %v1364
        %v9746 = vpack.c.bf16 %v1373, %v1370
        %v9747 = vpack.c.bf16 %v1379, %v1376
        %v9748 = vpack.c.bf16 %v1385, %v1382
        %v9749 = vpack.c.bf16 %v1391, %v1388
        %v9750 = vpack.c.bf16 %v1397, %v1394
        %v9751 = vpack.c.bf16 %v1403, %v1400
        %v9752 = vpack.c.bf16 %v1409, %v1406
        %v9753 = vpack.c.bf16 %v1415, %v1412
        %v9754 = vpack.c.bf16 %v1421, %v1418
        %v9755 = vpack.c.bf16 %v1427, %v1424
        %v9756 = vpack.c.bf16 %v4093, %v4092
        %v9757 = vpack.c.bf16 %v4095, %v4094
        %v9758 = vpack.c.bf16 %v4097, %v4096
        %v9759 = vpack.c.bf16 %v4099, %v4098
        %v9760 = vpack.c.bf16 %v4101, %v4100
        %v9761 = vpack.c.bf16 %v4103, %v4102
        %v9762 = vpack.c.bf16 %v4105, %v4104
        %v9763 = vpack.c.bf16 %v4107, %v4106
        %v9764 = vpack.c.bf16 %v4109, %v4108
        %v9765 = vpack.c.bf16 %v4111, %v4110
        %v9766 = vpack.c.bf16 %v4113, %v4112
        %v9767 = vpack.c.bf16 %v4115, %v4114
        %v9768 = vpack.c.bf16 %v4117, %v4116
        %v9769 = vpack.c.bf16 %v4119, %v4118
        %v9770 = vpack.c.bf16 %v4121, %v4120
        %v9771 = vpack.c.bf16 %v4123, %v4122
        %v9772 = vpack.c.bf16 %v9693, %v9692
        %v9773 = vpack.c.bf16 %v9695, %v9694
        %v9774 = vpack.c.bf16 %v9697, %v9696
        %v9775 = vpack.c.bf16 %v9699, %v9698
        %v9776 = vpack.c.bf16 %v9701, %v9700
        %v9777 = vpack.c.bf16 %v9703, %v9702
        %v9778 = vpack.c.bf16 %v9705, %v9704
        %v9779 = vpack.c.bf16 %v9707, %v9706
        %v9780 = vpack.c.bf16 %v9709, %v9708
        %v9781 = vpack.c.bf16 %v9711, %v9710
        %v9782 = vpack.c.bf16 %v9713, %v9712
        %v9783 = vpack.c.bf16 %v9715, %v9714
        %v9784 = vpack.c.bf16 %v9717, %v9716
        %v9785 = vpack.c.bf16 %v9719, %v9718
        %v9786 = vpack.c.bf16 %v9721, %v9720
        %v9787 = vpack.c.bf16 %v9723, %v9722
        %9804 = vrot.lane.b32.xlu0 %v9740, 96
        %v9805 = vpop.permute.xlu0 %9804
        %9806 = vrot.lane.b32.xlu0 %v9741, 96
        %v9807 = vpop.permute.xlu0 %9806
        %9808 = vrot.lane.b32.xlu0 %v9742, 96
        %v9809 = vpop.permute.xlu0 %9808
        %9810 = vrot.lane.b32.xlu0 %v9743, 96
        %v9811 = vpop.permute.xlu0 %9810
        %9812 = vrot.lane.b32.xlu0 %v9744, 96
        %v9813 = vpop.permute.xlu0 %9812
        %9814 = vrot.lane.b32.xlu0 %v9745, 96
        %v9815 = vpop.permute.xlu0 %9814
        %9816 = vrot.lane.b32.xlu0 %v9746, 96
        %v9817 = vpop.permute.xlu0 %9816
        %9818 = vrot.lane.b32.xlu0 %v9747, 96
        %v9819 = vpop.permute.xlu0 %9818
        %9820 = vrot.lane.b32.xlu0 %v9748, 96
        %v9821 = vpop.permute.xlu0 %9820
        %9822 = vrot.lane.b32.xlu0 %v9749, 96
        %v9823 = vpop.permute.xlu0 %9822
        %9824 = vrot.lane.b32.xlu0 %v9750, 96
        %v9825 = vpop.permute.xlu0 %9824
        %9826 = vrot.lane.b32.xlu0 %v9751, 96
        %v9827 = vpop.permute.xlu0 %9826
        %9828 = vrot.lane.b32.xlu0 %v9752, 96
        %v9829 = vpop.permute.xlu0 %9828
        %9830 = vrot.lane.b32.xlu0 %v9753, 96
        %v9831 = vpop.permute.xlu0 %9830
        %9832 = vrot.lane.b32.xlu0 %v9754, 96
        %v9833 = vpop.permute.xlu0 %9832
        %9834 = vrot.lane.b32.xlu0 %v9755, 96
        %v9835 = vpop.permute.xlu0 %9834
        %9852 = vrot.lane.b32.xlu0 %v9756, 64
        %v9853 = vpop.permute.xlu0 %9852
        %9854 = vrot.lane.b32.xlu0 %v9757, 64
        %v9855 = vpop.permute.xlu0 %9854
        %9856 = vrot.lane.b32.xlu0 %v9758, 64
        %v9857 = vpop.permute.xlu0 %9856
        %9858 = vrot.lane.b32.xlu0 %v9759, 64
        %v9859 = vpop.permute.xlu0 %9858
        %9860 = vrot.lane.b32.xlu0 %v9760, 64
        %v9861 = vpop.permute.xlu0 %9860
        %9862 = vrot.lane.b32.xlu0 %v9761, 64
        %v9863 = vpop.permute.xlu0 %9862
        %9864 = vrot.lane.b32.xlu0 %v9762, 64
        %v9865 = vpop.permute.xlu0 %9864
        %9866 = vrot.lane.b32.xlu0 %v9763, 64
        %v9867 = vpop.permute.xlu0 %9866
        %9868 = vrot.lane.b32.xlu0 %v9764, 64
        %v9869 = vpop.permute.xlu0 %9868
        %9870 = vrot.lane.b32.xlu0 %v9765, 64
        %v9871 = vpop.permute.xlu0 %9870
        %9872 = vrot.lane.b32.xlu0 %v9766, 64
        %v9873 = vpop.permute.xlu0 %9872
        %9874 = vrot.lane.b32.xlu0 %v9767, 64
        %v9875 = vpop.permute.xlu0 %9874
        %9876 = vrot.lane.b32.xlu0 %v9768, 64
        %v9877 = vpop.permute.xlu0 %9876
        %9878 = vrot.lane.b32.xlu0 %v9769, 64
        %v9879 = vpop.permute.xlu0 %9878
        %9880 = vrot.lane.b32.xlu0 %v9770, 64
        %v9881 = vpop.permute.xlu0 %9880
        %9882 = vrot.lane.b32.xlu0 %v9771, 64
        %v9883 = vpop.permute.xlu0 %9882
        %9900 = vrot.lane.b32.xlu0 %v9772, 32
        %v9901 = vpop.permute.xlu0 %9900
        %9902 = vrot.lane.b32.xlu0 %v9773, 32
        %v9903 = vpop.permute.xlu0 %9902
        %9904 = vrot.lane.b32.xlu0 %v9774, 32
        %v9905 = vpop.permute.xlu0 %9904
        %9906 = vrot.lane.b32.xlu0 %v9775, 32
        %v9907 = vpop.permute.xlu0 %9906
        %9908 = vrot.lane.b32.xlu0 %v9776, 32
        %v9909 = vpop.permute.xlu0 %9908
        %9910 = vrot.lane.b32.xlu0 %v9777, 32
        %v9911 = vpop.permute.xlu0 %9910
        %9912 = vrot.lane.b32.xlu0 %v9778, 32
        %v9913 = vpop.permute.xlu0 %9912
        %9914 = vrot.lane.b32.xlu0 %v9779, 32
        %v9915 = vpop.permute.xlu0 %9914
        %9916 = vrot.lane.b32.xlu0 %v9780, 32
        %v9917 = vpop.permute.xlu0 %9916
        %9918 = vrot.lane.b32.xlu0 %v9781, 32
        %v9919 = vpop.permute.xlu0 %9918
        %9920 = vrot.lane.b32.xlu0 %v9782, 32
        %v9921 = vpop.permute.xlu0 %9920
        %9922 = vrot.lane.b32.xlu0 %v9783, 32
        %v9923 = vpop.permute.xlu0 %9922
        %9924 = vrot.lane.b32.xlu0 %v9784, 32
        %v9925 = vpop.permute.xlu0 %9924
        %9926 = vrot.lane.b32.xlu0 %v9785, 32
        %v9927 = vpop.permute.xlu0 %9926
        %9928 = vrot.lane.b32.xlu0 %v9786, 32
        %v9929 = vpop.permute.xlu0 %9928
        %9930 = vrot.lane.b32.xlu0 %v9787, 32
        %v9931 = vpop.permute.xlu0 %9930
        %v9934 = vsel %vm359, %v9724, %v9805
        %v9937 = vsel %vm359, %v9725, %v9807
        %v9940 = vsel %vm359, %v9726, %v9809
        %v9943 = vsel %vm359, %v9727, %v9811
        %v9946 = vsel %vm359, %v9728, %v9813
        %v9949 = vsel %vm359, %v9729, %v9815
        %v9952 = vsel %vm359, %v9730, %v9817
        %v9955 = vsel %vm359, %v9731, %v9819
        %v9958 = vsel %vm359, %v9732, %v9821
        %v9961 = vsel %vm359, %v9733, %v9823
        %v9964 = vsel %vm359, %v9734, %v9825
        %v9967 = vsel %vm359, %v9735, %v9827
        %v9970 = vsel %vm359, %v9736, %v9829
        %v9973 = vsel %vm359, %v9737, %v9831
        %v9976 = vsel %vm359, %v9738, %v9833
        %v9979 = vsel %vm359, %v9739, %v9835
        %v9981 = vsel %vm2509, %v9805, %v9853
        %v9983 = vsel %vm2509, %v9807, %v9855
        %v9985 = vsel %vm2509, %v9809, %v9857
        %v9987 = vsel %vm2509, %v9811, %v9859
        %v9989 = vsel %vm2509, %v9813, %v9861
        %v9991 = vsel %vm2509, %v9815, %v9863
        %v9993 = vsel %vm2509, %v9817, %v9865
        %v9995 = vsel %vm2509, %v9819, %v9867
        %v9997 = vsel %vm2509, %v9821, %v9869
        %v9999 = vsel %vm2509, %v9823, %v9871
        %v10001 = vsel %vm2509, %v9825, %v9873
        %v10003 = vsel %vm2509, %v9827, %v9875
        %v10005 = vsel %vm2509, %v9829, %v9877
        %v10007 = vsel %vm2509, %v9831, %v9879
        %v10009 = vsel %vm2509, %v9833, %v9881
        %v10011 = vsel %vm2509, %v9835, %v9883
        %v10013 = vsel %vm8317, %v9853, %v9901
        %v10015 = vsel %vm8317, %v9855, %v9903
        %v10017 = vsel %vm8317, %v9857, %v9905
        %v10019 = vsel %vm8317, %v9859, %v9907
        %v10021 = vsel %vm8317, %v9861, %v9909
        %v10023 = vsel %vm8317, %v9863, %v9911
        %v10025 = vsel %vm8317, %v9865, %v9913
        %v10027 = vsel %vm8317, %v9867, %v9915
        %v10029 = vsel %vm8317, %v9869, %v9917
        %v10031 = vsel %vm8317, %v9871, %v9919
        %v10033 = vsel %vm8317, %v9873, %v9921
        %v10035 = vsel %vm8317, %v9875, %v9923
        %v10037 = vsel %vm8317, %v9877, %v9925
        %v10039 = vsel %vm8317, %v9879, %v9927
        %v10041 = vsel %vm8317, %v9881, %v9929
        %v10043 = vsel %vm8317, %v9883, %v9931
        %v10092 = vunpack.c.l.b16 %v9934
        %v10093 = vunpack.c.l.b16 %v9981
        %v10094 = vunpack.c.l.b16 %v10013
        %v10095 = vunpack.c.h.b16 %v9934
        %v10096 = vunpack.c.h.b16 %v9981
        %v10097 = vunpack.c.h.b16 %v10013
        %v10098 = vunpack.c.l.b16 %v9937
        %v10099 = vunpack.c.l.b16 %v9983
        %v10100 = vunpack.c.l.b16 %v10015
        %v10101 = vunpack.c.h.b16 %v9937
        %v10102 = vunpack.c.h.b16 %v9983
        %v10103 = vunpack.c.h.b16 %v10015
        %v10104 = vunpack.c.l.b16 %v9940
        %v10105 = vunpack.c.l.b16 %v9985
        %v10106 = vunpack.c.l.b16 %v10017
        %v10107 = vunpack.c.h.b16 %v9940
        %v10108 = vunpack.c.h.b16 %v9985
        %v10109 = vunpack.c.h.b16 %v10017
        %v10110 = vunpack.c.l.b16 %v9943
        %v10111 = vunpack.c.l.b16 %v9987
        %v10112 = vunpack.c.l.b16 %v10019
        %v10113 = vunpack.c.h.b16 %v9943
        %v10114 = vunpack.c.h.b16 %v9987
        %v10115 = vunpack.c.h.b16 %v10019
        %v10116 = vunpack.c.l.b16 %v9946
        %v10117 = vunpack.c.l.b16 %v9989
        %v10118 = vunpack.c.l.b16 %v10021
        %v10119 = vunpack.c.h.b16 %v9946
        %v10120 = vunpack.c.h.b16 %v9989
        %v10121 = vunpack.c.h.b16 %v10021
        %v10122 = vunpack.c.l.b16 %v9949
        %v10123 = vunpack.c.l.b16 %v9991
        %v10124 = vunpack.c.l.b16 %v10023
        %v10125 = vunpack.c.h.b16 %v9949
        %v10126 = vunpack.c.h.b16 %v9991
        %v10127 = vunpack.c.h.b16 %v10023
        %v10128 = vunpack.c.l.b16 %v9952
        %v10129 = vunpack.c.l.b16 %v9993
        %v10130 = vunpack.c.l.b16 %v10025
        %v10131 = vunpack.c.h.b16 %v9952
        %v10132 = vunpack.c.h.b16 %v9993
        %v10133 = vunpack.c.h.b16 %v10025
        %v10134 = vunpack.c.l.b16 %v9955
        %v10135 = vunpack.c.l.b16 %v9995
        %v10136 = vunpack.c.l.b16 %v10027
        %v10137 = vunpack.c.h.b16 %v9955
        %v10138 = vunpack.c.h.b16 %v9995
        %v10139 = vunpack.c.h.b16 %v10027
        %v10140 = vunpack.c.l.b16 %v9958
        %v10141 = vunpack.c.l.b16 %v9997
        %v10142 = vunpack.c.l.b16 %v10029
        %v10143 = vunpack.c.h.b16 %v9958
        %v10144 = vunpack.c.h.b16 %v9997
        %v10145 = vunpack.c.h.b16 %v10029
        %v10146 = vunpack.c.l.b16 %v9961
        %v10147 = vunpack.c.l.b16 %v9999
        %v10148 = vunpack.c.l.b16 %v10031
        %v10149 = vunpack.c.h.b16 %v9961
        %v10150 = vunpack.c.h.b16 %v9999
        %v10151 = vunpack.c.h.b16 %v10031
        %v10152 = vunpack.c.l.b16 %v9964
        %v10153 = vunpack.c.l.b16 %v10001
        %v10154 = vunpack.c.l.b16 %v10033
        %v10155 = vunpack.c.h.b16 %v9964
        %v10156 = vunpack.c.h.b16 %v10001
        %v10157 = vunpack.c.h.b16 %v10033
        %v10158 = vunpack.c.l.b16 %v9967
        %v10159 = vunpack.c.l.b16 %v10003
        %v10160 = vunpack.c.l.b16 %v10035
        %v10161 = vunpack.c.h.b16 %v9967
        %v10162 = vunpack.c.h.b16 %v10003
        %v10163 = vunpack.c.h.b16 %v10035
        %v10164 = vunpack.c.l.b16 %v9970
        %v10165 = vunpack.c.l.b16 %v10005
        %v10166 = vunpack.c.l.b16 %v10037
        %v10167 = vunpack.c.h.b16 %v9970
        %v10168 = vunpack.c.h.b16 %v10005
        %v10169 = vunpack.c.h.b16 %v10037
        %v10170 = vunpack.c.l.b16 %v9973
        %v10171 = vunpack.c.l.b16 %v10007
        %v10172 = vunpack.c.l.b16 %v10039
        %v10173 = vunpack.c.h.b16 %v9973
        %v10174 = vunpack.c.h.b16 %v10007
        %v10175 = vunpack.c.h.b16 %v10039
        %v10176 = vunpack.c.l.b16 %v9976
        %v10177 = vunpack.c.l.b16 %v10009
        %v10178 = vunpack.c.l.b16 %v10041
        %v10179 = vunpack.c.h.b16 %v9976
        %v10180 = vunpack.c.h.b16 %v10009
        %v10181 = vunpack.c.h.b16 %v10041
        %v10182 = vunpack.c.l.b16 %v9979
        %v10183 = vunpack.c.l.b16 %v10011
        %v10184 = vunpack.c.l.b16 %v10043
        %v10185 = vunpack.c.h.b16 %v9979
        %v10186 = vunpack.c.h.b16 %v10011
        %v10187 = vunpack.c.h.b16 %v10043
        %v10188 = vpack.c.b16 %v10093, %v10092
        %v10189 = vpack.c.b16 %v10094, %v10094
        %v10190 = vpack.c.b16 %v10096, %v10095
        %v10191 = vpack.c.b16 %v10097, %v10097
        %v10192 = vpack.c.b16 %v10099, %v10098
        %v10193 = vpack.c.b16 %v10100, %v10100
        %v10194 = vpack.c.b16 %v10102, %v10101
        %v10195 = vpack.c.b16 %v10103, %v10103
        %v10196 = vpack.c.b16 %v10105, %v10104
        %v10197 = vpack.c.b16 %v10106, %v10106
        %v10198 = vpack.c.b16 %v10108, %v10107
        %v10199 = vpack.c.b16 %v10109, %v10109
        %v10200 = vpack.c.b16 %v10111, %v10110
        %v10201 = vpack.c.b16 %v10112, %v10112
        %v10202 = vpack.c.b16 %v10114, %v10113
        %v10203 = vpack.c.b16 %v10115, %v10115
        %v10204 = vpack.c.b16 %v10117, %v10116
        %v10205 = vpack.c.b16 %v10118, %v10118
        %v10206 = vpack.c.b16 %v10120, %v10119
        %v10207 = vpack.c.b16 %v10121, %v10121
        %v10208 = vpack.c.b16 %v10123, %v10122
        %v10209 = vpack.c.b16 %v10124, %v10124
        %v10210 = vpack.c.b16 %v10126, %v10125
        %v10211 = vpack.c.b16 %v10127, %v10127
        %v10212 = vpack.c.b16 %v10129, %v10128
        %v10213 = vpack.c.b16 %v10130, %v10130
        %v10214 = vpack.c.b16 %v10132, %v10131
        %v10215 = vpack.c.b16 %v10133, %v10133
        %v10216 = vpack.c.b16 %v10135, %v10134
        %v10217 = vpack.c.b16 %v10136, %v10136
        %v10218 = vpack.c.b16 %v10138, %v10137
        %v10219 = vpack.c.b16 %v10139, %v10139
        %v10220 = vpack.c.b16 %v10141, %v10140
        %v10221 = vpack.c.b16 %v10142, %v10142
        %v10222 = vpack.c.b16 %v10144, %v10143
        %v10223 = vpack.c.b16 %v10145, %v10145
        %v10224 = vpack.c.b16 %v10147, %v10146
        %v10225 = vpack.c.b16 %v10148, %v10148
        %v10226 = vpack.c.b16 %v10150, %v10149
        %v10227 = vpack.c.b16 %v10151, %v10151
        %v10228 = vpack.c.b16 %v10153, %v10152
        %v10229 = vpack.c.b16 %v10154, %v10154
        %v10230 = vpack.c.b16 %v10156, %v10155
        %v10231 = vpack.c.b16 %v10157, %v10157
        %v10232 = vpack.c.b16 %v10159, %v10158
        %v10233 = vpack.c.b16 %v10160, %v10160
        %v10234 = vpack.c.b16 %v10162, %v10161
        %v10235 = vpack.c.b16 %v10163, %v10163
        %v10236 = vpack.c.b16 %v10165, %v10164
        %v10237 = vpack.c.b16 %v10166, %v10166
        %v10238 = vpack.c.b16 %v10168, %v10167
        %v10239 = vpack.c.b16 %v10169, %v10169
        %v10240 = vpack.c.b16 %v10171, %v10170
        %v10241 = vpack.c.b16 %v10172, %v10172
        %v10242 = vpack.c.b16 %v10174, %v10173
        %v10243 = vpack.c.b16 %v10175, %v10175
        %v10244 = vpack.c.b16 %v10177, %v10176
        %v10245 = vpack.c.b16 %v10178, %v10178
        %v10246 = vpack.c.b16 %v10180, %v10179
        %v10247 = vpack.c.b16 %v10181, %v10181
        %v10248 = vpack.c.b16 %v10183, %v10182
        %v10249 = vpack.c.b16 %v10184, %v10184
        %v10250 = vpack.c.b16 %v10186, %v10185
        %v10251 = vpack.c.b16 %v10187, %v10187
        %10316 = vst [vmem:[%s352] sm:$0xff] %v10188
        %10317 = vst [vmem:[%s352 + $0x8] sm:$0xf] %v10189
        %10318 = vst [vmem:[%s352 + $0xc] sm:$0xff] %v10190
        %10319 = vst [vmem:[%s352 + $0x14] sm:$0xf] %v10191
        %10320 = vst [vmem:[%s352 + $0x18] sm:$0xff] %v10192
        %10321 = vst [vmem:[%s352 + $0x20] sm:$0xf] %v10193
        %10322 = vst [vmem:[%s352 + $0x24] sm:$0xff] %v10194
        %10323 = vst [vmem:[%s352 + $0x2c] sm:$0xf] %v10195
        %10324 = vst [vmem:[%s352 + $0x30] sm:$0xff] %v10196
        %10325 = vst [vmem:[%s352 + $0x38] sm:$0xf] %v10197
        %10326 = vst [vmem:[%s352 + $0x3c] sm:$0xff] %v10198
        %10327 = vst [vmem:[%s352 + $0x44] sm:$0xf] %v10199
        %10328 = vst [vmem:[%s352 + $0x48] sm:$0xff] %v10200
        %10329 = vst [vmem:[%s352 + $0x50] sm:$0xf] %v10201
        %10330 = vst [vmem:[%s352 + $0x54] sm:$0xff] %v10202
        %10331 = vst [vmem:[%s352 + $0x5c] sm:$0xf] %v10203
        %10332 = vst [vmem:[%s352 + $0x60] sm:$0xff] %v10204
        %10333 = vst [vmem:[%s352 + $0x68] sm:$0xf] %v10205
        %10334 = vst [vmem:[%s352 + $0x6c] sm:$0xff] %v10206
        %10335 = vst [vmem:[%s352 + $0x74] sm:$0xf] %v10207
        %10336 = vst [vmem:[%s352 + $0x78] sm:$0xff] %v10208
        %10337 = vst [vmem:[%s352 + $0x80] sm:$0xf] %v10209
        %10338 = vst [vmem:[%s352 + $0x84] sm:$0xff] %v10210
        %10339 = vst [vmem:[%s352 + $0x8c] sm:$0xf] %v10211
        %10340 = vst [vmem:[%s352 + $0x90] sm:$0xff] %v10212
        %10341 = vst [vmem:[%s352 + $0x98] sm:$0xf] %v10213
        %10342 = vst [vmem:[%s352 + $0x9c] sm:$0xff] %v10214
        %10343 = vst [vmem:[%s352 + $0xa4] sm:$0xf] %v10215
        %10344 = vst [vmem:[%s352 + $0xa8] sm:$0xff] %v10216
        %10345 = vst [vmem:[%s352 + $0xb0] sm:$0xf] %v10217
        %10346 = vst [vmem:[%s352 + $0xb4] sm:$0xff] %v10218
        %10347 = vst [vmem:[%s352 + $0xbc] sm:$0xf] %v10219
        %10348 = vst [vmem:[%s352 + $0xc0] sm:$0xff] %v10220
        %10349 = vst [vmem:[%s352 + $0xc8] sm:$0xf] %v10221
        %10350 = vst [vmem:[%s352 + $0xcc] sm:$0xff] %v10222
        %10351 = vst [vmem:[%s352 + $0xd4] sm:$0xf] %v10223
        %10352 = vst [vmem:[%s352 + $0xd8] sm:$0xff] %v10224
        %10353 = vst [vmem:[%s352 + $0xe0] sm:$0xf] %v10225
        %10354 = vst [vmem:[%s352 + $0xe4] sm:$0xff] %v10226
        %10355 = vst [vmem:[%s352 + $0xec] sm:$0xf] %v10227
        %10356 = vst [vmem:[%s352 + $0xf0] sm:$0xff] %v10228
        %10357 = vst [vmem:[%s352 + $0xf8] sm:$0xf] %v10229
        %10358 = vst [vmem:[%s352 + $0xfc] sm:$0xff] %v10230
        %10359 = vst [vmem:[%s352 + $0x104] sm:$0xf] %v10231
        %10360 = vst [vmem:[%s352 + $0x108] sm:$0xff] %v10232
        %10361 = vst [vmem:[%s352 + $0x110] sm:$0xf] %v10233
        %10362 = vst [vmem:[%s352 + $0x114] sm:$0xff] %v10234
        %10363 = vst [vmem:[%s352 + $0x11c] sm:$0xf] %v10235
        %10364 = vst [vmem:[%s352 + $0x120] sm:$0xff] %v10236
        %10365 = vst [vmem:[%s352 + $0x128] sm:$0xf] %v10237
        %10366 = vst [vmem:[%s352 + $0x12c] sm:$0xff] %v10238
        %10367 = vst [vmem:[%s352 + $0x134] sm:$0xf] %v10239
        %10368 = vst [vmem:[%s352 + $0x138] sm:$0xff] %v10240
        %10369 = vst [vmem:[%s352 + $0x140] sm:$0xf] %v10241
        %10370 = vst [vmem:[%s352 + $0x144] sm:$0xff] %v10242
        %10371 = vst [vmem:[%s352 + $0x14c] sm:$0xf] %v10243
        %10372 = vst [vmem:[%s352 + $0x150] sm:$0xff] %v10244
        %10373 = vst [vmem:[%s352 + $0x158] sm:$0xf] %v10245
        %10374 = vst [vmem:[%s352 + $0x15c] sm:$0xff] %v10246
        %10375 = vst [vmem:[%s352 + $0x164] sm:$0xf] %v10247
        %10376 = vst [vmem:[%s352 + $0x168] sm:$0xff] %v10248
        %10377 = vst [vmem:[%s352 + $0x170] sm:$0xf] %v10249
        %10378 = vst [vmem:[%s352 + $0x174] sm:$0xff] %v10250
        %10379 = vst [vmem:[%s352 + $0x17c] sm:$0xf] %v10251
        %s10380 = sand.u32 %s247, 1
        %s10381 = scalar_lea.sflag [#allocation6], %s10380
        %s10382 = sand.u32 %s247, 1
        %s10383 = smul.addr %s10382, 384
        %s10384 = scalar_lea.vmem [#allocation5], %s10383
        // Predicated region
        $region61: #{inception_a_forward.1} parent=59 // pred_check
          %p10385 = pneg %p257
        $region62: #{inception_a_forward.1} parent=59 // pred_check_branch
          %10387 = sbr.rel (%p10385) target = $region64
        $region63: #{inception_a_forward.1} parent=59 // pred_region
          %s10389 = ssub.s32 6144, 6144
          %10390 = vsyncadd %s10381, %s10389
          %s10391 = smul.addr %s24, 96
          %s10392 = smul.addr %s10391, 64
          %s10393 = scalar_lea.hbm %s10, %s10392
          %s10394 = sshll.u32 %s10384, 4
          %s10395 = int_to_ptr.vmem [resolvable:$true] %s10394
          %10400 = dma.vmem_to_hbm [thread:$0]  %s10395, 6144, %s10393, %s10381, 192, 192, 12
        $region64: #{inception_a_forward.1} parent=59 // pred_fallthru
          _
      $region60: #{inception_a_forward.1} parent=5 // pred_fallthru
        _
      %p10401 = scmp.le.s32.totalorder 2, %s19
      // Predicated region
      $region65: #{inception_a_forward.1} parent=5 // pred_check
        %p10402 = pneg %p10401
      $region66: #{inception_a_forward.1} parent=5 // pred_check_branch
        %10404 = sbr.rel (%p10402) target = $region68
      $region67: #{inception_a_forward.1} parent=5 // pred_region
        %s10405 = ssub.s32 %s19, 2
        // Predicated region
        $region69: #{inception_a_forward.1} parent=67 // pred_check
          %p10406 = pneg %p263
        $region70: #{inception_a_forward.1} parent=67 // pred_check_branch
          %10408 = sbr.rel (%p10406) target = $region72
        $region71: #{inception_a_forward.1} parent=67 // pred_region
          %s10409 = sand.u32 %s248, 1
          %s10410 = scalar_lea.sflag [#allocation6], %s10409
          %s10411 = sand.u32 %s248, 1
          %s10412 = smul.addr %s10411, 384
          %s10413 = scalar_lea.vmem [#allocation5], %s10412
          %10414 = dma.done %s10410, 6144
        $region72: #{inception_a_forward.1} parent=67 // pred_fallthru
          _
      $region68: #{inception_a_forward.1} parent=5 // pred_fallthru
        _
    $region6: #{inception_a_forward.1} parent=1 // loop_footer
      %s23 = sadd.s32 1, %s19
    $region7: #{inception_a_forward.1} parent=1 // loop_footer_branch
      %18 = sbr.rel target = $region3
    $region8: #{inception_a_forward.1} parent=1 // loop_exit
      _
    %10415 = vsyncpa [#allocation6], 1
    %s10416 = scalar_lea.sflag [#allocation6], 1
    %10417 = vsyncpa %s10416, 1

</llo_original>
